<compile_context>
chip_gen: v5e
topology: v5e:2x2
jax: 0.10.0
libtpu: 0.0.40
codegen_flags: <defaults>
</compile_context>

<pallas_src>
import functools

import jax
import jax.numpy as jnp
from jax.experimental import pallas as pl
from jax.experimental.pallas import tpu as pltpu

HIDDEN = 128


# ----------------------------------------------------------------------------
# Fused kernel: layer-0 fwd/bwd LSTM -> layer-1 fwd LSTM + single bwd step ->
# MLP head (fc1..fc4 ReLU, fc5 sigmoid).  Everything stays in VMEM.
# ----------------------------------------------------------------------------
def _fused_bilstm_kernel(
    x2d_ref,                                   # (T*B, 8)   bf16, time-major, padded 7->8
    wih0f_ref, whh0f_ref, b0f_ref,             # (8,512) (128,512) (1,512)
    wih0b_ref, whh0b_ref, b0b_ref,
    wih1f_ref, whh1f_ref, b1f_ref,             # (256,512) (128,512) (1,512)
    wih1b_ref, b1b_ref,                        # (256,512) (1,512)  (no W_hh needed)
    w1_ref, bb1_ref,                           # (256,128) (1,128)
    w2_ref, bb2_ref,                           # (128,128) (1,128)  zero-padded
    w3_ref, bb3_ref,
    w4_ref, bb4_ref,
    w5_ref, bb5_ref,
    o_ref,                                     # (B, 128)  result in column 0
    seq_sc,                                    # VMEM scratch (T*B, 2H) f32
    *, T, B,
):
    H = HIDDEN
    f32 = jnp.float32
    bf16 = jnp.bfloat16

    def gates_split(g):                        # g: (B, 4H) f32
        i = jax.nn.sigmoid(g[:, 0 * H:1 * H])
        f = jax.nn.sigmoid(g[:, 1 * H:2 * H])
        gg = jnp.tanh(g[:, 2 * H:3 * H])
        o = jax.nn.sigmoid(g[:, 3 * H:4 * H])
        return i, f, gg, o

    def step(g_x, h, c, whh_ref):
        # g_x already contains x_t @ W_ih + (b_ih + b_hh)
        gates = g_x + jnp.dot(h.astype(bf16), whh_ref[...],
                              preferred_element_type=f32)
        i, f, gg, o = gates_split(gates)
        c = f * c + i * gg
        h = o * jnp.tanh(c)
        return h, c

    x2d = x2d_ref[...]                         # (T*B, 8) bf16

    # ---- hoisted input projections, layer 0 (one MXU matmul per direction) ----
    gx_f = jnp.dot(x2d, wih0f_ref[...], preferred_element_type=f32) + b0f_ref[...]
    gx_b = jnp.dot(x2d, wih0b_ref[...], preferred_element_type=f32) + b0b_ref[...]

    # ---- layer 0, forward direction ----
    h = jnp.zeros((B, H), f32)
    c = jnp.zeros((B, H), f32)
    for t in range(T):
        h, c = step(gx_f[t * B:(t + 1) * B, :], h, c, whh0f_ref)
        seq_sc[t * B:(t + 1) * B, 0:H] = h

    # ---- layer 0, backward direction (reverse indexing, no flip) ----
    h = jnp.zeros((B, H), f32)
    c = jnp.zeros((B, H), f32)
    for s in range(T):
        t = T - 1 - s
        h, c = step(gx_b[t * B:(t + 1) * B, :], h, c, whh0b_ref)
        seq_sc[t * B:(t + 1) * B, H:2 * H] = h

    # ---- layer 1 ----
    seq = seq_sc[...].astype(bf16)             # (T*B, 2H)
    # hoisted layer-1 forward input projection
    g1f = jnp.dot(seq, wih1f_ref[...], preferred_element_type=f32) + b1f_ref[...]
    h1 = jnp.zeros((B, H), f32)
    c1 = jnp.zeros((B, H), f32)
    for t in range(T):
        h1, c1 = step(g1f[t * B:(t + 1) * B, :], h1, c1, whh1f_ref)
    h1f_last = h1                              # forward hidden at final timestep

    # layer-1 backward: only its value at original time T-1 is consumed, which
    # is the backward LSTM's FIRST step (h0 = c0 = 0 => no recurrent matmul).
    g1b = (jnp.dot(seq[(T - 1) * B:T * B, :], wih1b_ref[...],
                   preferred_element_type=f32) + b1b_ref[...])
    i, f, gg, o = gates_split(g1b)
    c1b = i * gg                               # f * 0 + i * g
    h1b_last = o * jnp.tanh(c1b)

    # ---- MLP head (fused) ----
    def lin(hv, w_ref, b_ref):
        return (jnp.dot(hv.astype(bf16), w_ref[...],
                        preferred_element_type=f32) + b_ref[...])

    # concat(h_fwd, h_bwd) @ W1  ==  h_fwd @ W1[:H] + h_bwd @ W1[H:]
    hmlp = (jnp.dot(h1f_last.astype(bf16), w1_ref[0:H, :],
                    preferred_element_type=f32)
            + jnp.dot(h1b_last.astype(bf16), w1_ref[H:2 * H, :],
                      preferred_element_type=f32)
            + bb1_ref[...])
    hmlp = jnp.maximum(hmlp, 0.0)
    hmlp = jnp.maximum(lin(hmlp, w2_ref, bb2_ref), 0.0)
    hmlp = jnp.maximum(lin(hmlp, w3_ref, bb3_ref), 0.0)
    hmlp = jnp.maximum(lin(hmlp, w4_ref, bb4_ref), 0.0)
    o_ref[...] = jax.nn.sigmoid(lin(hmlp, w5_ref, bb5_ref))


# ----------------------------------------------------------------------------
# Parameter init (deterministic, PyTorch-style uniform bounds), pre-transposed,
# feature-padded and lane-padded so the kernel math is exact.
# ----------------------------------------------------------------------------
def init_params(key):
    H = HIDDEN
    keys = iter(jax.random.split(key, 64))

    def u(shape, bound):
        return jax.random.uniform(next(keys), shape, jnp.float32, -bound, bound)

    p = {}
    lstm_bound = 1.0 / (H ** 0.5)
    for layer, din in [(0, 7), (1, 2 * H)]:
        for d in ("fwd", "bwd"):
            wih = u((4 * H, din), lstm_bound)   # PyTorch weight_ih_l{k}[_reverse]
            whh = u((4 * H, H), lstm_bound)     # PyTorch weight_hh_l{k}[_reverse]
            bih = u((4 * H,), lstm_bound)
            bhh = u((4 * H,), lstm_bound)
            wih_t = wih.T                       # (din, 4H)
            if din == 7:
                # zero-pad feature axis 7 -> 8 (matches zero-padded input x)
                wih_t = jnp.pad(wih_t, ((0, 1), (0, 0)))
            p[f"l{layer}_{d}_wih_t"] = wih_t.astype(jnp.bfloat16)
            p[f"l{layer}_{d}_whh_t"] = whh.T.astype(jnp.bfloat16)
            p[f"l{layer}_{d}_b"] = (bih + bhh)[None, :]          # f32 (1, 4H)

    # MLP: zero-pad every layer to 128 output lanes / >=128 input rows.
    # Padded columns stay exactly zero through relu(0 + 0) and padded weight
    # rows are zero, so the result in column 0 is bit-identical math.
    fc_dims = [(2 * H, 128), (128, 64), (64, 32), (32, 8), (8, 1)]
    for idx, (fi, fo) in enumerate(fc_dims, start=1):
        bound = 1.0 / (fi ** 0.5)
        w_t = u((fo, fi), bound).T              # (fi, fo)
        b = u((fo,), bound)
        fi_pad = max(fi, 128)
        w_p = jnp.zeros((fi_pad, 128), jnp.float32).at[:fi, :fo].set(w_t)
        b_p = jnp.zeros((1, 128), jnp.float32).at[0, :fo].set(b)
        p[f"fc{idx}_w"] = w_p.astype(jnp.bfloat16)
        p[f"fc{idx}_b"] = b_p
    return p


# ----------------------------------------------------------------------------
# Full forward pass (mirrors BiLSTM.forward) — one fused pallas_call.
# ----------------------------------------------------------------------------
def bilstm_forward(params, x):
    B, T, F = x.shape
    H = HIDDEN
    # zero-pad feature dim 7 -> 8 and go time-major; flatten to (T*B, 8) so the
    # hoisted input projection is a single dense matmul inside the kernel.
    xp = jnp.pad(x, ((0, 0), (0, 0), (0, 8 - F)))
    x2d = jnp.transpose(xp, (1, 0, 2)).reshape(T * B, 8).astype(jnp.bfloat16)

    vmem = pl.BlockSpec(memory_space=pltpu.MemorySpace.VMEM)
    args = (
        x2d,
        params["l0_fwd_wih_t"], params["l0_fwd_whh_t"], params["l0_fwd_b"],
        params["l0_bwd_wih_t"], params["l0_bwd_whh_t"], params["l0_bwd_b"],
        params["l1_fwd_wih_t"], params["l1_fwd_whh_t"], params["l1_fwd_b"],
        params["l1_bwd_wih_t"], params["l1_bwd_b"],
        params["fc1_w"], params["fc1_b"],
        params["fc2_w"], params["fc2_b"],
        params["fc3_w"], params["fc3_b"],
        params["fc4_w"], params["fc4_b"],
        params["fc5_w"], params["fc5_b"],
    )
    out = pl.pallas_call(
        functools.partial(_fused_bilstm_kernel, T=T, B=B),
        out_shape=jax.ShapeDtypeStruct((B, 128), jnp.float32),
        in_specs=[vmem] * len(args),
        out_specs=vmem,
        scratch_shapes=[pltpu.VMEM((T * B, 2 * H), jnp.float32)],  # layer-0 output seq
    )(*args)
    return out[:, 0]  # == output_sigmoid.squeeze(1)


if __name__ == "__main__":
    key = jax.random.PRNGKey(0)
    kx, kp = jax.random.split(key)

    B, T, F = 2, 8, 7  # batch=2, seq=8, input_size=7 (as required by the LSTM)
    x = jax.random.normal(kx, (B, T, F), dtype=jnp.float32)
    params = init_params(kp)

    fwd = jax.jit(bilstm_forward)
    out = jax.block_until_ready(fwd(params, x))

    assert out.shape == (B,), out.shape
    assert out.dtype == jnp.float32
    assert bool(jnp.all((out >= 0.0) & (out <= 1.0)))
    print("KERNEL_OK")
</pallas_src>

<mosaic_0001>
module attributes {stable_mosaic.version = 11 : i64} {
  func.func @_fused_bilstm_kernel(%arg0: memref<16x8xbf16, #tpu.memory_space<vmem>>, %arg1: memref<8x512xbf16, #tpu.memory_space<vmem>>, %arg2: memref<128x512xbf16, #tpu.memory_space<vmem>>, %arg3: memref<1x512xf32, #tpu.memory_space<vmem>>, %arg4: memref<8x512xbf16, #tpu.memory_space<vmem>>, %arg5: memref<128x512xbf16, #tpu.memory_space<vmem>>, %arg6: memref<1x512xf32, #tpu.memory_space<vmem>>, %arg7: memref<256x512xbf16, #tpu.memory_space<vmem>>, %arg8: memref<128x512xbf16, #tpu.memory_space<vmem>>, %arg9: memref<1x512xf32, #tpu.memory_space<vmem>>, %arg10: memref<256x512xbf16, #tpu.memory_space<vmem>>, %arg11: memref<1x512xf32, #tpu.memory_space<vmem>>, %arg12: memref<256x128xbf16, #tpu.memory_space<vmem>>, %arg13: memref<1x128xf32, #tpu.memory_space<vmem>>, %arg14: memref<128x128xbf16, #tpu.memory_space<vmem>>, %arg15: memref<1x128xf32, #tpu.memory_space<vmem>>, %arg16: memref<128x128xbf16, #tpu.memory_space<vmem>>, %arg17: memref<1x128xf32, #tpu.memory_space<vmem>>, %arg18: memref<128x128xbf16, #tpu.memory_space<vmem>>, %arg19: memref<1x128xf32, #tpu.memory_space<vmem>>, %arg20: memref<128x128xbf16, #tpu.memory_space<vmem>>, %arg21: memref<1x128xf32, #tpu.memory_space<vmem>>, %arg22: memref<2x128xf32, #tpu.memory_space<vmem>>, %arg23: memref<16x256xf32, #tpu.memory_space<vmem>>) attributes {dimension_semantics = [], scalar_prefetch = 0 : i64, scratch_operands = 1 : i64, tpu.core_type = #tpu.core_type<tc>} {
    %c0 = arith.constant 0 : index
    %c0_0 = arith.constant 0 : index
    %0 = vector.load %arg0[%c0, %c0_0] : memref<16x8xbf16, #tpu.memory_space<vmem>>, vector<16x8xbf16>
    %c0_1 = arith.constant 0 : index
    %c0_2 = arith.constant 0 : index
    %1 = vector.load %arg1[%c0_1, %c0_2] : memref<8x512xbf16, #tpu.memory_space<vmem>>, vector<8x512xbf16>
    %cst = arith.constant dense<0.000000e+00> : vector<16x512xf32>
    %2 = tpu.matmul %0, %1, %cst {dimension_numbers = #tpu.dot_dimension_numbers<[1], [0], [0], [1], [0, 0, 1, 1], [], []>} : vector<16x8xbf16>, vector<8x512xbf16>, vector<16x512xf32> -> vector<16x512xf32>
    %c0_3 = arith.constant 0 : index
    %c0_4 = arith.constant 0 : index
    %3 = vector.load %arg3[%c0_3, %c0_4] : memref<1x512xf32, #tpu.memory_space<vmem>>, vector<1x512xf32>
    %4 = vector.broadcast %3 : vector<1x512xf32> to vector<16x512xf32>
    %5 = arith.addf %2, %4 : vector<16x512xf32>
    %c0_5 = arith.constant 0 : index
    %c0_6 = arith.constant 0 : index
    %6 = vector.load %arg4[%c0_5, %c0_6] : memref<8x512xbf16, #tpu.memory_space<vmem>>, vector<8x512xbf16>
    %cst_7 = arith.constant dense<0.000000e+00> : vector<16x512xf32>
    %7 = tpu.matmul %0, %6, %cst_7 {dimension_numbers = #tpu.dot_dimension_numbers<[1], [0], [0], [1], [0, 0, 1, 1], [], []>} : vector<16x8xbf16>, vector<8x512xbf16>, vector<16x512xf32> -> vector<16x512xf32>
    %c0_8 = arith.constant 0 : index
    %c0_9 = arith.constant 0 : index
    %8 = vector.load %arg6[%c0_8, %c0_9] : memref<1x512xf32, #tpu.memory_space<vmem>>, vector<1x512xf32>
    %9 = vector.broadcast %8 : vector<1x512xf32> to vector<16x512xf32>
    %10 = arith.addf %7, %9 : vector<16x512xf32>
    %cst_10 = arith.constant 0.000000e+00 : f32
    %11 = vector.broadcast %cst_10 : f32 to vector<2x128xf32>
    %cst_11 = arith.constant 0.000000e+00 : f32
    %12 = vector.broadcast %cst_11 : f32 to vector<2x128xf32>
    %13 = vector.extract_strided_slice %5 {offsets = [0, 0], sizes = [2, 512], strides = [1, 1]} : vector<16x512xf32> to vector<2x512xf32>
    %14 = arith.truncf %11 : vector<2x128xf32> to vector<2x128xbf16>
    %c0_12 = arith.constant 0 : index
    %c0_13 = arith.constant 0 : index
    %15 = vector.load %arg2[%c0_12, %c0_13] : memref<128x512xbf16, #tpu.memory_space<vmem>>, vector<128x512xbf16>
    %cst_14 = arith.constant dense<0.000000e+00> : vector<2x512xf32>
    %16 = tpu.matmul %14, %15, %cst_14 {dimension_numbers = #tpu.dot_dimension_numbers<[1], [0], [0], [1], [0, 0, 1, 1], [], []>} : vector<2x128xbf16>, vector<128x512xbf16>, vector<2x512xf32> -> vector<2x512xf32>
    %17 = arith.addf %13, %16 : vector<2x512xf32>
    %18 = vector.extract_strided_slice %17 {offsets = [0, 0], sizes = [2, 128], strides = [1, 1]} : vector<2x512xf32> to vector<2x128xf32>
    %19 = arith.negf %18 : vector<2x128xf32>
    %20 = math.exp %19 : vector<2x128xf32>
    %cst_15 = arith.constant 1.000000e+00 : f32
    %21 = vector.broadcast %cst_15 : f32 to vector<2x128xf32>
    %22 = arith.addf %21, %20 : vector<2x128xf32>
    %23 = arith.divf %21, %22 : vector<2x128xf32>
    %24 = vector.extract_strided_slice %17 {offsets = [0, 128], sizes = [2, 128], strides = [1, 1]} : vector<2x512xf32> to vector<2x128xf32>
    %25 = arith.negf %24 : vector<2x128xf32>
    %26 = math.exp %25 : vector<2x128xf32>
    %cst_16 = arith.constant 1.000000e+00 : f32
    %27 = vector.broadcast %cst_16 : f32 to vector<2x128xf32>
    %28 = arith.addf %27, %26 : vector<2x128xf32>
    %29 = arith.divf %27, %28 : vector<2x128xf32>
    %30 = vector.extract_strided_slice %17 {offsets = [0, 256], sizes = [2, 128], strides = [1, 1]} : vector<2x512xf32> to vector<2x128xf32>
    %31 = math.tanh %30 : vector<2x128xf32>
    %32 = vector.extract_strided_slice %17 {offsets = [0, 384], sizes = [2, 128], strides = [1, 1]} : vector<2x512xf32> to vector<2x128xf32>
    %33 = arith.negf %32 : vector<2x128xf32>
    %34 = math.exp %33 : vector<2x128xf32>
    %cst_17 = arith.constant 1.000000e+00 : f32
    %35 = vector.broadcast %cst_17 : f32 to vector<2x128xf32>
    %36 = arith.addf %35, %34 : vector<2x128xf32>
    %37 = arith.divf %35, %36 : vector<2x128xf32>
    %38 = arith.mulf %29, %12 : vector<2x128xf32>
    %39 = arith.mulf %23, %31 : vector<2x128xf32>
    %40 = arith.addf %38, %39 : vector<2x128xf32>
    %41 = math.tanh %40 : vector<2x128xf32>
    %42 = arith.mulf %37, %41 : vector<2x128xf32>
    %c0_18 = arith.constant 0 : index
    %c0_19 = arith.constant 0 : index
    %43 = vector.load %arg23[%c0_18, %c0_19] : memref<16x256xf32, #tpu.memory_space<vmem>>, vector<2x128xf32>
    tpu.vector_store %arg23[%c0_18, %c0_19], %42 {strides = array<i32>} : memref<16x256xf32, #tpu.memory_space<vmem>>, vector<2x128xf32>,
    %44 = vector.extract_strided_slice %5 {offsets = [2, 0], sizes = [2, 512], strides = [1, 1]} : vector<16x512xf32> to vector<2x512xf32>
    %45 = arith.truncf %42 : vector<2x128xf32> to vector<2x128xbf16>
    %c0_20 = arith.constant 0 : index
    %c0_21 = arith.constant 0 : index
    %46 = vector.load %arg2[%c0_20, %c0_21] : memref<128x512xbf16, #tpu.memory_space<vmem>>, vector<128x512xbf16>
    %cst_22 = arith.constant dense<0.000000e+00> : vector<2x512xf32>
    %47 = tpu.matmul %45, %46, %cst_22 {dimension_numbers = #tpu.dot_dimension_numbers<[1], [0], [0], [1], [0, 0, 1, 1], [], []>} : vector<2x128xbf16>, vector<128x512xbf16>, vector<2x512xf32> -> vector<2x512xf32>
    %48 = arith.addf %44, %47 : vector<2x512xf32>
    %49 = vector.extract_strided_slice %48 {offsets = [0, 0], sizes = [2, 128], strides = [1, 1]} : vector<2x512xf32> to vector<2x128xf32>
    %50 = arith.negf %49 : vector<2x128xf32>
    %51 = math.exp %50 : vector<2x128xf32>
    %cst_23 = arith.constant 1.000000e+00 : f32
    %52 = vector.broadcast %cst_23 : f32 to vector<2x128xf32>
    %53 = arith.addf %52, %51 : vector<2x128xf32>
    %54 = arith.divf %52, %53 : vector<2x128xf32>
    %55 = vector.extract_strided_slice %48 {offsets = [0, 128], sizes = [2, 128], strides = [1, 1]} : vector<2x512xf32> to vector<2x128xf32>
    %56 = arith.negf %55 : vector<2x128xf32>
    %57 = math.exp %56 : vector<2x128xf32>
    %cst_24 = arith.constant 1.000000e+00 : f32
    %58 = vector.broadcast %cst_24 : f32 to vector<2x128xf32>
    %59 = arith.addf %58, %57 : vector<2x128xf32>
    %60 = arith.divf %58, %59 : vector<2x128xf32>
    %61 = vector.extract_strided_slice %48 {offsets = [0, 256], sizes = [2, 128], strides = [1, 1]} : vector<2x512xf32> to vector<2x128xf32>
    %62 = math.tanh %61 : vector<2x128xf32>
    %63 = vector.extract_strided_slice %48 {offsets = [0, 384], sizes = [2, 128], strides = [1, 1]} : vector<2x512xf32> to vector<2x128xf32>
    %64 = arith.negf %63 : vector<2x128xf32>
    %65 = math.exp %64 : vector<2x128xf32>
    %cst_25 = arith.constant 1.000000e+00 : f32
    %66 = vector.broadcast %cst_25 : f32 to vector<2x128xf32>
    %67 = arith.addf %66, %65 : vector<2x128xf32>
    %68 = arith.divf %66, %67 : vector<2x128xf32>
    %69 = arith.mulf %60, %40 : vector<2x128xf32>
    %70 = arith.mulf %54, %62 : vector<2x128xf32>
    %71 = arith.addf %69, %70 : vector<2x128xf32>
    %72 = math.tanh %71 : vector<2x128xf32>
    %73 = arith.mulf %68, %72 : vector<2x128xf32>
    %c2 = arith.constant 2 : index
    %c0_26 = arith.constant 0 : index
    %74 = vector.load %arg23[%c2, %c0_26] : memref<16x256xf32, #tpu.memory_space<vmem>>, vector<2x128xf32>
    tpu.vector_store %arg23[%c2, %c0_26], %73 {strides = array<i32>} : memref<16x256xf32, #tpu.memory_space<vmem>>, vector<2x128xf32>,
    %75 = vector.extract_strided_slice %5 {offsets = [4, 0], sizes = [2, 512], strides = [1, 1]} : vector<16x512xf32> to vector<2x512xf32>
    %76 = arith.truncf %73 : vector<2x128xf32> to vector<2x128xbf16>
    %c0_27 = arith.constant 0 : index
    %c0_28 = arith.constant 0 : index
    %77 = vector.load %arg2[%c0_27, %c0_28] : memref<128x512xbf16, #tpu.memory_space<vmem>>, vector<128x512xbf16>
    %cst_29 = arith.constant dense<0.000000e+00> : vector<2x512xf32>
    %78 = tpu.matmul %76, %77, %cst_29 {dimension_numbers = #tpu.dot_dimension_numbers<[1], [0], [0], [1], [0, 0, 1, 1], [], []>} : vector<2x128xbf16>, vector<128x512xbf16>, vector<2x512xf32> -> vector<2x512xf32>
    %79 = arith.addf %75, %78 : vector<2x512xf32>
    %80 = vector.extract_strided_slice %79 {offsets = [0, 0], sizes = [2, 128], strides = [1, 1]} : vector<2x512xf32> to vector<2x128xf32>
    %81 = arith.negf %80 : vector<2x128xf32>
    %82 = math.exp %81 : vector<2x128xf32>
    %cst_30 = arith.constant 1.000000e+00 : f32
    %83 = vector.broadcast %cst_30 : f32 to vector<2x128xf32>
    %84 = arith.addf %83, %82 : vector<2x128xf32>
    %85 = arith.divf %83, %84 : vector<2x128xf32>
    %86 = vector.extract_strided_slice %79 {offsets = [0, 128], sizes = [2, 128], strides = [1, 1]} : vector<2x512xf32> to vector<2x128xf32>
    %87 = arith.negf %86 : vector<2x128xf32>
    %88 = math.exp %87 : vector<2x128xf32>
    %cst_31 = arith.constant 1.000000e+00 : f32
    %89 = vector.broadcast %cst_31 : f32 to vector<2x128xf32>
    %90 = arith.addf %89, %88 : vector<2x128xf32>
    %91 = arith.divf %89, %90 : vector<2x128xf32>
    %92 = vector.extract_strided_slice %79 {offsets = [0, 256], sizes = [2, 128], strides = [1, 1]} : vector<2x512xf32> to vector<2x128xf32>
    %93 = math.tanh %92 : vector<2x128xf32>
    %94 = vector.extract_strided_slice %79 {offsets = [0, 384], sizes = [2, 128], strides = [1, 1]} : vector<2x512xf32> to vector<2x128xf32>
    %95 = arith.negf %94 : vector<2x128xf32>
    %96 = math.exp %95 : vector<2x128xf32>
    %cst_32 = arith.constant 1.000000e+00 : f32
    %97 = vector.broadcast %cst_32 : f32 to vector<2x128xf32>
    %98 = arith.addf %97, %96 : vector<2x128xf32>
    %99 = arith.divf %97, %98 : vector<2x128xf32>
    %100 = arith.mulf %91, %71 : vector<2x128xf32>
    %101 = arith.mulf %85, %93 : vector<2x128xf32>
    %102 = arith.addf %100, %101 : vector<2x128xf32>
    %103 = math.tanh %102 : vector<2x128xf32>
    %104 = arith.mulf %99, %103 : vector<2x128xf32>
    %c4 = arith.constant 4 : index
    %c0_33 = arith.constant 0 : index
    %105 = vector.load %arg23[%c4, %c0_33] : memref<16x256xf32, #tpu.memory_space<vmem>>, vector<2x128xf32>
    tpu.vector_store %arg23[%c4, %c0_33], %104 {strides = array<i32>} : memref<16x256xf32, #tpu.memory_space<vmem>>, vector<2x128xf32>,
    %106 = vector.extract_strided_slice %5 {offsets = [6, 0], sizes = [2, 512], strides = [1, 1]} : vector<16x512xf32> to vector<2x512xf32>
    %107 = arith.truncf %104 : vector<2x128xf32> to vector<2x128xbf16>
    %c0_34 = arith.constant 0 : index
    %c0_35 = arith.constant 0 : index
    %108 = vector.load %arg2[%c0_34, %c0_35] : memref<128x512xbf16, #tpu.memory_space<vmem>>, vector<128x512xbf16>
    %cst_36 = arith.constant dense<0.000000e+00> : vector<2x512xf32>
    %109 = tpu.matmul %107, %108, %cst_36 {dimension_numbers = #tpu.dot_dimension_numbers<[1], [0], [0], [1], [0, 0, 1, 1], [], []>} : vector<2x128xbf16>, vector<128x512xbf16>, vector<2x512xf32> -> vector<2x512xf32>
    %110 = arith.addf %106, %109 : vector<2x512xf32>
    %111 = vector.extract_strided_slice %110 {offsets = [0, 0], sizes = [2, 128], strides = [1, 1]} : vector<2x512xf32> to vector<2x128xf32>
    %112 = arith.negf %111 : vector<2x128xf32>
    %113 = math.exp %112 : vector<2x128xf32>
    %cst_37 = arith.constant 1.000000e+00 : f32
    %114 = vector.broadcast %cst_37 : f32 to vector<2x128xf32>
    %115 = arith.addf %114, %113 : vector<2x128xf32>
    %116 = arith.divf %114, %115 : vector<2x128xf32>
    %117 = vector.extract_strided_slice %110 {offsets = [0, 128], sizes = [2, 128], strides = [1, 1]} : vector<2x512xf32> to vector<2x128xf32>
    %118 = arith.negf %117 : vector<2x128xf32>
    %119 = math.exp %118 : vector<2x128xf32>
    %cst_38 = arith.constant 1.000000e+00 : f32
    %120 = vector.broadcast %cst_38 : f32 to vector<2x128xf32>
    %121 = arith.addf %120, %119 : vector<2x128xf32>
    %122 = arith.divf %120, %121 : vector<2x128xf32>
    %123 = vector.extract_strided_slice %110 {offsets = [0, 256], sizes = [2, 128], strides = [1, 1]} : vector<2x512xf32> to vector<2x128xf32>
    %124 = math.tanh %123 : vector<2x128xf32>
    %125 = vector.extract_strided_slice %110 {offsets = [0, 384], sizes = [2, 128], strides = [1, 1]} : vector<2x512xf32> to vector<2x128xf32>
    %126 = arith.negf %125 : vector<2x128xf32>
    %127 = math.exp %126 : vector<2x128xf32>
    %cst_39 = arith.constant 1.000000e+00 : f32
    %128 = vector.broadcast %cst_39 : f32 to vector<2x128xf32>
    %129 = arith.addf %128, %127 : vector<2x128xf32>
    %130 = arith.divf %128, %129 : vector<2x128xf32>
    %131 = arith.mulf %122, %102 : vector<2x128xf32>
    %132 = arith.mulf %116, %124 : vector<2x128xf32>
    %133 = arith.addf %131, %132 : vector<2x128xf32>
    %134 = math.tanh %133 : vector<2x128xf32>
    %135 = arith.mulf %130, %134 : vector<2x128xf32>
    %c6 = arith.constant 6 : index
    %c0_40 = arith.constant 0 : index
    %136 = vector.load %arg23[%c6, %c0_40] : memref<16x256xf32, #tpu.memory_space<vmem>>, vector<2x128xf32>
    tpu.vector_store %arg23[%c6, %c0_40], %135 {strides = array<i32>} : memref<16x256xf32, #tpu.memory_space<vmem>>, vector<2x128xf32>,
    %137 = vector.extract_strided_slice %5 {offsets = [8, 0], sizes = [2, 512], strides = [1, 1]} : vector<16x512xf32> to vector<2x512xf32>
    %138 = arith.truncf %135 : vector<2x128xf32> to vector<2x128xbf16>
    %c0_41 = arith.constant 0 : index
    %c0_42 = arith.constant 0 : index
    %139 = vector.load %arg2[%c0_41, %c0_42] : memref<128x512xbf16, #tpu.memory_space<vmem>>, vector<128x512xbf16>
    %cst_43 = arith.constant dense<0.000000e+00> : vector<2x512xf32>
    %140 = tpu.matmul %138, %139, %cst_43 {dimension_numbers = #tpu.dot_dimension_numbers<[1], [0], [0], [1], [0, 0, 1, 1], [], []>} : vector<2x128xbf16>, vector<128x512xbf16>, vector<2x512xf32> -> vector<2x512xf32>
    %141 = arith.addf %137, %140 : vector<2x512xf32>
    %142 = vector.extract_strided_slice %141 {offsets = [0, 0], sizes = [2, 128], strides = [1, 1]} : vector<2x512xf32> to vector<2x128xf32>
    %143 = arith.negf %142 : vector<2x128xf32>
    %144 = math.exp %143 : vector<2x128xf32>
    %cst_44 = arith.constant 1.000000e+00 : f32
    %145 = vector.broadcast %cst_44 : f32 to vector<2x128xf32>
    %146 = arith.addf %145, %144 : vector<2x128xf32>
    %147 = arith.divf %145, %146 : vector<2x128xf32>
    %148 = vector.extract_strided_slice %141 {offsets = [0, 128], sizes = [2, 128], strides = [1, 1]} : vector<2x512xf32> to vector<2x128xf32>
    %149 = arith.negf %148 : vector<2x128xf32>
    %150 = math.exp %149 : vector<2x128xf32>
    %cst_45 = arith.constant 1.000000e+00 : f32
    %151 = vector.broadcast %cst_45 : f32 to vector<2x128xf32>
    %152 = arith.addf %151, %150 : vector<2x128xf32>
    %153 = arith.divf %151, %152 : vector<2x128xf32>
    %154 = vector.extract_strided_slice %141 {offsets = [0, 256], sizes = [2, 128], strides = [1, 1]} : vector<2x512xf32> to vector<2x128xf32>
    %155 = math.tanh %154 : vector<2x128xf32>
    %156 = vector.extract_strided_slice %141 {offsets = [0, 384], sizes = [2, 128], strides = [1, 1]} : vector<2x512xf32> to vector<2x128xf32>
    %157 = arith.negf %156 : vector<2x128xf32>
    %158 = math.exp %157 : vector<2x128xf32>
    %cst_46 = arith.constant 1.000000e+00 : f32
    %159 = vector.broadcast %cst_46 : f32 to vector<2x128xf32>
    %160 = arith.addf %159, %158 : vector<2x128xf32>
    %161 = arith.divf %159, %160 : vector<2x128xf32>
    %162 = arith.mulf %153, %133 : vector<2x128xf32>
    %163 = arith.mulf %147, %155 : vector<2x128xf32>
    %164 = arith.addf %162, %163 : vector<2x128xf32>
    %165 = math.tanh %164 : vector<2x128xf32>
    %166 = arith.mulf %161, %165 : vector<2x128xf32>
    %c8 = arith.constant 8 : index
    %c0_47 = arith.constant 0 : index
    %167 = vector.load %arg23[%c8, %c0_47] : memref<16x256xf32, #tpu.memory_space<vmem>>, vector<2x128xf32>
    tpu.vector_store %arg23[%c8, %c0_47], %166 {strides = array<i32>} : memref<16x256xf32, #tpu.memory_space<vmem>>, vector<2x128xf32>,
    %168 = vector.extract_strided_slice %5 {offsets = [10, 0], sizes = [2, 512], strides = [1, 1]} : vector<16x512xf32> to vector<2x512xf32>
    %169 = arith.truncf %166 : vector<2x128xf32> to vector<2x128xbf16>
    %c0_48 = arith.constant 0 : index
    %c0_49 = arith.constant 0 : index
    %170 = vector.load %arg2[%c0_48, %c0_49] : memref<128x512xbf16, #tpu.memory_space<vmem>>, vector<128x512xbf16>
    %cst_50 = arith.constant dense<0.000000e+00> : vector<2x512xf32>
    %171 = tpu.matmul %169, %170, %cst_50 {dimension_numbers = #tpu.dot_dimension_numbers<[1], [0], [0], [1], [0, 0, 1, 1], [], []>} : vector<2x128xbf16>, vector<128x512xbf16>, vector<2x512xf32> -> vector<2x512xf32>
    %172 = arith.addf %168, %171 : vector<2x512xf32>
    %173 = vector.extract_strided_slice %172 {offsets = [0, 0], sizes = [2, 128], strides = [1, 1]} : vector<2x512xf32> to vector<2x128xf32>
    %174 = arith.negf %173 : vector<2x128xf32>
    %175 = math.exp %174 : vector<2x128xf32>
    %cst_51 = arith.constant 1.000000e+00 : f32
    %176 = vector.broadcast %cst_51 : f32 to vector<2x128xf32>
    %177 = arith.addf %176, %175 : vector<2x128xf32>
    %178 = arith.divf %176, %177 : vector<2x128xf32>
    %179 = vector.extract_strided_slice %172 {offsets = [0, 128], sizes = [2, 128], strides = [1, 1]} : vector<2x512xf32> to vector<2x128xf32>
    %180 = arith.negf %179 : vector<2x128xf32>
    %181 = math.exp %180 : vector<2x128xf32>
    %cst_52 = arith.constant 1.000000e+00 : f32
    %182 = vector.broadcast %cst_52 : f32 to vector<2x128xf32>
    %183 = arith.addf %182, %181 : vector<2x128xf32>
    %184 = arith.divf %182, %183 : vector<2x128xf32>
    %185 = vector.extract_strided_slice %172 {offsets = [0, 256], sizes = [2, 128], strides = [1, 1]} : vector<2x512xf32> to vector<2x128xf32>
    %186 = math.tanh %185 : vector<2x128xf32>
    %187 = vector.extract_strided_slice %172 {offsets = [0, 384], sizes = [2, 128], strides = [1, 1]} : vector<2x512xf32> to vector<2x128xf32>
    %188 = arith.negf %187 : vector<2x128xf32>
    %189 = math.exp %188 : vector<2x128xf32>
    %cst_53 = arith.constant 1.000000e+00 : f32
    %190 = vector.broadcast %cst_53 : f32 to vector<2x128xf32>
    %191 = arith.addf %190, %189 : vector<2x128xf32>
    %192 = arith.divf %190, %191 : vector<2x128xf32>
    %193 = arith.mulf %184, %164 : vector<2x128xf32>
    %194 = arith.mulf %178, %186 : vector<2x128xf32>
    %195 = arith.addf %193, %194 : vector<2x128xf32>
    %196 = math.tanh %195 : vector<2x128xf32>
    %197 = arith.mulf %192, %196 : vector<2x128xf32>
    %c10 = arith.constant 10 : index
    %c0_54 = arith.constant 0 : index
    %198 = vector.load %arg23[%c10, %c0_54] : memref<16x256xf32, #tpu.memory_space<vmem>>, vector<2x128xf32>
    tpu.vector_store %arg23[%c10, %c0_54], %197 {strides = array<i32>} : memref<16x256xf32, #tpu.memory_space<vmem>>, vector<2x128xf32>,
    %199 = vector.extract_strided_slice %5 {offsets = [12, 0], sizes = [2, 512], strides = [1, 1]} : vector<16x512xf32> to vector<2x512xf32>
    %200 = arith.truncf %197 : vector<2x128xf32> to vector<2x128xbf16>
    %c0_55 = arith.constant 0 : index
    %c0_56 = arith.constant 0 : index
    %201 = vector.load %arg2[%c0_55, %c0_56] : memref<128x512xbf16, #tpu.memory_space<vmem>>, vector<128x512xbf16>
    %cst_57 = arith.constant dense<0.000000e+00> : vector<2x512xf32>
    %202 = tpu.matmul %200, %201, %cst_57 {dimension_numbers = #tpu.dot_dimension_numbers<[1], [0], [0], [1], [0, 0, 1, 1], [], []>} : vector<2x128xbf16>, vector<128x512xbf16>, vector<2x512xf32> -> vector<2x512xf32>
    %203 = arith.addf %199, %202 : vector<2x512xf32>
    %204 = vector.extract_strided_slice %203 {offsets = [0, 0], sizes = [2, 128], strides = [1, 1]} : vector<2x512xf32> to vector<2x128xf32>
    %205 = arith.negf %204 : vector<2x128xf32>
    %206 = math.exp %205 : vector<2x128xf32>
    %cst_58 = arith.constant 1.000000e+00 : f32
    %207 = vector.broadcast %cst_58 : f32 to vector<2x128xf32>
    %208 = arith.addf %207, %206 : vector<2x128xf32>
    %209 = arith.divf %207, %208 : vector<2x128xf32>
    %210 = vector.extract_strided_slice %203 {offsets = [0, 128], sizes = [2, 128], strides = [1, 1]} : vector<2x512xf32> to vector<2x128xf32>
    %211 = arith.negf %210 : vector<2x128xf32>
    %212 = math.exp %211 : vector<2x128xf32>
    %cst_59 = arith.constant 1.000000e+00 : f32
    %213 = vector.broadcast %cst_59 : f32 to vector<2x128xf32>
    %214 = arith.addf %213, %212 : vector<2x128xf32>
    %215 = arith.divf %213, %214 : vector<2x128xf32>
    %216 = vector.extract_strided_slice %203 {offsets = [0, 256], sizes = [2, 128], strides = [1, 1]} : vector<2x512xf32> to vector<2x128xf32>
    %217 = math.tanh %216 : vector<2x128xf32>
    %218 = vector.extract_strided_slice %203 {offsets = [0, 384], sizes = [2, 128], strides = [1, 1]} : vector<2x512xf32> to vector<2x128xf32>
    %219 = arith.negf %218 : vector<2x128xf32>
    %220 = math.exp %219 : vector<2x128xf32>
    %cst_60 = arith.constant 1.000000e+00 : f32
    %221 = vector.broadcast %cst_60 : f32 to vector<2x128xf32>
    %222 = arith.addf %221, %220 : vector<2x128xf32>
    %223 = arith.divf %221, %222 : vector<2x128xf32>
    %224 = arith.mulf %215, %195 : vector<2x128xf32>
    %225 = arith.mulf %209, %217 : vector<2x128xf32>
    %226 = arith.addf %224, %225 : vector<2x128xf32>
    %227 = math.tanh %226 : vector<2x128xf32>
    %228 = arith.mulf %223, %227 : vector<2x128xf32>
    %c12 = arith.constant 12 : index
    %c0_61 = arith.constant 0 : index
    %229 = vector.load %arg23[%c12, %c0_61] : memref<16x256xf32, #tpu.memory_space<vmem>>, vector<2x128xf32>
    tpu.vector_store %arg23[%c12, %c0_61], %228 {strides = array<i32>} : memref<16x256xf32, #tpu.memory_space<vmem>>, vector<2x128xf32>,
    %230 = vector.extract_strided_slice %5 {offsets = [14, 0], sizes = [2, 512], strides = [1, 1]} : vector<16x512xf32> to vector<2x512xf32>
    %231 = arith.truncf %228 : vector<2x128xf32> to vector<2x128xbf16>
    %c0_62 = arith.constant 0 : index
    %c0_63 = arith.constant 0 : index
    %232 = vector.load %arg2[%c0_62, %c0_63] : memref<128x512xbf16, #tpu.memory_space<vmem>>, vector<128x512xbf16>
    %cst_64 = arith.constant dense<0.000000e+00> : vector<2x512xf32>
    %233 = tpu.matmul %231, %232, %cst_64 {dimension_numbers = #tpu.dot_dimension_numbers<[1], [0], [0], [1], [0, 0, 1, 1], [], []>} : vector<2x128xbf16>, vector<128x512xbf16>, vector<2x512xf32> -> vector<2x512xf32>
    %234 = arith.addf %230, %233 : vector<2x512xf32>
    %235 = vector.extract_strided_slice %234 {offsets = [0, 0], sizes = [2, 128], strides = [1, 1]} : vector<2x512xf32> to vector<2x128xf32>
    %236 = arith.negf %235 : vector<2x128xf32>
    %237 = math.exp %236 : vector<2x128xf32>
    %cst_65 = arith.constant 1.000000e+00 : f32
    %238 = vector.broadcast %cst_65 : f32 to vector<2x128xf32>
    %239 = arith.addf %238, %237 : vector<2x128xf32>
    %240 = arith.divf %238, %239 : vector<2x128xf32>
    %241 = vector.extract_strided_slice %234 {offsets = [0, 128], sizes = [2, 128], strides = [1, 1]} : vector<2x512xf32> to vector<2x128xf32>
    %242 = arith.negf %241 : vector<2x128xf32>
    %243 = math.exp %242 : vector<2x128xf32>
    %cst_66 = arith.constant 1.000000e+00 : f32
    %244 = vector.broadcast %cst_66 : f32 to vector<2x128xf32>
    %245 = arith.addf %244, %243 : vector<2x128xf32>
    %246 = arith.divf %244, %245 : vector<2x128xf32>
    %247 = vector.extract_strided_slice %234 {offsets = [0, 256], sizes = [2, 128], strides = [1, 1]} : vector<2x512xf32> to vector<2x128xf32>
    %248 = math.tanh %247 : vector<2x128xf32>
    %249 = vector.extract_strided_slice %234 {offsets = [0, 384], sizes = [2, 128], strides = [1, 1]} : vector<2x512xf32> to vector<2x128xf32>
    %250 = arith.negf %249 : vector<2x128xf32>
    %251 = math.exp %250 : vector<2x128xf32>
    %cst_67 = arith.constant 1.000000e+00 : f32
    %252 = vector.broadcast %cst_67 : f32 to vector<2x128xf32>
    %253 = arith.addf %252, %251 : vector<2x128xf32>
    %254 = arith.divf %252, %253 : vector<2x128xf32>
    %255 = arith.mulf %246, %226 : vector<2x128xf32>
    %256 = arith.mulf %240, %248 : vector<2x128xf32>
    %257 = arith.addf %255, %256 : vector<2x128xf32>
    %258 = math.tanh %257 : vector<2x128xf32>
    %259 = arith.mulf %254, %258 : vector<2x128xf32>
    %c14 = arith.constant 14 : index
    %c0_68 = arith.constant 0 : index
    %260 = vector.load %arg23[%c14, %c0_68] : memref<16x256xf32, #tpu.memory_space<vmem>>, vector<2x128xf32>
    tpu.vector_store %arg23[%c14, %c0_68], %259 {strides = array<i32>} : memref<16x256xf32, #tpu.memory_space<vmem>>, vector<2x128xf32>,
    %cst_69 = arith.constant 0.000000e+00 : f32
    %261 = vector.broadcast %cst_69 : f32 to vector<2x128xf32>
    %cst_70 = arith.constant 0.000000e+00 : f32
    %262 = vector.broadcast %cst_70 : f32 to vector<2x128xf32>
    %263 = vector.extract_strided_slice %10 {offsets = [14, 0], sizes = [2, 512], strides = [1, 1]} : vector<16x512xf32> to vector<2x512xf32>
    %264 = arith.truncf %261 : vector<2x128xf32> to vector<2x128xbf16>
    %c0_71 = arith.constant 0 : index
    %c0_72 = arith.constant 0 : index
    %265 = vector.load %arg5[%c0_71, %c0_72] : memref<128x512xbf16, #tpu.memory_space<vmem>>, vector<128x512xbf16>
    %cst_73 = arith.constant dense<0.000000e+00> : vector<2x512xf32>
    %266 = tpu.matmul %264, %265, %cst_73 {dimension_numbers = #tpu.dot_dimension_numbers<[1], [0], [0], [1], [0, 0, 1, 1], [], []>} : vector<2x128xbf16>, vector<128x512xbf16>, vector<2x512xf32> -> vector<2x512xf32>
    %267 = arith.addf %263, %266 : vector<2x512xf32>
    %268 = vector.extract_strided_slice %267 {offsets = [0, 0], sizes = [2, 128], strides = [1, 1]} : vector<2x512xf32> to vector<2x128xf32>
    %269 = arith.negf %268 : vector<2x128xf32>
    %270 = math.exp %269 : vector<2x128xf32>
    %cst_74 = arith.constant 1.000000e+00 : f32
    %271 = vector.broadcast %cst_74 : f32 to vector<2x128xf32>
    %272 = arith.addf %271, %270 : vector<2x128xf32>
    %273 = arith.divf %271, %272 : vector<2x128xf32>
    %274 = vector.extract_strided_slice %267 {offsets = [0, 128], sizes = [2, 128], strides = [1, 1]} : vector<2x512xf32> to vector<2x128xf32>
    %275 = arith.negf %274 : vector<2x128xf32>
    %276 = math.exp %275 : vector<2x128xf32>
    %cst_75 = arith.constant 1.000000e+00 : f32
    %277 = vector.broadcast %cst_75 : f32 to vector<2x128xf32>
    %278 = arith.addf %277, %276 : vector<2x128xf32>
    %279 = arith.divf %277, %278 : vector<2x128xf32>
    %280 = vector.extract_strided_slice %267 {offsets = [0, 256], sizes = [2, 128], strides = [1, 1]} : vector<2x512xf32> to vector<2x128xf32>
    %281 = math.tanh %280 : vector<2x128xf32>
    %282 = vector.extract_strided_slice %267 {offsets = [0, 384], sizes = [2, 128], strides = [1, 1]} : vector<2x512xf32> to vector<2x128xf32>
    %283 = arith.negf %282 : vector<2x128xf32>
    %284 = math.exp %283 : vector<2x128xf32>
    %cst_76 = arith.constant 1.000000e+00 : f32
    %285 = vector.broadcast %cst_76 : f32 to vector<2x128xf32>
    %286 = arith.addf %285, %284 : vector<2x128xf32>
    %287 = arith.divf %285, %286 : vector<2x128xf32>
    %288 = arith.mulf %279, %262 : vector<2x128xf32>
    %289 = arith.mulf %273, %281 : vector<2x128xf32>
    %290 = arith.addf %288, %289 : vector<2x128xf32>
    %291 = math.tanh %290 : vector<2x128xf32>
    %292 = arith.mulf %287, %291 : vector<2x128xf32>
    %c14_77 = arith.constant 14 : index
    %c128 = arith.constant 128 : index
    %293 = vector.load %arg23[%c14_77, %c128] : memref<16x256xf32, #tpu.memory_space<vmem>>, vector<2x128xf32>
    tpu.vector_store %arg23[%c14_77, %c128], %292 {strides = array<i32>} : memref<16x256xf32, #tpu.memory_space<vmem>>, vector<2x128xf32>,
    %294 = vector.extract_strided_slice %10 {offsets = [12, 0], sizes = [2, 512], strides = [1, 1]} : vector<16x512xf32> to vector<2x512xf32>
    %295 = arith.truncf %292 : vector<2x128xf32> to vector<2x128xbf16>
    %c0_78 = arith.constant 0 : index
    %c0_79 = arith.constant 0 : index
    %296 = vector.load %arg5[%c0_78, %c0_79] : memref<128x512xbf16, #tpu.memory_space<vmem>>, vector<128x512xbf16>
    %cst_80 = arith.constant dense<0.000000e+00> : vector<2x512xf32>
    %297 = tpu.matmul %295, %296, %cst_80 {dimension_numbers = #tpu.dot_dimension_numbers<[1], [0], [0], [1], [0, 0, 1, 1], [], []>} : vector<2x128xbf16>, vector<128x512xbf16>, vector<2x512xf32> -> vector<2x512xf32>
    %298 = arith.addf %294, %297 : vector<2x512xf32>
    %299 = vector.extract_strided_slice %298 {offsets = [0, 0], sizes = [2, 128], strides = [1, 1]} : vector<2x512xf32> to vector<2x128xf32>
    %300 = arith.negf %299 : vector<2x128xf32>
    %301 = math.exp %300 : vector<2x128xf32>
    %cst_81 = arith.constant 1.000000e+00 : f32
    %302 = vector.broadcast %cst_81 : f32 to vector<2x128xf32>
    %303 = arith.addf %302, %301 : vector<2x128xf32>
    %304 = arith.divf %302, %303 : vector<2x128xf32>
    %305 = vector.extract_strided_slice %298 {offsets = [0, 128], sizes = [2, 128], strides = [1, 1]} : vector<2x512xf32> to vector<2x128xf32>
    %306 = arith.negf %305 : vector<2x128xf32>
    %307 = math.exp %306 : vector<2x128xf32>
    %cst_82 = arith.constant 1.000000e+00 : f32
    %308 = vector.broadcast %cst_82 : f32 to vector<2x128xf32>
    %309 = arith.addf %308, %307 : vector<2x128xf32>
    %310 = arith.divf %308, %309 : vector<2x128xf32>
    %311 = vector.extract_strided_slice %298 {offsets = [0, 256], sizes = [2, 128], strides = [1, 1]} : vector<2x512xf32> to vector<2x128xf32>
    %312 = math.tanh %311 : vector<2x128xf32>
    %313 = vector.extract_strided_slice %298 {offsets = [0, 384], sizes = [2, 128], strides = [1, 1]} : vector<2x512xf32> to vector<2x128xf32>
    %314 = arith.negf %313 : vector<2x128xf32>
    %315 = math.exp %314 : vector<2x128xf32>
    %cst_83 = arith.constant 1.000000e+00 : f32
    %316 = vector.broadcast %cst_83 : f32 to vector<2x128xf32>
    %317 = arith.addf %316, %315 : vector<2x128xf32>
    %318 = arith.divf %316, %317 : vector<2x128xf32>
    %319 = arith.mulf %310, %290 : vector<2x128xf32>
    %320 = arith.mulf %304, %312 : vector<2x128xf32>
    %321 = arith.addf %319, %320 : vector<2x128xf32>
    %322 = math.tanh %321 : vector<2x128xf32>
    %323 = arith.mulf %318, %322 : vector<2x128xf32>
    %c12_84 = arith.constant 12 : index
    %c128_85 = arith.constant 128 : index
    %324 = vector.load %arg23[%c12_84, %c128_85] : memref<16x256xf32, #tpu.memory_space<vmem>>, vector<2x128xf32>
    tpu.vector_store %arg23[%c12_84, %c128_85], %323 {strides = array<i32>} : memref<16x256xf32, #tpu.memory_space<vmem>>, vector<2x128xf32>,
    %325 = vector.extract_strided_slice %10 {offsets = [10, 0], sizes = [2, 512], strides = [1, 1]} : vector<16x512xf32> to vector<2x512xf32>
    %326 = arith.truncf %323 : vector<2x128xf32> to vector<2x128xbf16>
    %c0_86 = arith.constant 0 : index
    %c0_87 = arith.constant 0 : index
    %327 = vector.load %arg5[%c0_86, %c0_87] : memref<128x512xbf16, #tpu.memory_space<vmem>>, vector<128x512xbf16>
    %cst_88 = arith.constant dense<0.000000e+00> : vector<2x512xf32>
    %328 = tpu.matmul %326, %327, %cst_88 {dimension_numbers = #tpu.dot_dimension_numbers<[1], [0], [0], [1], [0, 0, 1, 1], [], []>} : vector<2x128xbf16>, vector<128x512xbf16>, vector<2x512xf32> -> vector<2x512xf32>
    %329 = arith.addf %325, %328 : vector<2x512xf32>
    %330 = vector.extract_strided_slice %329 {offsets = [0, 0], sizes = [2, 128], strides = [1, 1]} : vector<2x512xf32> to vector<2x128xf32>
    %331 = arith.negf %330 : vector<2x128xf32>
    %332 = math.exp %331 : vector<2x128xf32>
    %cst_89 = arith.constant 1.000000e+00 : f32
    %333 = vector.broadcast %cst_89 : f32 to vector<2x128xf32>
    %334 = arith.addf %333, %332 : vector<2x128xf32>
    %335 = arith.divf %333, %334 : vector<2x128xf32>
    %336 = vector.extract_strided_slice %329 {offsets = [0, 128], sizes = [2, 128], strides = [1, 1]} : vector<2x512xf32> to vector<2x128xf32>
    %337 = arith.negf %336 : vector<2x128xf32>
    %338 = math.exp %337 : vector<2x128xf32>
    %cst_90 = arith.constant 1.000000e+00 : f32
    %339 = vector.broadcast %cst_90 : f32 to vector<2x128xf32>
    %340 = arith.addf %339, %338 : vector<2x128xf32>
    %341 = arith.divf %339, %340 : vector<2x128xf32>
    %342 = vector.extract_strided_slice %329 {offsets = [0, 256], sizes = [2, 128], strides = [1, 1]} : vector<2x512xf32> to vector<2x128xf32>
    %343 = math.tanh %342 : vector<2x128xf32>
    %344 = vector.extract_strided_slice %329 {offsets = [0, 384], sizes = [2, 128], strides = [1, 1]} : vector<2x512xf32> to vector<2x128xf32>
    %345 = arith.negf %344 : vector<2x128xf32>
    %346 = math.exp %345 : vector<2x128xf32>
    %cst_91 = arith.constant 1.000000e+00 : f32
    %347 = vector.broadcast %cst_91 : f32 to vector<2x128xf32>
    %348 = arith.addf %347, %346 : vector<2x128xf32>
    %349 = arith.divf %347, %348 : vector<2x128xf32>
    %350 = arith.mulf %341, %321 : vector<2x128xf32>
    %351 = arith.mulf %335, %343 : vector<2x128xf32>
    %352 = arith.addf %350, %351 : vector<2x128xf32>
    %353 = math.tanh %352 : vector<2x128xf32>
    %354 = arith.mulf %349, %353 : vector<2x128xf32>
    %c10_92 = arith.constant 10 : index
    %c128_93 = arith.constant 128 : index
    %355 = vector.load %arg23[%c10_92, %c128_93] : memref<16x256xf32, #tpu.memory_space<vmem>>, vector<2x128xf32>
    tpu.vector_store %arg23[%c10_92, %c128_93], %354 {strides = array<i32>} : memref<16x256xf32, #tpu.memory_space<vmem>>, vector<2x128xf32>,
    %356 = vector.extract_strided_slice %10 {offsets = [8, 0], sizes = [2, 512], strides = [1, 1]} : vector<16x512xf32> to vector<2x512xf32>
    %357 = arith.truncf %354 : vector<2x128xf32> to vector<2x128xbf16>
    %c0_94 = arith.constant 0 : index
    %c0_95 = arith.constant 0 : index
    %358 = vector.load %arg5[%c0_94, %c0_95] : memref<128x512xbf16, #tpu.memory_space<vmem>>, vector<128x512xbf16>
    %cst_96 = arith.constant dense<0.000000e+00> : vector<2x512xf32>
    %359 = tpu.matmul %357, %358, %cst_96 {dimension_numbers = #tpu.dot_dimension_numbers<[1], [0], [0], [1], [0, 0, 1, 1], [], []>} : vector<2x128xbf16>, vector<128x512xbf16>, vector<2x512xf32> -> vector<2x512xf32>
    %360 = arith.addf %356, %359 : vector<2x512xf32>
    %361 = vector.extract_strided_slice %360 {offsets = [0, 0], sizes = [2, 128], strides = [1, 1]} : vector<2x512xf32> to vector<2x128xf32>
    %362 = arith.negf %361 : vector<2x128xf32>
    %363 = math.exp %362 : vector<2x128xf32>
    %cst_97 = arith.constant 1.000000e+00 : f32
    %364 = vector.broadcast %cst_97 : f32 to vector<2x128xf32>
    %365 = arith.addf %364, %363 : vector<2x128xf32>
    %366 = arith.divf %364, %365 : vector<2x128xf32>
    %367 = vector.extract_strided_slice %360 {offsets = [0, 128], sizes = [2, 128], strides = [1, 1]} : vector<2x512xf32> to vector<2x128xf32>
    %368 = arith.negf %367 : vector<2x128xf32>
    %369 = math.exp %368 : vector<2x128xf32>
    %cst_98 = arith.constant 1.000000e+00 : f32
    %370 = vector.broadcast %cst_98 : f32 to vector<2x128xf32>
    %371 = arith.addf %370, %369 : vector<2x128xf32>
    %372 = arith.divf %370, %371 : vector<2x128xf32>
    %373 = vector.extract_strided_slice %360 {offsets = [0, 256], sizes = [2, 128], strides = [1, 1]} : vector<2x512xf32> to vector<2x128xf32>
    %374 = math.tanh %373 : vector<2x128xf32>
    %375 = vector.extract_strided_slice %360 {offsets = [0, 384], sizes = [2, 128], strides = [1, 1]} : vector<2x512xf32> to vector<2x128xf32>
    %376 = arith.negf %375 : vector<2x128xf32>
    %377 = math.exp %376 : vector<2x128xf32>
    %cst_99 = arith.constant 1.000000e+00 : f32
    %378 = vector.broadcast %cst_99 : f32 to vector<2x128xf32>
    %379 = arith.addf %378, %377 : vector<2x128xf32>
    %380 = arith.divf %378, %379 : vector<2x128xf32>
    %381 = arith.mulf %372, %352 : vector<2x128xf32>
    %382 = arith.mulf %366, %374 : vector<2x128xf32>
    %383 = arith.addf %381, %382 : vector<2x128xf32>
    %384 = math.tanh %383 : vector<2x128xf32>
    %385 = arith.mulf %380, %384 : vector<2x128xf32>
    %c8_100 = arith.constant 8 : index
    %c128_101 = arith.constant 128 : index
    %386 = vector.load %arg23[%c8_100, %c128_101] : memref<16x256xf32, #tpu.memory_space<vmem>>, vector<2x128xf32>
    tpu.vector_store %arg23[%c8_100, %c128_101], %385 {strides = array<i32>} : memref<16x256xf32, #tpu.memory_space<vmem>>, vector<2x128xf32>,
    %387 = vector.extract_strided_slice %10 {offsets = [6, 0], sizes = [2, 512], strides = [1, 1]} : vector<16x512xf32> to vector<2x512xf32>
    %388 = arith.truncf %385 : vector<2x128xf32> to vector<2x128xbf16>
    %c0_102 = arith.constant 0 : index
    %c0_103 = arith.constant 0 : index
    %389 = vector.load %arg5[%c0_102, %c0_103] : memref<128x512xbf16, #tpu.memory_space<vmem>>, vector<128x512xbf16>
    %cst_104 = arith.constant dense<0.000000e+00> : vector<2x512xf32>
    %390 = tpu.matmul %388, %389, %cst_104 {dimension_numbers = #tpu.dot_dimension_numbers<[1], [0], [0], [1], [0, 0, 1, 1], [], []>} : vector<2x128xbf16>, vector<128x512xbf16>, vector<2x512xf32> -> vector<2x512xf32>
    %391 = arith.addf %387, %390 : vector<2x512xf32>
    %392 = vector.extract_strided_slice %391 {offsets = [0, 0], sizes = [2, 128], strides = [1, 1]} : vector<2x512xf32> to vector<2x128xf32>
    %393 = arith.negf %392 : vector<2x128xf32>
    %394 = math.exp %393 : vector<2x128xf32>
    %cst_105 = arith.constant 1.000000e+00 : f32
    %395 = vector.broadcast %cst_105 : f32 to vector<2x128xf32>
    %396 = arith.addf %395, %394 : vector<2x128xf32>
    %397 = arith.divf %395, %396 : vector<2x128xf32>
    %398 = vector.extract_strided_slice %391 {offsets = [0, 128], sizes = [2, 128], strides = [1, 1]} : vector<2x512xf32> to vector<2x128xf32>
    %399 = arith.negf %398 : vector<2x128xf32>
    %400 = math.exp %399 : vector<2x128xf32>
    %cst_106 = arith.constant 1.000000e+00 : f32
    %401 = vector.broadcast %cst_106 : f32 to vector<2x128xf32>
    %402 = arith.addf %401, %400 : vector<2x128xf32>
    %403 = arith.divf %401, %402 : vector<2x128xf32>
    %404 = vector.extract_strided_slice %391 {offsets = [0, 256], sizes = [2, 128], strides = [1, 1]} : vector<2x512xf32> to vector<2x128xf32>
    %405 = math.tanh %404 : vector<2x128xf32>
    %406 = vector.extract_strided_slice %391 {offsets = [0, 384], sizes = [2, 128], strides = [1, 1]} : vector<2x512xf32> to vector<2x128xf32>
    %407 = arith.negf %406 : vector<2x128xf32>
    %408 = math.exp %407 : vector<2x128xf32>
    %cst_107 = arith.constant 1.000000e+00 : f32
    %409 = vector.broadcast %cst_107 : f32 to vector<2x128xf32>
    %410 = arith.addf %409, %408 : vector<2x128xf32>
    %411 = arith.divf %409, %410 : vector<2x128xf32>
    %412 = arith.mulf %403, %383 : vector<2x128xf32>
    %413 = arith.mulf %397, %405 : vector<2x128xf32>
    %414 = arith.addf %412, %413 : vector<2x128xf32>
    %415 = math.tanh %414 : vector<2x128xf32>
    %416 = arith.mulf %411, %415 : vector<2x128xf32>
    %c6_108 = arith.constant 6 : index
    %c128_109 = arith.constant 128 : index
    %417 = vector.load %arg23[%c6_108, %c128_109] : memref<16x256xf32, #tpu.memory_space<vmem>>, vector<2x128xf32>
    tpu.vector_store %arg23[%c6_108, %c128_109], %416 {strides = array<i32>} : memref<16x256xf32, #tpu.memory_space<vmem>>, vector<2x128xf32>,
    %418 = vector.extract_strided_slice %10 {offsets = [4, 0], sizes = [2, 512], strides = [1, 1]} : vector<16x512xf32> to vector<2x512xf32>
    %419 = arith.truncf %416 : vector<2x128xf32> to vector<2x128xbf16>
    %c0_110 = arith.constant 0 : index
    %c0_111 = arith.constant 0 : index
    %420 = vector.load %arg5[%c0_110, %c0_111] : memref<128x512xbf16, #tpu.memory_space<vmem>>, vector<128x512xbf16>
    %cst_112 = arith.constant dense<0.000000e+00> : vector<2x512xf32>
    %421 = tpu.matmul %419, %420, %cst_112 {dimension_numbers = #tpu.dot_dimension_numbers<[1], [0], [0], [1], [0, 0, 1, 1], [], []>} : vector<2x128xbf16>, vector<128x512xbf16>, vector<2x512xf32> -> vector<2x512xf32>
    %422 = arith.addf %418, %421 : vector<2x512xf32>
    %423 = vector.extract_strided_slice %422 {offsets = [0, 0], sizes = [2, 128], strides = [1, 1]} : vector<2x512xf32> to vector<2x128xf32>
    %424 = arith.negf %423 : vector<2x128xf32>
    %425 = math.exp %424 : vector<2x128xf32>
    %cst_113 = arith.constant 1.000000e+00 : f32
    %426 = vector.broadcast %cst_113 : f32 to vector<2x128xf32>
    %427 = arith.addf %426, %425 : vector<2x128xf32>
    %428 = arith.divf %426, %427 : vector<2x128xf32>
    %429 = vector.extract_strided_slice %422 {offsets = [0, 128], sizes = [2, 128], strides = [1, 1]} : vector<2x512xf32> to vector<2x128xf32>
    %430 = arith.negf %429 : vector<2x128xf32>
    %431 = math.exp %430 : vector<2x128xf32>
    %cst_114 = arith.constant 1.000000e+00 : f32
    %432 = vector.broadcast %cst_114 : f32 to vector<2x128xf32>
    %433 = arith.addf %432, %431 : vector<2x128xf32>
    %434 = arith.divf %432, %433 : vector<2x128xf32>
    %435 = vector.extract_strided_slice %422 {offsets = [0, 256], sizes = [2, 128], strides = [1, 1]} : vector<2x512xf32> to vector<2x128xf32>
    %436 = math.tanh %435 : vector<2x128xf32>
    %437 = vector.extract_strided_slice %422 {offsets = [0, 384], sizes = [2, 128], strides = [1, 1]} : vector<2x512xf32> to vector<2x128xf32>
    %438 = arith.negf %437 : vector<2x128xf32>
    %439 = math.exp %438 : vector<2x128xf32>
    %cst_115 = arith.constant 1.000000e+00 : f32
    %440 = vector.broadcast %cst_115 : f32 to vector<2x128xf32>
    %441 = arith.addf %440, %439 : vector<2x128xf32>
    %442 = arith.divf %440, %441 : vector<2x128xf32>
    %443 = arith.mulf %434, %414 : vector<2x128xf32>
    %444 = arith.mulf %428, %436 : vector<2x128xf32>
    %445 = arith.addf %443, %444 : vector<2x128xf32>
    %446 = math.tanh %445 : vector<2x128xf32>
    %447 = arith.mulf %442, %446 : vector<2x128xf32>
    %c4_116 = arith.constant 4 : index
    %c128_117 = arith.constant 128 : index
    %448 = vector.load %arg23[%c4_116, %c128_117] : memref<16x256xf32, #tpu.memory_space<vmem>>, vector<2x128xf32>
    tpu.vector_store %arg23[%c4_116, %c128_117], %447 {strides = array<i32>} : memref<16x256xf32, #tpu.memory_space<vmem>>, vector<2x128xf32>,
    %449 = vector.extract_strided_slice %10 {offsets = [2, 0], sizes = [2, 512], strides = [1, 1]} : vector<16x512xf32> to vector<2x512xf32>
    %450 = arith.truncf %447 : vector<2x128xf32> to vector<2x128xbf16>
    %c0_118 = arith.constant 0 : index
    %c0_119 = arith.constant 0 : index
    %451 = vector.load %arg5[%c0_118, %c0_119] : memref<128x512xbf16, #tpu.memory_space<vmem>>, vector<128x512xbf16>
    %cst_120 = arith.constant dense<0.000000e+00> : vector<2x512xf32>
    %452 = tpu.matmul %450, %451, %cst_120 {dimension_numbers = #tpu.dot_dimension_numbers<[1], [0], [0], [1], [0, 0, 1, 1], [], []>} : vector<2x128xbf16>, vector<128x512xbf16>, vector<2x512xf32> -> vector<2x512xf32>
    %453 = arith.addf %449, %452 : vector<2x512xf32>
    %454 = vector.extract_strided_slice %453 {offsets = [0, 0], sizes = [2, 128], strides = [1, 1]} : vector<2x512xf32> to vector<2x128xf32>
    %455 = arith.negf %454 : vector<2x128xf32>
    %456 = math.exp %455 : vector<2x128xf32>
    %cst_121 = arith.constant 1.000000e+00 : f32
    %457 = vector.broadcast %cst_121 : f32 to vector<2x128xf32>
    %458 = arith.addf %457, %456 : vector<2x128xf32>
    %459 = arith.divf %457, %458 : vector<2x128xf32>
    %460 = vector.extract_strided_slice %453 {offsets = [0, 128], sizes = [2, 128], strides = [1, 1]} : vector<2x512xf32> to vector<2x128xf32>
    %461 = arith.negf %460 : vector<2x128xf32>
    %462 = math.exp %461 : vector<2x128xf32>
    %cst_122 = arith.constant 1.000000e+00 : f32
    %463 = vector.broadcast %cst_122 : f32 to vector<2x128xf32>
    %464 = arith.addf %463, %462 : vector<2x128xf32>
    %465 = arith.divf %463, %464 : vector<2x128xf32>
    %466 = vector.extract_strided_slice %453 {offsets = [0, 256], sizes = [2, 128], strides = [1, 1]} : vector<2x512xf32> to vector<2x128xf32>
    %467 = math.tanh %466 : vector<2x128xf32>
    %468 = vector.extract_strided_slice %453 {offsets = [0, 384], sizes = [2, 128], strides = [1, 1]} : vector<2x512xf32> to vector<2x128xf32>
    %469 = arith.negf %468 : vector<2x128xf32>
    %470 = math.exp %469 : vector<2x128xf32>
    %cst_123 = arith.constant 1.000000e+00 : f32
    %471 = vector.broadcast %cst_123 : f32 to vector<2x128xf32>
    %472 = arith.addf %471, %470 : vector<2x128xf32>
    %473 = arith.divf %471, %472 : vector<2x128xf32>
    %474 = arith.mulf %465, %445 : vector<2x128xf32>
    %475 = arith.mulf %459, %467 : vector<2x128xf32>
    %476 = arith.addf %474, %475 : vector<2x128xf32>
    %477 = math.tanh %476 : vector<2x128xf32>
    %478 = arith.mulf %473, %477 : vector<2x128xf32>
    %c2_124 = arith.constant 2 : index
    %c128_125 = arith.constant 128 : index
    %479 = vector.load %arg23[%c2_124, %c128_125] : memref<16x256xf32, #tpu.memory_space<vmem>>, vector<2x128xf32>
    tpu.vector_store %arg23[%c2_124, %c128_125], %478 {strides = array<i32>} : memref<16x256xf32, #tpu.memory_space<vmem>>, vector<2x128xf32>,
    %480 = vector.extract_strided_slice %10 {offsets = [0, 0], sizes = [2, 512], strides = [1, 1]} : vector<16x512xf32> to vector<2x512xf32>
    %481 = arith.truncf %478 : vector<2x128xf32> to vector<2x128xbf16>
    %c0_126 = arith.constant 0 : index
    %c0_127 = arith.constant 0 : index
    %482 = vector.load %arg5[%c0_126, %c0_127] : memref<128x512xbf16, #tpu.memory_space<vmem>>, vector<128x512xbf16>
    %cst_128 = arith.constant dense<0.000000e+00> : vector<2x512xf32>
    %483 = tpu.matmul %481, %482, %cst_128 {dimension_numbers = #tpu.dot_dimension_numbers<[1], [0], [0], [1], [0, 0, 1, 1], [], []>} : vector<2x128xbf16>, vector<128x512xbf16>, vector<2x512xf32> -> vector<2x512xf32>
    %484 = arith.addf %480, %483 : vector<2x512xf32>
    %485 = vector.extract_strided_slice %484 {offsets = [0, 0], sizes = [2, 128], strides = [1, 1]} : vector<2x512xf32> to vector<2x128xf32>
    %486 = arith.negf %485 : vector<2x128xf32>
    %487 = math.exp %486 : vector<2x128xf32>
    %cst_129 = arith.constant 1.000000e+00 : f32
    %488 = vector.broadcast %cst_129 : f32 to vector<2x128xf32>
    %489 = arith.addf %488, %487 : vector<2x128xf32>
    %490 = arith.divf %488, %489 : vector<2x128xf32>
    %491 = vector.extract_strided_slice %484 {offsets = [0, 128], sizes = [2, 128], strides = [1, 1]} : vector<2x512xf32> to vector<2x128xf32>
    %492 = arith.negf %491 : vector<2x128xf32>
    %493 = math.exp %492 : vector<2x128xf32>
    %cst_130 = arith.constant 1.000000e+00 : f32
    %494 = vector.broadcast %cst_130 : f32 to vector<2x128xf32>
    %495 = arith.addf %494, %493 : vector<2x128xf32>
    %496 = arith.divf %494, %495 : vector<2x128xf32>
    %497 = vector.extract_strided_slice %484 {offsets = [0, 256], sizes = [2, 128], strides = [1, 1]} : vector<2x512xf32> to vector<2x128xf32>
    %498 = math.tanh %497 : vector<2x128xf32>
    %499 = vector.extract_strided_slice %484 {offsets = [0, 384], sizes = [2, 128], strides = [1, 1]} : vector<2x512xf32> to vector<2x128xf32>
    %500 = arith.negf %499 : vector<2x128xf32>
    %501 = math.exp %500 : vector<2x128xf32>
    %cst_131 = arith.constant 1.000000e+00 : f32
    %502 = vector.broadcast %cst_131 : f32 to vector<2x128xf32>
    %503 = arith.addf %502, %501 : vector<2x128xf32>
    %504 = arith.divf %502, %503 : vector<2x128xf32>
    %505 = arith.mulf %496, %476 : vector<2x128xf32>
    %506 = arith.mulf %490, %498 : vector<2x128xf32>
    %507 = arith.addf %505, %506 : vector<2x128xf32>
    %508 = math.tanh %507 : vector<2x128xf32>
    %509 = arith.mulf %504, %508 : vector<2x128xf32>
    %c0_132 = arith.constant 0 : index
    %c128_133 = arith.constant 128 : index
    %510 = vector.load %arg23[%c0_132, %c128_133] : memref<16x256xf32, #tpu.memory_space<vmem>>, vector<2x128xf32>
    tpu.vector_store %arg23[%c0_132, %c128_133], %509 {strides = array<i32>} : memref<16x256xf32, #tpu.memory_space<vmem>>, vector<2x128xf32>,
    %c0_134 = arith.constant 0 : index
    %c0_135 = arith.constant 0 : index
    %511 = vector.load %arg23[%c0_134, %c0_135] : memref<16x256xf32, #tpu.memory_space<vmem>>, vector<16x256xf32>
    %512 = arith.truncf %511 : vector<16x256xf32> to vector<16x256xbf16>
    %c0_136 = arith.constant 0 : index
    %c0_137 = arith.constant 0 : index
    %513 = vector.load %arg7[%c0_136, %c0_137] : memref<256x512xbf16, #tpu.memory_space<vmem>>, vector<256x512xbf16>
    %cst_138 = arith.constant dense<0.000000e+00> : vector<16x512xf32>
    %514 = tpu.matmul %512, %513, %cst_138 {dimension_numbers = #tpu.dot_dimension_numbers<[1], [0], [0], [1], [0, 0, 1, 1], [], []>} : vector<16x256xbf16>, vector<256x512xbf16>, vector<16x512xf32> -> vector<16x512xf32>
    %c0_139 = arith.constant 0 : index
    %c0_140 = arith.constant 0 : index
    %515 = vector.load %arg9[%c0_139, %c0_140] : memref<1x512xf32, #tpu.memory_space<vmem>>, vector<1x512xf32>
    %516 = vector.broadcast %515 : vector<1x512xf32> to vector<16x512xf32>
    %517 = arith.addf %514, %516 : vector<16x512xf32>
    %cst_141 = arith.constant 0.000000e+00 : f32
    %518 = vector.broadcast %cst_141 : f32 to vector<2x128xf32>
    %cst_142 = arith.constant 0.000000e+00 : f32
    %519 = vector.broadcast %cst_142 : f32 to vector<2x128xf32>
    %520 = vector.extract_strided_slice %517 {offsets = [0, 0], sizes = [2, 512], strides = [1, 1]} : vector<16x512xf32> to vector<2x512xf32>
    %521 = arith.truncf %518 : vector<2x128xf32> to vector<2x128xbf16>
    %c0_143 = arith.constant 0 : index
    %c0_144 = arith.constant 0 : index
    %522 = vector.load %arg8[%c0_143, %c0_144] : memref<128x512xbf16, #tpu.memory_space<vmem>>, vector<128x512xbf16>
    %cst_145 = arith.constant dense<0.000000e+00> : vector<2x512xf32>
    %523 = tpu.matmul %521, %522, %cst_145 {dimension_numbers = #tpu.dot_dimension_numbers<[1], [0], [0], [1], [0, 0, 1, 1], [], []>} : vector<2x128xbf16>, vector<128x512xbf16>, vector<2x512xf32> -> vector<2x512xf32>
    %524 = arith.addf %520, %523 : vector<2x512xf32>
    %525 = vector.extract_strided_slice %524 {offsets = [0, 0], sizes = [2, 128], strides = [1, 1]} : vector<2x512xf32> to vector<2x128xf32>
    %526 = arith.negf %525 : vector<2x128xf32>
    %527 = math.exp %526 : vector<2x128xf32>
    %cst_146 = arith.constant 1.000000e+00 : f32
    %528 = vector.broadcast %cst_146 : f32 to vector<2x128xf32>
    %529 = arith.addf %528, %527 : vector<2x128xf32>
    %530 = arith.divf %528, %529 : vector<2x128xf32>
    %531 = vector.extract_strided_slice %524 {offsets = [0, 128], sizes = [2, 128], strides = [1, 1]} : vector<2x512xf32> to vector<2x128xf32>
    %532 = arith.negf %531 : vector<2x128xf32>
    %533 = math.exp %532 : vector<2x128xf32>
    %cst_147 = arith.constant 1.000000e+00 : f32
    %534 = vector.broadcast %cst_147 : f32 to vector<2x128xf32>
    %535 = arith.addf %534, %533 : vector<2x128xf32>
    %536 = arith.divf %534, %535 : vector<2x128xf32>
    %537 = vector.extract_strided_slice %524 {offsets = [0, 256], sizes = [2, 128], strides = [1, 1]} : vector<2x512xf32> to vector<2x128xf32>
    %538 = math.tanh %537 : vector<2x128xf32>
    %539 = vector.extract_strided_slice %524 {offsets = [0, 384], sizes = [2, 128], strides = [1, 1]} : vector<2x512xf32> to vector<2x128xf32>
    %540 = arith.negf %539 : vector<2x128xf32>
    %541 = math.exp %540 : vector<2x128xf32>
    %cst_148 = arith.constant 1.000000e+00 : f32
    %542 = vector.broadcast %cst_148 : f32 to vector<2x128xf32>
    %543 = arith.addf %542, %541 : vector<2x128xf32>
    %544 = arith.divf %542, %543 : vector<2x128xf32>
    %545 = arith.mulf %536, %519 : vector<2x128xf32>
    %546 = arith.mulf %530, %538 : vector<2x128xf32>
    %547 = arith.addf %545, %546 : vector<2x128xf32>
    %548 = math.tanh %547 : vector<2x128xf32>
    %549 = arith.mulf %544, %548 : vector<2x128xf32>
    %550 = vector.extract_strided_slice %517 {offsets = [2, 0], sizes = [2, 512], strides = [1, 1]} : vector<16x512xf32> to vector<2x512xf32>
    %551 = arith.truncf %549 : vector<2x128xf32> to vector<2x128xbf16>
    %c0_149 = arith.constant 0 : index
    %c0_150 = arith.constant 0 : index
    %552 = vector.load %arg8[%c0_149, %c0_150] : memref<128x512xbf16, #tpu.memory_space<vmem>>, vector<128x512xbf16>
    %cst_151 = arith.constant dense<0.000000e+00> : vector<2x512xf32>
    %553 = tpu.matmul %551, %552, %cst_151 {dimension_numbers = #tpu.dot_dimension_numbers<[1], [0], [0], [1], [0, 0, 1, 1], [], []>} : vector<2x128xbf16>, vector<128x512xbf16>, vector<2x512xf32> -> vector<2x512xf32>
    %554 = arith.addf %550, %553 : vector<2x512xf32>
    %555 = vector.extract_strided_slice %554 {offsets = [0, 0], sizes = [2, 128], strides = [1, 1]} : vector<2x512xf32> to vector<2x128xf32>
    %556 = arith.negf %555 : vector<2x128xf32>
    %557 = math.exp %556 : vector<2x128xf32>
    %cst_152 = arith.constant 1.000000e+00 : f32
    %558 = vector.broadcast %cst_152 : f32 to vector<2x128xf32>
    %559 = arith.addf %558, %557 : vector<2x128xf32>
    %560 = arith.divf %558, %559 : vector<2x128xf32>
    %561 = vector.extract_strided_slice %554 {offsets = [0, 128], sizes = [2, 128], strides = [1, 1]} : vector<2x512xf32> to vector<2x128xf32>
    %562 = arith.negf %561 : vector<2x128xf32>
    %563 = math.exp %562 : vector<2x128xf32>
    %cst_153 = arith.constant 1.000000e+00 : f32
    %564 = vector.broadcast %cst_153 : f32 to vector<2x128xf32>
    %565 = arith.addf %564, %563 : vector<2x128xf32>
    %566 = arith.divf %564, %565 : vector<2x128xf32>
    %567 = vector.extract_strided_slice %554 {offsets = [0, 256], sizes = [2, 128], strides = [1, 1]} : vector<2x512xf32> to vector<2x128xf32>
    %568 = math.tanh %567 : vector<2x128xf32>
    %569 = vector.extract_strided_slice %554 {offsets = [0, 384], sizes = [2, 128], strides = [1, 1]} : vector<2x512xf32> to vector<2x128xf32>
    %570 = arith.negf %569 : vector<2x128xf32>
    %571 = math.exp %570 : vector<2x128xf32>
    %cst_154 = arith.constant 1.000000e+00 : f32
    %572 = vector.broadcast %cst_154 : f32 to vector<2x128xf32>
    %573 = arith.addf %572, %571 : vector<2x128xf32>
    %574 = arith.divf %572, %573 : vector<2x128xf32>
    %575 = arith.mulf %566, %547 : vector<2x128xf32>
    %576 = arith.mulf %560, %568 : vector<2x128xf32>
    %577 = arith.addf %575, %576 : vector<2x128xf32>
    %578 = math.tanh %577 : vector<2x128xf32>
    %579 = arith.mulf %574, %578 : vector<2x128xf32>
    %580 = vector.extract_strided_slice %517 {offsets = [4, 0], sizes = [2, 512], strides = [1, 1]} : vector<16x512xf32> to vector<2x512xf32>
    %581 = arith.truncf %579 : vector<2x128xf32> to vector<2x128xbf16>
    %c0_155 = arith.constant 0 : index
    %c0_156 = arith.constant 0 : index
    %582 = vector.load %arg8[%c0_155, %c0_156] : memref<128x512xbf16, #tpu.memory_space<vmem>>, vector<128x512xbf16>
    %cst_157 = arith.constant dense<0.000000e+00> : vector<2x512xf32>
    %583 = tpu.matmul %581, %582, %cst_157 {dimension_numbers = #tpu.dot_dimension_numbers<[1], [0], [0], [1], [0, 0, 1, 1], [], []>} : vector<2x128xbf16>, vector<128x512xbf16>, vector<2x512xf32> -> vector<2x512xf32>
    %584 = arith.addf %580, %583 : vector<2x512xf32>
    %585 = vector.extract_strided_slice %584 {offsets = [0, 0], sizes = [2, 128], strides = [1, 1]} : vector<2x512xf32> to vector<2x128xf32>
    %586 = arith.negf %585 : vector<2x128xf32>
    %587 = math.exp %586 : vector<2x128xf32>
    %cst_158 = arith.constant 1.000000e+00 : f32
    %588 = vector.broadcast %cst_158 : f32 to vector<2x128xf32>
    %589 = arith.addf %588, %587 : vector<2x128xf32>
    %590 = arith.divf %588, %589 : vector<2x128xf32>
    %591 = vector.extract_strided_slice %584 {offsets = [0, 128], sizes = [2, 128], strides = [1, 1]} : vector<2x512xf32> to vector<2x128xf32>
    %592 = arith.negf %591 : vector<2x128xf32>
    %593 = math.exp %592 : vector<2x128xf32>
    %cst_159 = arith.constant 1.000000e+00 : f32
    %594 = vector.broadcast %cst_159 : f32 to vector<2x128xf32>
    %595 = arith.addf %594, %593 : vector<2x128xf32>
    %596 = arith.divf %594, %595 : vector<2x128xf32>
    %597 = vector.extract_strided_slice %584 {offsets = [0, 256], sizes = [2, 128], strides = [1, 1]} : vector<2x512xf32> to vector<2x128xf32>
    %598 = math.tanh %597 : vector<2x128xf32>
    %599 = vector.extract_strided_slice %584 {offsets = [0, 384], sizes = [2, 128], strides = [1, 1]} : vector<2x512xf32> to vector<2x128xf32>
    %600 = arith.negf %599 : vector<2x128xf32>
    %601 = math.exp %600 : vector<2x128xf32>
    %cst_160 = arith.constant 1.000000e+00 : f32
    %602 = vector.broadcast %cst_160 : f32 to vector<2x128xf32>
    %603 = arith.addf %602, %601 : vector<2x128xf32>
    %604 = arith.divf %602, %603 : vector<2x128xf32>
    %605 = arith.mulf %596, %577 : vector<2x128xf32>
    %606 = arith.mulf %590, %598 : vector<2x128xf32>
    %607 = arith.addf %605, %606 : vector<2x128xf32>
    %608 = math.tanh %607 : vector<2x128xf32>
    %609 = arith.mulf %604, %608 : vector<2x128xf32>
    %610 = vector.extract_strided_slice %517 {offsets = [6, 0], sizes = [2, 512], strides = [1, 1]} : vector<16x512xf32> to vector<2x512xf32>
    %611 = arith.truncf %609 : vector<2x128xf32> to vector<2x128xbf16>
    %c0_161 = arith.constant 0 : index
    %c0_162 = arith.constant 0 : index
    %612 = vector.load %arg8[%c0_161, %c0_162] : memref<128x512xbf16, #tpu.memory_space<vmem>>, vector<128x512xbf16>
    %cst_163 = arith.constant dense<0.000000e+00> : vector<2x512xf32>
    %613 = tpu.matmul %611, %612, %cst_163 {dimension_numbers = #tpu.dot_dimension_numbers<[1], [0], [0], [1], [0, 0, 1, 1], [], []>} : vector<2x128xbf16>, vector<128x512xbf16>, vector<2x512xf32> -> vector<2x512xf32>
    %614 = arith.addf %610, %613 : vector<2x512xf32>
    %615 = vector.extract_strided_slice %614 {offsets = [0, 0], sizes = [2, 128], strides = [1, 1]} : vector<2x512xf32> to vector<2x128xf32>
    %616 = arith.negf %615 : vector<2x128xf32>
    %617 = math.exp %616 : vector<2x128xf32>
    %cst_164 = arith.constant 1.000000e+00 : f32
    %618 = vector.broadcast %cst_164 : f32 to vector<2x128xf32>
    %619 = arith.addf %618, %617 : vector<2x128xf32>
    %620 = arith.divf %618, %619 : vector<2x128xf32>
    %621 = vector.extract_strided_slice %614 {offsets = [0, 128], sizes = [2, 128], strides = [1, 1]} : vector<2x512xf32> to vector<2x128xf32>
    %622 = arith.negf %621 : vector<2x128xf32>
    %623 = math.exp %622 : vector<2x128xf32>
    %cst_165 = arith.constant 1.000000e+00 : f32
    %624 = vector.broadcast %cst_165 : f32 to vector<2x128xf32>
    %625 = arith.addf %624, %623 : vector<2x128xf32>
    %626 = arith.divf %624, %625 : vector<2x128xf32>
    %627 = vector.extract_strided_slice %614 {offsets = [0, 256], sizes = [2, 128], strides = [1, 1]} : vector<2x512xf32> to vector<2x128xf32>
    %628 = math.tanh %627 : vector<2x128xf32>
    %629 = vector.extract_strided_slice %614 {offsets = [0, 384], sizes = [2, 128], strides = [1, 1]} : vector<2x512xf32> to vector<2x128xf32>
    %630 = arith.negf %629 : vector<2x128xf32>
    %631 = math.exp %630 : vector<2x128xf32>
    %cst_166 = arith.constant 1.000000e+00 : f32
    %632 = vector.broadcast %cst_166 : f32 to vector<2x128xf32>
    %633 = arith.addf %632, %631 : vector<2x128xf32>
    %634 = arith.divf %632, %633 : vector<2x128xf32>
    %635 = arith.mulf %626, %607 : vector<2x128xf32>
    %636 = arith.mulf %620, %628 : vector<2x128xf32>
    %637 = arith.addf %635, %636 : vector<2x128xf32>
    %638 = math.tanh %637 : vector<2x128xf32>
    %639 = arith.mulf %634, %638 : vector<2x128xf32>
    %640 = vector.extract_strided_slice %517 {offsets = [8, 0], sizes = [2, 512], strides = [1, 1]} : vector<16x512xf32> to vector<2x512xf32>
    %641 = arith.truncf %639 : vector<2x128xf32> to vector<2x128xbf16>
    %c0_167 = arith.constant 0 : index
    %c0_168 = arith.constant 0 : index
    %642 = vector.load %arg8[%c0_167, %c0_168] : memref<128x512xbf16, #tpu.memory_space<vmem>>, vector<128x512xbf16>
    %cst_169 = arith.constant dense<0.000000e+00> : vector<2x512xf32>
    %643 = tpu.matmul %641, %642, %cst_169 {dimension_numbers = #tpu.dot_dimension_numbers<[1], [0], [0], [1], [0, 0, 1, 1], [], []>} : vector<2x128xbf16>, vector<128x512xbf16>, vector<2x512xf32> -> vector<2x512xf32>
    %644 = arith.addf %640, %643 : vector<2x512xf32>
    %645 = vector.extract_strided_slice %644 {offsets = [0, 0], sizes = [2, 128], strides = [1, 1]} : vector<2x512xf32> to vector<2x128xf32>
    %646 = arith.negf %645 : vector<2x128xf32>
    %647 = math.exp %646 : vector<2x128xf32>
    %cst_170 = arith.constant 1.000000e+00 : f32
    %648 = vector.broadcast %cst_170 : f32 to vector<2x128xf32>
    %649 = arith.addf %648, %647 : vector<2x128xf32>
    %650 = arith.divf %648, %649 : vector<2x128xf32>
    %651 = vector.extract_strided_slice %644 {offsets = [0, 128], sizes = [2, 128], strides = [1, 1]} : vector<2x512xf32> to vector<2x128xf32>
    %652 = arith.negf %651 : vector<2x128xf32>
    %653 = math.exp %652 : vector<2x128xf32>
    %cst_171 = arith.constant 1.000000e+00 : f32
    %654 = vector.broadcast %cst_171 : f32 to vector<2x128xf32>
    %655 = arith.addf %654, %653 : vector<2x128xf32>
    %656 = arith.divf %654, %655 : vector<2x128xf32>
    %657 = vector.extract_strided_slice %644 {offsets = [0, 256], sizes = [2, 128], strides = [1, 1]} : vector<2x512xf32> to vector<2x128xf32>
    %658 = math.tanh %657 : vector<2x128xf32>
    %659 = vector.extract_strided_slice %644 {offsets = [0, 384], sizes = [2, 128], strides = [1, 1]} : vector<2x512xf32> to vector<2x128xf32>
    %660 = arith.negf %659 : vector<2x128xf32>
    %661 = math.exp %660 : vector<2x128xf32>
    %cst_172 = arith.constant 1.000000e+00 : f32
    %662 = vector.broadcast %cst_172 : f32 to vector<2x128xf32>
    %663 = arith.addf %662, %661 : vector<2x128xf32>
    %664 = arith.divf %662, %663 : vector<2x128xf32>
    %665 = arith.mulf %656, %637 : vector<2x128xf32>
    %666 = arith.mulf %650, %658 : vector<2x128xf32>
    %667 = arith.addf %665, %666 : vector<2x128xf32>
    %668 = math.tanh %667 : vector<2x128xf32>
    %669 = arith.mulf %664, %668 : vector<2x128xf32>
    %670 = vector.extract_strided_slice %517 {offsets = [10, 0], sizes = [2, 512], strides = [1, 1]} : vector<16x512xf32> to vector<2x512xf32>
    %671 = arith.truncf %669 : vector<2x128xf32> to vector<2x128xbf16>
    %c0_173 = arith.constant 0 : index
    %c0_174 = arith.constant 0 : index
    %672 = vector.load %arg8[%c0_173, %c0_174] : memref<128x512xbf16, #tpu.memory_space<vmem>>, vector<128x512xbf16>
    %cst_175 = arith.constant dense<0.000000e+00> : vector<2x512xf32>
    %673 = tpu.matmul %671, %672, %cst_175 {dimension_numbers = #tpu.dot_dimension_numbers<[1], [0], [0], [1], [0, 0, 1, 1], [], []>} : vector<2x128xbf16>, vector<128x512xbf16>, vector<2x512xf32> -> vector<2x512xf32>
    %674 = arith.addf %670, %673 : vector<2x512xf32>
    %675 = vector.extract_strided_slice %674 {offsets = [0, 0], sizes = [2, 128], strides = [1, 1]} : vector<2x512xf32> to vector<2x128xf32>
    %676 = arith.negf %675 : vector<2x128xf32>
    %677 = math.exp %676 : vector<2x128xf32>
    %cst_176 = arith.constant 1.000000e+00 : f32
    %678 = vector.broadcast %cst_176 : f32 to vector<2x128xf32>
    %679 = arith.addf %678, %677 : vector<2x128xf32>
    %680 = arith.divf %678, %679 : vector<2x128xf32>
    %681 = vector.extract_strided_slice %674 {offsets = [0, 128], sizes = [2, 128], strides = [1, 1]} : vector<2x512xf32> to vector<2x128xf32>
    %682 = arith.negf %681 : vector<2x128xf32>
    %683 = math.exp %682 : vector<2x128xf32>
    %cst_177 = arith.constant 1.000000e+00 : f32
    %684 = vector.broadcast %cst_177 : f32 to vector<2x128xf32>
    %685 = arith.addf %684, %683 : vector<2x128xf32>
    %686 = arith.divf %684, %685 : vector<2x128xf32>
    %687 = vector.extract_strided_slice %674 {offsets = [0, 256], sizes = [2, 128], strides = [1, 1]} : vector<2x512xf32> to vector<2x128xf32>
    %688 = math.tanh %687 : vector<2x128xf32>
    %689 = vector.extract_strided_slice %674 {offsets = [0, 384], sizes = [2, 128], strides = [1, 1]} : vector<2x512xf32> to vector<2x128xf32>
    %690 = arith.negf %689 : vector<2x128xf32>
    %691 = math.exp %690 : vector<2x128xf32>
    %cst_178 = arith.constant 1.000000e+00 : f32
    %692 = vector.broadcast %cst_178 : f32 to vector<2x128xf32>
    %693 = arith.addf %692, %691 : vector<2x128xf32>
    %694 = arith.divf %692, %693 : vector<2x128xf32>
    %695 = arith.mulf %686, %667 : vector<2x128xf32>
    %696 = arith.mulf %680, %688 : vector<2x128xf32>
    %697 = arith.addf %695, %696 : vector<2x128xf32>
    %698 = math.tanh %697 : vector<2x128xf32>
    %699 = arith.mulf %694, %698 : vector<2x128xf32>
    %700 = vector.extract_strided_slice %517 {offsets = [12, 0], sizes = [2, 512], strides = [1, 1]} : vector<16x512xf32> to vector<2x512xf32>
    %701 = arith.truncf %699 : vector<2x128xf32> to vector<2x128xbf16>
    %c0_179 = arith.constant 0 : index
    %c0_180 = arith.constant 0 : index
    %702 = vector.load %arg8[%c0_179, %c0_180] : memref<128x512xbf16, #tpu.memory_space<vmem>>, vector<128x512xbf16>
    %cst_181 = arith.constant dense<0.000000e+00> : vector<2x512xf32>
    %703 = tpu.matmul %701, %702, %cst_181 {dimension_numbers = #tpu.dot_dimension_numbers<[1], [0], [0], [1], [0, 0, 1, 1], [], []>} : vector<2x128xbf16>, vector<128x512xbf16>, vector<2x512xf32> -> vector<2x512xf32>
    %704 = arith.addf %700, %703 : vector<2x512xf32>
    %705 = vector.extract_strided_slice %704 {offsets = [0, 0], sizes = [2, 128], strides = [1, 1]} : vector<2x512xf32> to vector<2x128xf32>
    %706 = arith.negf %705 : vector<2x128xf32>
    %707 = math.exp %706 : vector<2x128xf32>
    %cst_182 = arith.constant 1.000000e+00 : f32
    %708 = vector.broadcast %cst_182 : f32 to vector<2x128xf32>
    %709 = arith.addf %708, %707 : vector<2x128xf32>
    %710 = arith.divf %708, %709 : vector<2x128xf32>
    %711 = vector.extract_strided_slice %704 {offsets = [0, 128], sizes = [2, 128], strides = [1, 1]} : vector<2x512xf32> to vector<2x128xf32>
    %712 = arith.negf %711 : vector<2x128xf32>
    %713 = math.exp %712 : vector<2x128xf32>
    %cst_183 = arith.constant 1.000000e+00 : f32
    %714 = vector.broadcast %cst_183 : f32 to vector<2x128xf32>
    %715 = arith.addf %714, %713 : vector<2x128xf32>
    %716 = arith.divf %714, %715 : vector<2x128xf32>
    %717 = vector.extract_strided_slice %704 {offsets = [0, 256], sizes = [2, 128], strides = [1, 1]} : vector<2x512xf32> to vector<2x128xf32>
    %718 = math.tanh %717 : vector<2x128xf32>
    %719 = vector.extract_strided_slice %704 {offsets = [0, 384], sizes = [2, 128], strides = [1, 1]} : vector<2x512xf32> to vector<2x128xf32>
    %720 = arith.negf %719 : vector<2x128xf32>
    %721 = math.exp %720 : vector<2x128xf32>
    %cst_184 = arith.constant 1.000000e+00 : f32
    %722 = vector.broadcast %cst_184 : f32 to vector<2x128xf32>
    %723 = arith.addf %722, %721 : vector<2x128xf32>
    %724 = arith.divf %722, %723 : vector<2x128xf32>
    %725 = arith.mulf %716, %697 : vector<2x128xf32>
    %726 = arith.mulf %710, %718 : vector<2x128xf32>
    %727 = arith.addf %725, %726 : vector<2x128xf32>
    %728 = math.tanh %727 : vector<2x128xf32>
    %729 = arith.mulf %724, %728 : vector<2x128xf32>
    %730 = vector.extract_strided_slice %517 {offsets = [14, 0], sizes = [2, 512], strides = [1, 1]} : vector<16x512xf32> to vector<2x512xf32>
    %731 = arith.truncf %729 : vector<2x128xf32> to vector<2x128xbf16>
    %c0_185 = arith.constant 0 : index
    %c0_186 = arith.constant 0 : index
    %732 = vector.load %arg8[%c0_185, %c0_186] : memref<128x512xbf16, #tpu.memory_space<vmem>>, vector<128x512xbf16>
    %cst_187 = arith.constant dense<0.000000e+00> : vector<2x512xf32>
    %733 = tpu.matmul %731, %732, %cst_187 {dimension_numbers = #tpu.dot_dimension_numbers<[1], [0], [0], [1], [0, 0, 1, 1], [], []>} : vector<2x128xbf16>, vector<128x512xbf16>, vector<2x512xf32> -> vector<2x512xf32>
    %734 = arith.addf %730, %733 : vector<2x512xf32>
    %735 = vector.extract_strided_slice %734 {offsets = [0, 0], sizes = [2, 128], strides = [1, 1]} : vector<2x512xf32> to vector<2x128xf32>
    %736 = arith.negf %735 : vector<2x128xf32>
    %737 = math.exp %736 : vector<2x128xf32>
    %cst_188 = arith.constant 1.000000e+00 : f32
    %738 = vector.broadcast %cst_188 : f32 to vector<2x128xf32>
    %739 = arith.addf %738, %737 : vector<2x128xf32>
    %740 = arith.divf %738, %739 : vector<2x128xf32>
    %741 = vector.extract_strided_slice %734 {offsets = [0, 128], sizes = [2, 128], strides = [1, 1]} : vector<2x512xf32> to vector<2x128xf32>
    %742 = arith.negf %741 : vector<2x128xf32>
    %743 = math.exp %742 : vector<2x128xf32>
    %cst_189 = arith.constant 1.000000e+00 : f32
    %744 = vector.broadcast %cst_189 : f32 to vector<2x128xf32>
    %745 = arith.addf %744, %743 : vector<2x128xf32>
    %746 = arith.divf %744, %745 : vector<2x128xf32>
    %747 = vector.extract_strided_slice %734 {offsets = [0, 256], sizes = [2, 128], strides = [1, 1]} : vector<2x512xf32> to vector<2x128xf32>
    %748 = math.tanh %747 : vector<2x128xf32>
    %749 = vector.extract_strided_slice %734 {offsets = [0, 384], sizes = [2, 128], strides = [1, 1]} : vector<2x512xf32> to vector<2x128xf32>
    %750 = arith.negf %749 : vector<2x128xf32>
    %751 = math.exp %750 : vector<2x128xf32>
    %cst_190 = arith.constant 1.000000e+00 : f32
    %752 = vector.broadcast %cst_190 : f32 to vector<2x128xf32>
    %753 = arith.addf %752, %751 : vector<2x128xf32>
    %754 = arith.divf %752, %753 : vector<2x128xf32>
    %755 = arith.mulf %746, %727 : vector<2x128xf32>
    %756 = arith.mulf %740, %748 : vector<2x128xf32>
    %757 = arith.addf %755, %756 : vector<2x128xf32>
    %758 = math.tanh %757 : vector<2x128xf32>
    %759 = arith.mulf %754, %758 : vector<2x128xf32>
    %760 = vector.extract_strided_slice %512 {offsets = [14, 0], sizes = [2, 256], strides = [1, 1]} : vector<16x256xbf16> to vector<2x256xbf16>
    %c0_191 = arith.constant 0 : index
    %c0_192 = arith.constant 0 : index
    %761 = vector.load %arg10[%c0_191, %c0_192] : memref<256x512xbf16, #tpu.memory_space<vmem>>, vector<256x512xbf16>
    %cst_193 = arith.constant dense<0.000000e+00> : vector<2x512xf32>
    %762 = tpu.matmul %760, %761, %cst_193 {dimension_numbers = #tpu.dot_dimension_numbers<[1], [0], [0], [1], [0, 0, 1, 1], [], []>} : vector<2x256xbf16>, vector<256x512xbf16>, vector<2x512xf32> -> vector<2x512xf32>
    %c0_194 = arith.constant 0 : index
    %c0_195 = arith.constant 0 : index
    %763 = vector.load %arg11[%c0_194, %c0_195] : memref<1x512xf32, #tpu.memory_space<vmem>>, vector<1x512xf32>
    %764 = vector.broadcast %763 : vector<1x512xf32> to vector<2x512xf32>
    %765 = arith.addf %762, %764 : vector<2x512xf32>
    %766 = vector.extract_strided_slice %765 {offsets = [0, 0], sizes = [2, 128], strides = [1, 1]} : vector<2x512xf32> to vector<2x128xf32>
    %767 = arith.negf %766 : vector<2x128xf32>
    %768 = math.exp %767 : vector<2x128xf32>
    %cst_196 = arith.constant 1.000000e+00 : f32
    %769 = vector.broadcast %cst_196 : f32 to vector<2x128xf32>
    %770 = arith.addf %769, %768 : vector<2x128xf32>
    %771 = arith.divf %769, %770 : vector<2x128xf32>
    %772 = vector.extract_strided_slice %765 {offsets = [0, 256], sizes = [2, 128], strides = [1, 1]} : vector<2x512xf32> to vector<2x128xf32>
    %773 = math.tanh %772 : vector<2x128xf32>
    %774 = vector.extract_strided_slice %765 {offsets = [0, 384], sizes = [2, 128], strides = [1, 1]} : vector<2x512xf32> to vector<2x128xf32>
    %775 = arith.negf %774 : vector<2x128xf32>
    %776 = math.exp %775 : vector<2x128xf32>
    %cst_197 = arith.constant 1.000000e+00 : f32
    %777 = vector.broadcast %cst_197 : f32 to vector<2x128xf32>
    %778 = arith.addf %777, %776 : vector<2x128xf32>
    %779 = arith.divf %777, %778 : vector<2x128xf32>
    %780 = arith.mulf %771, %773 : vector<2x128xf32>
    %781 = math.tanh %780 : vector<2x128xf32>
    %782 = arith.mulf %779, %781 : vector<2x128xf32>
    %783 = arith.truncf %759 : vector<2x128xf32> to vector<2x128xbf16>
    %c0_198 = arith.constant 0 : index
    %c0_199 = arith.constant 0 : index
    %784 = vector.load %arg12[%c0_198, %c0_199] : memref<256x128xbf16, #tpu.memory_space<vmem>>, vector<128x128xbf16>
    %cst_200 = arith.constant dense<0.000000e+00> : vector<2x128xf32>
    %785 = tpu.matmul %783, %784, %cst_200 {dimension_numbers = #tpu.dot_dimension_numbers<[1], [0], [0], [1], [0, 0, 1, 1], [], []>} : vector<2x128xbf16>, vector<128x128xbf16>, vector<2x128xf32> -> vector<2x128xf32>
    %786 = arith.truncf %782 : vector<2x128xf32> to vector<2x128xbf16>
    %c128_201 = arith.constant 128 : index
    %c0_202 = arith.constant 0 : index
    %787 = vector.load %arg12[%c128_201, %c0_202] : memref<256x128xbf16, #tpu.memory_space<vmem>>, vector<128x128xbf16>
    %cst_203 = arith.constant dense<0.000000e+00> : vector<2x128xf32>
    %788 = tpu.matmul %786, %787, %cst_203 {dimension_numbers = #tpu.dot_dimension_numbers<[1], [0], [0], [1], [0, 0, 1, 1], [], []>} : vector<2x128xbf16>, vector<128x128xbf16>, vector<2x128xf32> -> vector<2x128xf32>
    %789 = arith.addf %785, %788 : vector<2x128xf32>
    %c0_204 = arith.constant 0 : index
    %c0_205 = arith.constant 0 : index
    %790 = vector.load %arg13[%c0_204, %c0_205] : memref<1x128xf32, #tpu.memory_space<vmem>>, vector<1x128xf32>
    %791 = vector.broadcast %790 : vector<1x128xf32> to vector<2x128xf32>
    %792 = arith.addf %789, %791 : vector<2x128xf32>
    %cst_206 = arith.constant 0.000000e+00 : f32
    %793 = vector.broadcast %cst_206 : f32 to vector<2x128xf32>
    %794 = arith.maximumf %792, %793 : vector<2x128xf32>
    %795 = arith.truncf %794 : vector<2x128xf32> to vector<2x128xbf16>
    %c0_207 = arith.constant 0 : index
    %c0_208 = arith.constant 0 : index
    %796 = vector.load %arg14[%c0_207, %c0_208] : memref<128x128xbf16, #tpu.memory_space<vmem>>, vector<128x128xbf16>
    %cst_209 = arith.constant dense<0.000000e+00> : vector<2x128xf32>
    %797 = tpu.matmul %795, %796, %cst_209 {dimension_numbers = #tpu.dot_dimension_numbers<[1], [0], [0], [1], [0, 0, 1, 1], [], []>} : vector<2x128xbf16>, vector<128x128xbf16>, vector<2x128xf32> -> vector<2x128xf32>
    %c0_210 = arith.constant 0 : index
    %c0_211 = arith.constant 0 : index
    %798 = vector.load %arg15[%c0_210, %c0_211] : memref<1x128xf32, #tpu.memory_space<vmem>>, vector<1x128xf32>
    %799 = vector.broadcast %798 : vector<1x128xf32> to vector<2x128xf32>
    %800 = arith.addf %797, %799 : vector<2x128xf32>
    %cst_212 = arith.constant 0.000000e+00 : f32
    %801 = vector.broadcast %cst_212 : f32 to vector<2x128xf32>
    %802 = arith.maximumf %800, %801 : vector<2x128xf32>
    %803 = arith.truncf %802 : vector<2x128xf32> to vector<2x128xbf16>
    %c0_213 = arith.constant 0 : index
    %c0_214 = arith.constant 0 : index
    %804 = vector.load %arg16[%c0_213, %c0_214] : memref<128x128xbf16, #tpu.memory_space<vmem>>, vector<128x128xbf16>
    %cst_215 = arith.constant dense<0.000000e+00> : vector<2x128xf32>
    %805 = tpu.matmul %803, %804, %cst_215 {dimension_numbers = #tpu.dot_dimension_numbers<[1], [0], [0], [1], [0, 0, 1, 1], [], []>} : vector<2x128xbf16>, vector<128x128xbf16>, vector<2x128xf32> -> vector<2x128xf32>
    %c0_216 = arith.constant 0 : index
    %c0_217 = arith.constant 0 : index
    %806 = vector.load %arg17[%c0_216, %c0_217] : memref<1x128xf32, #tpu.memory_space<vmem>>, vector<1x128xf32>
    %807 = vector.broadcast %806 : vector<1x128xf32> to vector<2x128xf32>
    %808 = arith.addf %805, %807 : vector<2x128xf32>
    %cst_218 = arith.constant 0.000000e+00 : f32
    %809 = vector.broadcast %cst_218 : f32 to vector<2x128xf32>
    %810 = arith.maximumf %808, %809 : vector<2x128xf32>
    %811 = arith.truncf %810 : vector<2x128xf32> to vector<2x128xbf16>
    %c0_219 = arith.constant 0 : index
    %c0_220 = arith.constant 0 : index
    %812 = vector.load %arg18[%c0_219, %c0_220] : memref<128x128xbf16, #tpu.memory_space<vmem>>, vector<128x128xbf16>
    %cst_221 = arith.constant dense<0.000000e+00> : vector<2x128xf32>
    %813 = tpu.matmul %811, %812, %cst_221 {dimension_numbers = #tpu.dot_dimension_numbers<[1], [0], [0], [1], [0, 0, 1, 1], [], []>} : vector<2x128xbf16>, vector<128x128xbf16>, vector<2x128xf32> -> vector<2x128xf32>
    %c0_222 = arith.constant 0 : index
    %c0_223 = arith.constant 0 : index
    %814 = vector.load %arg19[%c0_222, %c0_223] : memref<1x128xf32, #tpu.memory_space<vmem>>, vector<1x128xf32>
    %815 = vector.broadcast %814 : vector<1x128xf32> to vector<2x128xf32>
    %816 = arith.addf %813, %815 : vector<2x128xf32>
    %cst_224 = arith.constant 0.000000e+00 : f32
    %817 = vector.broadcast %cst_224 : f32 to vector<2x128xf32>
    %818 = arith.maximumf %816, %817 : vector<2x128xf32>
    %819 = arith.truncf %818 : vector<2x128xf32> to vector<2x128xbf16>
    %c0_225 = arith.constant 0 : index
    %c0_226 = arith.constant 0 : index
    %820 = vector.load %arg20[%c0_225, %c0_226] : memref<128x128xbf16, #tpu.memory_space<vmem>>, vector<128x128xbf16>
    %cst_227 = arith.constant dense<0.000000e+00> : vector<2x128xf32>
    %821 = tpu.matmul %819, %820, %cst_227 {dimension_numbers = #tpu.dot_dimension_numbers<[1], [0], [0], [1], [0, 0, 1, 1], [], []>} : vector<2x128xbf16>, vector<128x128xbf16>, vector<2x128xf32> -> vector<2x128xf32>
    %c0_228 = arith.constant 0 : index
    %c0_229 = arith.constant 0 : index
    %822 = vector.load %arg21[%c0_228, %c0_229] : memref<1x128xf32, #tpu.memory_space<vmem>>, vector<1x128xf32>
    %823 = vector.broadcast %822 : vector<1x128xf32> to vector<2x128xf32>
    %824 = arith.addf %821, %823 : vector<2x128xf32>
    %825 = arith.negf %824 : vector<2x128xf32>
    %826 = math.exp %825 : vector<2x128xf32>
    %cst_230 = arith.constant 1.000000e+00 : f32
    %827 = vector.broadcast %cst_230 : f32 to vector<2x128xf32>
    %828 = arith.addf %827, %826 : vector<2x128xf32>
    %829 = arith.divf %827, %828 : vector<2x128xf32>
    %c0_231 = arith.constant 0 : index
    %c0_232 = arith.constant 0 : index
    %830 = vector.load %arg22[%c0_231, %c0_232] : memref<2x128xf32, #tpu.memory_space<vmem>>, vector<2x128xf32>
    tpu.vector_store %arg22[%c0_231, %c0_232], %829 {strides = array<i32>} : memref<2x128xf32, #tpu.memory_space<vmem>>, vector<2x128xf32>,
    return
  }
}

</mosaic_0001>

<llo_original>
// kernel: bilstm_forward.1
$region0: #{bilstm_forward.1}
  #allocation0 [shape = 'u32[]', space=smem, size = 0x4, offset = 0x4, fixed_abs, tag = 'smem constant byte address 0x4 - core index']
  #allocation1 [shape = 'u32[72,128]{1,0:T(1,128)}', space=vmem, size = 0x9000, scoped, tag = 'internal scratch']
  #allocation2 [shape = 'f32[16,256]{1,0:T(8,128)}', space=vmem, size = 0x4000, scoped, tag = 'scratch operand']
  %s0 = inlined_call_operand.vmem [shape: bf16[16,8], index: 0, kind: input, shape index: {}]
  %s1 = inlined_call_operand.vmem [shape: bf16[8,512], index: 1, kind: input, shape index: {}]
  %s2 = inlined_call_operand.hbm [shape: bf16[128,512], index: 2, kind: input, shape index: {}]
  %s3 = inlined_call_operand.vmem [shape: f32[1,512], index: 3, kind: input, shape index: {}]
  %s4 = inlined_call_operand.vmem [shape: bf16[8,512], index: 4, kind: input, shape index: {}]
  %s5 = inlined_call_operand.hbm [shape: bf16[128,512], index: 5, kind: input, shape index: {}]
  %s6 = inlined_call_operand.vmem [shape: f32[1,512], index: 6, kind: input, shape index: {}]
  %s7 = inlined_call_operand.hbm [shape: bf16[256,512], index: 7, kind: input, shape index: {}]
  %s8 = inlined_call_operand.hbm [shape: bf16[128,512], index: 8, kind: input, shape index: {}]
  %s9 = inlined_call_operand.vmem [shape: f32[1,512], index: 9, kind: input, shape index: {}]
  %s10 = inlined_call_operand.hbm [shape: bf16[256,512], index: 10, kind: input, shape index: {}]
  %s11 = inlined_call_operand.vmem [shape: f32[1,512], index: 11, kind: input, shape index: {}]
  %s12 = inlined_call_operand.hbm [shape: bf16[256,128], index: 12, kind: input, shape index: {}]
  %s13 = inlined_call_operand.vmem [shape: f32[1,128], index: 13, kind: input, shape index: {}]
  %s14 = inlined_call_operand.hbm [shape: bf16[128,128], index: 14, kind: input, shape index: {}]
  %s15 = inlined_call_operand.vmem [shape: f32[1,128], index: 15, kind: input, shape index: {}]
  %s16 = inlined_call_operand.hbm [shape: bf16[128,128], index: 16, kind: input, shape index: {}]
  %s17 = inlined_call_operand.vmem [shape: f32[1,128], index: 17, kind: input, shape index: {}]
  %s18 = inlined_call_operand.hbm [shape: bf16[128,128], index: 18, kind: input, shape index: {}]
  %s19 = inlined_call_operand.vmem [shape: f32[1,128], index: 19, kind: input, shape index: {}]
  %s20 = inlined_call_operand.hbm [shape: bf16[128,128], index: 20, kind: input, shape index: {}]
  %s21 = inlined_call_operand.vmem [shape: f32[1,128], index: 21, kind: input, shape index: {}]
  %s22 = inlined_call_operand.vmem [shape: f32[2,128], index: 22, kind: output, shape index: {}]
  %s23 = sld [smem:[#allocation0]]
  $region138: #{bilstm_forward.1} parent=0
    _
  %s25 = ssub.s32 1, %s23
  %s26 = scalar_select 0, %s25, %s23
  $region1: #{bilstm_forward.1} parent=0
    #allocation3 [shape = 'u8[131072]{0}', space=vmem, size = 0x20000, scoped, tag = 'input window, operand 2, single buffered']
    #allocation4 [shape = 's32[1]{0}', space=sflag, size = 0x4, scoped, tag = 'scoped memory for bilstm_forward.1']
    #allocation5 [shape = 'u8[131072]{0}', space=vmem, size = 0x20000, scoped, tag = 'input window, operand 5, single buffered']
    #allocation6 [shape = 's32[1]{0}', space=sflag, size = 0x4, scoped, tag = 'scoped memory for bilstm_forward.1']
    #allocation7 [shape = 'u8[262144]{0}', space=vmem, size = 0x40000, scoped, tag = 'input window, operand 7, single buffered']
    #allocation8 [shape = 'u8[131072]{0}', space=vmem, size = 0x20000, scoped, tag = 'input window, operand 8, single buffered']
    #allocation9 [shape = 's32[1]{0}', space=sflag, size = 0x4, scoped, tag = 'scoped memory for bilstm_forward.1']
    #allocation10 [shape = 'u8[262144]{0}', space=vmem, size = 0x40000, scoped, tag = 'input window, operand 10, single buffered']
    #allocation11 [shape = 'u8[65536]{0}', space=vmem, size = 0x10000, scoped, tag = 'input window, operand 12, single buffered']
    #allocation12 [shape = 's32[1]{0}', space=sflag, size = 0x4, scoped, tag = 'scoped memory for bilstm_forward.1']
    #allocation13 [shape = 'u8[32768]{0}', space=vmem, size = 0x8000, scoped, tag = 'input window, operand 14, single buffered']
    #allocation14 [shape = 'u8[32768]{0}', space=vmem, size = 0x8000, scoped, tag = 'input window, operand 16, single buffered']
    #allocation15 [shape = 's32[1]{0}', space=sflag, size = 0x4, scoped, tag = 'scoped memory for bilstm_forward.1']
    #allocation16 [shape = 'u8[32768]{0}', space=vmem, size = 0x8000, scoped, tag = 'input window, operand 18, single buffered']
    #allocation17 [shape = 'u8[32768]{0}', space=vmem, size = 0x8000, scoped, tag = 'input window, operand 20, single buffered']
    #allocation18 [shape = 's32[1]{0}', space=sflag, size = 0x4, scoped, tag = 'scoped memory for bilstm_forward.1']
    %27 = vsyncpa [#allocation4], 0
    %28 = vsyncpa [#allocation6], 0
    %29 = vsyncpa [#allocation9], 0
    %30 = vsyncpa [#allocation12], 0
    %31 = vsyncpa [#allocation15], 0
    %32 = vsyncpa [#allocation18], 0
    // Predicated region
    $region2: #{bilstm_forward.1} parent=1 // pred_check
      _
    $region3: #{bilstm_forward.1} parent=1 // pred_check_branch
      %34 = sbr.rel (0) target = $region5
    $region4: #{bilstm_forward.1} parent=1 // pred_region
      _
    $region5: #{bilstm_forward.1} parent=1 // pred_fallthru
      _
    // Predicated region
    $region6: #{bilstm_forward.1} parent=1 // pred_check
      _
    $region7: #{bilstm_forward.1} parent=1 // pred_check_branch
      %36 = sbr.rel (0) target = $region9
    $region8: #{bilstm_forward.1} parent=1 // pred_region
      _
    $region9: #{bilstm_forward.1} parent=1 // pred_fallthru
      _
    // Predicated region
    $region10: #{bilstm_forward.1} parent=1 // pred_check
      _
    $region11: #{bilstm_forward.1} parent=1 // pred_check_branch
      %38 = sbr.rel (0) target = $region13
    $region12: #{bilstm_forward.1} parent=1 // pred_region
      %40 = vsyncadd [#allocation4], 0
      %s41 = sshll.u32 %s2, 4
      %s42 = int_to_ptr.hbm [resolvable:$true] %s41
      %s43 = sshll.u32 [#allocation3], 4
      %s44 = int_to_ptr.vmem [resolvable:$true] %s43
      %49 = dma.hbm_to_vmem [thread:$0]  %s42, 4096, %s44, [#allocation4], 256, 256, 16
    $region13: #{bilstm_forward.1} parent=1 // pred_fallthru
      _
    // Predicated region
    $region14: #{bilstm_forward.1} parent=1 // pred_check
      _
    $region15: #{bilstm_forward.1} parent=1 // pred_check_branch
      %51 = sbr.rel (0) target = $region17
    $region16: #{bilstm_forward.1} parent=1 // pred_region
      _
    $region17: #{bilstm_forward.1} parent=1 // pred_fallthru
      _
    // Predicated region
    $region18: #{bilstm_forward.1} parent=1 // pred_check
      _
    $region19: #{bilstm_forward.1} parent=1 // pred_check_branch
      %53 = sbr.rel (0) target = $region21
    $region20: #{bilstm_forward.1} parent=1 // pred_region
      _
    $region21: #{bilstm_forward.1} parent=1 // pred_fallthru
      _
    // Predicated region
    $region22: #{bilstm_forward.1} parent=1 // pred_check
      _
    $region23: #{bilstm_forward.1} parent=1 // pred_check_branch
      %55 = sbr.rel (0) target = $region25
    $region24: #{bilstm_forward.1} parent=1 // pred_region
      %57 = vsyncadd [#allocation6], 0
      %s58 = sshll.u32 %s5, 4
      %s59 = int_to_ptr.hbm [resolvable:$true] %s58
      %s60 = sshll.u32 [#allocation5], 4
      %s61 = int_to_ptr.vmem [resolvable:$true] %s60
      %66 = dma.hbm_to_vmem [thread:$0]  %s59, 4096, %s61, [#allocation6], 256, 256, 16
    $region25: #{bilstm_forward.1} parent=1 // pred_fallthru
      _
    // Predicated region
    $region26: #{bilstm_forward.1} parent=1 // pred_check
      _
    $region27: #{bilstm_forward.1} parent=1 // pred_check_branch
      %68 = sbr.rel (0) target = $region29
    $region28: #{bilstm_forward.1} parent=1 // pred_region
      _
    $region29: #{bilstm_forward.1} parent=1 // pred_fallthru
      _
    // Predicated region
    $region30: #{bilstm_forward.1} parent=1 // pred_check
      _
    $region31: #{bilstm_forward.1} parent=1 // pred_check_branch
      %70 = sbr.rel (0) target = $region33
    $region32: #{bilstm_forward.1} parent=1 // pred_region
      %72 = vsyncadd [#allocation6], 0
      %s73 = sshll.u32 %s7, 4
      %s74 = int_to_ptr.hbm [resolvable:$true] %s73
      %s75 = sshll.u32 [#allocation7], 4
      %s76 = int_to_ptr.vmem [resolvable:$true] %s75
      %81 = dma.hbm_to_vmem [thread:$0]  %s74, 8192, %s76, [#allocation6], 256, 256, 16
    $region33: #{bilstm_forward.1} parent=1 // pred_fallthru
      _
    // Predicated region
    $region34: #{bilstm_forward.1} parent=1 // pred_check
      _
    $region35: #{bilstm_forward.1} parent=1 // pred_check_branch
      %83 = sbr.rel (0) target = $region37
    $region36: #{bilstm_forward.1} parent=1 // pred_region
      %85 = vsyncadd [#allocation9], 0
      %s86 = sshll.u32 %s8, 4
      %s87 = int_to_ptr.hbm [resolvable:$true] %s86
      %s88 = sshll.u32 [#allocation8], 4
      %s89 = int_to_ptr.vmem [resolvable:$true] %s88
      %94 = dma.hbm_to_vmem [thread:$0]  %s87, 4096, %s89, [#allocation9], 256, 256, 16
    $region37: #{bilstm_forward.1} parent=1 // pred_fallthru
      _
    // Predicated region
    $region38: #{bilstm_forward.1} parent=1 // pred_check
      _
    $region39: #{bilstm_forward.1} parent=1 // pred_check_branch
      %96 = sbr.rel (0) target = $region41
    $region40: #{bilstm_forward.1} parent=1 // pred_region
      _
    $region41: #{bilstm_forward.1} parent=1 // pred_fallthru
      _
    // Predicated region
    $region42: #{bilstm_forward.1} parent=1 // pred_check
      _
    $region43: #{bilstm_forward.1} parent=1 // pred_check_branch
      %98 = sbr.rel (0) target = $region45
    $region44: #{bilstm_forward.1} parent=1 // pred_region
      %100 = vsyncadd [#allocation9], 0
      %s101 = sshll.u32 %s10, 4
      %s102 = int_to_ptr.hbm [resolvable:$true] %s101
      %s103 = sshll.u32 [#allocation10], 4
      %s104 = int_to_ptr.vmem [resolvable:$true] %s103
      %109 = dma.hbm_to_vmem [thread:$0]  %s102, 8192, %s104, [#allocation9], 256, 256, 16
    $region45: #{bilstm_forward.1} parent=1 // pred_fallthru
      _
    // Predicated region
    $region46: #{bilstm_forward.1} parent=1 // pred_check
      _
    $region47: #{bilstm_forward.1} parent=1 // pred_check_branch
      %111 = sbr.rel (0) target = $region49
    $region48: #{bilstm_forward.1} parent=1 // pred_region
      _
    $region49: #{bilstm_forward.1} parent=1 // pred_fallthru
      _
    // Predicated region
    $region50: #{bilstm_forward.1} parent=1 // pred_check
      _
    $region51: #{bilstm_forward.1} parent=1 // pred_check_branch
      %113 = sbr.rel (0) target = $region53
    $region52: #{bilstm_forward.1} parent=1 // pred_region
      %115 = vsyncadd [#allocation12], 0
      %s116 = sshll.u32 %s12, 4
      %s117 = int_to_ptr.hbm [resolvable:$true] %s116
      %s118 = sshll.u32 [#allocation11], 4
      %s119 = int_to_ptr.vmem [resolvable:$true] %s118
      %124 = dma.hbm_to_vmem [thread:$0]  %s117, 2048, %s119, [#allocation12], 64, 64, 4
    $region53: #{bilstm_forward.1} parent=1 // pred_fallthru
      _
    // Predicated region
    $region54: #{bilstm_forward.1} parent=1 // pred_check
      _
    $region55: #{bilstm_forward.1} parent=1 // pred_check_branch
      %126 = sbr.rel (0) target = $region57
    $region56: #{bilstm_forward.1} parent=1 // pred_region
      _
    $region57: #{bilstm_forward.1} parent=1 // pred_fallthru
      _
    // Predicated region
    $region58: #{bilstm_forward.1} parent=1 // pred_check
      _
    $region59: #{bilstm_forward.1} parent=1 // pred_check_branch
      %128 = sbr.rel (0) target = $region61
    $region60: #{bilstm_forward.1} parent=1 // pred_region
      %130 = vsyncadd [#allocation12], 0
      %s131 = sshll.u32 %s14, 4
      %s132 = int_to_ptr.hbm [resolvable:$true] %s131
      %s133 = sshll.u32 [#allocation13], 4
      %s134 = int_to_ptr.vmem [resolvable:$true] %s133
      %139 = dma.hbm_to_vmem [thread:$0]  %s132, 1024, %s134, [#allocation12], 64, 64, 4
    $region61: #{bilstm_forward.1} parent=1 // pred_fallthru
      _
    // Predicated region
    $region62: #{bilstm_forward.1} parent=1 // pred_check
      _
    $region63: #{bilstm_forward.1} parent=1 // pred_check_branch
      %141 = sbr.rel (0) target = $region65
    $region64: #{bilstm_forward.1} parent=1 // pred_region
      _
    $region65: #{bilstm_forward.1} parent=1 // pred_fallthru
      _
    // Predicated region
    $region66: #{bilstm_forward.1} parent=1 // pred_check
      _
    $region67: #{bilstm_forward.1} parent=1 // pred_check_branch
      %143 = sbr.rel (0) target = $region69
    $region68: #{bilstm_forward.1} parent=1 // pred_region
      %145 = vsyncadd [#allocation15], 0
      %s146 = sshll.u32 %s16, 4
      %s147 = int_to_ptr.hbm [resolvable:$true] %s146
      %s148 = sshll.u32 [#allocation14], 4
      %s149 = int_to_ptr.vmem [resolvable:$true] %s148
      %154 = dma.hbm_to_vmem [thread:$0]  %s147, 1024, %s149, [#allocation15], 64, 64, 4
    $region69: #{bilstm_forward.1} parent=1 // pred_fallthru
      _
    // Predicated region
    $region70: #{bilstm_forward.1} parent=1 // pred_check
      _
    $region71: #{bilstm_forward.1} parent=1 // pred_check_branch
      %156 = sbr.rel (0) target = $region73
    $region72: #{bilstm_forward.1} parent=1 // pred_region
      _
    $region73: #{bilstm_forward.1} parent=1 // pred_fallthru
      _
    // Predicated region
    $region74: #{bilstm_forward.1} parent=1 // pred_check
      _
    $region75: #{bilstm_forward.1} parent=1 // pred_check_branch
      %158 = sbr.rel (0) target = $region77
    $region76: #{bilstm_forward.1} parent=1 // pred_region
      %160 = vsyncadd [#allocation15], 0
      %s161 = sshll.u32 %s18, 4
      %s162 = int_to_ptr.hbm [resolvable:$true] %s161
      %s163 = sshll.u32 [#allocation16], 4
      %s164 = int_to_ptr.vmem [resolvable:$true] %s163
      %169 = dma.hbm_to_vmem [thread:$0]  %s162, 1024, %s164, [#allocation15], 64, 64, 4
    $region77: #{bilstm_forward.1} parent=1 // pred_fallthru
      _
    // Predicated region
    $region78: #{bilstm_forward.1} parent=1 // pred_check
      _
    $region79: #{bilstm_forward.1} parent=1 // pred_check_branch
      %171 = sbr.rel (0) target = $region81
    $region80: #{bilstm_forward.1} parent=1 // pred_region
      _
    $region81: #{bilstm_forward.1} parent=1 // pred_fallthru
      _
    // Predicated region
    $region82: #{bilstm_forward.1} parent=1 // pred_check
      _
    $region83: #{bilstm_forward.1} parent=1 // pred_check_branch
      %173 = sbr.rel (0) target = $region85
    $region84: #{bilstm_forward.1} parent=1 // pred_region
      %175 = vsyncadd [#allocation18], 0
      %s176 = sshll.u32 %s20, 4
      %s177 = int_to_ptr.hbm [resolvable:$true] %s176
      %s178 = sshll.u32 [#allocation17], 4
      %s179 = int_to_ptr.vmem [resolvable:$true] %s178
      %184 = dma.hbm_to_vmem [thread:$0]  %s177, 1024, %s179, [#allocation18], 64, 64, 4
    $region85: #{bilstm_forward.1} parent=1 // pred_fallthru
      _
    // Predicated region
    $region86: #{bilstm_forward.1} parent=1 // pred_check
      _
    $region87: #{bilstm_forward.1} parent=1 // pred_check_branch
      %186 = sbr.rel (0) target = $region89
    $region88: #{bilstm_forward.1} parent=1 // pred_region
      _
    $region89: #{bilstm_forward.1} parent=1 // pred_fallthru
      _
    // Predicated region
    $region90: #{bilstm_forward.1} parent=1 // pred_check
      _
    $region91: #{bilstm_forward.1} parent=1 // pred_check_branch
      %188 = sbr.rel (0) target = $region93
    $region92: #{bilstm_forward.1} parent=1 // pred_region
      %190 = dma.done [#allocation4], 4096
    $region93: #{bilstm_forward.1} parent=1 // pred_fallthru
      _
    // Predicated region
    $region94: #{bilstm_forward.1} parent=1 // pred_check
      _
    $region95: #{bilstm_forward.1} parent=1 // pred_check_branch
      %192 = sbr.rel (0) target = $region97
    $region96: #{bilstm_forward.1} parent=1 // pred_region
      %194 = dma.done [#allocation6], 4096
    $region97: #{bilstm_forward.1} parent=1 // pred_fallthru
      _
    // Predicated region
    $region98: #{bilstm_forward.1} parent=1 // pred_check
      _
    $region99: #{bilstm_forward.1} parent=1 // pred_check_branch
      %196 = sbr.rel (0) target = $region101
    $region100: #{bilstm_forward.1} parent=1 // pred_region
      %198 = dma.done [#allocation6], 8192
    $region101: #{bilstm_forward.1} parent=1 // pred_fallthru
      _
    // Predicated region
    $region102: #{bilstm_forward.1} parent=1 // pred_check
      _
    $region103: #{bilstm_forward.1} parent=1 // pred_check_branch
      %200 = sbr.rel (0) target = $region105
    $region104: #{bilstm_forward.1} parent=1 // pred_region
      %202 = dma.done [#allocation9], 4096
    $region105: #{bilstm_forward.1} parent=1 // pred_fallthru
      _
    // Predicated region
    $region106: #{bilstm_forward.1} parent=1 // pred_check
      _
    $region107: #{bilstm_forward.1} parent=1 // pred_check_branch
      %204 = sbr.rel (0) target = $region109
    $region108: #{bilstm_forward.1} parent=1 // pred_region
      %206 = dma.done [#allocation9], 8192
    $region109: #{bilstm_forward.1} parent=1 // pred_fallthru
      _
    // Predicated region
    $region110: #{bilstm_forward.1} parent=1 // pred_check
      _
    $region111: #{bilstm_forward.1} parent=1 // pred_check_branch
      %208 = sbr.rel (0) target = $region113
    $region112: #{bilstm_forward.1} parent=1 // pred_region
      %210 = dma.done [#allocation12], 2048
    $region113: #{bilstm_forward.1} parent=1 // pred_fallthru
      _
    // Predicated region
    $region114: #{bilstm_forward.1} parent=1 // pred_check
      _
    $region115: #{bilstm_forward.1} parent=1 // pred_check_branch
      %212 = sbr.rel (0) target = $region117
    $region116: #{bilstm_forward.1} parent=1 // pred_region
      %214 = dma.done [#allocation12], 1024
    $region117: #{bilstm_forward.1} parent=1 // pred_fallthru
      _
    // Predicated region
    $region118: #{bilstm_forward.1} parent=1 // pred_check
      _
    $region119: #{bilstm_forward.1} parent=1 // pred_check_branch
      %216 = sbr.rel (0) target = $region121
    $region120: #{bilstm_forward.1} parent=1 // pred_region
      %218 = dma.done [#allocation15], 1024
    $region121: #{bilstm_forward.1} parent=1 // pred_fallthru
      _
    // Predicated region
    $region122: #{bilstm_forward.1} parent=1 // pred_check
      _
    $region123: #{bilstm_forward.1} parent=1 // pred_check_branch
      %220 = sbr.rel (0) target = $region125
    $region124: #{bilstm_forward.1} parent=1 // pred_region
      %222 = dma.done [#allocation15], 1024
    $region125: #{bilstm_forward.1} parent=1 // pred_fallthru
      _
    // Predicated region
    $region126: #{bilstm_forward.1} parent=1 // pred_check
      _
    $region127: #{bilstm_forward.1} parent=1 // pred_check_branch
      %224 = sbr.rel (0) target = $region129
    $region128: #{bilstm_forward.1} parent=1 // pred_region
      %226 = dma.done [#allocation18], 1024
    $region129: #{bilstm_forward.1} parent=1 // pred_fallthru
      _
    %v228 = vld [vmem:[%s0] sm:$0xf]
    %v229 = vld [vmem:[%s0 + $0x4] sm:$0xf]
    %v230 = vld [vmem:[%s1] sm:$0xff]
    %v231 = vld [vmem:[%s1 + $0x8] sm:$0xff]
    %v232 = vld [vmem:[%s3] sm:$0xf]
    %v234 = vperm.slane %v232, 0
    %v235 = vperm.slane %v232, 1
    %v236 = vperm.slane %v232, 2
    %v237 = vperm.slane %v232, 3
    %v244 = vunpack.c.l.b16 %v228
    %v245 = vunpack.c.l.b16 %v229
    %v246 = vpack.c.b16 %v245, %v244
    %v249 = vunpack.c.l.b16 %v230
    %v250 = vunpack.c.h.b16 %v230
    %v251 = vunpack.c.l.b16 %v231
    %v252 = vunpack.c.h.b16 %v231
    %v253 = vpack.c.b16 %v249, %v249
    %v254 = vpack.c.b16 %v250, %v250
    %v255 = vpack.c.b16 %v251, %v251
    %v256 = vpack.c.b16 %v252, %v252
    %vm257 = vcmask 64512
    %v259 = vsel %vm257, %v246, 0
    %vm261 = vcmask 1043456
    %v263 = vsel %vm261, %v253, 0
    %v266 = vsel %vm261, %v254, 0
    %v269 = vsel %vm261, %v255, 0
    %v272 = vsel %vm261, %v256, 0
    %274 = vmatpush.bf16.msra.mxu0 0
    %275 = vmatpush.bf16.msra.mxu0 0
    %276 = vmatpush.bf16.msra.mxu0 0
    %277 = vmatpush.bf16.msra.mxu0 0
    %278 = vmatpush.bf16.msra.mxu0 0
    %279 = vmatpush.bf16.msra.mxu0 0
    %280 = vmatpush.bf16.msra.mxu0 0
    %281 = vmatpush.bf16.msra.mxu0 %v263
    %282 = vmatmul.bf16.gmra.mxu0 %v259
    %v283 = vpop.f32.mrf.mxu0
    %v284 = vadd.f32 %v234, %v283
    %v285 = vpop.f32.mrf.mxu0
    %v286 = vadd.f32 %v234, %v285
    %287 = vdwg.mxu0
    %288 = vmatpush.bf16.msra.mxu0 0
    %289 = vmatpush.bf16.msra.mxu0 0
    %290 = vmatpush.bf16.msra.mxu0 0
    %291 = vmatpush.bf16.msra.mxu0 0
    %292 = vmatpush.bf16.msra.mxu0 0
    %293 = vmatpush.bf16.msra.mxu0 0
    %294 = vmatpush.bf16.msra.mxu0 0
    %295 = vmatpush.bf16.msra.mxu0 %v266
    %296 = vmatmul.bf16.gmra.mxu0 %v259
    %v297 = vpop.f32.mrf.mxu0
    %v298 = vadd.f32 %v235, %v297
    %v299 = vpop.f32.mrf.mxu0
    %v300 = vadd.f32 %v235, %v299
    %301 = vdwg.mxu0
    %302 = vmatpush.bf16.msra.mxu0 0
    %303 = vmatpush.bf16.msra.mxu0 0
    %304 = vmatpush.bf16.msra.mxu0 0
    %305 = vmatpush.bf16.msra.mxu0 0
    %306 = vmatpush.bf16.msra.mxu0 0
    %307 = vmatpush.bf16.msra.mxu0 0
    %308 = vmatpush.bf16.msra.mxu0 0
    %309 = vmatpush.bf16.msra.mxu0 %v269
    %310 = vmatmul.bf16.gmra.mxu0 %v259
    %v311 = vpop.f32.mrf.mxu0
    %v312 = vadd.f32 %v236, %v311
    %v313 = vpop.f32.mrf.mxu0
    %v314 = vadd.f32 %v236, %v313
    %315 = vdwg.mxu0
    %316 = vmatpush.bf16.msra.mxu0 0
    %317 = vmatpush.bf16.msra.mxu0 0
    %318 = vmatpush.bf16.msra.mxu0 0
    %319 = vmatpush.bf16.msra.mxu0 0
    %320 = vmatpush.bf16.msra.mxu0 0
    %321 = vmatpush.bf16.msra.mxu0 0
    %322 = vmatpush.bf16.msra.mxu0 0
    %323 = vmatpush.bf16.msra.mxu0 %v272
    %324 = vmatmul.bf16.gmra.mxu0 %v259
    %v325 = vpop.f32.mrf.mxu0
    %v326 = vadd.f32 %v237, %v325
    %v327 = vpop.f32.mrf.mxu0
    %v328 = vadd.f32 %v237, %v327
    %329 = vdwg.mxu0
    %v330 = vld [vmem:[%s4] sm:$0xff]
    %v331 = vld [vmem:[%s4 + $0x8] sm:$0xff]
    %v332 = vld [vmem:[%s6] sm:$0xf]
    %v334 = vperm.slane %v332, 0
    %v335 = vperm.slane %v332, 1
    %v336 = vperm.slane %v332, 2
    %v337 = vperm.slane %v332, 3
    %v344 = vunpack.c.l.b16 %v330
    %v345 = vunpack.c.h.b16 %v330
    %v346 = vunpack.c.l.b16 %v331
    %v347 = vunpack.c.h.b16 %v331
    %v348 = vpack.c.b16 %v344, %v344
    %v349 = vpack.c.b16 %v345, %v345
    %v350 = vpack.c.b16 %v346, %v346
    %v351 = vpack.c.b16 %v347, %v347
    %v353 = vsel %vm261, %v348, 0
    %v356 = vsel %vm261, %v349, 0
    %v359 = vsel %vm261, %v350, 0
    %v362 = vsel %vm261, %v351, 0
    %364 = vmatpush.bf16.msra.mxu0 0
    %365 = vmatpush.bf16.msra.mxu0 0
    %366 = vmatpush.bf16.msra.mxu0 0
    %367 = vmatpush.bf16.msra.mxu0 0
    %368 = vmatpush.bf16.msra.mxu0 0
    %369 = vmatpush.bf16.msra.mxu0 0
    %370 = vmatpush.bf16.msra.mxu0 0
    %371 = vmatpush.bf16.msra.mxu0 %v353
    %372 = vmatmul.bf16.gmra.mxu0 %v259
    %v373 = vpop.f32.mrf.mxu0
    %v374 = vadd.f32 %v334, %v373
    %v375 = vpop.f32.mrf.mxu0
    %v376 = vadd.f32 %v334, %v375
    %377 = vdwg.mxu0
    %378 = vmatpush.bf16.msra.mxu0 0
    %379 = vmatpush.bf16.msra.mxu0 0
    %380 = vmatpush.bf16.msra.mxu0 0
    %381 = vmatpush.bf16.msra.mxu0 0
    %382 = vmatpush.bf16.msra.mxu0 0
    %383 = vmatpush.bf16.msra.mxu0 0
    %384 = vmatpush.bf16.msra.mxu0 0
    %385 = vmatpush.bf16.msra.mxu0 %v356
    %386 = vmatmul.bf16.gmra.mxu0 %v259
    %v387 = vpop.f32.mrf.mxu0
    %v388 = vadd.f32 %v335, %v387
    %v389 = vpop.f32.mrf.mxu0
    %v390 = vadd.f32 %v335, %v389
    %391 = vdwg.mxu0
    %392 = vmatpush.bf16.msra.mxu0 0
    %393 = vmatpush.bf16.msra.mxu0 0
    %394 = vmatpush.bf16.msra.mxu0 0
    %395 = vmatpush.bf16.msra.mxu0 0
    %396 = vmatpush.bf16.msra.mxu0 0
    %397 = vmatpush.bf16.msra.mxu0 0
    %398 = vmatpush.bf16.msra.mxu0 0
    %399 = vmatpush.bf16.msra.mxu0 %v359
    %400 = vmatmul.bf16.gmra.mxu0 %v259
    %v401 = vpop.f32.mrf.mxu0
    %v402 = vadd.f32 %v336, %v401
    %v403 = vpop.f32.mrf.mxu0
    %v404 = vadd.f32 %v336, %v403
    %405 = vdwg.mxu0
    %406 = vmatpush.bf16.msra.mxu0 0
    %407 = vmatpush.bf16.msra.mxu0 0
    %408 = vmatpush.bf16.msra.mxu0 0
    %409 = vmatpush.bf16.msra.mxu0 0
    %410 = vmatpush.bf16.msra.mxu0 0
    %411 = vmatpush.bf16.msra.mxu0 0
    %412 = vmatpush.bf16.msra.mxu0 0
    %413 = vmatpush.bf16.msra.mxu0 %v362
    %414 = vmatmul.bf16.gmra.mxu0 %v259
    %v415 = vpop.f32.mrf.mxu0
    %v416 = vadd.f32 %v337, %v415
    %v417 = vpop.f32.mrf.mxu0
    %v418 = vadd.f32 %v337, %v417
    %419 = vdwg.mxu0
    %v420 = vld [vmem:[#allocation3] sm:$0xff]
    %v421 = vld [vmem:[#allocation3 + $0x8] sm:$0xff]
    %v422 = vld [vmem:[#allocation3 + $0x10] sm:$0xff]
    %v423 = vld [vmem:[#allocation3 + $0x18] sm:$0xff]
    %v424 = vld [vmem:[#allocation3 + $0x20] sm:$0xff]
    %v425 = vld [vmem:[#allocation3 + $0x28] sm:$0xff]
    %v426 = vld [vmem:[#allocation3 + $0x30] sm:$0xff]
    %v427 = vld [vmem:[#allocation3 + $0x38] sm:$0xff]
    %v428 = vld [vmem:[#allocation3 + $0x40] sm:$0xff]
    %v429 = vld [vmem:[#allocation3 + $0x48] sm:$0xff]
    %v430 = vld [vmem:[#allocation3 + $0x50] sm:$0xff]
    %v431 = vld [vmem:[#allocation3 + $0x58] sm:$0xff]
    %v432 = vld [vmem:[#allocation3 + $0x60] sm:$0xff]
    %v433 = vld [vmem:[#allocation3 + $0x68] sm:$0xff]
    %v434 = vld [vmem:[#allocation3 + $0x70] sm:$0xff]
    %v435 = vld [vmem:[#allocation3 + $0x78] sm:$0xff]
    %v436 = vld [vmem:[#allocation3 + $0x80] sm:$0xff]
    %v437 = vld [vmem:[#allocation3 + $0x88] sm:$0xff]
    %v438 = vld [vmem:[#allocation3 + $0x90] sm:$0xff]
    %v439 = vld [vmem:[#allocation3 + $0x98] sm:$0xff]
    %v440 = vld [vmem:[#allocation3 + $0xa0] sm:$0xff]
    %v441 = vld [vmem:[#allocation3 + $0xa8] sm:$0xff]
    %v442 = vld [vmem:[#allocation3 + $0xb0] sm:$0xff]
    %v443 = vld [vmem:[#allocation3 + $0xb8] sm:$0xff]
    %v444 = vld [vmem:[#allocation3 + $0xc0] sm:$0xff]
    %v445 = vld [vmem:[#allocation3 + $0xc8] sm:$0xff]
    %v446 = vld [vmem:[#allocation3 + $0xd0] sm:$0xff]
    %v447 = vld [vmem:[#allocation3 + $0xd8] sm:$0xff]
    %v448 = vld [vmem:[#allocation3 + $0xe0] sm:$0xff]
    %v449 = vld [vmem:[#allocation3 + $0xe8] sm:$0xff]
    %v450 = vld [vmem:[#allocation3 + $0xf0] sm:$0xff]
    %v451 = vld [vmem:[#allocation3 + $0xf8] sm:$0xff]
    %v484 = vunpack.c.l.b16 %v420
    %v485 = vunpack.c.h.b16 %v420
    %v486 = vunpack.c.l.b16 %v421
    %v487 = vunpack.c.h.b16 %v421
    %v488 = vunpack.c.l.b16 %v422
    %v489 = vunpack.c.h.b16 %v422
    %v490 = vunpack.c.l.b16 %v423
    %v491 = vunpack.c.h.b16 %v423
    %v492 = vunpack.c.l.b16 %v424
    %v493 = vunpack.c.h.b16 %v424
    %v494 = vunpack.c.l.b16 %v425
    %v495 = vunpack.c.h.b16 %v425
    %v496 = vunpack.c.l.b16 %v426
    %v497 = vunpack.c.h.b16 %v426
    %v498 = vunpack.c.l.b16 %v427
    %v499 = vunpack.c.h.b16 %v427
    %v500 = vunpack.c.l.b16 %v428
    %v501 = vunpack.c.h.b16 %v428
    %v502 = vunpack.c.l.b16 %v429
    %v503 = vunpack.c.h.b16 %v429
    %v504 = vunpack.c.l.b16 %v430
    %v505 = vunpack.c.h.b16 %v430
    %v506 = vunpack.c.l.b16 %v431
    %v507 = vunpack.c.h.b16 %v431
    %v508 = vunpack.c.l.b16 %v432
    %v509 = vunpack.c.h.b16 %v432
    %v510 = vunpack.c.l.b16 %v433
    %v511 = vunpack.c.h.b16 %v433
    %v512 = vunpack.c.l.b16 %v434
    %v513 = vunpack.c.h.b16 %v434
    %v514 = vunpack.c.l.b16 %v435
    %v515 = vunpack.c.h.b16 %v435
    %v516 = vunpack.c.l.b16 %v436
    %v517 = vunpack.c.h.b16 %v436
    %v518 = vunpack.c.l.b16 %v437
    %v519 = vunpack.c.h.b16 %v437
    %v520 = vunpack.c.l.b16 %v438
    %v521 = vunpack.c.h.b16 %v438
    %v522 = vunpack.c.l.b16 %v439
    %v523 = vunpack.c.h.b16 %v439
    %v524 = vunpack.c.l.b16 %v440
    %v525 = vunpack.c.h.b16 %v440
    %v526 = vunpack.c.l.b16 %v441
    %v527 = vunpack.c.h.b16 %v441
    %v528 = vunpack.c.l.b16 %v442
    %v529 = vunpack.c.h.b16 %v442
    %v530 = vunpack.c.l.b16 %v443
    %v531 = vunpack.c.h.b16 %v443
    %v532 = vunpack.c.l.b16 %v444
    %v533 = vunpack.c.h.b16 %v444
    %v534 = vunpack.c.l.b16 %v445
    %v535 = vunpack.c.h.b16 %v445
    %v536 = vunpack.c.l.b16 %v446
    %v537 = vunpack.c.h.b16 %v446
    %v538 = vunpack.c.l.b16 %v447
    %v539 = vunpack.c.h.b16 %v447
    %v540 = vunpack.c.l.b16 %v448
    %v541 = vunpack.c.h.b16 %v448
    %v542 = vunpack.c.l.b16 %v449
    %v543 = vunpack.c.h.b16 %v449
    %v544 = vunpack.c.l.b16 %v450
    %v545 = vunpack.c.h.b16 %v450
    %v546 = vunpack.c.l.b16 %v451
    %v547 = vunpack.c.h.b16 %v451
    %v548 = vpack.c.b16 %v488, %v484
    %v549 = vpack.c.b16 %v489, %v485
    %v550 = vpack.c.b16 %v490, %v486
    %v551 = vpack.c.b16 %v491, %v487
    %v552 = vpack.c.b16 %v496, %v492
    %v553 = vpack.c.b16 %v497, %v493
    %v554 = vpack.c.b16 %v498, %v494
    %v555 = vpack.c.b16 %v499, %v495
    %v556 = vpack.c.b16 %v504, %v500
    %v557 = vpack.c.b16 %v505, %v501
    %v558 = vpack.c.b16 %v506, %v502
    %v559 = vpack.c.b16 %v507, %v503
    %v560 = vpack.c.b16 %v512, %v508
    %v561 = vpack.c.b16 %v513, %v509
    %v562 = vpack.c.b16 %v514, %v510
    %v563 = vpack.c.b16 %v515, %v511
    %v564 = vpack.c.b16 %v520, %v516
    %v565 = vpack.c.b16 %v521, %v517
    %v566 = vpack.c.b16 %v522, %v518
    %v567 = vpack.c.b16 %v523, %v519
    %v568 = vpack.c.b16 %v528, %v524
    %v569 = vpack.c.b16 %v529, %v525
    %v570 = vpack.c.b16 %v530, %v526
    %v571 = vpack.c.b16 %v531, %v527
    %v572 = vpack.c.b16 %v536, %v532
    %v573 = vpack.c.b16 %v537, %v533
    %v574 = vpack.c.b16 %v538, %v534
    %v575 = vpack.c.b16 %v539, %v535
    %v576 = vpack.c.b16 %v544, %v540
    %v577 = vpack.c.b16 %v545, %v541
    %v578 = vpack.c.b16 %v546, %v542
    %v579 = vpack.c.b16 %v547, %v543
    %612 = vmatpush.bf16.msra.mxu0 %v576
    %613 = vmatpush.bf16.msra.mxu0 %v572
    %614 = vmatpush.bf16.msra.mxu0 %v568
    %615 = vmatpush.bf16.msra.mxu0 %v564
    %616 = vmatpush.bf16.msra.mxu0 %v560
    %617 = vmatpush.bf16.msra.mxu0 %v556
    %618 = vmatpush.bf16.msra.mxu0 %v552
    %619 = vmatpush.bf16.msra.mxu0 %v548
    %620 = vmatmul.bf16.gmra.mxu0 0
    %v621 = vpop.f32.mrf.mxu0
    %v622 = vadd.f32 0.0, %v621
    %v623 = vpop.f32.mrf.mxu0
    %624 = vdwg.mxu0
    %625 = vmatpush.bf16.msra.mxu0 %v577
    %626 = vmatpush.bf16.msra.mxu0 %v573
    %627 = vmatpush.bf16.msra.mxu0 %v569
    %628 = vmatpush.bf16.msra.mxu0 %v565
    %629 = vmatpush.bf16.msra.mxu0 %v561
    %630 = vmatpush.bf16.msra.mxu0 %v557
    %631 = vmatpush.bf16.msra.mxu0 %v553
    %632 = vmatpush.bf16.msra.mxu0 %v549
    %633 = vmatmul.bf16.gmra.mxu0 0
    %v634 = vpop.f32.mrf.mxu0
    %v635 = vadd.f32 0.0, %v634
    %v636 = vpop.f32.mrf.mxu0
    %637 = vdwg.mxu0
    %638 = vmatpush.bf16.msra.mxu0 %v578
    %639 = vmatpush.bf16.msra.mxu0 %v574
    %640 = vmatpush.bf16.msra.mxu0 %v570
    %641 = vmatpush.bf16.msra.mxu0 %v566
    %642 = vmatpush.bf16.msra.mxu0 %v562
    %643 = vmatpush.bf16.msra.mxu0 %v558
    %644 = vmatpush.bf16.msra.mxu0 %v554
    %645 = vmatpush.bf16.msra.mxu0 %v550
    %646 = vmatmul.bf16.gmra.mxu0 0
    %v647 = vpop.f32.mrf.mxu0
    %v648 = vadd.f32 0.0, %v647
    %v649 = vpop.f32.mrf.mxu0
    %650 = vdwg.mxu0
    %651 = vmatpush.bf16.msra.mxu0 %v579
    %652 = vmatpush.bf16.msra.mxu0 %v575
    %653 = vmatpush.bf16.msra.mxu0 %v571
    %654 = vmatpush.bf16.msra.mxu0 %v567
    %655 = vmatpush.bf16.msra.mxu0 %v563
    %656 = vmatpush.bf16.msra.mxu0 %v559
    %657 = vmatpush.bf16.msra.mxu0 %v555
    %658 = vmatpush.bf16.msra.mxu0 %v551
    %659 = vmatmul.bf16.gmra.mxu0 0
    %v660 = vpop.f32.mrf.mxu0
    %v661 = vadd.f32 0.0, %v660
    %v662 = vpop.f32.mrf.mxu0
    %663 = vdwg.mxu0
    %v664 = vadd.f32 %v284, %v622
    %v665 = vadd.f32 %v298, %v635
    %v666 = vadd.f32 %v312, %v648
    %v667 = vadd.f32 %v326, %v661
    %v668 = vxor.u32 %v664, 2147483648
    %v669 = vmul.f32 %v668, 1.442695
    %v670 = vpow.pop %v669
    %v671 = vadd.f32 %v670, 1.0
    %v672 = vrcp.pop %v671
    %v673 = vmul.f32 %v671, %v672
    %v674 = vsub.f32 1.0, %v673
    %v675 = vmul.f32 %v672, %v674
    %v676 = vadd.f32 %v672, %v675
    %vm677 = vweird.f32 %v671
    %vm678 = vweird.f32 %v672
    %vm679 = vmor %vm677, %vm678
    %v680 = vsel %vm679, %v672, %v676
    %v681 = vand.u32 2147483647, %v671
    %vm682 = vcmp.eq.f32.partialorder %v681, 8.507059e+37
    %v683 = vand.u32 %v671, 2147483648
    %v684 = vor.u32 1.1754944e-38, %v683
    %v685 = vsel %vm682, %v684, %v680
    %v686 = vmul.f32 1.0, %v685
    %v687 = vxor.u32 %v665, 2147483648
    %v688 = vmul.f32 %v687, 1.442695
    %v689 = vpow.pop %v688
    %v690 = vadd.f32 %v689, 1.0
    %v691 = vrcp.pop %v690
    %v692 = vmul.f32 %v690, %v691
    %v693 = vsub.f32 1.0, %v692
    %v694 = vmul.f32 %v691, %v693
    %v695 = vadd.f32 %v691, %v694
    %vm696 = vweird.f32 %v690
    %vm697 = vweird.f32 %v691
    %vm698 = vmor %vm696, %vm697
    %v699 = vsel %vm698, %v691, %v695
    %v700 = vand.u32 2147483647, %v690
    %vm701 = vcmp.eq.f32.partialorder %v700, 8.507059e+37
    %v702 = vand.u32 %v690, 2147483648
    %v703 = vor.u32 1.1754944e-38, %v702
    %v704 = vsel %vm701, %v703, %v699
    %v705 = vmul.f32 1.0, %v704
    %v706 = vtanh.pop %v666
    %v707 = vxor.u32 %v667, 2147483648
    %v708 = vmul.f32 %v707, 1.442695
    %v709 = vpow.pop %v708
    %v710 = vadd.f32 %v709, 1.0
    %v711 = vrcp.pop %v710
    %v712 = vmul.f32 %v710, %v711
    %v713 = vsub.f32 1.0, %v712
    %v714 = vmul.f32 %v711, %v713
    %v715 = vadd.f32 %v711, %v714
    %vm716 = vweird.f32 %v710
    %vm717 = vweird.f32 %v711
    %vm718 = vmor %vm716, %vm717
    %v719 = vsel %vm718, %v711, %v715
    %v720 = vand.u32 2147483647, %v710
    %vm721 = vcmp.eq.f32.partialorder %v720, 8.507059e+37
    %v722 = vand.u32 %v710, 2147483648
    %v723 = vor.u32 1.1754944e-38, %v722
    %v724 = vsel %vm721, %v723, %v719
    %v725 = vmul.f32 1.0, %v724
    %v726 = vmul.f32 %v705, 0.0
    %v727 = vmul.f32 %v686, %v706
    %v728 = vadd.f32 %v726, %v727
    %v729 = vtanh.pop %v728
    %v730 = vmul.f32 %v725, %v729
    %731 = vst [vmem:[#allocation2] sm:$0x3] %v730
    %v732 = vpack.c.bf16 %v730, %v730
    %v733 = vld [vmem:[#allocation3] sm:$0xff]
    %v734 = vld [vmem:[#allocation3 + $0x8] sm:$0xff]
    %v735 = vld [vmem:[#allocation3 + $0x10] sm:$0xff]
    %v736 = vld [vmem:[#allocation3 + $0x18] sm:$0xff]
    %v737 = vld [vmem:[#allocation3 + $0x20] sm:$0xff]
    %v738 = vld [vmem:[#allocation3 + $0x28] sm:$0xff]
    %v739 = vld [vmem:[#allocation3 + $0x30] sm:$0xff]
    %v740 = vld [vmem:[#allocation3 + $0x38] sm:$0xff]
    %v741 = vld [vmem:[#allocation3 + $0x40] sm:$0xff]
    %v742 = vld [vmem:[#allocation3 + $0x48] sm:$0xff]
    %v743 = vld [vmem:[#allocation3 + $0x50] sm:$0xff]
    %v744 = vld [vmem:[#allocation3 + $0x58] sm:$0xff]
    %v745 = vld [vmem:[#allocation3 + $0x60] sm:$0xff]
    %v746 = vld [vmem:[#allocation3 + $0x68] sm:$0xff]
    %v747 = vld [vmem:[#allocation3 + $0x70] sm:$0xff]
    %v748 = vld [vmem:[#allocation3 + $0x78] sm:$0xff]
    %v749 = vld [vmem:[#allocation3 + $0x80] sm:$0xff]
    %v750 = vld [vmem:[#allocation3 + $0x88] sm:$0xff]
    %v751 = vld [vmem:[#allocation3 + $0x90] sm:$0xff]
    %v752 = vld [vmem:[#allocation3 + $0x98] sm:$0xff]
    %v753 = vld [vmem:[#allocation3 + $0xa0] sm:$0xff]
    %v754 = vld [vmem:[#allocation3 + $0xa8] sm:$0xff]
    %v755 = vld [vmem:[#allocation3 + $0xb0] sm:$0xff]
    %v756 = vld [vmem:[#allocation3 + $0xb8] sm:$0xff]
    %v757 = vld [vmem:[#allocation3 + $0xc0] sm:$0xff]
    %v758 = vld [vmem:[#allocation3 + $0xc8] sm:$0xff]
    %v759 = vld [vmem:[#allocation3 + $0xd0] sm:$0xff]
    %v760 = vld [vmem:[#allocation3 + $0xd8] sm:$0xff]
    %v761 = vld [vmem:[#allocation3 + $0xe0] sm:$0xff]
    %v762 = vld [vmem:[#allocation3 + $0xe8] sm:$0xff]
    %v763 = vld [vmem:[#allocation3 + $0xf0] sm:$0xff]
    %v764 = vld [vmem:[#allocation3 + $0xf8] sm:$0xff]
    %v797 = vunpack.c.l.b16 %v733
    %v798 = vunpack.c.h.b16 %v733
    %v799 = vunpack.c.l.b16 %v734
    %v800 = vunpack.c.h.b16 %v734
    %v801 = vunpack.c.l.b16 %v735
    %v802 = vunpack.c.h.b16 %v735
    %v803 = vunpack.c.l.b16 %v736
    %v804 = vunpack.c.h.b16 %v736
    %v805 = vunpack.c.l.b16 %v737
    %v806 = vunpack.c.h.b16 %v737
    %v807 = vunpack.c.l.b16 %v738
    %v808 = vunpack.c.h.b16 %v738
    %v809 = vunpack.c.l.b16 %v739
    %v810 = vunpack.c.h.b16 %v739
    %v811 = vunpack.c.l.b16 %v740
    %v812 = vunpack.c.h.b16 %v740
    %v813 = vunpack.c.l.b16 %v741
    %v814 = vunpack.c.h.b16 %v741
    %v815 = vunpack.c.l.b16 %v742
    %v816 = vunpack.c.h.b16 %v742
    %v817 = vunpack.c.l.b16 %v743
    %v818 = vunpack.c.h.b16 %v743
    %v819 = vunpack.c.l.b16 %v744
    %v820 = vunpack.c.h.b16 %v744
    %v821 = vunpack.c.l.b16 %v745
    %v822 = vunpack.c.h.b16 %v745
    %v823 = vunpack.c.l.b16 %v746
    %v824 = vunpack.c.h.b16 %v746
    %v825 = vunpack.c.l.b16 %v747
    %v826 = vunpack.c.h.b16 %v747
    %v827 = vunpack.c.l.b16 %v748
    %v828 = vunpack.c.h.b16 %v748
    %v829 = vunpack.c.l.b16 %v749
    %v830 = vunpack.c.h.b16 %v749
    %v831 = vunpack.c.l.b16 %v750
    %v832 = vunpack.c.h.b16 %v750
    %v833 = vunpack.c.l.b16 %v751
    %v834 = vunpack.c.h.b16 %v751
    %v835 = vunpack.c.l.b16 %v752
    %v836 = vunpack.c.h.b16 %v752
    %v837 = vunpack.c.l.b16 %v753
    %v838 = vunpack.c.h.b16 %v753
    %v839 = vunpack.c.l.b16 %v754
    %v840 = vunpack.c.h.b16 %v754
    %v841 = vunpack.c.l.b16 %v755
    %v842 = vunpack.c.h.b16 %v755
    %v843 = vunpack.c.l.b16 %v756
    %v844 = vunpack.c.h.b16 %v756
    %v845 = vunpack.c.l.b16 %v757
    %v846 = vunpack.c.h.b16 %v757
    %v847 = vunpack.c.l.b16 %v758
    %v848 = vunpack.c.h.b16 %v758
    %v849 = vunpack.c.l.b16 %v759
    %v850 = vunpack.c.h.b16 %v759
    %v851 = vunpack.c.l.b16 %v760
    %v852 = vunpack.c.h.b16 %v760
    %v853 = vunpack.c.l.b16 %v761
    %v854 = vunpack.c.h.b16 %v761
    %v855 = vunpack.c.l.b16 %v762
    %v856 = vunpack.c.h.b16 %v762
    %v857 = vunpack.c.l.b16 %v763
    %v858 = vunpack.c.h.b16 %v763
    %v859 = vunpack.c.l.b16 %v764
    %v860 = vunpack.c.h.b16 %v764
    %v861 = vpack.c.b16 %v801, %v797
    %v862 = vpack.c.b16 %v802, %v798
    %v863 = vpack.c.b16 %v803, %v799
    %v864 = vpack.c.b16 %v804, %v800
    %v865 = vpack.c.b16 %v809, %v805
    %v866 = vpack.c.b16 %v810, %v806
    %v867 = vpack.c.b16 %v811, %v807
    %v868 = vpack.c.b16 %v812, %v808
    %v869 = vpack.c.b16 %v817, %v813
    %v870 = vpack.c.b16 %v818, %v814
    %v871 = vpack.c.b16 %v819, %v815
    %v872 = vpack.c.b16 %v820, %v816
    %v873 = vpack.c.b16 %v825, %v821
    %v874 = vpack.c.b16 %v826, %v822
    %v875 = vpack.c.b16 %v827, %v823
    %v876 = vpack.c.b16 %v828, %v824
    %v877 = vpack.c.b16 %v833, %v829
    %v878 = vpack.c.b16 %v834, %v830
    %v879 = vpack.c.b16 %v835, %v831
    %v880 = vpack.c.b16 %v836, %v832
    %v881 = vpack.c.b16 %v841, %v837
    %v882 = vpack.c.b16 %v842, %v838
    %v883 = vpack.c.b16 %v843, %v839
    %v884 = vpack.c.b16 %v844, %v840
    %v885 = vpack.c.b16 %v849, %v845
    %v886 = vpack.c.b16 %v850, %v846
    %v887 = vpack.c.b16 %v851, %v847
    %v888 = vpack.c.b16 %v852, %v848
    %v889 = vpack.c.b16 %v857, %v853
    %v890 = vpack.c.b16 %v858, %v854
    %v891 = vpack.c.b16 %v859, %v855
    %v892 = vpack.c.b16 %v860, %v856
    %925 = vmatpush.bf16.msra.mxu0 %v889
    %926 = vmatpush.bf16.msra.mxu0 %v885
    %927 = vmatpush.bf16.msra.mxu0 %v881
    %928 = vmatpush.bf16.msra.mxu0 %v877
    %929 = vmatpush.bf16.msra.mxu0 %v873
    %930 = vmatpush.bf16.msra.mxu0 %v869
    %931 = vmatpush.bf16.msra.mxu0 %v865
    %932 = vmatpush.bf16.msra.mxu0 %v861
    %933 = vmatmul.bf16.gmra.mxu0 %v732
    %v934 = vpop.f32.mrf.mxu0
    %v935 = vadd.f32 0.0, %v934
    %v936 = vpop.f32.mrf.mxu0
    %937 = vdwg.mxu0
    %938 = vmatpush.bf16.msra.mxu0 %v890
    %939 = vmatpush.bf16.msra.mxu0 %v886
    %940 = vmatpush.bf16.msra.mxu0 %v882
    %941 = vmatpush.bf16.msra.mxu0 %v878
    %942 = vmatpush.bf16.msra.mxu0 %v874
    %943 = vmatpush.bf16.msra.mxu0 %v870
    %944 = vmatpush.bf16.msra.mxu0 %v866
    %945 = vmatpush.bf16.msra.mxu0 %v862
    %946 = vmatmul.bf16.gmra.mxu0 %v732
    %v947 = vpop.f32.mrf.mxu0
    %v948 = vadd.f32 0.0, %v947
    %v949 = vpop.f32.mrf.mxu0
    %950 = vdwg.mxu0
    %951 = vmatpush.bf16.msra.mxu0 %v891
    %952 = vmatpush.bf16.msra.mxu0 %v887
    %953 = vmatpush.bf16.msra.mxu0 %v883
    %954 = vmatpush.bf16.msra.mxu0 %v879
    %955 = vmatpush.bf16.msra.mxu0 %v875
    %956 = vmatpush.bf16.msra.mxu0 %v871
    %957 = vmatpush.bf16.msra.mxu0 %v867
    %958 = vmatpush.bf16.msra.mxu0 %v863
    %959 = vmatmul.bf16.gmra.mxu0 %v732
    %v960 = vpop.f32.mrf.mxu0
    %v961 = vadd.f32 0.0, %v960
    %v962 = vpop.f32.mrf.mxu0
    %963 = vdwg.mxu0
    %964 = vmatpush.bf16.msra.mxu0 %v892
    %965 = vmatpush.bf16.msra.mxu0 %v888
    %966 = vmatpush.bf16.msra.mxu0 %v884
    %967 = vmatpush.bf16.msra.mxu0 %v880
    %968 = vmatpush.bf16.msra.mxu0 %v876
    %969 = vmatpush.bf16.msra.mxu0 %v872
    %970 = vmatpush.bf16.msra.mxu0 %v868
    %971 = vmatpush.bf16.msra.mxu0 %v864
    %972 = vmatmul.bf16.gmra.mxu0 %v732
    %v973 = vpop.f32.mrf.mxu0
    %v974 = vadd.f32 0.0, %v973
    %v975 = vpop.f32.mrf.mxu0
    %976 = vdwg.mxu0
    %v981 = vrot.slane %v935, 6
    %v982 = vrot.slane %v948, 6
    %v983 = vrot.slane %v961, 6
    %v984 = vrot.slane %v974, 6
    %v989 = vadd.f32 %v284, %v981
    %v990 = vadd.f32 %v298, %v982
    %v991 = vadd.f32 %v312, %v983
    %v992 = vadd.f32 %v326, %v984
    %v993 = vxor.u32 %v989, 2147483648
    %v994 = vmul.f32 %v993, 1.442695
    %v995 = vpow.pop %v994
    %v996 = vadd.f32 %v995, 1.0
    %v997 = vrcp.pop %v996
    %v998 = vmul.f32 %v996, %v997
    %v999 = vsub.f32 1.0, %v998
    %v1000 = vmul.f32 %v997, %v999
    %v1001 = vadd.f32 %v997, %v1000
    %vm1002 = vweird.f32 %v996
    %vm1003 = vweird.f32 %v997
    %vm1004 = vmor %vm1002, %vm1003
    %v1005 = vsel %vm1004, %v997, %v1001
    %v1006 = vand.u32 2147483647, %v996
    %vm1007 = vcmp.eq.f32.partialorder %v1006, 8.507059e+37
    %v1008 = vand.u32 %v996, 2147483648
    %v1009 = vor.u32 1.1754944e-38, %v1008
    %v1010 = vsel %vm1007, %v1009, %v1005
    %v1011 = vmul.f32 1.0, %v1010
    %v1012 = vxor.u32 %v990, 2147483648
    %v1013 = vmul.f32 %v1012, 1.442695
    %v1014 = vpow.pop %v1013
    %v1015 = vadd.f32 %v1014, 1.0
    %v1016 = vrcp.pop %v1015
    %v1017 = vmul.f32 %v1015, %v1016
    %v1018 = vsub.f32 1.0, %v1017
    %v1019 = vmul.f32 %v1016, %v1018
    %v1020 = vadd.f32 %v1016, %v1019
    %vm1021 = vweird.f32 %v1015
    %vm1022 = vweird.f32 %v1016
    %vm1023 = vmor %vm1021, %vm1022
    %v1024 = vsel %vm1023, %v1016, %v1020
    %v1025 = vand.u32 2147483647, %v1015
    %vm1026 = vcmp.eq.f32.partialorder %v1025, 8.507059e+37
    %v1027 = vand.u32 %v1015, 2147483648
    %v1028 = vor.u32 1.1754944e-38, %v1027
    %v1029 = vsel %vm1026, %v1028, %v1024
    %v1030 = vmul.f32 1.0, %v1029
    %v1031 = vtanh.pop %v991
    %v1032 = vxor.u32 %v992, 2147483648
    %v1033 = vmul.f32 %v1032, 1.442695
    %v1034 = vpow.pop %v1033
    %v1035 = vadd.f32 %v1034, 1.0
    %v1036 = vrcp.pop %v1035
    %v1037 = vmul.f32 %v1035, %v1036
    %v1038 = vsub.f32 1.0, %v1037
    %v1039 = vmul.f32 %v1036, %v1038
    %v1040 = vadd.f32 %v1036, %v1039
    %vm1041 = vweird.f32 %v1035
    %vm1042 = vweird.f32 %v1036
    %vm1043 = vmor %vm1041, %vm1042
    %v1044 = vsel %vm1043, %v1036, %v1040
    %v1045 = vand.u32 2147483647, %v1035
    %vm1046 = vcmp.eq.f32.partialorder %v1045, 8.507059e+37
    %v1047 = vand.u32 %v1035, 2147483648
    %v1048 = vor.u32 1.1754944e-38, %v1047
    %v1049 = vsel %vm1046, %v1048, %v1044
    %v1050 = vmul.f32 1.0, %v1049
    %v1052 = vrot.slane %v728, 6
    %v1054 = vmul.f32 %v1030, %v1052
    %v1055 = vmul.f32 %v1011, %v1031
    %v1056 = vadd.f32 %v1054, %v1055
    %v1057 = vtanh.pop %v1056
    %v1058 = vmul.f32 %v1050, %v1057
    %1059 = vst [vmem:[#allocation2] sm:$0xc] %v1058
    %v1060 = vpack.c.bf16 %v1058, %v1058
    %v1061 = vld [vmem:[#allocation3] sm:$0xff]
    %v1062 = vld [vmem:[#allocation3 + $0x8] sm:$0xff]
    %v1063 = vld [vmem:[#allocation3 + $0x10] sm:$0xff]
    %v1064 = vld [vmem:[#allocation3 + $0x18] sm:$0xff]
    %v1065 = vld [vmem:[#allocation3 + $0x20] sm:$0xff]
    %v1066 = vld [vmem:[#allocation3 + $0x28] sm:$0xff]
    %v1067 = vld [vmem:[#allocation3 + $0x30] sm:$0xff]
    %v1068 = vld [vmem:[#allocation3 + $0x38] sm:$0xff]
    %v1069 = vld [vmem:[#allocation3 + $0x40] sm:$0xff]
    %v1070 = vld [vmem:[#allocation3 + $0x48] sm:$0xff]
    %v1071 = vld [vmem:[#allocation3 + $0x50] sm:$0xff]
    %v1072 = vld [vmem:[#allocation3 + $0x58] sm:$0xff]
    %v1073 = vld [vmem:[#allocation3 + $0x60] sm:$0xff]
    %v1074 = vld [vmem:[#allocation3 + $0x68] sm:$0xff]
    %v1075 = vld [vmem:[#allocation3 + $0x70] sm:$0xff]
    %v1076 = vld [vmem:[#allocation3 + $0x78] sm:$0xff]
    %v1077 = vld [vmem:[#allocation3 + $0x80] sm:$0xff]
    %v1078 = vld [vmem:[#allocation3 + $0x88] sm:$0xff]
    %v1079 = vld [vmem:[#allocation3 + $0x90] sm:$0xff]
    %v1080 = vld [vmem:[#allocation3 + $0x98] sm:$0xff]
    %v1081 = vld [vmem:[#allocation3 + $0xa0] sm:$0xff]
    %v1082 = vld [vmem:[#allocation3 + $0xa8] sm:$0xff]
    %v1083 = vld [vmem:[#allocation3 + $0xb0] sm:$0xff]
    %v1084 = vld [vmem:[#allocation3 + $0xb8] sm:$0xff]
    %v1085 = vld [vmem:[#allocation3 + $0xc0] sm:$0xff]
    %v1086 = vld [vmem:[#allocation3 + $0xc8] sm:$0xff]
    %v1087 = vld [vmem:[#allocation3 + $0xd0] sm:$0xff]
    %v1088 = vld [vmem:[#allocation3 + $0xd8] sm:$0xff]
    %v1089 = vld [vmem:[#allocation3 + $0xe0] sm:$0xff]
    %v1090 = vld [vmem:[#allocation3 + $0xe8] sm:$0xff]
    %v1091 = vld [vmem:[#allocation3 + $0xf0] sm:$0xff]
    %v1092 = vld [vmem:[#allocation3 + $0xf8] sm:$0xff]
    %v1094 = vrot.slane %v1060, 1
    %v1128 = vunpack.c.l.b16 %v1061
    %v1129 = vunpack.c.h.b16 %v1061
    %v1130 = vunpack.c.l.b16 %v1062
    %v1131 = vunpack.c.h.b16 %v1062
    %v1132 = vunpack.c.l.b16 %v1063
    %v1133 = vunpack.c.h.b16 %v1063
    %v1134 = vunpack.c.l.b16 %v1064
    %v1135 = vunpack.c.h.b16 %v1064
    %v1136 = vunpack.c.l.b16 %v1065
    %v1137 = vunpack.c.h.b16 %v1065
    %v1138 = vunpack.c.l.b16 %v1066
    %v1139 = vunpack.c.h.b16 %v1066
    %v1140 = vunpack.c.l.b16 %v1067
    %v1141 = vunpack.c.h.b16 %v1067
    %v1142 = vunpack.c.l.b16 %v1068
    %v1143 = vunpack.c.h.b16 %v1068
    %v1144 = vunpack.c.l.b16 %v1069
    %v1145 = vunpack.c.h.b16 %v1069
    %v1146 = vunpack.c.l.b16 %v1070
    %v1147 = vunpack.c.h.b16 %v1070
    %v1148 = vunpack.c.l.b16 %v1071
    %v1149 = vunpack.c.h.b16 %v1071
    %v1150 = vunpack.c.l.b16 %v1072
    %v1151 = vunpack.c.h.b16 %v1072
    %v1152 = vunpack.c.l.b16 %v1073
    %v1153 = vunpack.c.h.b16 %v1073
    %v1154 = vunpack.c.l.b16 %v1074
    %v1155 = vunpack.c.h.b16 %v1074
    %v1156 = vunpack.c.l.b16 %v1075
    %v1157 = vunpack.c.h.b16 %v1075
    %v1158 = vunpack.c.l.b16 %v1076
    %v1159 = vunpack.c.h.b16 %v1076
    %v1160 = vunpack.c.l.b16 %v1077
    %v1161 = vunpack.c.h.b16 %v1077
    %v1162 = vunpack.c.l.b16 %v1078
    %v1163 = vunpack.c.h.b16 %v1078
    %v1164 = vunpack.c.l.b16 %v1079
    %v1165 = vunpack.c.h.b16 %v1079
    %v1166 = vunpack.c.l.b16 %v1080
    %v1167 = vunpack.c.h.b16 %v1080
    %v1168 = vunpack.c.l.b16 %v1081
    %v1169 = vunpack.c.h.b16 %v1081
    %v1170 = vunpack.c.l.b16 %v1082
    %v1171 = vunpack.c.h.b16 %v1082
    %v1172 = vunpack.c.l.b16 %v1083
    %v1173 = vunpack.c.h.b16 %v1083
    %v1174 = vunpack.c.l.b16 %v1084
    %v1175 = vunpack.c.h.b16 %v1084
    %v1176 = vunpack.c.l.b16 %v1085
    %v1177 = vunpack.c.h.b16 %v1085
    %v1178 = vunpack.c.l.b16 %v1086
    %v1179 = vunpack.c.h.b16 %v1086
    %v1180 = vunpack.c.l.b16 %v1087
    %v1181 = vunpack.c.h.b16 %v1087
    %v1182 = vunpack.c.l.b16 %v1088
    %v1183 = vunpack.c.h.b16 %v1088
    %v1184 = vunpack.c.l.b16 %v1089
    %v1185 = vunpack.c.h.b16 %v1089
    %v1186 = vunpack.c.l.b16 %v1090
    %v1187 = vunpack.c.h.b16 %v1090
    %v1188 = vunpack.c.l.b16 %v1091
    %v1189 = vunpack.c.h.b16 %v1091
    %v1190 = vunpack.c.l.b16 %v1092
    %v1191 = vunpack.c.h.b16 %v1092
    %v1192 = vpack.c.b16 %v1132, %v1128
    %v1193 = vpack.c.b16 %v1133, %v1129
    %v1194 = vpack.c.b16 %v1134, %v1130
    %v1195 = vpack.c.b16 %v1135, %v1131
    %v1196 = vpack.c.b16 %v1140, %v1136
    %v1197 = vpack.c.b16 %v1141, %v1137
    %v1198 = vpack.c.b16 %v1142, %v1138
    %v1199 = vpack.c.b16 %v1143, %v1139
    %v1200 = vpack.c.b16 %v1148, %v1144
    %v1201 = vpack.c.b16 %v1149, %v1145
    %v1202 = vpack.c.b16 %v1150, %v1146
    %v1203 = vpack.c.b16 %v1151, %v1147
    %v1204 = vpack.c.b16 %v1156, %v1152
    %v1205 = vpack.c.b16 %v1157, %v1153
    %v1206 = vpack.c.b16 %v1158, %v1154
    %v1207 = vpack.c.b16 %v1159, %v1155
    %v1208 = vpack.c.b16 %v1164, %v1160
    %v1209 = vpack.c.b16 %v1165, %v1161
    %v1210 = vpack.c.b16 %v1166, %v1162
    %v1211 = vpack.c.b16 %v1167, %v1163
    %v1212 = vpack.c.b16 %v1172, %v1168
    %v1213 = vpack.c.b16 %v1173, %v1169
    %v1214 = vpack.c.b16 %v1174, %v1170
    %v1215 = vpack.c.b16 %v1175, %v1171
    %v1216 = vpack.c.b16 %v1180, %v1176
    %v1217 = vpack.c.b16 %v1181, %v1177
    %v1218 = vpack.c.b16 %v1182, %v1178
    %v1219 = vpack.c.b16 %v1183, %v1179
    %v1220 = vpack.c.b16 %v1188, %v1184
    %v1221 = vpack.c.b16 %v1189, %v1185
    %v1222 = vpack.c.b16 %v1190, %v1186
    %v1223 = vpack.c.b16 %v1191, %v1187
    %1256 = vmatpush.bf16.msra.mxu0 %v1220
    %1257 = vmatpush.bf16.msra.mxu0 %v1216
    %1258 = vmatpush.bf16.msra.mxu0 %v1212
    %1259 = vmatpush.bf16.msra.mxu0 %v1208
    %1260 = vmatpush.bf16.msra.mxu0 %v1204
    %1261 = vmatpush.bf16.msra.mxu0 %v1200
    %1262 = vmatpush.bf16.msra.mxu0 %v1196
    %1263 = vmatpush.bf16.msra.mxu0 %v1192
    %1264 = vmatmul.bf16.gmra.mxu0 %v1094
    %v1265 = vpop.f32.mrf.mxu0
    %v1266 = vadd.f32 0.0, %v1265
    %v1267 = vpop.f32.mrf.mxu0
    %1268 = vdwg.mxu0
    %1269 = vmatpush.bf16.msra.mxu0 %v1221
    %1270 = vmatpush.bf16.msra.mxu0 %v1217
    %1271 = vmatpush.bf16.msra.mxu0 %v1213
    %1272 = vmatpush.bf16.msra.mxu0 %v1209
    %1273 = vmatpush.bf16.msra.mxu0 %v1205
    %1274 = vmatpush.bf16.msra.mxu0 %v1201
    %1275 = vmatpush.bf16.msra.mxu0 %v1197
    %1276 = vmatpush.bf16.msra.mxu0 %v1193
    %1277 = vmatmul.bf16.gmra.mxu0 %v1094
    %v1278 = vpop.f32.mrf.mxu0
    %v1279 = vadd.f32 0.0, %v1278
    %v1280 = vpop.f32.mrf.mxu0
    %1281 = vdwg.mxu0
    %1282 = vmatpush.bf16.msra.mxu0 %v1222
    %1283 = vmatpush.bf16.msra.mxu0 %v1218
    %1284 = vmatpush.bf16.msra.mxu0 %v1214
    %1285 = vmatpush.bf16.msra.mxu0 %v1210
    %1286 = vmatpush.bf16.msra.mxu0 %v1206
    %1287 = vmatpush.bf16.msra.mxu0 %v1202
    %1288 = vmatpush.bf16.msra.mxu0 %v1198
    %1289 = vmatpush.bf16.msra.mxu0 %v1194
    %1290 = vmatmul.bf16.gmra.mxu0 %v1094
    %v1291 = vpop.f32.mrf.mxu0
    %v1292 = vadd.f32 0.0, %v1291
    %v1293 = vpop.f32.mrf.mxu0
    %1294 = vdwg.mxu0
    %1295 = vmatpush.bf16.msra.mxu0 %v1223
    %1296 = vmatpush.bf16.msra.mxu0 %v1219
    %1297 = vmatpush.bf16.msra.mxu0 %v1215
    %1298 = vmatpush.bf16.msra.mxu0 %v1211
    %1299 = vmatpush.bf16.msra.mxu0 %v1207
    %1300 = vmatpush.bf16.msra.mxu0 %v1203
    %1301 = vmatpush.bf16.msra.mxu0 %v1199
    %1302 = vmatpush.bf16.msra.mxu0 %v1195
    %1303 = vmatmul.bf16.gmra.mxu0 %v1094
    %v1304 = vpop.f32.mrf.mxu0
    %v1305 = vadd.f32 0.0, %v1304
    %v1306 = vpop.f32.mrf.mxu0
    %1307 = vdwg.mxu0
    %v1312 = vrot.slane %v1266, 4
    %v1313 = vrot.slane %v1279, 4
    %v1314 = vrot.slane %v1292, 4
    %v1315 = vrot.slane %v1305, 4
    %v1320 = vadd.f32 %v284, %v1312
    %v1321 = vadd.f32 %v298, %v1313
    %v1322 = vadd.f32 %v312, %v1314
    %v1323 = vadd.f32 %v326, %v1315
    %v1324 = vxor.u32 %v1320, 2147483648
    %v1325 = vmul.f32 %v1324, 1.442695
    %v1326 = vpow.pop %v1325
    %v1327 = vadd.f32 %v1326, 1.0
    %v1328 = vrcp.pop %v1327
    %v1329 = vmul.f32 %v1327, %v1328
    %v1330 = vsub.f32 1.0, %v1329
    %v1331 = vmul.f32 %v1328, %v1330
    %v1332 = vadd.f32 %v1328, %v1331
    %vm1333 = vweird.f32 %v1327
    %vm1334 = vweird.f32 %v1328
    %vm1335 = vmor %vm1333, %vm1334
    %v1336 = vsel %vm1335, %v1328, %v1332
    %v1337 = vand.u32 2147483647, %v1327
    %vm1338 = vcmp.eq.f32.partialorder %v1337, 8.507059e+37
    %v1339 = vand.u32 %v1327, 2147483648
    %v1340 = vor.u32 1.1754944e-38, %v1339
    %v1341 = vsel %vm1338, %v1340, %v1336
    %v1342 = vmul.f32 1.0, %v1341
    %v1343 = vxor.u32 %v1321, 2147483648
    %v1344 = vmul.f32 %v1343, 1.442695
    %v1345 = vpow.pop %v1344
    %v1346 = vadd.f32 %v1345, 1.0
    %v1347 = vrcp.pop %v1346
    %v1348 = vmul.f32 %v1346, %v1347
    %v1349 = vsub.f32 1.0, %v1348
    %v1350 = vmul.f32 %v1347, %v1349
    %v1351 = vadd.f32 %v1347, %v1350
    %vm1352 = vweird.f32 %v1346
    %vm1353 = vweird.f32 %v1347
    %vm1354 = vmor %vm1352, %vm1353
    %v1355 = vsel %vm1354, %v1347, %v1351
    %v1356 = vand.u32 2147483647, %v1346
    %vm1357 = vcmp.eq.f32.partialorder %v1356, 8.507059e+37
    %v1358 = vand.u32 %v1346, 2147483648
    %v1359 = vor.u32 1.1754944e-38, %v1358
    %v1360 = vsel %vm1357, %v1359, %v1355
    %v1361 = vmul.f32 1.0, %v1360
    %v1362 = vtanh.pop %v1322
    %v1363 = vxor.u32 %v1323, 2147483648
    %v1364 = vmul.f32 %v1363, 1.442695
    %v1365 = vpow.pop %v1364
    %v1366 = vadd.f32 %v1365, 1.0
    %v1367 = vrcp.pop %v1366
    %v1368 = vmul.f32 %v1366, %v1367
    %v1369 = vsub.f32 1.0, %v1368
    %v1370 = vmul.f32 %v1367, %v1369
    %v1371 = vadd.f32 %v1367, %v1370
    %vm1372 = vweird.f32 %v1366
    %vm1373 = vweird.f32 %v1367
    %vm1374 = vmor %vm1372, %vm1373
    %v1375 = vsel %vm1374, %v1367, %v1371
    %v1376 = vand.u32 2147483647, %v1366
    %vm1377 = vcmp.eq.f32.partialorder %v1376, 8.507059e+37
    %v1378 = vand.u32 %v1366, 2147483648
    %v1379 = vor.u32 1.1754944e-38, %v1378
    %v1380 = vsel %vm1377, %v1379, %v1375
    %v1381 = vmul.f32 1.0, %v1380
    %v1383 = vrot.slane %v1056, 6
    %v1385 = vmul.f32 %v1361, %v1383
    %v1386 = vmul.f32 %v1342, %v1362
    %v1387 = vadd.f32 %v1385, %v1386
    %v1388 = vtanh.pop %v1387
    %v1389 = vmul.f32 %v1381, %v1388
    %1390 = vst [vmem:[#allocation2] sm:$0x30] %v1389
    %v1391 = vpack.c.bf16 %v1389, %v1389
    %v1392 = vld [vmem:[#allocation3] sm:$0xff]
    %v1393 = vld [vmem:[#allocation3 + $0x8] sm:$0xff]
    %v1394 = vld [vmem:[#allocation3 + $0x10] sm:$0xff]
    %v1395 = vld [vmem:[#allocation3 + $0x18] sm:$0xff]
    %v1396 = vld [vmem:[#allocation3 + $0x20] sm:$0xff]
    %v1397 = vld [vmem:[#allocation3 + $0x28] sm:$0xff]
    %v1398 = vld [vmem:[#allocation3 + $0x30] sm:$0xff]
    %v1399 = vld [vmem:[#allocation3 + $0x38] sm:$0xff]
    %v1400 = vld [vmem:[#allocation3 + $0x40] sm:$0xff]
    %v1401 = vld [vmem:[#allocation3 + $0x48] sm:$0xff]
    %v1402 = vld [vmem:[#allocation3 + $0x50] sm:$0xff]
    %v1403 = vld [vmem:[#allocation3 + $0x58] sm:$0xff]
    %v1404 = vld [vmem:[#allocation3 + $0x60] sm:$0xff]
    %v1405 = vld [vmem:[#allocation3 + $0x68] sm:$0xff]
    %v1406 = vld [vmem:[#allocation3 + $0x70] sm:$0xff]
    %v1407 = vld [vmem:[#allocation3 + $0x78] sm:$0xff]
    %v1408 = vld [vmem:[#allocation3 + $0x80] sm:$0xff]
    %v1409 = vld [vmem:[#allocation3 + $0x88] sm:$0xff]
    %v1410 = vld [vmem:[#allocation3 + $0x90] sm:$0xff]
    %v1411 = vld [vmem:[#allocation3 + $0x98] sm:$0xff]
    %v1412 = vld [vmem:[#allocation3 + $0xa0] sm:$0xff]
    %v1413 = vld [vmem:[#allocation3 + $0xa8] sm:$0xff]
    %v1414 = vld [vmem:[#allocation3 + $0xb0] sm:$0xff]
    %v1415 = vld [vmem:[#allocation3 + $0xb8] sm:$0xff]
    %v1416 = vld [vmem:[#allocation3 + $0xc0] sm:$0xff]
    %v1417 = vld [vmem:[#allocation3 + $0xc8] sm:$0xff]
    %v1418 = vld [vmem:[#allocation3 + $0xd0] sm:$0xff]
    %v1419 = vld [vmem:[#allocation3 + $0xd8] sm:$0xff]
    %v1420 = vld [vmem:[#allocation3 + $0xe0] sm:$0xff]
    %v1421 = vld [vmem:[#allocation3 + $0xe8] sm:$0xff]
    %v1422 = vld [vmem:[#allocation3 + $0xf0] sm:$0xff]
    %v1423 = vld [vmem:[#allocation3 + $0xf8] sm:$0xff]
    %v1425 = vrot.slane %v1391, 2
    %v1459 = vunpack.c.l.b16 %v1392
    %v1460 = vunpack.c.h.b16 %v1392
    %v1461 = vunpack.c.l.b16 %v1393
    %v1462 = vunpack.c.h.b16 %v1393
    %v1463 = vunpack.c.l.b16 %v1394
    %v1464 = vunpack.c.h.b16 %v1394
    %v1465 = vunpack.c.l.b16 %v1395
    %v1466 = vunpack.c.h.b16 %v1395
    %v1467 = vunpack.c.l.b16 %v1396
    %v1468 = vunpack.c.h.b16 %v1396
    %v1469 = vunpack.c.l.b16 %v1397
    %v1470 = vunpack.c.h.b16 %v1397
    %v1471 = vunpack.c.l.b16 %v1398
    %v1472 = vunpack.c.h.b16 %v1398
    %v1473 = vunpack.c.l.b16 %v1399
    %v1474 = vunpack.c.h.b16 %v1399
    %v1475 = vunpack.c.l.b16 %v1400
    %v1476 = vunpack.c.h.b16 %v1400
    %v1477 = vunpack.c.l.b16 %v1401
    %v1478 = vunpack.c.h.b16 %v1401
    %v1479 = vunpack.c.l.b16 %v1402
    %v1480 = vunpack.c.h.b16 %v1402
    %v1481 = vunpack.c.l.b16 %v1403
    %v1482 = vunpack.c.h.b16 %v1403
    %v1483 = vunpack.c.l.b16 %v1404
    %v1484 = vunpack.c.h.b16 %v1404
    %v1485 = vunpack.c.l.b16 %v1405
    %v1486 = vunpack.c.h.b16 %v1405
    %v1487 = vunpack.c.l.b16 %v1406
    %v1488 = vunpack.c.h.b16 %v1406
    %v1489 = vunpack.c.l.b16 %v1407
    %v1490 = vunpack.c.h.b16 %v1407
    %v1491 = vunpack.c.l.b16 %v1408
    %v1492 = vunpack.c.h.b16 %v1408
    %v1493 = vunpack.c.l.b16 %v1409
    %v1494 = vunpack.c.h.b16 %v1409
    %v1495 = vunpack.c.l.b16 %v1410
    %v1496 = vunpack.c.h.b16 %v1410
    %v1497 = vunpack.c.l.b16 %v1411
    %v1498 = vunpack.c.h.b16 %v1411
    %v1499 = vunpack.c.l.b16 %v1412
    %v1500 = vunpack.c.h.b16 %v1412
    %v1501 = vunpack.c.l.b16 %v1413
    %v1502 = vunpack.c.h.b16 %v1413
    %v1503 = vunpack.c.l.b16 %v1414
    %v1504 = vunpack.c.h.b16 %v1414
    %v1505 = vunpack.c.l.b16 %v1415
    %v1506 = vunpack.c.h.b16 %v1415
    %v1507 = vunpack.c.l.b16 %v1416
    %v1508 = vunpack.c.h.b16 %v1416
    %v1509 = vunpack.c.l.b16 %v1417
    %v1510 = vunpack.c.h.b16 %v1417
    %v1511 = vunpack.c.l.b16 %v1418
    %v1512 = vunpack.c.h.b16 %v1418
    %v1513 = vunpack.c.l.b16 %v1419
    %v1514 = vunpack.c.h.b16 %v1419
    %v1515 = vunpack.c.l.b16 %v1420
    %v1516 = vunpack.c.h.b16 %v1420
    %v1517 = vunpack.c.l.b16 %v1421
    %v1518 = vunpack.c.h.b16 %v1421
    %v1519 = vunpack.c.l.b16 %v1422
    %v1520 = vunpack.c.h.b16 %v1422
    %v1521 = vunpack.c.l.b16 %v1423
    %v1522 = vunpack.c.h.b16 %v1423
    %v1523 = vpack.c.b16 %v1463, %v1459
    %v1524 = vpack.c.b16 %v1464, %v1460
    %v1525 = vpack.c.b16 %v1465, %v1461
    %v1526 = vpack.c.b16 %v1466, %v1462
    %v1527 = vpack.c.b16 %v1471, %v1467
    %v1528 = vpack.c.b16 %v1472, %v1468
    %v1529 = vpack.c.b16 %v1473, %v1469
    %v1530 = vpack.c.b16 %v1474, %v1470
    %v1531 = vpack.c.b16 %v1479, %v1475
    %v1532 = vpack.c.b16 %v1480, %v1476
    %v1533 = vpack.c.b16 %v1481, %v1477
    %v1534 = vpack.c.b16 %v1482, %v1478
    %v1535 = vpack.c.b16 %v1487, %v1483
    %v1536 = vpack.c.b16 %v1488, %v1484
    %v1537 = vpack.c.b16 %v1489, %v1485
    %v1538 = vpack.c.b16 %v1490, %v1486
    %v1539 = vpack.c.b16 %v1495, %v1491
    %v1540 = vpack.c.b16 %v1496, %v1492
    %v1541 = vpack.c.b16 %v1497, %v1493
    %v1542 = vpack.c.b16 %v1498, %v1494
    %v1543 = vpack.c.b16 %v1503, %v1499
    %v1544 = vpack.c.b16 %v1504, %v1500
    %v1545 = vpack.c.b16 %v1505, %v1501
    %v1546 = vpack.c.b16 %v1506, %v1502
    %v1547 = vpack.c.b16 %v1511, %v1507
    %v1548 = vpack.c.b16 %v1512, %v1508
    %v1549 = vpack.c.b16 %v1513, %v1509
    %v1550 = vpack.c.b16 %v1514, %v1510
    %v1551 = vpack.c.b16 %v1519, %v1515
    %v1552 = vpack.c.b16 %v1520, %v1516
    %v1553 = vpack.c.b16 %v1521, %v1517
    %v1554 = vpack.c.b16 %v1522, %v1518
    %1587 = vmatpush.bf16.msra.mxu0 %v1551
    %1588 = vmatpush.bf16.msra.mxu0 %v1547
    %1589 = vmatpush.bf16.msra.mxu0 %v1543
    %1590 = vmatpush.bf16.msra.mxu0 %v1539
    %1591 = vmatpush.bf16.msra.mxu0 %v1535
    %1592 = vmatpush.bf16.msra.mxu0 %v1531
    %1593 = vmatpush.bf16.msra.mxu0 %v1527
    %1594 = vmatpush.bf16.msra.mxu0 %v1523
    %1595 = vmatmul.bf16.gmra.mxu0 %v1425
    %v1596 = vpop.f32.mrf.mxu0
    %v1597 = vadd.f32 0.0, %v1596
    %v1598 = vpop.f32.mrf.mxu0
    %1599 = vdwg.mxu0
    %1600 = vmatpush.bf16.msra.mxu0 %v1552
    %1601 = vmatpush.bf16.msra.mxu0 %v1548
    %1602 = vmatpush.bf16.msra.mxu0 %v1544
    %1603 = vmatpush.bf16.msra.mxu0 %v1540
    %1604 = vmatpush.bf16.msra.mxu0 %v1536
    %1605 = vmatpush.bf16.msra.mxu0 %v1532
    %1606 = vmatpush.bf16.msra.mxu0 %v1528
    %1607 = vmatpush.bf16.msra.mxu0 %v1524
    %1608 = vmatmul.bf16.gmra.mxu0 %v1425
    %v1609 = vpop.f32.mrf.mxu0
    %v1610 = vadd.f32 0.0, %v1609
    %v1611 = vpop.f32.mrf.mxu0
    %1612 = vdwg.mxu0
    %1613 = vmatpush.bf16.msra.mxu0 %v1553
    %1614 = vmatpush.bf16.msra.mxu0 %v1549
    %1615 = vmatpush.bf16.msra.mxu0 %v1545
    %1616 = vmatpush.bf16.msra.mxu0 %v1541
    %1617 = vmatpush.bf16.msra.mxu0 %v1537
    %1618 = vmatpush.bf16.msra.mxu0 %v1533
    %1619 = vmatpush.bf16.msra.mxu0 %v1529
    %1620 = vmatpush.bf16.msra.mxu0 %v1525
    %1621 = vmatmul.bf16.gmra.mxu0 %v1425
    %v1622 = vpop.f32.mrf.mxu0
    %v1623 = vadd.f32 0.0, %v1622
    %v1624 = vpop.f32.mrf.mxu0
    %1625 = vdwg.mxu0
    %1626 = vmatpush.bf16.msra.mxu0 %v1554
    %1627 = vmatpush.bf16.msra.mxu0 %v1550
    %1628 = vmatpush.bf16.msra.mxu0 %v1546
    %1629 = vmatpush.bf16.msra.mxu0 %v1542
    %1630 = vmatpush.bf16.msra.mxu0 %v1538
    %1631 = vmatpush.bf16.msra.mxu0 %v1534
    %1632 = vmatpush.bf16.msra.mxu0 %v1530
    %1633 = vmatpush.bf16.msra.mxu0 %v1526
    %1634 = vmatmul.bf16.gmra.mxu0 %v1425
    %v1635 = vpop.f32.mrf.mxu0
    %v1636 = vadd.f32 0.0, %v1635
    %v1637 = vpop.f32.mrf.mxu0
    %1638 = vdwg.mxu0
    %v1643 = vrot.slane %v1597, 2
    %v1644 = vrot.slane %v1610, 2
    %v1645 = vrot.slane %v1623, 2
    %v1646 = vrot.slane %v1636, 2
    %v1651 = vadd.f32 %v284, %v1643
    %v1652 = vadd.f32 %v298, %v1644
    %v1653 = vadd.f32 %v312, %v1645
    %v1654 = vadd.f32 %v326, %v1646
    %v1655 = vxor.u32 %v1651, 2147483648
    %v1656 = vmul.f32 %v1655, 1.442695
    %v1657 = vpow.pop %v1656
    %v1658 = vadd.f32 %v1657, 1.0
    %v1659 = vrcp.pop %v1658
    %v1660 = vmul.f32 %v1658, %v1659
    %v1661 = vsub.f32 1.0, %v1660
    %v1662 = vmul.f32 %v1659, %v1661
    %v1663 = vadd.f32 %v1659, %v1662
    %vm1664 = vweird.f32 %v1658
    %vm1665 = vweird.f32 %v1659
    %vm1666 = vmor %vm1664, %vm1665
    %v1667 = vsel %vm1666, %v1659, %v1663
    %v1668 = vand.u32 2147483647, %v1658
    %vm1669 = vcmp.eq.f32.partialorder %v1668, 8.507059e+37
    %v1670 = vand.u32 %v1658, 2147483648
    %v1671 = vor.u32 1.1754944e-38, %v1670
    %v1672 = vsel %vm1669, %v1671, %v1667
    %v1673 = vmul.f32 1.0, %v1672
    %v1674 = vxor.u32 %v1652, 2147483648
    %v1675 = vmul.f32 %v1674, 1.442695
    %v1676 = vpow.pop %v1675
    %v1677 = vadd.f32 %v1676, 1.0
    %v1678 = vrcp.pop %v1677
    %v1679 = vmul.f32 %v1677, %v1678
    %v1680 = vsub.f32 1.0, %v1679
    %v1681 = vmul.f32 %v1678, %v1680
    %v1682 = vadd.f32 %v1678, %v1681
    %vm1683 = vweird.f32 %v1677
    %vm1684 = vweird.f32 %v1678
    %vm1685 = vmor %vm1683, %vm1684
    %v1686 = vsel %vm1685, %v1678, %v1682
    %v1687 = vand.u32 2147483647, %v1677
    %vm1688 = vcmp.eq.f32.partialorder %v1687, 8.507059e+37
    %v1689 = vand.u32 %v1677, 2147483648
    %v1690 = vor.u32 1.1754944e-38, %v1689
    %v1691 = vsel %vm1688, %v1690, %v1686
    %v1692 = vmul.f32 1.0, %v1691
    %v1693 = vtanh.pop %v1653
    %v1694 = vxor.u32 %v1654, 2147483648
    %v1695 = vmul.f32 %v1694, 1.442695
    %v1696 = vpow.pop %v1695
    %v1697 = vadd.f32 %v1696, 1.0
    %v1698 = vrcp.pop %v1697
    %v1699 = vmul.f32 %v1697, %v1698
    %v1700 = vsub.f32 1.0, %v1699
    %v1701 = vmul.f32 %v1698, %v1700
    %v1702 = vadd.f32 %v1698, %v1701
    %vm1703 = vweird.f32 %v1697
    %vm1704 = vweird.f32 %v1698
    %vm1705 = vmor %vm1703, %vm1704
    %v1706 = vsel %vm1705, %v1698, %v1702
    %v1707 = vand.u32 2147483647, %v1697
    %vm1708 = vcmp.eq.f32.partialorder %v1707, 8.507059e+37
    %v1709 = vand.u32 %v1697, 2147483648
    %v1710 = vor.u32 1.1754944e-38, %v1709
    %v1711 = vsel %vm1708, %v1710, %v1706
    %v1712 = vmul.f32 1.0, %v1711
    %v1714 = vrot.slane %v1387, 6
    %v1716 = vmul.f32 %v1692, %v1714
    %v1717 = vmul.f32 %v1673, %v1693
    %v1718 = vadd.f32 %v1716, %v1717
    %v1719 = vtanh.pop %v1718
    %v1720 = vmul.f32 %v1712, %v1719
    %1721 = vst [vmem:[#allocation2] sm:$0xc0] %v1720
    %v1722 = vpack.c.bf16 %v1720, %v1720
    %v1723 = vld [vmem:[#allocation3] sm:$0xff]
    %v1724 = vld [vmem:[#allocation3 + $0x8] sm:$0xff]
    %v1725 = vld [vmem:[#allocation3 + $0x10] sm:$0xff]
    %v1726 = vld [vmem:[#allocation3 + $0x18] sm:$0xff]
    %v1727 = vld [vmem:[#allocation3 + $0x20] sm:$0xff]
    %v1728 = vld [vmem:[#allocation3 + $0x28] sm:$0xff]
    %v1729 = vld [vmem:[#allocation3 + $0x30] sm:$0xff]
    %v1730 = vld [vmem:[#allocation3 + $0x38] sm:$0xff]
    %v1731 = vld [vmem:[#allocation3 + $0x40] sm:$0xff]
    %v1732 = vld [vmem:[#allocation3 + $0x48] sm:$0xff]
    %v1733 = vld [vmem:[#allocation3 + $0x50] sm:$0xff]
    %v1734 = vld [vmem:[#allocation3 + $0x58] sm:$0xff]
    %v1735 = vld [vmem:[#allocation3 + $0x60] sm:$0xff]
    %v1736 = vld [vmem:[#allocation3 + $0x68] sm:$0xff]
    %v1737 = vld [vmem:[#allocation3 + $0x70] sm:$0xff]
    %v1738 = vld [vmem:[#allocation3 + $0x78] sm:$0xff]
    %v1739 = vld [vmem:[#allocation3 + $0x80] sm:$0xff]
    %v1740 = vld [vmem:[#allocation3 + $0x88] sm:$0xff]
    %v1741 = vld [vmem:[#allocation3 + $0x90] sm:$0xff]
    %v1742 = vld [vmem:[#allocation3 + $0x98] sm:$0xff]
    %v1743 = vld [vmem:[#allocation3 + $0xa0] sm:$0xff]
    %v1744 = vld [vmem:[#allocation3 + $0xa8] sm:$0xff]
    %v1745 = vld [vmem:[#allocation3 + $0xb0] sm:$0xff]
    %v1746 = vld [vmem:[#allocation3 + $0xb8] sm:$0xff]
    %v1747 = vld [vmem:[#allocation3 + $0xc0] sm:$0xff]
    %v1748 = vld [vmem:[#allocation3 + $0xc8] sm:$0xff]
    %v1749 = vld [vmem:[#allocation3 + $0xd0] sm:$0xff]
    %v1750 = vld [vmem:[#allocation3 + $0xd8] sm:$0xff]
    %v1751 = vld [vmem:[#allocation3 + $0xe0] sm:$0xff]
    %v1752 = vld [vmem:[#allocation3 + $0xe8] sm:$0xff]
    %v1753 = vld [vmem:[#allocation3 + $0xf0] sm:$0xff]
    %v1754 = vld [vmem:[#allocation3 + $0xf8] sm:$0xff]
    %v1756 = vrot.slane %v1722, 3
    %v1790 = vunpack.c.l.b16 %v1723
    %v1791 = vunpack.c.h.b16 %v1723
    %v1792 = vunpack.c.l.b16 %v1724
    %v1793 = vunpack.c.h.b16 %v1724
    %v1794 = vunpack.c.l.b16 %v1725
    %v1795 = vunpack.c.h.b16 %v1725
    %v1796 = vunpack.c.l.b16 %v1726
    %v1797 = vunpack.c.h.b16 %v1726
    %v1798 = vunpack.c.l.b16 %v1727
    %v1799 = vunpack.c.h.b16 %v1727
    %v1800 = vunpack.c.l.b16 %v1728
    %v1801 = vunpack.c.h.b16 %v1728
    %v1802 = vunpack.c.l.b16 %v1729
    %v1803 = vunpack.c.h.b16 %v1729
    %v1804 = vunpack.c.l.b16 %v1730
    %v1805 = vunpack.c.h.b16 %v1730
    %v1806 = vunpack.c.l.b16 %v1731
    %v1807 = vunpack.c.h.b16 %v1731
    %v1808 = vunpack.c.l.b16 %v1732
    %v1809 = vunpack.c.h.b16 %v1732
    %v1810 = vunpack.c.l.b16 %v1733
    %v1811 = vunpack.c.h.b16 %v1733
    %v1812 = vunpack.c.l.b16 %v1734
    %v1813 = vunpack.c.h.b16 %v1734
    %v1814 = vunpack.c.l.b16 %v1735
    %v1815 = vunpack.c.h.b16 %v1735
    %v1816 = vunpack.c.l.b16 %v1736
    %v1817 = vunpack.c.h.b16 %v1736
    %v1818 = vunpack.c.l.b16 %v1737
    %v1819 = vunpack.c.h.b16 %v1737
    %v1820 = vunpack.c.l.b16 %v1738
    %v1821 = vunpack.c.h.b16 %v1738
    %v1822 = vunpack.c.l.b16 %v1739
    %v1823 = vunpack.c.h.b16 %v1739
    %v1824 = vunpack.c.l.b16 %v1740
    %v1825 = vunpack.c.h.b16 %v1740
    %v1826 = vunpack.c.l.b16 %v1741
    %v1827 = vunpack.c.h.b16 %v1741
    %v1828 = vunpack.c.l.b16 %v1742
    %v1829 = vunpack.c.h.b16 %v1742
    %v1830 = vunpack.c.l.b16 %v1743
    %v1831 = vunpack.c.h.b16 %v1743
    %v1832 = vunpack.c.l.b16 %v1744
    %v1833 = vunpack.c.h.b16 %v1744
    %v1834 = vunpack.c.l.b16 %v1745
    %v1835 = vunpack.c.h.b16 %v1745
    %v1836 = vunpack.c.l.b16 %v1746
    %v1837 = vunpack.c.h.b16 %v1746
    %v1838 = vunpack.c.l.b16 %v1747
    %v1839 = vunpack.c.h.b16 %v1747
    %v1840 = vunpack.c.l.b16 %v1748
    %v1841 = vunpack.c.h.b16 %v1748
    %v1842 = vunpack.c.l.b16 %v1749
    %v1843 = vunpack.c.h.b16 %v1749
    %v1844 = vunpack.c.l.b16 %v1750
    %v1845 = vunpack.c.h.b16 %v1750
    %v1846 = vunpack.c.l.b16 %v1751
    %v1847 = vunpack.c.h.b16 %v1751
    %v1848 = vunpack.c.l.b16 %v1752
    %v1849 = vunpack.c.h.b16 %v1752
    %v1850 = vunpack.c.l.b16 %v1753
    %v1851 = vunpack.c.h.b16 %v1753
    %v1852 = vunpack.c.l.b16 %v1754
    %v1853 = vunpack.c.h.b16 %v1754
    %v1854 = vpack.c.b16 %v1794, %v1790
    %v1855 = vpack.c.b16 %v1795, %v1791
    %v1856 = vpack.c.b16 %v1796, %v1792
    %v1857 = vpack.c.b16 %v1797, %v1793
    %v1858 = vpack.c.b16 %v1802, %v1798
    %v1859 = vpack.c.b16 %v1803, %v1799
    %v1860 = vpack.c.b16 %v1804, %v1800
    %v1861 = vpack.c.b16 %v1805, %v1801
    %v1862 = vpack.c.b16 %v1810, %v1806
    %v1863 = vpack.c.b16 %v1811, %v1807
    %v1864 = vpack.c.b16 %v1812, %v1808
    %v1865 = vpack.c.b16 %v1813, %v1809
    %v1866 = vpack.c.b16 %v1818, %v1814
    %v1867 = vpack.c.b16 %v1819, %v1815
    %v1868 = vpack.c.b16 %v1820, %v1816
    %v1869 = vpack.c.b16 %v1821, %v1817
    %v1870 = vpack.c.b16 %v1826, %v1822
    %v1871 = vpack.c.b16 %v1827, %v1823
    %v1872 = vpack.c.b16 %v1828, %v1824
    %v1873 = vpack.c.b16 %v1829, %v1825
    %v1874 = vpack.c.b16 %v1834, %v1830
    %v1875 = vpack.c.b16 %v1835, %v1831
    %v1876 = vpack.c.b16 %v1836, %v1832
    %v1877 = vpack.c.b16 %v1837, %v1833
    %v1878 = vpack.c.b16 %v1842, %v1838
    %v1879 = vpack.c.b16 %v1843, %v1839
    %v1880 = vpack.c.b16 %v1844, %v1840
    %v1881 = vpack.c.b16 %v1845, %v1841
    %v1882 = vpack.c.b16 %v1850, %v1846
    %v1883 = vpack.c.b16 %v1851, %v1847
    %v1884 = vpack.c.b16 %v1852, %v1848
    %v1885 = vpack.c.b16 %v1853, %v1849
    %1918 = vmatpush.bf16.msra.mxu0 %v1882
    %1919 = vmatpush.bf16.msra.mxu0 %v1878
    %1920 = vmatpush.bf16.msra.mxu0 %v1874
    %1921 = vmatpush.bf16.msra.mxu0 %v1870
    %1922 = vmatpush.bf16.msra.mxu0 %v1866
    %1923 = vmatpush.bf16.msra.mxu0 %v1862
    %1924 = vmatpush.bf16.msra.mxu0 %v1858
    %1925 = vmatpush.bf16.msra.mxu0 %v1854
    %1926 = vmatmul.bf16.gmra.mxu0 %v1756
    %v1927 = vpop.f32.mrf.mxu0
    %v1928 = vadd.f32 0.0, %v1927
    %v1929 = vpop.f32.mrf.mxu0
    %1930 = vdwg.mxu0
    %1931 = vmatpush.bf16.msra.mxu0 %v1883
    %1932 = vmatpush.bf16.msra.mxu0 %v1879
    %1933 = vmatpush.bf16.msra.mxu0 %v1875
    %1934 = vmatpush.bf16.msra.mxu0 %v1871
    %1935 = vmatpush.bf16.msra.mxu0 %v1867
    %1936 = vmatpush.bf16.msra.mxu0 %v1863
    %1937 = vmatpush.bf16.msra.mxu0 %v1859
    %1938 = vmatpush.bf16.msra.mxu0 %v1855
    %1939 = vmatmul.bf16.gmra.mxu0 %v1756
    %v1940 = vpop.f32.mrf.mxu0
    %v1941 = vadd.f32 0.0, %v1940
    %v1942 = vpop.f32.mrf.mxu0
    %1943 = vdwg.mxu0
    %1944 = vmatpush.bf16.msra.mxu0 %v1884
    %1945 = vmatpush.bf16.msra.mxu0 %v1880
    %1946 = vmatpush.bf16.msra.mxu0 %v1876
    %1947 = vmatpush.bf16.msra.mxu0 %v1872
    %1948 = vmatpush.bf16.msra.mxu0 %v1868
    %1949 = vmatpush.bf16.msra.mxu0 %v1864
    %1950 = vmatpush.bf16.msra.mxu0 %v1860
    %1951 = vmatpush.bf16.msra.mxu0 %v1856
    %1952 = vmatmul.bf16.gmra.mxu0 %v1756
    %v1953 = vpop.f32.mrf.mxu0
    %v1954 = vadd.f32 0.0, %v1953
    %v1955 = vpop.f32.mrf.mxu0
    %1956 = vdwg.mxu0
    %1957 = vmatpush.bf16.msra.mxu0 %v1885
    %1958 = vmatpush.bf16.msra.mxu0 %v1881
    %1959 = vmatpush.bf16.msra.mxu0 %v1877
    %1960 = vmatpush.bf16.msra.mxu0 %v1873
    %1961 = vmatpush.bf16.msra.mxu0 %v1869
    %1962 = vmatpush.bf16.msra.mxu0 %v1865
    %1963 = vmatpush.bf16.msra.mxu0 %v1861
    %1964 = vmatpush.bf16.msra.mxu0 %v1857
    %1965 = vmatmul.bf16.gmra.mxu0 %v1756
    %v1966 = vpop.f32.mrf.mxu0
    %v1967 = vadd.f32 0.0, %v1966
    %v1968 = vpop.f32.mrf.mxu0
    %1969 = vdwg.mxu0
    %v1970 = vadd.f32 %v286, %v1928
    %v1971 = vadd.f32 %v300, %v1941
    %v1972 = vadd.f32 %v314, %v1954
    %v1973 = vadd.f32 %v328, %v1967
    %v1974 = vxor.u32 %v1970, 2147483648
    %v1975 = vmul.f32 %v1974, 1.442695
    %v1976 = vpow.pop %v1975
    %v1977 = vadd.f32 %v1976, 1.0
    %v1978 = vrcp.pop %v1977
    %v1979 = vmul.f32 %v1977, %v1978
    %v1980 = vsub.f32 1.0, %v1979
    %v1981 = vmul.f32 %v1978, %v1980
    %v1982 = vadd.f32 %v1978, %v1981
    %vm1983 = vweird.f32 %v1977
    %vm1984 = vweird.f32 %v1978
    %vm1985 = vmor %vm1983, %vm1984
    %v1986 = vsel %vm1985, %v1978, %v1982
    %v1987 = vand.u32 2147483647, %v1977
    %vm1988 = vcmp.eq.f32.partialorder %v1987, 8.507059e+37
    %v1989 = vand.u32 %v1977, 2147483648
    %v1990 = vor.u32 1.1754944e-38, %v1989
    %v1991 = vsel %vm1988, %v1990, %v1986
    %v1992 = vmul.f32 1.0, %v1991
    %v1993 = vxor.u32 %v1971, 2147483648
    %v1994 = vmul.f32 %v1993, 1.442695
    %v1995 = vpow.pop %v1994
    %v1996 = vadd.f32 %v1995, 1.0
    %v1997 = vrcp.pop %v1996
    %v1998 = vmul.f32 %v1996, %v1997
    %v1999 = vsub.f32 1.0, %v1998
    %v2000 = vmul.f32 %v1997, %v1999
    %v2001 = vadd.f32 %v1997, %v2000
    %vm2002 = vweird.f32 %v1996
    %vm2003 = vweird.f32 %v1997
    %vm2004 = vmor %vm2002, %vm2003
    %v2005 = vsel %vm2004, %v1997, %v2001
    %v2006 = vand.u32 2147483647, %v1996
    %vm2007 = vcmp.eq.f32.partialorder %v2006, 8.507059e+37
    %v2008 = vand.u32 %v1996, 2147483648
    %v2009 = vor.u32 1.1754944e-38, %v2008
    %v2010 = vsel %vm2007, %v2009, %v2005
    %v2011 = vmul.f32 1.0, %v2010
    %v2012 = vtanh.pop %v1972
    %v2013 = vxor.u32 %v1973, 2147483648
    %v2014 = vmul.f32 %v2013, 1.442695
    %v2015 = vpow.pop %v2014
    %v2016 = vadd.f32 %v2015, 1.0
    %v2017 = vrcp.pop %v2016
    %v2018 = vmul.f32 %v2016, %v2017
    %v2019 = vsub.f32 1.0, %v2018
    %v2020 = vmul.f32 %v2017, %v2019
    %v2021 = vadd.f32 %v2017, %v2020
    %vm2022 = vweird.f32 %v2016
    %vm2023 = vweird.f32 %v2017
    %vm2024 = vmor %vm2022, %vm2023
    %v2025 = vsel %vm2024, %v2017, %v2021
    %v2026 = vand.u32 2147483647, %v2016
    %vm2027 = vcmp.eq.f32.partialorder %v2026, 8.507059e+37
    %v2028 = vand.u32 %v2016, 2147483648
    %v2029 = vor.u32 1.1754944e-38, %v2028
    %v2030 = vsel %vm2027, %v2029, %v2025
    %v2031 = vmul.f32 1.0, %v2030
    %v2033 = vrot.slane %v1718, 6
    %v2035 = vmul.f32 %v2011, %v2033
    %v2036 = vmul.f32 %v1992, %v2012
    %v2037 = vadd.f32 %v2035, %v2036
    %v2038 = vtanh.pop %v2037
    %v2039 = vmul.f32 %v2031, %v2038
    %2040 = vst [vmem:[#allocation2 + $0x10] sm:$0x3] %v2039
    %v2041 = vpack.c.bf16 %v2039, %v2039
    %v2042 = vld [vmem:[#allocation3] sm:$0xff]
    %v2043 = vld [vmem:[#allocation3 + $0x8] sm:$0xff]
    %v2044 = vld [vmem:[#allocation3 + $0x10] sm:$0xff]
    %v2045 = vld [vmem:[#allocation3 + $0x18] sm:$0xff]
    %v2046 = vld [vmem:[#allocation3 + $0x20] sm:$0xff]
    %v2047 = vld [vmem:[#allocation3 + $0x28] sm:$0xff]
    %v2048 = vld [vmem:[#allocation3 + $0x30] sm:$0xff]
    %v2049 = vld [vmem:[#allocation3 + $0x38] sm:$0xff]
    %v2050 = vld [vmem:[#allocation3 + $0x40] sm:$0xff]
    %v2051 = vld [vmem:[#allocation3 + $0x48] sm:$0xff]
    %v2052 = vld [vmem:[#allocation3 + $0x50] sm:$0xff]
    %v2053 = vld [vmem:[#allocation3 + $0x58] sm:$0xff]
    %v2054 = vld [vmem:[#allocation3 + $0x60] sm:$0xff]
    %v2055 = vld [vmem:[#allocation3 + $0x68] sm:$0xff]
    %v2056 = vld [vmem:[#allocation3 + $0x70] sm:$0xff]
    %v2057 = vld [vmem:[#allocation3 + $0x78] sm:$0xff]
    %v2058 = vld [vmem:[#allocation3 + $0x80] sm:$0xff]
    %v2059 = vld [vmem:[#allocation3 + $0x88] sm:$0xff]
    %v2060 = vld [vmem:[#allocation3 + $0x90] sm:$0xff]
    %v2061 = vld [vmem:[#allocation3 + $0x98] sm:$0xff]
    %v2062 = vld [vmem:[#allocation3 + $0xa0] sm:$0xff]
    %v2063 = vld [vmem:[#allocation3 + $0xa8] sm:$0xff]
    %v2064 = vld [vmem:[#allocation3 + $0xb0] sm:$0xff]
    %v2065 = vld [vmem:[#allocation3 + $0xb8] sm:$0xff]
    %v2066 = vld [vmem:[#allocation3 + $0xc0] sm:$0xff]
    %v2067 = vld [vmem:[#allocation3 + $0xc8] sm:$0xff]
    %v2068 = vld [vmem:[#allocation3 + $0xd0] sm:$0xff]
    %v2069 = vld [vmem:[#allocation3 + $0xd8] sm:$0xff]
    %v2070 = vld [vmem:[#allocation3 + $0xe0] sm:$0xff]
    %v2071 = vld [vmem:[#allocation3 + $0xe8] sm:$0xff]
    %v2072 = vld [vmem:[#allocation3 + $0xf0] sm:$0xff]
    %v2073 = vld [vmem:[#allocation3 + $0xf8] sm:$0xff]
    %v2106 = vunpack.c.l.b16 %v2042
    %v2107 = vunpack.c.h.b16 %v2042
    %v2108 = vunpack.c.l.b16 %v2043
    %v2109 = vunpack.c.h.b16 %v2043
    %v2110 = vunpack.c.l.b16 %v2044
    %v2111 = vunpack.c.h.b16 %v2044
    %v2112 = vunpack.c.l.b16 %v2045
    %v2113 = vunpack.c.h.b16 %v2045
    %v2114 = vunpack.c.l.b16 %v2046
    %v2115 = vunpack.c.h.b16 %v2046
    %v2116 = vunpack.c.l.b16 %v2047
    %v2117 = vunpack.c.h.b16 %v2047
    %v2118 = vunpack.c.l.b16 %v2048
    %v2119 = vunpack.c.h.b16 %v2048
    %v2120 = vunpack.c.l.b16 %v2049
    %v2121 = vunpack.c.h.b16 %v2049
    %v2122 = vunpack.c.l.b16 %v2050
    %v2123 = vunpack.c.h.b16 %v2050
    %v2124 = vunpack.c.l.b16 %v2051
    %v2125 = vunpack.c.h.b16 %v2051
    %v2126 = vunpack.c.l.b16 %v2052
    %v2127 = vunpack.c.h.b16 %v2052
    %v2128 = vunpack.c.l.b16 %v2053
    %v2129 = vunpack.c.h.b16 %v2053
    %v2130 = vunpack.c.l.b16 %v2054
    %v2131 = vunpack.c.h.b16 %v2054
    %v2132 = vunpack.c.l.b16 %v2055
    %v2133 = vunpack.c.h.b16 %v2055
    %v2134 = vunpack.c.l.b16 %v2056
    %v2135 = vunpack.c.h.b16 %v2056
    %v2136 = vunpack.c.l.b16 %v2057
    %v2137 = vunpack.c.h.b16 %v2057
    %v2138 = vunpack.c.l.b16 %v2058
    %v2139 = vunpack.c.h.b16 %v2058
    %v2140 = vunpack.c.l.b16 %v2059
    %v2141 = vunpack.c.h.b16 %v2059
    %v2142 = vunpack.c.l.b16 %v2060
    %v2143 = vunpack.c.h.b16 %v2060
    %v2144 = vunpack.c.l.b16 %v2061
    %v2145 = vunpack.c.h.b16 %v2061
    %v2146 = vunpack.c.l.b16 %v2062
    %v2147 = vunpack.c.h.b16 %v2062
    %v2148 = vunpack.c.l.b16 %v2063
    %v2149 = vunpack.c.h.b16 %v2063
    %v2150 = vunpack.c.l.b16 %v2064
    %v2151 = vunpack.c.h.b16 %v2064
    %v2152 = vunpack.c.l.b16 %v2065
    %v2153 = vunpack.c.h.b16 %v2065
    %v2154 = vunpack.c.l.b16 %v2066
    %v2155 = vunpack.c.h.b16 %v2066
    %v2156 = vunpack.c.l.b16 %v2067
    %v2157 = vunpack.c.h.b16 %v2067
    %v2158 = vunpack.c.l.b16 %v2068
    %v2159 = vunpack.c.h.b16 %v2068
    %v2160 = vunpack.c.l.b16 %v2069
    %v2161 = vunpack.c.h.b16 %v2069
    %v2162 = vunpack.c.l.b16 %v2070
    %v2163 = vunpack.c.h.b16 %v2070
    %v2164 = vunpack.c.l.b16 %v2071
    %v2165 = vunpack.c.h.b16 %v2071
    %v2166 = vunpack.c.l.b16 %v2072
    %v2167 = vunpack.c.h.b16 %v2072
    %v2168 = vunpack.c.l.b16 %v2073
    %v2169 = vunpack.c.h.b16 %v2073
    %v2170 = vpack.c.b16 %v2110, %v2106
    %v2171 = vpack.c.b16 %v2111, %v2107
    %v2172 = vpack.c.b16 %v2112, %v2108
    %v2173 = vpack.c.b16 %v2113, %v2109
    %v2174 = vpack.c.b16 %v2118, %v2114
    %v2175 = vpack.c.b16 %v2119, %v2115
    %v2176 = vpack.c.b16 %v2120, %v2116
    %v2177 = vpack.c.b16 %v2121, %v2117
    %v2178 = vpack.c.b16 %v2126, %v2122
    %v2179 = vpack.c.b16 %v2127, %v2123
    %v2180 = vpack.c.b16 %v2128, %v2124
    %v2181 = vpack.c.b16 %v2129, %v2125
    %v2182 = vpack.c.b16 %v2134, %v2130
    %v2183 = vpack.c.b16 %v2135, %v2131
    %v2184 = vpack.c.b16 %v2136, %v2132
    %v2185 = vpack.c.b16 %v2137, %v2133
    %v2186 = vpack.c.b16 %v2142, %v2138
    %v2187 = vpack.c.b16 %v2143, %v2139
    %v2188 = vpack.c.b16 %v2144, %v2140
    %v2189 = vpack.c.b16 %v2145, %v2141
    %v2190 = vpack.c.b16 %v2150, %v2146
    %v2191 = vpack.c.b16 %v2151, %v2147
    %v2192 = vpack.c.b16 %v2152, %v2148
    %v2193 = vpack.c.b16 %v2153, %v2149
    %v2194 = vpack.c.b16 %v2158, %v2154
    %v2195 = vpack.c.b16 %v2159, %v2155
    %v2196 = vpack.c.b16 %v2160, %v2156
    %v2197 = vpack.c.b16 %v2161, %v2157
    %v2198 = vpack.c.b16 %v2166, %v2162
    %v2199 = vpack.c.b16 %v2167, %v2163
    %v2200 = vpack.c.b16 %v2168, %v2164
    %v2201 = vpack.c.b16 %v2169, %v2165
    %2234 = vmatpush.bf16.msra.mxu0 %v2198
    %2235 = vmatpush.bf16.msra.mxu0 %v2194
    %2236 = vmatpush.bf16.msra.mxu0 %v2190
    %2237 = vmatpush.bf16.msra.mxu0 %v2186
    %2238 = vmatpush.bf16.msra.mxu0 %v2182
    %2239 = vmatpush.bf16.msra.mxu0 %v2178
    %2240 = vmatpush.bf16.msra.mxu0 %v2174
    %2241 = vmatpush.bf16.msra.mxu0 %v2170
    %2242 = vmatmul.bf16.gmra.mxu0 %v2041
    %v2243 = vpop.f32.mrf.mxu0
    %v2244 = vadd.f32 0.0, %v2243
    %v2245 = vpop.f32.mrf.mxu0
    %2246 = vdwg.mxu0
    %2247 = vmatpush.bf16.msra.mxu0 %v2199
    %2248 = vmatpush.bf16.msra.mxu0 %v2195
    %2249 = vmatpush.bf16.msra.mxu0 %v2191
    %2250 = vmatpush.bf16.msra.mxu0 %v2187
    %2251 = vmatpush.bf16.msra.mxu0 %v2183
    %2252 = vmatpush.bf16.msra.mxu0 %v2179
    %2253 = vmatpush.bf16.msra.mxu0 %v2175
    %2254 = vmatpush.bf16.msra.mxu0 %v2171
    %2255 = vmatmul.bf16.gmra.mxu0 %v2041
    %v2256 = vpop.f32.mrf.mxu0
    %v2257 = vadd.f32 0.0, %v2256
    %v2258 = vpop.f32.mrf.mxu0
    %2259 = vdwg.mxu0
    %2260 = vmatpush.bf16.msra.mxu0 %v2200
    %2261 = vmatpush.bf16.msra.mxu0 %v2196
    %2262 = vmatpush.bf16.msra.mxu0 %v2192
    %2263 = vmatpush.bf16.msra.mxu0 %v2188
    %2264 = vmatpush.bf16.msra.mxu0 %v2184
    %2265 = vmatpush.bf16.msra.mxu0 %v2180
    %2266 = vmatpush.bf16.msra.mxu0 %v2176
    %2267 = vmatpush.bf16.msra.mxu0 %v2172
    %2268 = vmatmul.bf16.gmra.mxu0 %v2041
    %v2269 = vpop.f32.mrf.mxu0
    %v2270 = vadd.f32 0.0, %v2269
    %v2271 = vpop.f32.mrf.mxu0
    %2272 = vdwg.mxu0
    %2273 = vmatpush.bf16.msra.mxu0 %v2201
    %2274 = vmatpush.bf16.msra.mxu0 %v2197
    %2275 = vmatpush.bf16.msra.mxu0 %v2193
    %2276 = vmatpush.bf16.msra.mxu0 %v2189
    %2277 = vmatpush.bf16.msra.mxu0 %v2185
    %2278 = vmatpush.bf16.msra.mxu0 %v2181
    %2279 = vmatpush.bf16.msra.mxu0 %v2177
    %2280 = vmatpush.bf16.msra.mxu0 %v2173
    %2281 = vmatmul.bf16.gmra.mxu0 %v2041
    %v2282 = vpop.f32.mrf.mxu0
    %v2283 = vadd.f32 0.0, %v2282
    %v2284 = vpop.f32.mrf.mxu0
    %2285 = vdwg.mxu0
    %v2290 = vrot.slane %v2244, 6
    %v2291 = vrot.slane %v2257, 6
    %v2292 = vrot.slane %v2270, 6
    %v2293 = vrot.slane %v2283, 6
    %v2298 = vadd.f32 %v286, %v2290
    %v2299 = vadd.f32 %v300, %v2291
    %v2300 = vadd.f32 %v314, %v2292
    %v2301 = vadd.f32 %v328, %v2293
    %v2302 = vxor.u32 %v2298, 2147483648
    %v2303 = vmul.f32 %v2302, 1.442695
    %v2304 = vpow.pop %v2303
    %v2305 = vadd.f32 %v2304, 1.0
    %v2306 = vrcp.pop %v2305
    %v2307 = vmul.f32 %v2305, %v2306
    %v2308 = vsub.f32 1.0, %v2307
    %v2309 = vmul.f32 %v2306, %v2308
    %v2310 = vadd.f32 %v2306, %v2309
    %vm2311 = vweird.f32 %v2305
    %vm2312 = vweird.f32 %v2306
    %vm2313 = vmor %vm2311, %vm2312
    %v2314 = vsel %vm2313, %v2306, %v2310
    %v2315 = vand.u32 2147483647, %v2305
    %vm2316 = vcmp.eq.f32.partialorder %v2315, 8.507059e+37
    %v2317 = vand.u32 %v2305, 2147483648
    %v2318 = vor.u32 1.1754944e-38, %v2317
    %v2319 = vsel %vm2316, %v2318, %v2314
    %v2320 = vmul.f32 1.0, %v2319
    %v2321 = vxor.u32 %v2299, 2147483648
    %v2322 = vmul.f32 %v2321, 1.442695
    %v2323 = vpow.pop %v2322
    %v2324 = vadd.f32 %v2323, 1.0
    %v2325 = vrcp.pop %v2324
    %v2326 = vmul.f32 %v2324, %v2325
    %v2327 = vsub.f32 1.0, %v2326
    %v2328 = vmul.f32 %v2325, %v2327
    %v2329 = vadd.f32 %v2325, %v2328
    %vm2330 = vweird.f32 %v2324
    %vm2331 = vweird.f32 %v2325
    %vm2332 = vmor %vm2330, %vm2331
    %v2333 = vsel %vm2332, %v2325, %v2329
    %v2334 = vand.u32 2147483647, %v2324
    %vm2335 = vcmp.eq.f32.partialorder %v2334, 8.507059e+37
    %v2336 = vand.u32 %v2324, 2147483648
    %v2337 = vor.u32 1.1754944e-38, %v2336
    %v2338 = vsel %vm2335, %v2337, %v2333
    %v2339 = vmul.f32 1.0, %v2338
    %v2340 = vtanh.pop %v2300
    %v2341 = vxor.u32 %v2301, 2147483648
    %v2342 = vmul.f32 %v2341, 1.442695
    %v2343 = vpow.pop %v2342
    %v2344 = vadd.f32 %v2343, 1.0
    %v2345 = vrcp.pop %v2344
    %v2346 = vmul.f32 %v2344, %v2345
    %v2347 = vsub.f32 1.0, %v2346
    %v2348 = vmul.f32 %v2345, %v2347
    %v2349 = vadd.f32 %v2345, %v2348
    %vm2350 = vweird.f32 %v2344
    %vm2351 = vweird.f32 %v2345
    %vm2352 = vmor %vm2350, %vm2351
    %v2353 = vsel %vm2352, %v2345, %v2349
    %v2354 = vand.u32 2147483647, %v2344
    %vm2355 = vcmp.eq.f32.partialorder %v2354, 8.507059e+37
    %v2356 = vand.u32 %v2344, 2147483648
    %v2357 = vor.u32 1.1754944e-38, %v2356
    %v2358 = vsel %vm2355, %v2357, %v2353
    %v2359 = vmul.f32 1.0, %v2358
    %v2361 = vrot.slane %v2037, 6
    %v2363 = vmul.f32 %v2339, %v2361
    %v2364 = vmul.f32 %v2320, %v2340
    %v2365 = vadd.f32 %v2363, %v2364
    %v2366 = vtanh.pop %v2365
    %v2367 = vmul.f32 %v2359, %v2366
    %2368 = vst [vmem:[#allocation2 + $0x10] sm:$0xc] %v2367
    %v2369 = vpack.c.bf16 %v2367, %v2367
    %v2370 = vld [vmem:[#allocation3] sm:$0xff]
    %v2371 = vld [vmem:[#allocation3 + $0x8] sm:$0xff]
    %v2372 = vld [vmem:[#allocation3 + $0x10] sm:$0xff]
    %v2373 = vld [vmem:[#allocation3 + $0x18] sm:$0xff]
    %v2374 = vld [vmem:[#allocation3 + $0x20] sm:$0xff]
    %v2375 = vld [vmem:[#allocation3 + $0x28] sm:$0xff]
    %v2376 = vld [vmem:[#allocation3 + $0x30] sm:$0xff]
    %v2377 = vld [vmem:[#allocation3 + $0x38] sm:$0xff]
    %v2378 = vld [vmem:[#allocation3 + $0x40] sm:$0xff]
    %v2379 = vld [vmem:[#allocation3 + $0x48] sm:$0xff]
    %v2380 = vld [vmem:[#allocation3 + $0x50] sm:$0xff]
    %v2381 = vld [vmem:[#allocation3 + $0x58] sm:$0xff]
    %v2382 = vld [vmem:[#allocation3 + $0x60] sm:$0xff]
    %v2383 = vld [vmem:[#allocation3 + $0x68] sm:$0xff]
    %v2384 = vld [vmem:[#allocation3 + $0x70] sm:$0xff]
    %v2385 = vld [vmem:[#allocation3 + $0x78] sm:$0xff]
    %v2386 = vld [vmem:[#allocation3 + $0x80] sm:$0xff]
    %v2387 = vld [vmem:[#allocation3 + $0x88] sm:$0xff]
    %v2388 = vld [vmem:[#allocation3 + $0x90] sm:$0xff]
    %v2389 = vld [vmem:[#allocation3 + $0x98] sm:$0xff]
    %v2390 = vld [vmem:[#allocation3 + $0xa0] sm:$0xff]
    %v2391 = vld [vmem:[#allocation3 + $0xa8] sm:$0xff]
    %v2392 = vld [vmem:[#allocation3 + $0xb0] sm:$0xff]
    %v2393 = vld [vmem:[#allocation3 + $0xb8] sm:$0xff]
    %v2394 = vld [vmem:[#allocation3 + $0xc0] sm:$0xff]
    %v2395 = vld [vmem:[#allocation3 + $0xc8] sm:$0xff]
    %v2396 = vld [vmem:[#allocation3 + $0xd0] sm:$0xff]
    %v2397 = vld [vmem:[#allocation3 + $0xd8] sm:$0xff]
    %v2398 = vld [vmem:[#allocation3 + $0xe0] sm:$0xff]
    %v2399 = vld [vmem:[#allocation3 + $0xe8] sm:$0xff]
    %v2400 = vld [vmem:[#allocation3 + $0xf0] sm:$0xff]
    %v2401 = vld [vmem:[#allocation3 + $0xf8] sm:$0xff]
    %v2403 = vrot.slane %v2369, 1
    %v2437 = vunpack.c.l.b16 %v2370
    %v2438 = vunpack.c.h.b16 %v2370
    %v2439 = vunpack.c.l.b16 %v2371
    %v2440 = vunpack.c.h.b16 %v2371
    %v2441 = vunpack.c.l.b16 %v2372
    %v2442 = vunpack.c.h.b16 %v2372
    %v2443 = vunpack.c.l.b16 %v2373
    %v2444 = vunpack.c.h.b16 %v2373
    %v2445 = vunpack.c.l.b16 %v2374
    %v2446 = vunpack.c.h.b16 %v2374
    %v2447 = vunpack.c.l.b16 %v2375
    %v2448 = vunpack.c.h.b16 %v2375
    %v2449 = vunpack.c.l.b16 %v2376
    %v2450 = vunpack.c.h.b16 %v2376
    %v2451 = vunpack.c.l.b16 %v2377
    %v2452 = vunpack.c.h.b16 %v2377
    %v2453 = vunpack.c.l.b16 %v2378
    %v2454 = vunpack.c.h.b16 %v2378
    %v2455 = vunpack.c.l.b16 %v2379
    %v2456 = vunpack.c.h.b16 %v2379
    %v2457 = vunpack.c.l.b16 %v2380
    %v2458 = vunpack.c.h.b16 %v2380
    %v2459 = vunpack.c.l.b16 %v2381
    %v2460 = vunpack.c.h.b16 %v2381
    %v2461 = vunpack.c.l.b16 %v2382
    %v2462 = vunpack.c.h.b16 %v2382
    %v2463 = vunpack.c.l.b16 %v2383
    %v2464 = vunpack.c.h.b16 %v2383
    %v2465 = vunpack.c.l.b16 %v2384
    %v2466 = vunpack.c.h.b16 %v2384
    %v2467 = vunpack.c.l.b16 %v2385
    %v2468 = vunpack.c.h.b16 %v2385
    %v2469 = vunpack.c.l.b16 %v2386
    %v2470 = vunpack.c.h.b16 %v2386
    %v2471 = vunpack.c.l.b16 %v2387
    %v2472 = vunpack.c.h.b16 %v2387
    %v2473 = vunpack.c.l.b16 %v2388
    %v2474 = vunpack.c.h.b16 %v2388
    %v2475 = vunpack.c.l.b16 %v2389
    %v2476 = vunpack.c.h.b16 %v2389
    %v2477 = vunpack.c.l.b16 %v2390
    %v2478 = vunpack.c.h.b16 %v2390
    %v2479 = vunpack.c.l.b16 %v2391
    %v2480 = vunpack.c.h.b16 %v2391
    %v2481 = vunpack.c.l.b16 %v2392
    %v2482 = vunpack.c.h.b16 %v2392
    %v2483 = vunpack.c.l.b16 %v2393
    %v2484 = vunpack.c.h.b16 %v2393
    %v2485 = vunpack.c.l.b16 %v2394
    %v2486 = vunpack.c.h.b16 %v2394
    %v2487 = vunpack.c.l.b16 %v2395
    %v2488 = vunpack.c.h.b16 %v2395
    %v2489 = vunpack.c.l.b16 %v2396
    %v2490 = vunpack.c.h.b16 %v2396
    %v2491 = vunpack.c.l.b16 %v2397
    %v2492 = vunpack.c.h.b16 %v2397
    %v2493 = vunpack.c.l.b16 %v2398
    %v2494 = vunpack.c.h.b16 %v2398
    %v2495 = vunpack.c.l.b16 %v2399
    %v2496 = vunpack.c.h.b16 %v2399
    %v2497 = vunpack.c.l.b16 %v2400
    %v2498 = vunpack.c.h.b16 %v2400
    %v2499 = vunpack.c.l.b16 %v2401
    %v2500 = vunpack.c.h.b16 %v2401
    %v2501 = vpack.c.b16 %v2441, %v2437
    %v2502 = vpack.c.b16 %v2442, %v2438
    %v2503 = vpack.c.b16 %v2443, %v2439
    %v2504 = vpack.c.b16 %v2444, %v2440
    %v2505 = vpack.c.b16 %v2449, %v2445
    %v2506 = vpack.c.b16 %v2450, %v2446
    %v2507 = vpack.c.b16 %v2451, %v2447
    %v2508 = vpack.c.b16 %v2452, %v2448
    %v2509 = vpack.c.b16 %v2457, %v2453
    %v2510 = vpack.c.b16 %v2458, %v2454
    %v2511 = vpack.c.b16 %v2459, %v2455
    %v2512 = vpack.c.b16 %v2460, %v2456
    %v2513 = vpack.c.b16 %v2465, %v2461
    %v2514 = vpack.c.b16 %v2466, %v2462
    %v2515 = vpack.c.b16 %v2467, %v2463
    %v2516 = vpack.c.b16 %v2468, %v2464
    %v2517 = vpack.c.b16 %v2473, %v2469
    %v2518 = vpack.c.b16 %v2474, %v2470
    %v2519 = vpack.c.b16 %v2475, %v2471
    %v2520 = vpack.c.b16 %v2476, %v2472
    %v2521 = vpack.c.b16 %v2481, %v2477
    %v2522 = vpack.c.b16 %v2482, %v2478
    %v2523 = vpack.c.b16 %v2483, %v2479
    %v2524 = vpack.c.b16 %v2484, %v2480
    %v2525 = vpack.c.b16 %v2489, %v2485
    %v2526 = vpack.c.b16 %v2490, %v2486
    %v2527 = vpack.c.b16 %v2491, %v2487
    %v2528 = vpack.c.b16 %v2492, %v2488
    %v2529 = vpack.c.b16 %v2497, %v2493
    %v2530 = vpack.c.b16 %v2498, %v2494
    %v2531 = vpack.c.b16 %v2499, %v2495
    %v2532 = vpack.c.b16 %v2500, %v2496
    %2565 = vmatpush.bf16.msra.mxu0 %v2529
    %2566 = vmatpush.bf16.msra.mxu0 %v2525
    %2567 = vmatpush.bf16.msra.mxu0 %v2521
    %2568 = vmatpush.bf16.msra.mxu0 %v2517
    %2569 = vmatpush.bf16.msra.mxu0 %v2513
    %2570 = vmatpush.bf16.msra.mxu0 %v2509
    %2571 = vmatpush.bf16.msra.mxu0 %v2505
    %2572 = vmatpush.bf16.msra.mxu0 %v2501
    %2573 = vmatmul.bf16.gmra.mxu0 %v2403
    %v2574 = vpop.f32.mrf.mxu0
    %v2575 = vadd.f32 0.0, %v2574
    %v2576 = vpop.f32.mrf.mxu0
    %2577 = vdwg.mxu0
    %2578 = vmatpush.bf16.msra.mxu0 %v2530
    %2579 = vmatpush.bf16.msra.mxu0 %v2526
    %2580 = vmatpush.bf16.msra.mxu0 %v2522
    %2581 = vmatpush.bf16.msra.mxu0 %v2518
    %2582 = vmatpush.bf16.msra.mxu0 %v2514
    %2583 = vmatpush.bf16.msra.mxu0 %v2510
    %2584 = vmatpush.bf16.msra.mxu0 %v2506
    %2585 = vmatpush.bf16.msra.mxu0 %v2502
    %2586 = vmatmul.bf16.gmra.mxu0 %v2403
    %v2587 = vpop.f32.mrf.mxu0
    %v2588 = vadd.f32 0.0, %v2587
    %v2589 = vpop.f32.mrf.mxu0
    %2590 = vdwg.mxu0
    %2591 = vmatpush.bf16.msra.mxu0 %v2531
    %2592 = vmatpush.bf16.msra.mxu0 %v2527
    %2593 = vmatpush.bf16.msra.mxu0 %v2523
    %2594 = vmatpush.bf16.msra.mxu0 %v2519
    %2595 = vmatpush.bf16.msra.mxu0 %v2515
    %2596 = vmatpush.bf16.msra.mxu0 %v2511
    %2597 = vmatpush.bf16.msra.mxu0 %v2507
    %2598 = vmatpush.bf16.msra.mxu0 %v2503
    %2599 = vmatmul.bf16.gmra.mxu0 %v2403
    %v2600 = vpop.f32.mrf.mxu0
    %v2601 = vadd.f32 0.0, %v2600
    %v2602 = vpop.f32.mrf.mxu0
    %2603 = vdwg.mxu0
    %2604 = vmatpush.bf16.msra.mxu0 %v2532
    %2605 = vmatpush.bf16.msra.mxu0 %v2528
    %2606 = vmatpush.bf16.msra.mxu0 %v2524
    %2607 = vmatpush.bf16.msra.mxu0 %v2520
    %2608 = vmatpush.bf16.msra.mxu0 %v2516
    %2609 = vmatpush.bf16.msra.mxu0 %v2512
    %2610 = vmatpush.bf16.msra.mxu0 %v2508
    %2611 = vmatpush.bf16.msra.mxu0 %v2504
    %2612 = vmatmul.bf16.gmra.mxu0 %v2403
    %v2613 = vpop.f32.mrf.mxu0
    %v2614 = vadd.f32 0.0, %v2613
    %v2615 = vpop.f32.mrf.mxu0
    %2616 = vdwg.mxu0
    %v2621 = vrot.slane %v2575, 4
    %v2622 = vrot.slane %v2588, 4
    %v2623 = vrot.slane %v2601, 4
    %v2624 = vrot.slane %v2614, 4
    %v2629 = vadd.f32 %v286, %v2621
    %v2630 = vadd.f32 %v300, %v2622
    %v2631 = vadd.f32 %v314, %v2623
    %v2632 = vadd.f32 %v328, %v2624
    %v2633 = vxor.u32 %v2629, 2147483648
    %v2634 = vmul.f32 %v2633, 1.442695
    %v2635 = vpow.pop %v2634
    %v2636 = vadd.f32 %v2635, 1.0
    %v2637 = vrcp.pop %v2636
    %v2638 = vmul.f32 %v2636, %v2637
    %v2639 = vsub.f32 1.0, %v2638
    %v2640 = vmul.f32 %v2637, %v2639
    %v2641 = vadd.f32 %v2637, %v2640
    %vm2642 = vweird.f32 %v2636
    %vm2643 = vweird.f32 %v2637
    %vm2644 = vmor %vm2642, %vm2643
    %v2645 = vsel %vm2644, %v2637, %v2641
    %v2646 = vand.u32 2147483647, %v2636
    %vm2647 = vcmp.eq.f32.partialorder %v2646, 8.507059e+37
    %v2648 = vand.u32 %v2636, 2147483648
    %v2649 = vor.u32 1.1754944e-38, %v2648
    %v2650 = vsel %vm2647, %v2649, %v2645
    %v2651 = vmul.f32 1.0, %v2650
    %v2652 = vxor.u32 %v2630, 2147483648
    %v2653 = vmul.f32 %v2652, 1.442695
    %v2654 = vpow.pop %v2653
    %v2655 = vadd.f32 %v2654, 1.0
    %v2656 = vrcp.pop %v2655
    %v2657 = vmul.f32 %v2655, %v2656
    %v2658 = vsub.f32 1.0, %v2657
    %v2659 = vmul.f32 %v2656, %v2658
    %v2660 = vadd.f32 %v2656, %v2659
    %vm2661 = vweird.f32 %v2655
    %vm2662 = vweird.f32 %v2656
    %vm2663 = vmor %vm2661, %vm2662
    %v2664 = vsel %vm2663, %v2656, %v2660
    %v2665 = vand.u32 2147483647, %v2655
    %vm2666 = vcmp.eq.f32.partialorder %v2665, 8.507059e+37
    %v2667 = vand.u32 %v2655, 2147483648
    %v2668 = vor.u32 1.1754944e-38, %v2667
    %v2669 = vsel %vm2666, %v2668, %v2664
    %v2670 = vmul.f32 1.0, %v2669
    %v2671 = vtanh.pop %v2631
    %v2672 = vxor.u32 %v2632, 2147483648
    %v2673 = vmul.f32 %v2672, 1.442695
    %v2674 = vpow.pop %v2673
    %v2675 = vadd.f32 %v2674, 1.0
    %v2676 = vrcp.pop %v2675
    %v2677 = vmul.f32 %v2675, %v2676
    %v2678 = vsub.f32 1.0, %v2677
    %v2679 = vmul.f32 %v2676, %v2678
    %v2680 = vadd.f32 %v2676, %v2679
    %vm2681 = vweird.f32 %v2675
    %vm2682 = vweird.f32 %v2676
    %vm2683 = vmor %vm2681, %vm2682
    %v2684 = vsel %vm2683, %v2676, %v2680
    %v2685 = vand.u32 2147483647, %v2675
    %vm2686 = vcmp.eq.f32.partialorder %v2685, 8.507059e+37
    %v2687 = vand.u32 %v2675, 2147483648
    %v2688 = vor.u32 1.1754944e-38, %v2687
    %v2689 = vsel %vm2686, %v2688, %v2684
    %v2690 = vmul.f32 1.0, %v2689
    %v2692 = vrot.slane %v2365, 6
    %v2694 = vmul.f32 %v2670, %v2692
    %v2695 = vmul.f32 %v2651, %v2671
    %v2696 = vadd.f32 %v2694, %v2695
    %v2697 = vtanh.pop %v2696
    %v2698 = vmul.f32 %v2690, %v2697
    %2699 = vst [vmem:[#allocation2 + $0x10] sm:$0x30] %v2698
    %v2700 = vpack.c.bf16 %v2698, %v2698
    %v2701 = vld [vmem:[#allocation3] sm:$0xff]
    %v2702 = vld [vmem:[#allocation3 + $0x8] sm:$0xff]
    %v2703 = vld [vmem:[#allocation3 + $0x10] sm:$0xff]
    %v2704 = vld [vmem:[#allocation3 + $0x18] sm:$0xff]
    %v2705 = vld [vmem:[#allocation3 + $0x20] sm:$0xff]
    %v2706 = vld [vmem:[#allocation3 + $0x28] sm:$0xff]
    %v2707 = vld [vmem:[#allocation3 + $0x30] sm:$0xff]
    %v2708 = vld [vmem:[#allocation3 + $0x38] sm:$0xff]
    %v2709 = vld [vmem:[#allocation3 + $0x40] sm:$0xff]
    %v2710 = vld [vmem:[#allocation3 + $0x48] sm:$0xff]
    %v2711 = vld [vmem:[#allocation3 + $0x50] sm:$0xff]
    %v2712 = vld [vmem:[#allocation3 + $0x58] sm:$0xff]
    %v2713 = vld [vmem:[#allocation3 + $0x60] sm:$0xff]
    %v2714 = vld [vmem:[#allocation3 + $0x68] sm:$0xff]
    %v2715 = vld [vmem:[#allocation3 + $0x70] sm:$0xff]
    %v2716 = vld [vmem:[#allocation3 + $0x78] sm:$0xff]
    %v2717 = vld [vmem:[#allocation3 + $0x80] sm:$0xff]
    %v2718 = vld [vmem:[#allocation3 + $0x88] sm:$0xff]
    %v2719 = vld [vmem:[#allocation3 + $0x90] sm:$0xff]
    %v2720 = vld [vmem:[#allocation3 + $0x98] sm:$0xff]
    %v2721 = vld [vmem:[#allocation3 + $0xa0] sm:$0xff]
    %v2722 = vld [vmem:[#allocation3 + $0xa8] sm:$0xff]
    %v2723 = vld [vmem:[#allocation3 + $0xb0] sm:$0xff]
    %v2724 = vld [vmem:[#allocation3 + $0xb8] sm:$0xff]
    %v2725 = vld [vmem:[#allocation3 + $0xc0] sm:$0xff]
    %v2726 = vld [vmem:[#allocation3 + $0xc8] sm:$0xff]
    %v2727 = vld [vmem:[#allocation3 + $0xd0] sm:$0xff]
    %v2728 = vld [vmem:[#allocation3 + $0xd8] sm:$0xff]
    %v2729 = vld [vmem:[#allocation3 + $0xe0] sm:$0xff]
    %v2730 = vld [vmem:[#allocation3 + $0xe8] sm:$0xff]
    %v2731 = vld [vmem:[#allocation3 + $0xf0] sm:$0xff]
    %v2732 = vld [vmem:[#allocation3 + $0xf8] sm:$0xff]
    %v2734 = vrot.slane %v2700, 2
    %v2768 = vunpack.c.l.b16 %v2701
    %v2769 = vunpack.c.h.b16 %v2701
    %v2770 = vunpack.c.l.b16 %v2702
    %v2771 = vunpack.c.h.b16 %v2702
    %v2772 = vunpack.c.l.b16 %v2703
    %v2773 = vunpack.c.h.b16 %v2703
    %v2774 = vunpack.c.l.b16 %v2704
    %v2775 = vunpack.c.h.b16 %v2704
    %v2776 = vunpack.c.l.b16 %v2705
    %v2777 = vunpack.c.h.b16 %v2705
    %v2778 = vunpack.c.l.b16 %v2706
    %v2779 = vunpack.c.h.b16 %v2706
    %v2780 = vunpack.c.l.b16 %v2707
    %v2781 = vunpack.c.h.b16 %v2707
    %v2782 = vunpack.c.l.b16 %v2708
    %v2783 = vunpack.c.h.b16 %v2708
    %v2784 = vunpack.c.l.b16 %v2709
    %v2785 = vunpack.c.h.b16 %v2709
    %v2786 = vunpack.c.l.b16 %v2710
    %v2787 = vunpack.c.h.b16 %v2710
    %v2788 = vunpack.c.l.b16 %v2711
    %v2789 = vunpack.c.h.b16 %v2711
    %v2790 = vunpack.c.l.b16 %v2712
    %v2791 = vunpack.c.h.b16 %v2712
    %v2792 = vunpack.c.l.b16 %v2713
    %v2793 = vunpack.c.h.b16 %v2713
    %v2794 = vunpack.c.l.b16 %v2714
    %v2795 = vunpack.c.h.b16 %v2714
    %v2796 = vunpack.c.l.b16 %v2715
    %v2797 = vunpack.c.h.b16 %v2715
    %v2798 = vunpack.c.l.b16 %v2716
    %v2799 = vunpack.c.h.b16 %v2716
    %v2800 = vunpack.c.l.b16 %v2717
    %v2801 = vunpack.c.h.b16 %v2717
    %v2802 = vunpack.c.l.b16 %v2718
    %v2803 = vunpack.c.h.b16 %v2718
    %v2804 = vunpack.c.l.b16 %v2719
    %v2805 = vunpack.c.h.b16 %v2719
    %v2806 = vunpack.c.l.b16 %v2720
    %v2807 = vunpack.c.h.b16 %v2720
    %v2808 = vunpack.c.l.b16 %v2721
    %v2809 = vunpack.c.h.b16 %v2721
    %v2810 = vunpack.c.l.b16 %v2722
    %v2811 = vunpack.c.h.b16 %v2722
    %v2812 = vunpack.c.l.b16 %v2723
    %v2813 = vunpack.c.h.b16 %v2723
    %v2814 = vunpack.c.l.b16 %v2724
    %v2815 = vunpack.c.h.b16 %v2724
    %v2816 = vunpack.c.l.b16 %v2725
    %v2817 = vunpack.c.h.b16 %v2725
    %v2818 = vunpack.c.l.b16 %v2726
    %v2819 = vunpack.c.h.b16 %v2726
    %v2820 = vunpack.c.l.b16 %v2727
    %v2821 = vunpack.c.h.b16 %v2727
    %v2822 = vunpack.c.l.b16 %v2728
    %v2823 = vunpack.c.h.b16 %v2728
    %v2824 = vunpack.c.l.b16 %v2729
    %v2825 = vunpack.c.h.b16 %v2729
    %v2826 = vunpack.c.l.b16 %v2730
    %v2827 = vunpack.c.h.b16 %v2730
    %v2828 = vunpack.c.l.b16 %v2731
    %v2829 = vunpack.c.h.b16 %v2731
    %v2830 = vunpack.c.l.b16 %v2732
    %v2831 = vunpack.c.h.b16 %v2732
    %v2832 = vpack.c.b16 %v2772, %v2768
    %v2833 = vpack.c.b16 %v2773, %v2769
    %v2834 = vpack.c.b16 %v2774, %v2770
    %v2835 = vpack.c.b16 %v2775, %v2771
    %v2836 = vpack.c.b16 %v2780, %v2776
    %v2837 = vpack.c.b16 %v2781, %v2777
    %v2838 = vpack.c.b16 %v2782, %v2778
    %v2839 = vpack.c.b16 %v2783, %v2779
    %v2840 = vpack.c.b16 %v2788, %v2784
    %v2841 = vpack.c.b16 %v2789, %v2785
    %v2842 = vpack.c.b16 %v2790, %v2786
    %v2843 = vpack.c.b16 %v2791, %v2787
    %v2844 = vpack.c.b16 %v2796, %v2792
    %v2845 = vpack.c.b16 %v2797, %v2793
    %v2846 = vpack.c.b16 %v2798, %v2794
    %v2847 = vpack.c.b16 %v2799, %v2795
    %v2848 = vpack.c.b16 %v2804, %v2800
    %v2849 = vpack.c.b16 %v2805, %v2801
    %v2850 = vpack.c.b16 %v2806, %v2802
    %v2851 = vpack.c.b16 %v2807, %v2803
    %v2852 = vpack.c.b16 %v2812, %v2808
    %v2853 = vpack.c.b16 %v2813, %v2809
    %v2854 = vpack.c.b16 %v2814, %v2810
    %v2855 = vpack.c.b16 %v2815, %v2811
    %v2856 = vpack.c.b16 %v2820, %v2816
    %v2857 = vpack.c.b16 %v2821, %v2817
    %v2858 = vpack.c.b16 %v2822, %v2818
    %v2859 = vpack.c.b16 %v2823, %v2819
    %v2860 = vpack.c.b16 %v2828, %v2824
    %v2861 = vpack.c.b16 %v2829, %v2825
    %v2862 = vpack.c.b16 %v2830, %v2826
    %v2863 = vpack.c.b16 %v2831, %v2827
    %2896 = vmatpush.bf16.msra.mxu0 %v2860
    %2897 = vmatpush.bf16.msra.mxu0 %v2856
    %2898 = vmatpush.bf16.msra.mxu0 %v2852
    %2899 = vmatpush.bf16.msra.mxu0 %v2848
    %2900 = vmatpush.bf16.msra.mxu0 %v2844
    %2901 = vmatpush.bf16.msra.mxu0 %v2840
    %2902 = vmatpush.bf16.msra.mxu0 %v2836
    %2903 = vmatpush.bf16.msra.mxu0 %v2832
    %2904 = vmatmul.bf16.gmra.mxu0 %v2734
    %v2905 = vpop.f32.mrf.mxu0
    %v2906 = vadd.f32 0.0, %v2905
    %v2907 = vpop.f32.mrf.mxu0
    %2908 = vdwg.mxu0
    %2909 = vmatpush.bf16.msra.mxu0 %v2861
    %2910 = vmatpush.bf16.msra.mxu0 %v2857
    %2911 = vmatpush.bf16.msra.mxu0 %v2853
    %2912 = vmatpush.bf16.msra.mxu0 %v2849
    %2913 = vmatpush.bf16.msra.mxu0 %v2845
    %2914 = vmatpush.bf16.msra.mxu0 %v2841
    %2915 = vmatpush.bf16.msra.mxu0 %v2837
    %2916 = vmatpush.bf16.msra.mxu0 %v2833
    %2917 = vmatmul.bf16.gmra.mxu0 %v2734
    %v2918 = vpop.f32.mrf.mxu0
    %v2919 = vadd.f32 0.0, %v2918
    %v2920 = vpop.f32.mrf.mxu0
    %2921 = vdwg.mxu0
    %2922 = vmatpush.bf16.msra.mxu0 %v2862
    %2923 = vmatpush.bf16.msra.mxu0 %v2858
    %2924 = vmatpush.bf16.msra.mxu0 %v2854
    %2925 = vmatpush.bf16.msra.mxu0 %v2850
    %2926 = vmatpush.bf16.msra.mxu0 %v2846
    %2927 = vmatpush.bf16.msra.mxu0 %v2842
    %2928 = vmatpush.bf16.msra.mxu0 %v2838
    %2929 = vmatpush.bf16.msra.mxu0 %v2834
    %2930 = vmatmul.bf16.gmra.mxu0 %v2734
    %v2931 = vpop.f32.mrf.mxu0
    %v2932 = vadd.f32 0.0, %v2931
    %v2933 = vpop.f32.mrf.mxu0
    %2934 = vdwg.mxu0
    %2935 = vmatpush.bf16.msra.mxu0 %v2863
    %2936 = vmatpush.bf16.msra.mxu0 %v2859
    %2937 = vmatpush.bf16.msra.mxu0 %v2855
    %2938 = vmatpush.bf16.msra.mxu0 %v2851
    %2939 = vmatpush.bf16.msra.mxu0 %v2847
    %2940 = vmatpush.bf16.msra.mxu0 %v2843
    %2941 = vmatpush.bf16.msra.mxu0 %v2839
    %2942 = vmatpush.bf16.msra.mxu0 %v2835
    %2943 = vmatmul.bf16.gmra.mxu0 %v2734
    %v2944 = vpop.f32.mrf.mxu0
    %v2945 = vadd.f32 0.0, %v2944
    %v2946 = vpop.f32.mrf.mxu0
    %2947 = vdwg.mxu0
    %v2952 = vrot.slane %v2906, 2
    %v2953 = vrot.slane %v2919, 2
    %v2954 = vrot.slane %v2932, 2
    %v2955 = vrot.slane %v2945, 2
    %v2960 = vadd.f32 %v286, %v2952
    %v2961 = vadd.f32 %v300, %v2953
    %v2962 = vadd.f32 %v314, %v2954
    %v2963 = vadd.f32 %v328, %v2955
    %v2964 = vxor.u32 %v2960, 2147483648
    %v2965 = vmul.f32 %v2964, 1.442695
    %v2966 = vpow.pop %v2965
    %v2967 = vadd.f32 %v2966, 1.0
    %v2968 = vrcp.pop %v2967
    %v2969 = vmul.f32 %v2967, %v2968
    %v2970 = vsub.f32 1.0, %v2969
    %v2971 = vmul.f32 %v2968, %v2970
    %v2972 = vadd.f32 %v2968, %v2971
    %vm2973 = vweird.f32 %v2967
    %vm2974 = vweird.f32 %v2968
    %vm2975 = vmor %vm2973, %vm2974
    %v2976 = vsel %vm2975, %v2968, %v2972
    %v2977 = vand.u32 2147483647, %v2967
    %vm2978 = vcmp.eq.f32.partialorder %v2977, 8.507059e+37
    %v2979 = vand.u32 %v2967, 2147483648
    %v2980 = vor.u32 1.1754944e-38, %v2979
    %v2981 = vsel %vm2978, %v2980, %v2976
    %v2982 = vmul.f32 1.0, %v2981
    %v2983 = vxor.u32 %v2961, 2147483648
    %v2984 = vmul.f32 %v2983, 1.442695
    %v2985 = vpow.pop %v2984
    %v2986 = vadd.f32 %v2985, 1.0
    %v2987 = vrcp.pop %v2986
    %v2988 = vmul.f32 %v2986, %v2987
    %v2989 = vsub.f32 1.0, %v2988
    %v2990 = vmul.f32 %v2987, %v2989
    %v2991 = vadd.f32 %v2987, %v2990
    %vm2992 = vweird.f32 %v2986
    %vm2993 = vweird.f32 %v2987
    %vm2994 = vmor %vm2992, %vm2993
    %v2995 = vsel %vm2994, %v2987, %v2991
    %v2996 = vand.u32 2147483647, %v2986
    %vm2997 = vcmp.eq.f32.partialorder %v2996, 8.507059e+37
    %v2998 = vand.u32 %v2986, 2147483648
    %v2999 = vor.u32 1.1754944e-38, %v2998
    %v3000 = vsel %vm2997, %v2999, %v2995
    %v3001 = vmul.f32 1.0, %v3000
    %v3002 = vtanh.pop %v2962
    %v3003 = vxor.u32 %v2963, 2147483648
    %v3004 = vmul.f32 %v3003, 1.442695
    %v3005 = vpow.pop %v3004
    %v3006 = vadd.f32 %v3005, 1.0
    %v3007 = vrcp.pop %v3006
    %v3008 = vmul.f32 %v3006, %v3007
    %v3009 = vsub.f32 1.0, %v3008
    %v3010 = vmul.f32 %v3007, %v3009
    %v3011 = vadd.f32 %v3007, %v3010
    %vm3012 = vweird.f32 %v3006
    %vm3013 = vweird.f32 %v3007
    %vm3014 = vmor %vm3012, %vm3013
    %v3015 = vsel %vm3014, %v3007, %v3011
    %v3016 = vand.u32 2147483647, %v3006
    %vm3017 = vcmp.eq.f32.partialorder %v3016, 8.507059e+37
    %v3018 = vand.u32 %v3006, 2147483648
    %v3019 = vor.u32 1.1754944e-38, %v3018
    %v3020 = vsel %vm3017, %v3019, %v3015
    %v3021 = vmul.f32 1.0, %v3020
    %v3023 = vrot.slane %v2696, 6
    %v3025 = vmul.f32 %v3001, %v3023
    %v3026 = vmul.f32 %v2982, %v3002
    %v3027 = vadd.f32 %v3025, %v3026
    %v3028 = vtanh.pop %v3027
    %v3029 = vmul.f32 %v3021, %v3028
    %3030 = vst [vmem:[#allocation2 + $0x10] sm:$0xc0] %v3029
    %v3031 = vld [vmem:[#allocation5] sm:$0xff]
    %v3032 = vld [vmem:[#allocation5 + $0x8] sm:$0xff]
    %v3033 = vld [vmem:[#allocation5 + $0x10] sm:$0xff]
    %v3034 = vld [vmem:[#allocation5 + $0x18] sm:$0xff]
    %v3035 = vld [vmem:[#allocation5 + $0x20] sm:$0xff]
    %v3036 = vld [vmem:[#allocation5 + $0x28] sm:$0xff]
    %v3037 = vld [vmem:[#allocation5 + $0x30] sm:$0xff]
    %v3038 = vld [vmem:[#allocation5 + $0x38] sm:$0xff]
    %v3039 = vld [vmem:[#allocation5 + $0x40] sm:$0xff]
    %v3040 = vld [vmem:[#allocation5 + $0x48] sm:$0xff]
    %v3041 = vld [vmem:[#allocation5 + $0x50] sm:$0xff]
    %v3042 = vld [vmem:[#allocation5 + $0x58] sm:$0xff]
    %v3043 = vld [vmem:[#allocation5 + $0x60] sm:$0xff]
    %v3044 = vld [vmem:[#allocation5 + $0x68] sm:$0xff]
    %v3045 = vld [vmem:[#allocation5 + $0x70] sm:$0xff]
    %v3046 = vld [vmem:[#allocation5 + $0x78] sm:$0xff]
    %v3047 = vld [vmem:[#allocation5 + $0x80] sm:$0xff]
    %v3048 = vld [vmem:[#allocation5 + $0x88] sm:$0xff]
    %v3049 = vld [vmem:[#allocation5 + $0x90] sm:$0xff]
    %v3050 = vld [vmem:[#allocation5 + $0x98] sm:$0xff]
    %v3051 = vld [vmem:[#allocation5 + $0xa0] sm:$0xff]
    %v3052 = vld [vmem:[#allocation5 + $0xa8] sm:$0xff]
    %v3053 = vld [vmem:[#allocation5 + $0xb0] sm:$0xff]
    %v3054 = vld [vmem:[#allocation5 + $0xb8] sm:$0xff]
    %v3055 = vld [vmem:[#allocation5 + $0xc0] sm:$0xff]
    %v3056 = vld [vmem:[#allocation5 + $0xc8] sm:$0xff]
    %v3057 = vld [vmem:[#allocation5 + $0xd0] sm:$0xff]
    %v3058 = vld [vmem:[#allocation5 + $0xd8] sm:$0xff]
    %v3059 = vld [vmem:[#allocation5 + $0xe0] sm:$0xff]
    %v3060 = vld [vmem:[#allocation5 + $0xe8] sm:$0xff]
    %v3061 = vld [vmem:[#allocation5 + $0xf0] sm:$0xff]
    %v3062 = vld [vmem:[#allocation5 + $0xf8] sm:$0xff]
    %v3095 = vunpack.c.l.b16 %v3031
    %v3096 = vunpack.c.h.b16 %v3031
    %v3097 = vunpack.c.l.b16 %v3032
    %v3098 = vunpack.c.h.b16 %v3032
    %v3099 = vunpack.c.l.b16 %v3033
    %v3100 = vunpack.c.h.b16 %v3033
    %v3101 = vunpack.c.l.b16 %v3034
    %v3102 = vunpack.c.h.b16 %v3034
    %v3103 = vunpack.c.l.b16 %v3035
    %v3104 = vunpack.c.h.b16 %v3035
    %v3105 = vunpack.c.l.b16 %v3036
    %v3106 = vunpack.c.h.b16 %v3036
    %v3107 = vunpack.c.l.b16 %v3037
    %v3108 = vunpack.c.h.b16 %v3037
    %v3109 = vunpack.c.l.b16 %v3038
    %v3110 = vunpack.c.h.b16 %v3038
    %v3111 = vunpack.c.l.b16 %v3039
    %v3112 = vunpack.c.h.b16 %v3039
    %v3113 = vunpack.c.l.b16 %v3040
    %v3114 = vunpack.c.h.b16 %v3040
    %v3115 = vunpack.c.l.b16 %v3041
    %v3116 = vunpack.c.h.b16 %v3041
    %v3117 = vunpack.c.l.b16 %v3042
    %v3118 = vunpack.c.h.b16 %v3042
    %v3119 = vunpack.c.l.b16 %v3043
    %v3120 = vunpack.c.h.b16 %v3043
    %v3121 = vunpack.c.l.b16 %v3044
    %v3122 = vunpack.c.h.b16 %v3044
    %v3123 = vunpack.c.l.b16 %v3045
    %v3124 = vunpack.c.h.b16 %v3045
    %v3125 = vunpack.c.l.b16 %v3046
    %v3126 = vunpack.c.h.b16 %v3046
    %v3127 = vunpack.c.l.b16 %v3047
    %v3128 = vunpack.c.h.b16 %v3047
    %v3129 = vunpack.c.l.b16 %v3048
    %v3130 = vunpack.c.h.b16 %v3048
    %v3131 = vunpack.c.l.b16 %v3049
    %v3132 = vunpack.c.h.b16 %v3049
    %v3133 = vunpack.c.l.b16 %v3050
    %v3134 = vunpack.c.h.b16 %v3050
    %v3135 = vunpack.c.l.b16 %v3051
    %v3136 = vunpack.c.h.b16 %v3051
    %v3137 = vunpack.c.l.b16 %v3052
    %v3138 = vunpack.c.h.b16 %v3052
    %v3139 = vunpack.c.l.b16 %v3053
    %v3140 = vunpack.c.h.b16 %v3053
    %v3141 = vunpack.c.l.b16 %v3054
    %v3142 = vunpack.c.h.b16 %v3054
    %v3143 = vunpack.c.l.b16 %v3055
    %v3144 = vunpack.c.h.b16 %v3055
    %v3145 = vunpack.c.l.b16 %v3056
    %v3146 = vunpack.c.h.b16 %v3056
    %v3147 = vunpack.c.l.b16 %v3057
    %v3148 = vunpack.c.h.b16 %v3057
    %v3149 = vunpack.c.l.b16 %v3058
    %v3150 = vunpack.c.h.b16 %v3058
    %v3151 = vunpack.c.l.b16 %v3059
    %v3152 = vunpack.c.h.b16 %v3059
    %v3153 = vunpack.c.l.b16 %v3060
    %v3154 = vunpack.c.h.b16 %v3060
    %v3155 = vunpack.c.l.b16 %v3061
    %v3156 = vunpack.c.h.b16 %v3061
    %v3157 = vunpack.c.l.b16 %v3062
    %v3158 = vunpack.c.h.b16 %v3062
    %v3159 = vpack.c.b16 %v3099, %v3095
    %v3160 = vpack.c.b16 %v3100, %v3096
    %v3161 = vpack.c.b16 %v3101, %v3097
    %v3162 = vpack.c.b16 %v3102, %v3098
    %v3163 = vpack.c.b16 %v3107, %v3103
    %v3164 = vpack.c.b16 %v3108, %v3104
    %v3165 = vpack.c.b16 %v3109, %v3105
    %v3166 = vpack.c.b16 %v3110, %v3106
    %v3167 = vpack.c.b16 %v3115, %v3111
    %v3168 = vpack.c.b16 %v3116, %v3112
    %v3169 = vpack.c.b16 %v3117, %v3113
    %v3170 = vpack.c.b16 %v3118, %v3114
    %v3171 = vpack.c.b16 %v3123, %v3119
    %v3172 = vpack.c.b16 %v3124, %v3120
    %v3173 = vpack.c.b16 %v3125, %v3121
    %v3174 = vpack.c.b16 %v3126, %v3122
    %v3175 = vpack.c.b16 %v3131, %v3127
    %v3176 = vpack.c.b16 %v3132, %v3128
    %v3177 = vpack.c.b16 %v3133, %v3129
    %v3178 = vpack.c.b16 %v3134, %v3130
    %v3179 = vpack.c.b16 %v3139, %v3135
    %v3180 = vpack.c.b16 %v3140, %v3136
    %v3181 = vpack.c.b16 %v3141, %v3137
    %v3182 = vpack.c.b16 %v3142, %v3138
    %v3183 = vpack.c.b16 %v3147, %v3143
    %v3184 = vpack.c.b16 %v3148, %v3144
    %v3185 = vpack.c.b16 %v3149, %v3145
    %v3186 = vpack.c.b16 %v3150, %v3146
    %v3187 = vpack.c.b16 %v3155, %v3151
    %v3188 = vpack.c.b16 %v3156, %v3152
    %v3189 = vpack.c.b16 %v3157, %v3153
    %v3190 = vpack.c.b16 %v3158, %v3154
    %3223 = vmatpush.bf16.msra.mxu0 %v3187
    %3224 = vmatpush.bf16.msra.mxu0 %v3183
    %3225 = vmatpush.bf16.msra.mxu0 %v3179
    %3226 = vmatpush.bf16.msra.mxu0 %v3175
    %3227 = vmatpush.bf16.msra.mxu0 %v3171
    %3228 = vmatpush.bf16.msra.mxu0 %v3167
    %3229 = vmatpush.bf16.msra.mxu0 %v3163
    %3230 = vmatpush.bf16.msra.mxu0 %v3159
    %3231 = vmatmul.bf16.gmra.mxu0 0
    %v3232 = vpop.f32.mrf.mxu0
    %v3233 = vadd.f32 0.0, %v3232
    %v3234 = vpop.f32.mrf.mxu0
    %3235 = vdwg.mxu0
    %3236 = vmatpush.bf16.msra.mxu0 %v3188
    %3237 = vmatpush.bf16.msra.mxu0 %v3184
    %3238 = vmatpush.bf16.msra.mxu0 %v3180
    %3239 = vmatpush.bf16.msra.mxu0 %v3176
    %3240 = vmatpush.bf16.msra.mxu0 %v3172
    %3241 = vmatpush.bf16.msra.mxu0 %v3168
    %3242 = vmatpush.bf16.msra.mxu0 %v3164
    %3243 = vmatpush.bf16.msra.mxu0 %v3160
    %3244 = vmatmul.bf16.gmra.mxu0 0
    %v3245 = vpop.f32.mrf.mxu0
    %v3246 = vadd.f32 0.0, %v3245
    %v3247 = vpop.f32.mrf.mxu0
    %3248 = vdwg.mxu0
    %3249 = vmatpush.bf16.msra.mxu0 %v3189
    %3250 = vmatpush.bf16.msra.mxu0 %v3185
    %3251 = vmatpush.bf16.msra.mxu0 %v3181
    %3252 = vmatpush.bf16.msra.mxu0 %v3177
    %3253 = vmatpush.bf16.msra.mxu0 %v3173
    %3254 = vmatpush.bf16.msra.mxu0 %v3169
    %3255 = vmatpush.bf16.msra.mxu0 %v3165
    %3256 = vmatpush.bf16.msra.mxu0 %v3161
    %3257 = vmatmul.bf16.gmra.mxu0 0
    %v3258 = vpop.f32.mrf.mxu0
    %v3259 = vadd.f32 0.0, %v3258
    %v3260 = vpop.f32.mrf.mxu0
    %3261 = vdwg.mxu0
    %3262 = vmatpush.bf16.msra.mxu0 %v3190
    %3263 = vmatpush.bf16.msra.mxu0 %v3186
    %3264 = vmatpush.bf16.msra.mxu0 %v3182
    %3265 = vmatpush.bf16.msra.mxu0 %v3178
    %3266 = vmatpush.bf16.msra.mxu0 %v3174
    %3267 = vmatpush.bf16.msra.mxu0 %v3170
    %3268 = vmatpush.bf16.msra.mxu0 %v3166
    %3269 = vmatpush.bf16.msra.mxu0 %v3162
    %3270 = vmatmul.bf16.gmra.mxu0 0
    %v3271 = vpop.f32.mrf.mxu0
    %v3272 = vadd.f32 0.0, %v3271
    %v3273 = vpop.f32.mrf.mxu0
    %3274 = vdwg.mxu0
    %v3279 = vrot.slane %v3233, 2
    %v3280 = vrot.slane %v3246, 2
    %v3281 = vrot.slane %v3259, 2
    %v3282 = vrot.slane %v3272, 2
    %v3287 = vadd.f32 %v376, %v3279
    %v3288 = vadd.f32 %v390, %v3280
    %v3289 = vadd.f32 %v404, %v3281
    %v3290 = vadd.f32 %v418, %v3282
    %v3291 = vxor.u32 %v3287, 2147483648
    %v3292 = vmul.f32 %v3291, 1.442695
    %v3293 = vpow.pop %v3292
    %v3294 = vadd.f32 %v3293, 1.0
    %v3295 = vrcp.pop %v3294
    %v3296 = vmul.f32 %v3294, %v3295
    %v3297 = vsub.f32 1.0, %v3296
    %v3298 = vmul.f32 %v3295, %v3297
    %v3299 = vadd.f32 %v3295, %v3298
    %vm3300 = vweird.f32 %v3294
    %vm3301 = vweird.f32 %v3295
    %vm3302 = vmor %vm3300, %vm3301
    %v3303 = vsel %vm3302, %v3295, %v3299
    %v3304 = vand.u32 2147483647, %v3294
    %vm3305 = vcmp.eq.f32.partialorder %v3304, 8.507059e+37
    %v3306 = vand.u32 %v3294, 2147483648
    %v3307 = vor.u32 1.1754944e-38, %v3306
    %v3308 = vsel %vm3305, %v3307, %v3303
    %v3309 = vmul.f32 1.0, %v3308
    %v3310 = vxor.u32 %v3288, 2147483648
    %v3311 = vmul.f32 %v3310, 1.442695
    %v3312 = vpow.pop %v3311
    %v3313 = vadd.f32 %v3312, 1.0
    %v3314 = vrcp.pop %v3313
    %v3315 = vmul.f32 %v3313, %v3314
    %v3316 = vsub.f32 1.0, %v3315
    %v3317 = vmul.f32 %v3314, %v3316
    %v3318 = vadd.f32 %v3314, %v3317
    %vm3319 = vweird.f32 %v3313
    %vm3320 = vweird.f32 %v3314
    %vm3321 = vmor %vm3319, %vm3320
    %v3322 = vsel %vm3321, %v3314, %v3318
    %v3323 = vand.u32 2147483647, %v3313
    %vm3324 = vcmp.eq.f32.partialorder %v3323, 8.507059e+37
    %v3325 = vand.u32 %v3313, 2147483648
    %v3326 = vor.u32 1.1754944e-38, %v3325
    %v3327 = vsel %vm3324, %v3326, %v3322
    %v3328 = vmul.f32 1.0, %v3327
    %v3329 = vtanh.pop %v3289
    %v3330 = vxor.u32 %v3290, 2147483648
    %v3331 = vmul.f32 %v3330, 1.442695
    %v3332 = vpow.pop %v3331
    %v3333 = vadd.f32 %v3332, 1.0
    %v3334 = vrcp.pop %v3333
    %v3335 = vmul.f32 %v3333, %v3334
    %v3336 = vsub.f32 1.0, %v3335
    %v3337 = vmul.f32 %v3334, %v3336
    %v3338 = vadd.f32 %v3334, %v3337
    %vm3339 = vweird.f32 %v3333
    %vm3340 = vweird.f32 %v3334
    %vm3341 = vmor %vm3339, %vm3340
    %v3342 = vsel %vm3341, %v3334, %v3338
    %v3343 = vand.u32 2147483647, %v3333
    %vm3344 = vcmp.eq.f32.partialorder %v3343, 8.507059e+37
    %v3345 = vand.u32 %v3333, 2147483648
    %v3346 = vor.u32 1.1754944e-38, %v3345
    %v3347 = vsel %vm3344, %v3346, %v3342
    %v3348 = vmul.f32 1.0, %v3347
    %v3349 = vmul.f32 %v3328, 0.0
    %v3350 = vmul.f32 %v3309, %v3329
    %v3351 = vadd.f32 %v3349, %v3350
    %v3352 = vtanh.pop %v3351
    %v3353 = vmul.f32 %v3348, %v3352
    %3354 = vst [vmem:[#allocation2 + $0x18] sm:$0xc0] %v3353
    %v3355 = vpack.c.bf16 %v3353, %v3353
    %v3356 = vld [vmem:[#allocation5] sm:$0xff]
    %v3357 = vld [vmem:[#allocation5 + $0x8] sm:$0xff]
    %v3358 = vld [vmem:[#allocation5 + $0x10] sm:$0xff]
    %v3359 = vld [vmem:[#allocation5 + $0x18] sm:$0xff]
    %v3360 = vld [vmem:[#allocation5 + $0x20] sm:$0xff]
    %v3361 = vld [vmem:[#allocation5 + $0x28] sm:$0xff]
    %v3362 = vld [vmem:[#allocation5 + $0x30] sm:$0xff]
    %v3363 = vld [vmem:[#allocation5 + $0x38] sm:$0xff]
    %v3364 = vld [vmem:[#allocation5 + $0x40] sm:$0xff]
    %v3365 = vld [vmem:[#allocation5 + $0x48] sm:$0xff]
    %v3366 = vld [vmem:[#allocation5 + $0x50] sm:$0xff]
    %v3367 = vld [vmem:[#allocation5 + $0x58] sm:$0xff]
    %v3368 = vld [vmem:[#allocation5 + $0x60] sm:$0xff]
    %v3369 = vld [vmem:[#allocation5 + $0x68] sm:$0xff]
    %v3370 = vld [vmem:[#allocation5 + $0x70] sm:$0xff]
    %v3371 = vld [vmem:[#allocation5 + $0x78] sm:$0xff]
    %v3372 = vld [vmem:[#allocation5 + $0x80] sm:$0xff]
    %v3373 = vld [vmem:[#allocation5 + $0x88] sm:$0xff]
    %v3374 = vld [vmem:[#allocation5 + $0x90] sm:$0xff]
    %v3375 = vld [vmem:[#allocation5 + $0x98] sm:$0xff]
    %v3376 = vld [vmem:[#allocation5 + $0xa0] sm:$0xff]
    %v3377 = vld [vmem:[#allocation5 + $0xa8] sm:$0xff]
    %v3378 = vld [vmem:[#allocation5 + $0xb0] sm:$0xff]
    %v3379 = vld [vmem:[#allocation5 + $0xb8] sm:$0xff]
    %v3380 = vld [vmem:[#allocation5 + $0xc0] sm:$0xff]
    %v3381 = vld [vmem:[#allocation5 + $0xc8] sm:$0xff]
    %v3382 = vld [vmem:[#allocation5 + $0xd0] sm:$0xff]
    %v3383 = vld [vmem:[#allocation5 + $0xd8] sm:$0xff]
    %v3384 = vld [vmem:[#allocation5 + $0xe0] sm:$0xff]
    %v3385 = vld [vmem:[#allocation5 + $0xe8] sm:$0xff]
    %v3386 = vld [vmem:[#allocation5 + $0xf0] sm:$0xff]
    %v3387 = vld [vmem:[#allocation5 + $0xf8] sm:$0xff]
    %v3389 = vrot.slane %v3355, 3
    %v3423 = vunpack.c.l.b16 %v3356
    %v3424 = vunpack.c.h.b16 %v3356
    %v3425 = vunpack.c.l.b16 %v3357
    %v3426 = vunpack.c.h.b16 %v3357
    %v3427 = vunpack.c.l.b16 %v3358
    %v3428 = vunpack.c.h.b16 %v3358
    %v3429 = vunpack.c.l.b16 %v3359
    %v3430 = vunpack.c.h.b16 %v3359
    %v3431 = vunpack.c.l.b16 %v3360
    %v3432 = vunpack.c.h.b16 %v3360
    %v3433 = vunpack.c.l.b16 %v3361
    %v3434 = vunpack.c.h.b16 %v3361
    %v3435 = vunpack.c.l.b16 %v3362
    %v3436 = vunpack.c.h.b16 %v3362
    %v3437 = vunpack.c.l.b16 %v3363
    %v3438 = vunpack.c.h.b16 %v3363
    %v3439 = vunpack.c.l.b16 %v3364
    %v3440 = vunpack.c.h.b16 %v3364
    %v3441 = vunpack.c.l.b16 %v3365
    %v3442 = vunpack.c.h.b16 %v3365
    %v3443 = vunpack.c.l.b16 %v3366
    %v3444 = vunpack.c.h.b16 %v3366
    %v3445 = vunpack.c.l.b16 %v3367
    %v3446 = vunpack.c.h.b16 %v3367
    %v3447 = vunpack.c.l.b16 %v3368
    %v3448 = vunpack.c.h.b16 %v3368
    %v3449 = vunpack.c.l.b16 %v3369
    %v3450 = vunpack.c.h.b16 %v3369
    %v3451 = vunpack.c.l.b16 %v3370
    %v3452 = vunpack.c.h.b16 %v3370
    %v3453 = vunpack.c.l.b16 %v3371
    %v3454 = vunpack.c.h.b16 %v3371
    %v3455 = vunpack.c.l.b16 %v3372
    %v3456 = vunpack.c.h.b16 %v3372
    %v3457 = vunpack.c.l.b16 %v3373
    %v3458 = vunpack.c.h.b16 %v3373
    %v3459 = vunpack.c.l.b16 %v3374
    %v3460 = vunpack.c.h.b16 %v3374
    %v3461 = vunpack.c.l.b16 %v3375
    %v3462 = vunpack.c.h.b16 %v3375
    %v3463 = vunpack.c.l.b16 %v3376
    %v3464 = vunpack.c.h.b16 %v3376
    %v3465 = vunpack.c.l.b16 %v3377
    %v3466 = vunpack.c.h.b16 %v3377
    %v3467 = vunpack.c.l.b16 %v3378
    %v3468 = vunpack.c.h.b16 %v3378
    %v3469 = vunpack.c.l.b16 %v3379
    %v3470 = vunpack.c.h.b16 %v3379
    %v3471 = vunpack.c.l.b16 %v3380
    %v3472 = vunpack.c.h.b16 %v3380
    %v3473 = vunpack.c.l.b16 %v3381
    %v3474 = vunpack.c.h.b16 %v3381
    %v3475 = vunpack.c.l.b16 %v3382
    %v3476 = vunpack.c.h.b16 %v3382
    %v3477 = vunpack.c.l.b16 %v3383
    %v3478 = vunpack.c.h.b16 %v3383
    %v3479 = vunpack.c.l.b16 %v3384
    %v3480 = vunpack.c.h.b16 %v3384
    %v3481 = vunpack.c.l.b16 %v3385
    %v3482 = vunpack.c.h.b16 %v3385
    %v3483 = vunpack.c.l.b16 %v3386
    %v3484 = vunpack.c.h.b16 %v3386
    %v3485 = vunpack.c.l.b16 %v3387
    %v3486 = vunpack.c.h.b16 %v3387
    %v3487 = vpack.c.b16 %v3427, %v3423
    %v3488 = vpack.c.b16 %v3428, %v3424
    %v3489 = vpack.c.b16 %v3429, %v3425
    %v3490 = vpack.c.b16 %v3430, %v3426
    %v3491 = vpack.c.b16 %v3435, %v3431
    %v3492 = vpack.c.b16 %v3436, %v3432
    %v3493 = vpack.c.b16 %v3437, %v3433
    %v3494 = vpack.c.b16 %v3438, %v3434
    %v3495 = vpack.c.b16 %v3443, %v3439
    %v3496 = vpack.c.b16 %v3444, %v3440
    %v3497 = vpack.c.b16 %v3445, %v3441
    %v3498 = vpack.c.b16 %v3446, %v3442
    %v3499 = vpack.c.b16 %v3451, %v3447
    %v3500 = vpack.c.b16 %v3452, %v3448
    %v3501 = vpack.c.b16 %v3453, %v3449
    %v3502 = vpack.c.b16 %v3454, %v3450
    %v3503 = vpack.c.b16 %v3459, %v3455
    %v3504 = vpack.c.b16 %v3460, %v3456
    %v3505 = vpack.c.b16 %v3461, %v3457
    %v3506 = vpack.c.b16 %v3462, %v3458
    %v3507 = vpack.c.b16 %v3467, %v3463
    %v3508 = vpack.c.b16 %v3468, %v3464
    %v3509 = vpack.c.b16 %v3469, %v3465
    %v3510 = vpack.c.b16 %v3470, %v3466
    %v3511 = vpack.c.b16 %v3475, %v3471
    %v3512 = vpack.c.b16 %v3476, %v3472
    %v3513 = vpack.c.b16 %v3477, %v3473
    %v3514 = vpack.c.b16 %v3478, %v3474
    %v3515 = vpack.c.b16 %v3483, %v3479
    %v3516 = vpack.c.b16 %v3484, %v3480
    %v3517 = vpack.c.b16 %v3485, %v3481
    %v3518 = vpack.c.b16 %v3486, %v3482
    %3551 = vmatpush.bf16.msra.mxu0 %v3515
    %3552 = vmatpush.bf16.msra.mxu0 %v3511
    %3553 = vmatpush.bf16.msra.mxu0 %v3507
    %3554 = vmatpush.bf16.msra.mxu0 %v3503
    %3555 = vmatpush.bf16.msra.mxu0 %v3499
    %3556 = vmatpush.bf16.msra.mxu0 %v3495
    %3557 = vmatpush.bf16.msra.mxu0 %v3491
    %3558 = vmatpush.bf16.msra.mxu0 %v3487
    %3559 = vmatmul.bf16.gmra.mxu0 %v3389
    %v3560 = vpop.f32.mrf.mxu0
    %v3561 = vadd.f32 0.0, %v3560
    %v3562 = vpop.f32.mrf.mxu0
    %3563 = vdwg.mxu0
    %3564 = vmatpush.bf16.msra.mxu0 %v3516
    %3565 = vmatpush.bf16.msra.mxu0 %v3512
    %3566 = vmatpush.bf16.msra.mxu0 %v3508
    %3567 = vmatpush.bf16.msra.mxu0 %v3504
    %3568 = vmatpush.bf16.msra.mxu0 %v3500
    %3569 = vmatpush.bf16.msra.mxu0 %v3496
    %3570 = vmatpush.bf16.msra.mxu0 %v3492
    %3571 = vmatpush.bf16.msra.mxu0 %v3488
    %3572 = vmatmul.bf16.gmra.mxu0 %v3389
    %v3573 = vpop.f32.mrf.mxu0
    %v3574 = vadd.f32 0.0, %v3573
    %v3575 = vpop.f32.mrf.mxu0
    %3576 = vdwg.mxu0
    %3577 = vmatpush.bf16.msra.mxu0 %v3517
    %3578 = vmatpush.bf16.msra.mxu0 %v3513
    %3579 = vmatpush.bf16.msra.mxu0 %v3509
    %3580 = vmatpush.bf16.msra.mxu0 %v3505
    %3581 = vmatpush.bf16.msra.mxu0 %v3501
    %3582 = vmatpush.bf16.msra.mxu0 %v3497
    %3583 = vmatpush.bf16.msra.mxu0 %v3493
    %3584 = vmatpush.bf16.msra.mxu0 %v3489
    %3585 = vmatmul.bf16.gmra.mxu0 %v3389
    %v3586 = vpop.f32.mrf.mxu0
    %v3587 = vadd.f32 0.0, %v3586
    %v3588 = vpop.f32.mrf.mxu0
    %3589 = vdwg.mxu0
    %3590 = vmatpush.bf16.msra.mxu0 %v3518
    %3591 = vmatpush.bf16.msra.mxu0 %v3514
    %3592 = vmatpush.bf16.msra.mxu0 %v3510
    %3593 = vmatpush.bf16.msra.mxu0 %v3506
    %3594 = vmatpush.bf16.msra.mxu0 %v3502
    %3595 = vmatpush.bf16.msra.mxu0 %v3498
    %3596 = vmatpush.bf16.msra.mxu0 %v3494
    %3597 = vmatpush.bf16.msra.mxu0 %v3490
    %3598 = vmatmul.bf16.gmra.mxu0 %v3389
    %v3599 = vpop.f32.mrf.mxu0
    %v3600 = vadd.f32 0.0, %v3599
    %v3601 = vpop.f32.mrf.mxu0
    %3602 = vdwg.mxu0
    %v3607 = vrot.slane %v3561, 4
    %v3608 = vrot.slane %v3574, 4
    %v3609 = vrot.slane %v3587, 4
    %v3610 = vrot.slane %v3600, 4
    %v3615 = vadd.f32 %v376, %v3607
    %v3616 = vadd.f32 %v390, %v3608
    %v3617 = vadd.f32 %v404, %v3609
    %v3618 = vadd.f32 %v418, %v3610
    %v3619 = vxor.u32 %v3615, 2147483648
    %v3620 = vmul.f32 %v3619, 1.442695
    %v3621 = vpow.pop %v3620
    %v3622 = vadd.f32 %v3621, 1.0
    %v3623 = vrcp.pop %v3622
    %v3624 = vmul.f32 %v3622, %v3623
    %v3625 = vsub.f32 1.0, %v3624
    %v3626 = vmul.f32 %v3623, %v3625
    %v3627 = vadd.f32 %v3623, %v3626
    %vm3628 = vweird.f32 %v3622
    %vm3629 = vweird.f32 %v3623
    %vm3630 = vmor %vm3628, %vm3629
    %v3631 = vsel %vm3630, %v3623, %v3627
    %v3632 = vand.u32 2147483647, %v3622
    %vm3633 = vcmp.eq.f32.partialorder %v3632, 8.507059e+37
    %v3634 = vand.u32 %v3622, 2147483648
    %v3635 = vor.u32 1.1754944e-38, %v3634
    %v3636 = vsel %vm3633, %v3635, %v3631
    %v3637 = vmul.f32 1.0, %v3636
    %v3638 = vxor.u32 %v3616, 2147483648
    %v3639 = vmul.f32 %v3638, 1.442695
    %v3640 = vpow.pop %v3639
    %v3641 = vadd.f32 %v3640, 1.0
    %v3642 = vrcp.pop %v3641
    %v3643 = vmul.f32 %v3641, %v3642
    %v3644 = vsub.f32 1.0, %v3643
    %v3645 = vmul.f32 %v3642, %v3644
    %v3646 = vadd.f32 %v3642, %v3645
    %vm3647 = vweird.f32 %v3641
    %vm3648 = vweird.f32 %v3642
    %vm3649 = vmor %vm3647, %vm3648
    %v3650 = vsel %vm3649, %v3642, %v3646
    %v3651 = vand.u32 2147483647, %v3641
    %vm3652 = vcmp.eq.f32.partialorder %v3651, 8.507059e+37
    %v3653 = vand.u32 %v3641, 2147483648
    %v3654 = vor.u32 1.1754944e-38, %v3653
    %v3655 = vsel %vm3652, %v3654, %v3650
    %v3656 = vmul.f32 1.0, %v3655
    %v3657 = vtanh.pop %v3617
    %v3658 = vxor.u32 %v3618, 2147483648
    %v3659 = vmul.f32 %v3658, 1.442695
    %v3660 = vpow.pop %v3659
    %v3661 = vadd.f32 %v3660, 1.0
    %v3662 = vrcp.pop %v3661
    %v3663 = vmul.f32 %v3661, %v3662
    %v3664 = vsub.f32 1.0, %v3663
    %v3665 = vmul.f32 %v3662, %v3664
    %v3666 = vadd.f32 %v3662, %v3665
    %vm3667 = vweird.f32 %v3661
    %vm3668 = vweird.f32 %v3662
    %vm3669 = vmor %vm3667, %vm3668
    %v3670 = vsel %vm3669, %v3662, %v3666
    %v3671 = vand.u32 2147483647, %v3661
    %vm3672 = vcmp.eq.f32.partialorder %v3671, 8.507059e+37
    %v3673 = vand.u32 %v3661, 2147483648
    %v3674 = vor.u32 1.1754944e-38, %v3673
    %v3675 = vsel %vm3672, %v3674, %v3670
    %v3676 = vmul.f32 1.0, %v3675
    %v3678 = vrot.slane %v3351, 2
    %v3680 = vmul.f32 %v3656, %v3678
    %v3681 = vmul.f32 %v3637, %v3657
    %v3682 = vadd.f32 %v3680, %v3681
    %v3683 = vtanh.pop %v3682
    %v3684 = vmul.f32 %v3676, %v3683
    %3685 = vst [vmem:[#allocation2 + $0x18] sm:$0x30] %v3684
    %v3686 = vpack.c.bf16 %v3684, %v3684
    %v3687 = vld [vmem:[#allocation5] sm:$0xff]
    %v3688 = vld [vmem:[#allocation5 + $0x8] sm:$0xff]
    %v3689 = vld [vmem:[#allocation5 + $0x10] sm:$0xff]
    %v3690 = vld [vmem:[#allocation5 + $0x18] sm:$0xff]
    %v3691 = vld [vmem:[#allocation5 + $0x20] sm:$0xff]
    %v3692 = vld [vmem:[#allocation5 + $0x28] sm:$0xff]
    %v3693 = vld [vmem:[#allocation5 + $0x30] sm:$0xff]
    %v3694 = vld [vmem:[#allocation5 + $0x38] sm:$0xff]
    %v3695 = vld [vmem:[#allocation5 + $0x40] sm:$0xff]
    %v3696 = vld [vmem:[#allocation5 + $0x48] sm:$0xff]
    %v3697 = vld [vmem:[#allocation5 + $0x50] sm:$0xff]
    %v3698 = vld [vmem:[#allocation5 + $0x58] sm:$0xff]
    %v3699 = vld [vmem:[#allocation5 + $0x60] sm:$0xff]
    %v3700 = vld [vmem:[#allocation5 + $0x68] sm:$0xff]
    %v3701 = vld [vmem:[#allocation5 + $0x70] sm:$0xff]
    %v3702 = vld [vmem:[#allocation5 + $0x78] sm:$0xff]
    %v3703 = vld [vmem:[#allocation5 + $0x80] sm:$0xff]
    %v3704 = vld [vmem:[#allocation5 + $0x88] sm:$0xff]
    %v3705 = vld [vmem:[#allocation5 + $0x90] sm:$0xff]
    %v3706 = vld [vmem:[#allocation5 + $0x98] sm:$0xff]
    %v3707 = vld [vmem:[#allocation5 + $0xa0] sm:$0xff]
    %v3708 = vld [vmem:[#allocation5 + $0xa8] sm:$0xff]
    %v3709 = vld [vmem:[#allocation5 + $0xb0] sm:$0xff]
    %v3710 = vld [vmem:[#allocation5 + $0xb8] sm:$0xff]
    %v3711 = vld [vmem:[#allocation5 + $0xc0] sm:$0xff]
    %v3712 = vld [vmem:[#allocation5 + $0xc8] sm:$0xff]
    %v3713 = vld [vmem:[#allocation5 + $0xd0] sm:$0xff]
    %v3714 = vld [vmem:[#allocation5 + $0xd8] sm:$0xff]
    %v3715 = vld [vmem:[#allocation5 + $0xe0] sm:$0xff]
    %v3716 = vld [vmem:[#allocation5 + $0xe8] sm:$0xff]
    %v3717 = vld [vmem:[#allocation5 + $0xf0] sm:$0xff]
    %v3718 = vld [vmem:[#allocation5 + $0xf8] sm:$0xff]
    %v3720 = vrot.slane %v3686, 2
    %v3754 = vunpack.c.l.b16 %v3687
    %v3755 = vunpack.c.h.b16 %v3687
    %v3756 = vunpack.c.l.b16 %v3688
    %v3757 = vunpack.c.h.b16 %v3688
    %v3758 = vunpack.c.l.b16 %v3689
    %v3759 = vunpack.c.h.b16 %v3689
    %v3760 = vunpack.c.l.b16 %v3690
    %v3761 = vunpack.c.h.b16 %v3690
    %v3762 = vunpack.c.l.b16 %v3691
    %v3763 = vunpack.c.h.b16 %v3691
    %v3764 = vunpack.c.l.b16 %v3692
    %v3765 = vunpack.c.h.b16 %v3692
    %v3766 = vunpack.c.l.b16 %v3693
    %v3767 = vunpack.c.h.b16 %v3693
    %v3768 = vunpack.c.l.b16 %v3694
    %v3769 = vunpack.c.h.b16 %v3694
    %v3770 = vunpack.c.l.b16 %v3695
    %v3771 = vunpack.c.h.b16 %v3695
    %v3772 = vunpack.c.l.b16 %v3696
    %v3773 = vunpack.c.h.b16 %v3696
    %v3774 = vunpack.c.l.b16 %v3697
    %v3775 = vunpack.c.h.b16 %v3697
    %v3776 = vunpack.c.l.b16 %v3698
    %v3777 = vunpack.c.h.b16 %v3698
    %v3778 = vunpack.c.l.b16 %v3699
    %v3779 = vunpack.c.h.b16 %v3699
    %v3780 = vunpack.c.l.b16 %v3700
    %v3781 = vunpack.c.h.b16 %v3700
    %v3782 = vunpack.c.l.b16 %v3701
    %v3783 = vunpack.c.h.b16 %v3701
    %v3784 = vunpack.c.l.b16 %v3702
    %v3785 = vunpack.c.h.b16 %v3702
    %v3786 = vunpack.c.l.b16 %v3703
    %v3787 = vunpack.c.h.b16 %v3703
    %v3788 = vunpack.c.l.b16 %v3704
    %v3789 = vunpack.c.h.b16 %v3704
    %v3790 = vunpack.c.l.b16 %v3705
    %v3791 = vunpack.c.h.b16 %v3705
    %v3792 = vunpack.c.l.b16 %v3706
    %v3793 = vunpack.c.h.b16 %v3706
    %v3794 = vunpack.c.l.b16 %v3707
    %v3795 = vunpack.c.h.b16 %v3707
    %v3796 = vunpack.c.l.b16 %v3708
    %v3797 = vunpack.c.h.b16 %v3708
    %v3798 = vunpack.c.l.b16 %v3709
    %v3799 = vunpack.c.h.b16 %v3709
    %v3800 = vunpack.c.l.b16 %v3710
    %v3801 = vunpack.c.h.b16 %v3710
    %v3802 = vunpack.c.l.b16 %v3711
    %v3803 = vunpack.c.h.b16 %v3711
    %v3804 = vunpack.c.l.b16 %v3712
    %v3805 = vunpack.c.h.b16 %v3712
    %v3806 = vunpack.c.l.b16 %v3713
    %v3807 = vunpack.c.h.b16 %v3713
    %v3808 = vunpack.c.l.b16 %v3714
    %v3809 = vunpack.c.h.b16 %v3714
    %v3810 = vunpack.c.l.b16 %v3715
    %v3811 = vunpack.c.h.b16 %v3715
    %v3812 = vunpack.c.l.b16 %v3716
    %v3813 = vunpack.c.h.b16 %v3716
    %v3814 = vunpack.c.l.b16 %v3717
    %v3815 = vunpack.c.h.b16 %v3717
    %v3816 = vunpack.c.l.b16 %v3718
    %v3817 = vunpack.c.h.b16 %v3718
    %v3818 = vpack.c.b16 %v3758, %v3754
    %v3819 = vpack.c.b16 %v3759, %v3755
    %v3820 = vpack.c.b16 %v3760, %v3756
    %v3821 = vpack.c.b16 %v3761, %v3757
    %v3822 = vpack.c.b16 %v3766, %v3762
    %v3823 = vpack.c.b16 %v3767, %v3763
    %v3824 = vpack.c.b16 %v3768, %v3764
    %v3825 = vpack.c.b16 %v3769, %v3765
    %v3826 = vpack.c.b16 %v3774, %v3770
    %v3827 = vpack.c.b16 %v3775, %v3771
    %v3828 = vpack.c.b16 %v3776, %v3772
    %v3829 = vpack.c.b16 %v3777, %v3773
    %v3830 = vpack.c.b16 %v3782, %v3778
    %v3831 = vpack.c.b16 %v3783, %v3779
    %v3832 = vpack.c.b16 %v3784, %v3780
    %v3833 = vpack.c.b16 %v3785, %v3781
    %v3834 = vpack.c.b16 %v3790, %v3786
    %v3835 = vpack.c.b16 %v3791, %v3787
    %v3836 = vpack.c.b16 %v3792, %v3788
    %v3837 = vpack.c.b16 %v3793, %v3789
    %v3838 = vpack.c.b16 %v3798, %v3794
    %v3839 = vpack.c.b16 %v3799, %v3795
    %v3840 = vpack.c.b16 %v3800, %v3796
    %v3841 = vpack.c.b16 %v3801, %v3797
    %v3842 = vpack.c.b16 %v3806, %v3802
    %v3843 = vpack.c.b16 %v3807, %v3803
    %v3844 = vpack.c.b16 %v3808, %v3804
    %v3845 = vpack.c.b16 %v3809, %v3805
    %v3846 = vpack.c.b16 %v3814, %v3810
    %v3847 = vpack.c.b16 %v3815, %v3811
    %v3848 = vpack.c.b16 %v3816, %v3812
    %v3849 = vpack.c.b16 %v3817, %v3813
    %3882 = vmatpush.bf16.msra.mxu0 %v3846
    %3883 = vmatpush.bf16.msra.mxu0 %v3842
    %3884 = vmatpush.bf16.msra.mxu0 %v3838
    %3885 = vmatpush.bf16.msra.mxu0 %v3834
    %3886 = vmatpush.bf16.msra.mxu0 %v3830
    %3887 = vmatpush.bf16.msra.mxu0 %v3826
    %3888 = vmatpush.bf16.msra.mxu0 %v3822
    %3889 = vmatpush.bf16.msra.mxu0 %v3818
    %3890 = vmatmul.bf16.gmra.mxu0 %v3720
    %v3891 = vpop.f32.mrf.mxu0
    %v3892 = vadd.f32 0.0, %v3891
    %v3893 = vpop.f32.mrf.mxu0
    %3894 = vdwg.mxu0
    %3895 = vmatpush.bf16.msra.mxu0 %v3847
    %3896 = vmatpush.bf16.msra.mxu0 %v3843
    %3897 = vmatpush.bf16.msra.mxu0 %v3839
    %3898 = vmatpush.bf16.msra.mxu0 %v3835
    %3899 = vmatpush.bf16.msra.mxu0 %v3831
    %3900 = vmatpush.bf16.msra.mxu0 %v3827
    %3901 = vmatpush.bf16.msra.mxu0 %v3823
    %3902 = vmatpush.bf16.msra.mxu0 %v3819
    %3903 = vmatmul.bf16.gmra.mxu0 %v3720
    %v3904 = vpop.f32.mrf.mxu0
    %v3905 = vadd.f32 0.0, %v3904
    %v3906 = vpop.f32.mrf.mxu0
    %3907 = vdwg.mxu0
    %3908 = vmatpush.bf16.msra.mxu0 %v3848
    %3909 = vmatpush.bf16.msra.mxu0 %v3844
    %3910 = vmatpush.bf16.msra.mxu0 %v3840
    %3911 = vmatpush.bf16.msra.mxu0 %v3836
    %3912 = vmatpush.bf16.msra.mxu0 %v3832
    %3913 = vmatpush.bf16.msra.mxu0 %v3828
    %3914 = vmatpush.bf16.msra.mxu0 %v3824
    %3915 = vmatpush.bf16.msra.mxu0 %v3820
    %3916 = vmatmul.bf16.gmra.mxu0 %v3720
    %v3917 = vpop.f32.mrf.mxu0
    %v3918 = vadd.f32 0.0, %v3917
    %v3919 = vpop.f32.mrf.mxu0
    %3920 = vdwg.mxu0
    %3921 = vmatpush.bf16.msra.mxu0 %v3849
    %3922 = vmatpush.bf16.msra.mxu0 %v3845
    %3923 = vmatpush.bf16.msra.mxu0 %v3841
    %3924 = vmatpush.bf16.msra.mxu0 %v3837
    %3925 = vmatpush.bf16.msra.mxu0 %v3833
    %3926 = vmatpush.bf16.msra.mxu0 %v3829
    %3927 = vmatpush.bf16.msra.mxu0 %v3825
    %3928 = vmatpush.bf16.msra.mxu0 %v3821
    %3929 = vmatmul.bf16.gmra.mxu0 %v3720
    %v3930 = vpop.f32.mrf.mxu0
    %v3931 = vadd.f32 0.0, %v3930
    %v3932 = vpop.f32.mrf.mxu0
    %3933 = vdwg.mxu0
    %v3938 = vrot.slane %v3892, 6
    %v3939 = vrot.slane %v3905, 6
    %v3940 = vrot.slane %v3918, 6
    %v3941 = vrot.slane %v3931, 6
    %v3946 = vadd.f32 %v376, %v3938
    %v3947 = vadd.f32 %v390, %v3939
    %v3948 = vadd.f32 %v404, %v3940
    %v3949 = vadd.f32 %v418, %v3941
    %v3950 = vxor.u32 %v3946, 2147483648
    %v3951 = vmul.f32 %v3950, 1.442695
    %v3952 = vpow.pop %v3951
    %v3953 = vadd.f32 %v3952, 1.0
    %v3954 = vrcp.pop %v3953
    %v3955 = vmul.f32 %v3953, %v3954
    %v3956 = vsub.f32 1.0, %v3955
    %v3957 = vmul.f32 %v3954, %v3956
    %v3958 = vadd.f32 %v3954, %v3957
    %vm3959 = vweird.f32 %v3953
    %vm3960 = vweird.f32 %v3954
    %vm3961 = vmor %vm3959, %vm3960
    %v3962 = vsel %vm3961, %v3954, %v3958
    %v3963 = vand.u32 2147483647, %v3953
    %vm3964 = vcmp.eq.f32.partialorder %v3963, 8.507059e+37
    %v3965 = vand.u32 %v3953, 2147483648
    %v3966 = vor.u32 1.1754944e-38, %v3965
    %v3967 = vsel %vm3964, %v3966, %v3962
    %v3968 = vmul.f32 1.0, %v3967
    %v3969 = vxor.u32 %v3947, 2147483648
    %v3970 = vmul.f32 %v3969, 1.442695
    %v3971 = vpow.pop %v3970
    %v3972 = vadd.f32 %v3971, 1.0
    %v3973 = vrcp.pop %v3972
    %v3974 = vmul.f32 %v3972, %v3973
    %v3975 = vsub.f32 1.0, %v3974
    %v3976 = vmul.f32 %v3973, %v3975
    %v3977 = vadd.f32 %v3973, %v3976
    %vm3978 = vweird.f32 %v3972
    %vm3979 = vweird.f32 %v3973
    %vm3980 = vmor %vm3978, %vm3979
    %v3981 = vsel %vm3980, %v3973, %v3977
    %v3982 = vand.u32 2147483647, %v3972
    %vm3983 = vcmp.eq.f32.partialorder %v3982, 8.507059e+37
    %v3984 = vand.u32 %v3972, 2147483648
    %v3985 = vor.u32 1.1754944e-38, %v3984
    %v3986 = vsel %vm3983, %v3985, %v3981
    %v3987 = vmul.f32 1.0, %v3986
    %v3988 = vtanh.pop %v3948
    %v3989 = vxor.u32 %v3949, 2147483648
    %v3990 = vmul.f32 %v3989, 1.442695
    %v3991 = vpow.pop %v3990
    %v3992 = vadd.f32 %v3991, 1.0
    %v3993 = vrcp.pop %v3992
    %v3994 = vmul.f32 %v3992, %v3993
    %v3995 = vsub.f32 1.0, %v3994
    %v3996 = vmul.f32 %v3993, %v3995
    %v3997 = vadd.f32 %v3993, %v3996
    %vm3998 = vweird.f32 %v3992
    %vm3999 = vweird.f32 %v3993
    %vm4000 = vmor %vm3998, %vm3999
    %v4001 = vsel %vm4000, %v3993, %v3997
    %v4002 = vand.u32 2147483647, %v3992
    %vm4003 = vcmp.eq.f32.partialorder %v4002, 8.507059e+37
    %v4004 = vand.u32 %v3992, 2147483648
    %v4005 = vor.u32 1.1754944e-38, %v4004
    %v4006 = vsel %vm4003, %v4005, %v4001
    %v4007 = vmul.f32 1.0, %v4006
    %v4009 = vrot.slane %v3682, 2
    %v4011 = vmul.f32 %v3987, %v4009
    %v4012 = vmul.f32 %v3968, %v3988
    %v4013 = vadd.f32 %v4011, %v4012
    %v4014 = vtanh.pop %v4013
    %v4015 = vmul.f32 %v4007, %v4014
    %4016 = vst [vmem:[#allocation2 + $0x18] sm:$0xc] %v4015
    %v4017 = vpack.c.bf16 %v4015, %v4015
    %v4018 = vld [vmem:[#allocation5] sm:$0xff]
    %v4019 = vld [vmem:[#allocation5 + $0x8] sm:$0xff]
    %v4020 = vld [vmem:[#allocation5 + $0x10] sm:$0xff]
    %v4021 = vld [vmem:[#allocation5 + $0x18] sm:$0xff]
    %v4022 = vld [vmem:[#allocation5 + $0x20] sm:$0xff]
    %v4023 = vld [vmem:[#allocation5 + $0x28] sm:$0xff]
    %v4024 = vld [vmem:[#allocation5 + $0x30] sm:$0xff]
    %v4025 = vld [vmem:[#allocation5 + $0x38] sm:$0xff]
    %v4026 = vld [vmem:[#allocation5 + $0x40] sm:$0xff]
    %v4027 = vld [vmem:[#allocation5 + $0x48] sm:$0xff]
    %v4028 = vld [vmem:[#allocation5 + $0x50] sm:$0xff]
    %v4029 = vld [vmem:[#allocation5 + $0x58] sm:$0xff]
    %v4030 = vld [vmem:[#allocation5 + $0x60] sm:$0xff]
    %v4031 = vld [vmem:[#allocation5 + $0x68] sm:$0xff]
    %v4032 = vld [vmem:[#allocation5 + $0x70] sm:$0xff]
    %v4033 = vld [vmem:[#allocation5 + $0x78] sm:$0xff]
    %v4034 = vld [vmem:[#allocation5 + $0x80] sm:$0xff]
    %v4035 = vld [vmem:[#allocation5 + $0x88] sm:$0xff]
    %v4036 = vld [vmem:[#allocation5 + $0x90] sm:$0xff]
    %v4037 = vld [vmem:[#allocation5 + $0x98] sm:$0xff]
    %v4038 = vld [vmem:[#allocation5 + $0xa0] sm:$0xff]
    %v4039 = vld [vmem:[#allocation5 + $0xa8] sm:$0xff]
    %v4040 = vld [vmem:[#allocation5 + $0xb0] sm:$0xff]
    %v4041 = vld [vmem:[#allocation5 + $0xb8] sm:$0xff]
    %v4042 = vld [vmem:[#allocation5 + $0xc0] sm:$0xff]
    %v4043 = vld [vmem:[#allocation5 + $0xc8] sm:$0xff]
    %v4044 = vld [vmem:[#allocation5 + $0xd0] sm:$0xff]
    %v4045 = vld [vmem:[#allocation5 + $0xd8] sm:$0xff]
    %v4046 = vld [vmem:[#allocation5 + $0xe0] sm:$0xff]
    %v4047 = vld [vmem:[#allocation5 + $0xe8] sm:$0xff]
    %v4048 = vld [vmem:[#allocation5 + $0xf0] sm:$0xff]
    %v4049 = vld [vmem:[#allocation5 + $0xf8] sm:$0xff]
    %v4051 = vrot.slane %v4017, 1
    %v4085 = vunpack.c.l.b16 %v4018
    %v4086 = vunpack.c.h.b16 %v4018
    %v4087 = vunpack.c.l.b16 %v4019
    %v4088 = vunpack.c.h.b16 %v4019
    %v4089 = vunpack.c.l.b16 %v4020
    %v4090 = vunpack.c.h.b16 %v4020
    %v4091 = vunpack.c.l.b16 %v4021
    %v4092 = vunpack.c.h.b16 %v4021
    %v4093 = vunpack.c.l.b16 %v4022
    %v4094 = vunpack.c.h.b16 %v4022
    %v4095 = vunpack.c.l.b16 %v4023
    %v4096 = vunpack.c.h.b16 %v4023
    %v4097 = vunpack.c.l.b16 %v4024
    %v4098 = vunpack.c.h.b16 %v4024
    %v4099 = vunpack.c.l.b16 %v4025
    %v4100 = vunpack.c.h.b16 %v4025
    %v4101 = vunpack.c.l.b16 %v4026
    %v4102 = vunpack.c.h.b16 %v4026
    %v4103 = vunpack.c.l.b16 %v4027
    %v4104 = vunpack.c.h.b16 %v4027
    %v4105 = vunpack.c.l.b16 %v4028
    %v4106 = vunpack.c.h.b16 %v4028
    %v4107 = vunpack.c.l.b16 %v4029
    %v4108 = vunpack.c.h.b16 %v4029
    %v4109 = vunpack.c.l.b16 %v4030
    %v4110 = vunpack.c.h.b16 %v4030
    %v4111 = vunpack.c.l.b16 %v4031
    %v4112 = vunpack.c.h.b16 %v4031
    %v4113 = vunpack.c.l.b16 %v4032
    %v4114 = vunpack.c.h.b16 %v4032
    %v4115 = vunpack.c.l.b16 %v4033
    %v4116 = vunpack.c.h.b16 %v4033
    %v4117 = vunpack.c.l.b16 %v4034
    %v4118 = vunpack.c.h.b16 %v4034
    %v4119 = vunpack.c.l.b16 %v4035
    %v4120 = vunpack.c.h.b16 %v4035
    %v4121 = vunpack.c.l.b16 %v4036
    %v4122 = vunpack.c.h.b16 %v4036
    %v4123 = vunpack.c.l.b16 %v4037
    %v4124 = vunpack.c.h.b16 %v4037
    %v4125 = vunpack.c.l.b16 %v4038
    %v4126 = vunpack.c.h.b16 %v4038
    %v4127 = vunpack.c.l.b16 %v4039
    %v4128 = vunpack.c.h.b16 %v4039
    %v4129 = vunpack.c.l.b16 %v4040
    %v4130 = vunpack.c.h.b16 %v4040
    %v4131 = vunpack.c.l.b16 %v4041
    %v4132 = vunpack.c.h.b16 %v4041
    %v4133 = vunpack.c.l.b16 %v4042
    %v4134 = vunpack.c.h.b16 %v4042
    %v4135 = vunpack.c.l.b16 %v4043
    %v4136 = vunpack.c.h.b16 %v4043
    %v4137 = vunpack.c.l.b16 %v4044
    %v4138 = vunpack.c.h.b16 %v4044
    %v4139 = vunpack.c.l.b16 %v4045
    %v4140 = vunpack.c.h.b16 %v4045
    %v4141 = vunpack.c.l.b16 %v4046
    %v4142 = vunpack.c.h.b16 %v4046
    %v4143 = vunpack.c.l.b16 %v4047
    %v4144 = vunpack.c.h.b16 %v4047
    %v4145 = vunpack.c.l.b16 %v4048
    %v4146 = vunpack.c.h.b16 %v4048
    %v4147 = vunpack.c.l.b16 %v4049
    %v4148 = vunpack.c.h.b16 %v4049
    %v4149 = vpack.c.b16 %v4089, %v4085
    %v4150 = vpack.c.b16 %v4090, %v4086
    %v4151 = vpack.c.b16 %v4091, %v4087
    %v4152 = vpack.c.b16 %v4092, %v4088
    %v4153 = vpack.c.b16 %v4097, %v4093
    %v4154 = vpack.c.b16 %v4098, %v4094
    %v4155 = vpack.c.b16 %v4099, %v4095
    %v4156 = vpack.c.b16 %v4100, %v4096
    %v4157 = vpack.c.b16 %v4105, %v4101
    %v4158 = vpack.c.b16 %v4106, %v4102
    %v4159 = vpack.c.b16 %v4107, %v4103
    %v4160 = vpack.c.b16 %v4108, %v4104
    %v4161 = vpack.c.b16 %v4113, %v4109
    %v4162 = vpack.c.b16 %v4114, %v4110
    %v4163 = vpack.c.b16 %v4115, %v4111
    %v4164 = vpack.c.b16 %v4116, %v4112
    %v4165 = vpack.c.b16 %v4121, %v4117
    %v4166 = vpack.c.b16 %v4122, %v4118
    %v4167 = vpack.c.b16 %v4123, %v4119
    %v4168 = vpack.c.b16 %v4124, %v4120
    %v4169 = vpack.c.b16 %v4129, %v4125
    %v4170 = vpack.c.b16 %v4130, %v4126
    %v4171 = vpack.c.b16 %v4131, %v4127
    %v4172 = vpack.c.b16 %v4132, %v4128
    %v4173 = vpack.c.b16 %v4137, %v4133
    %v4174 = vpack.c.b16 %v4138, %v4134
    %v4175 = vpack.c.b16 %v4139, %v4135
    %v4176 = vpack.c.b16 %v4140, %v4136
    %v4177 = vpack.c.b16 %v4145, %v4141
    %v4178 = vpack.c.b16 %v4146, %v4142
    %v4179 = vpack.c.b16 %v4147, %v4143
    %v4180 = vpack.c.b16 %v4148, %v4144
    %4213 = vmatpush.bf16.msra.mxu0 %v4177
    %4214 = vmatpush.bf16.msra.mxu0 %v4173
    %4215 = vmatpush.bf16.msra.mxu0 %v4169
    %4216 = vmatpush.bf16.msra.mxu0 %v4165
    %4217 = vmatpush.bf16.msra.mxu0 %v4161
    %4218 = vmatpush.bf16.msra.mxu0 %v4157
    %4219 = vmatpush.bf16.msra.mxu0 %v4153
    %4220 = vmatpush.bf16.msra.mxu0 %v4149
    %4221 = vmatmul.bf16.gmra.mxu0 %v4051
    %v4222 = vpop.f32.mrf.mxu0
    %v4223 = vadd.f32 0.0, %v4222
    %v4224 = vpop.f32.mrf.mxu0
    %4225 = vdwg.mxu0
    %4226 = vmatpush.bf16.msra.mxu0 %v4178
    %4227 = vmatpush.bf16.msra.mxu0 %v4174
    %4228 = vmatpush.bf16.msra.mxu0 %v4170
    %4229 = vmatpush.bf16.msra.mxu0 %v4166
    %4230 = vmatpush.bf16.msra.mxu0 %v4162
    %4231 = vmatpush.bf16.msra.mxu0 %v4158
    %4232 = vmatpush.bf16.msra.mxu0 %v4154
    %4233 = vmatpush.bf16.msra.mxu0 %v4150
    %4234 = vmatmul.bf16.gmra.mxu0 %v4051
    %v4235 = vpop.f32.mrf.mxu0
    %v4236 = vadd.f32 0.0, %v4235
    %v4237 = vpop.f32.mrf.mxu0
    %4238 = vdwg.mxu0
    %4239 = vmatpush.bf16.msra.mxu0 %v4179
    %4240 = vmatpush.bf16.msra.mxu0 %v4175
    %4241 = vmatpush.bf16.msra.mxu0 %v4171
    %4242 = vmatpush.bf16.msra.mxu0 %v4167
    %4243 = vmatpush.bf16.msra.mxu0 %v4163
    %4244 = vmatpush.bf16.msra.mxu0 %v4159
    %4245 = vmatpush.bf16.msra.mxu0 %v4155
    %4246 = vmatpush.bf16.msra.mxu0 %v4151
    %4247 = vmatmul.bf16.gmra.mxu0 %v4051
    %v4248 = vpop.f32.mrf.mxu0
    %v4249 = vadd.f32 0.0, %v4248
    %v4250 = vpop.f32.mrf.mxu0
    %4251 = vdwg.mxu0
    %4252 = vmatpush.bf16.msra.mxu0 %v4180
    %4253 = vmatpush.bf16.msra.mxu0 %v4176
    %4254 = vmatpush.bf16.msra.mxu0 %v4172
    %4255 = vmatpush.bf16.msra.mxu0 %v4168
    %4256 = vmatpush.bf16.msra.mxu0 %v4164
    %4257 = vmatpush.bf16.msra.mxu0 %v4160
    %4258 = vmatpush.bf16.msra.mxu0 %v4156
    %4259 = vmatpush.bf16.msra.mxu0 %v4152
    %4260 = vmatmul.bf16.gmra.mxu0 %v4051
    %v4261 = vpop.f32.mrf.mxu0
    %v4262 = vadd.f32 0.0, %v4261
    %v4263 = vpop.f32.mrf.mxu0
    %4264 = vdwg.mxu0
    %v4265 = vadd.f32 %v376, %v4223
    %v4266 = vadd.f32 %v390, %v4236
    %v4267 = vadd.f32 %v404, %v4249
    %v4268 = vadd.f32 %v418, %v4262
    %v4269 = vxor.u32 %v4265, 2147483648
    %v4270 = vmul.f32 %v4269, 1.442695
    %v4271 = vpow.pop %v4270
    %v4272 = vadd.f32 %v4271, 1.0
    %v4273 = vrcp.pop %v4272
    %v4274 = vmul.f32 %v4272, %v4273
    %v4275 = vsub.f32 1.0, %v4274
    %v4276 = vmul.f32 %v4273, %v4275
    %v4277 = vadd.f32 %v4273, %v4276
    %vm4278 = vweird.f32 %v4272
    %vm4279 = vweird.f32 %v4273
    %vm4280 = vmor %vm4278, %vm4279
    %v4281 = vsel %vm4280, %v4273, %v4277
    %v4282 = vand.u32 2147483647, %v4272
    %vm4283 = vcmp.eq.f32.partialorder %v4282, 8.507059e+37
    %v4284 = vand.u32 %v4272, 2147483648
    %v4285 = vor.u32 1.1754944e-38, %v4284
    %v4286 = vsel %vm4283, %v4285, %v4281
    %v4287 = vmul.f32 1.0, %v4286
    %v4288 = vxor.u32 %v4266, 2147483648
    %v4289 = vmul.f32 %v4288, 1.442695
    %v4290 = vpow.pop %v4289
    %v4291 = vadd.f32 %v4290, 1.0
    %v4292 = vrcp.pop %v4291
    %v4293 = vmul.f32 %v4291, %v4292
    %v4294 = vsub.f32 1.0, %v4293
    %v4295 = vmul.f32 %v4292, %v4294
    %v4296 = vadd.f32 %v4292, %v4295
    %vm4297 = vweird.f32 %v4291
    %vm4298 = vweird.f32 %v4292
    %vm4299 = vmor %vm4297, %vm4298
    %v4300 = vsel %vm4299, %v4292, %v4296
    %v4301 = vand.u32 2147483647, %v4291
    %vm4302 = vcmp.eq.f32.partialorder %v4301, 8.507059e+37
    %v4303 = vand.u32 %v4291, 2147483648
    %v4304 = vor.u32 1.1754944e-38, %v4303
    %v4305 = vsel %vm4302, %v4304, %v4300
    %v4306 = vmul.f32 1.0, %v4305
    %v4307 = vtanh.pop %v4267
    %v4308 = vxor.u32 %v4268, 2147483648
    %v4309 = vmul.f32 %v4308, 1.442695
    %v4310 = vpow.pop %v4309
    %v4311 = vadd.f32 %v4310, 1.0
    %v4312 = vrcp.pop %v4311
    %v4313 = vmul.f32 %v4311, %v4312
    %v4314 = vsub.f32 1.0, %v4313
    %v4315 = vmul.f32 %v4312, %v4314
    %v4316 = vadd.f32 %v4312, %v4315
    %vm4317 = vweird.f32 %v4311
    %vm4318 = vweird.f32 %v4312
    %vm4319 = vmor %vm4317, %vm4318
    %v4320 = vsel %vm4319, %v4312, %v4316
    %v4321 = vand.u32 2147483647, %v4311
    %vm4322 = vcmp.eq.f32.partialorder %v4321, 8.507059e+37
    %v4323 = vand.u32 %v4311, 2147483648
    %v4324 = vor.u32 1.1754944e-38, %v4323
    %v4325 = vsel %vm4322, %v4324, %v4320
    %v4326 = vmul.f32 1.0, %v4325
    %v4328 = vrot.slane %v4013, 2
    %v4330 = vmul.f32 %v4306, %v4328
    %v4331 = vmul.f32 %v4287, %v4307
    %v4332 = vadd.f32 %v4330, %v4331
    %v4333 = vtanh.pop %v4332
    %v4334 = vmul.f32 %v4326, %v4333
    %4335 = vst [vmem:[#allocation2 + $0x18] sm:$0x3] %v4334
    %v4336 = vpack.c.bf16 %v4334, %v4334
    %v4337 = vld [vmem:[#allocation5] sm:$0xff]
    %v4338 = vld [vmem:[#allocation5 + $0x8] sm:$0xff]
    %v4339 = vld [vmem:[#allocation5 + $0x10] sm:$0xff]
    %v4340 = vld [vmem:[#allocation5 + $0x18] sm:$0xff]
    %v4341 = vld [vmem:[#allocation5 + $0x20] sm:$0xff]
    %v4342 = vld [vmem:[#allocation5 + $0x28] sm:$0xff]
    %v4343 = vld [vmem:[#allocation5 + $0x30] sm:$0xff]
    %v4344 = vld [vmem:[#allocation5 + $0x38] sm:$0xff]
    %v4345 = vld [vmem:[#allocation5 + $0x40] sm:$0xff]
    %v4346 = vld [vmem:[#allocation5 + $0x48] sm:$0xff]
    %v4347 = vld [vmem:[#allocation5 + $0x50] sm:$0xff]
    %v4348 = vld [vmem:[#allocation5 + $0x58] sm:$0xff]
    %v4349 = vld [vmem:[#allocation5 + $0x60] sm:$0xff]
    %v4350 = vld [vmem:[#allocation5 + $0x68] sm:$0xff]
    %v4351 = vld [vmem:[#allocation5 + $0x70] sm:$0xff]
    %v4352 = vld [vmem:[#allocation5 + $0x78] sm:$0xff]
    %v4353 = vld [vmem:[#allocation5 + $0x80] sm:$0xff]
    %v4354 = vld [vmem:[#allocation5 + $0x88] sm:$0xff]
    %v4355 = vld [vmem:[#allocation5 + $0x90] sm:$0xff]
    %v4356 = vld [vmem:[#allocation5 + $0x98] sm:$0xff]
    %v4357 = vld [vmem:[#allocation5 + $0xa0] sm:$0xff]
    %v4358 = vld [vmem:[#allocation5 + $0xa8] sm:$0xff]
    %v4359 = vld [vmem:[#allocation5 + $0xb0] sm:$0xff]
    %v4360 = vld [vmem:[#allocation5 + $0xb8] sm:$0xff]
    %v4361 = vld [vmem:[#allocation5 + $0xc0] sm:$0xff]
    %v4362 = vld [vmem:[#allocation5 + $0xc8] sm:$0xff]
    %v4363 = vld [vmem:[#allocation5 + $0xd0] sm:$0xff]
    %v4364 = vld [vmem:[#allocation5 + $0xd8] sm:$0xff]
    %v4365 = vld [vmem:[#allocation5 + $0xe0] sm:$0xff]
    %v4366 = vld [vmem:[#allocation5 + $0xe8] sm:$0xff]
    %v4367 = vld [vmem:[#allocation5 + $0xf0] sm:$0xff]
    %v4368 = vld [vmem:[#allocation5 + $0xf8] sm:$0xff]
    %v4401 = vunpack.c.l.b16 %v4337
    %v4402 = vunpack.c.h.b16 %v4337
    %v4403 = vunpack.c.l.b16 %v4338
    %v4404 = vunpack.c.h.b16 %v4338
    %v4405 = vunpack.c.l.b16 %v4339
    %v4406 = vunpack.c.h.b16 %v4339
    %v4407 = vunpack.c.l.b16 %v4340
    %v4408 = vunpack.c.h.b16 %v4340
    %v4409 = vunpack.c.l.b16 %v4341
    %v4410 = vunpack.c.h.b16 %v4341
    %v4411 = vunpack.c.l.b16 %v4342
    %v4412 = vunpack.c.h.b16 %v4342
    %v4413 = vunpack.c.l.b16 %v4343
    %v4414 = vunpack.c.h.b16 %v4343
    %v4415 = vunpack.c.l.b16 %v4344
    %v4416 = vunpack.c.h.b16 %v4344
    %v4417 = vunpack.c.l.b16 %v4345
    %v4418 = vunpack.c.h.b16 %v4345
    %v4419 = vunpack.c.l.b16 %v4346
    %v4420 = vunpack.c.h.b16 %v4346
    %v4421 = vunpack.c.l.b16 %v4347
    %v4422 = vunpack.c.h.b16 %v4347
    %v4423 = vunpack.c.l.b16 %v4348
    %v4424 = vunpack.c.h.b16 %v4348
    %v4425 = vunpack.c.l.b16 %v4349
    %v4426 = vunpack.c.h.b16 %v4349
    %v4427 = vunpack.c.l.b16 %v4350
    %v4428 = vunpack.c.h.b16 %v4350
    %v4429 = vunpack.c.l.b16 %v4351
    %v4430 = vunpack.c.h.b16 %v4351
    %v4431 = vunpack.c.l.b16 %v4352
    %v4432 = vunpack.c.h.b16 %v4352
    %v4433 = vunpack.c.l.b16 %v4353
    %v4434 = vunpack.c.h.b16 %v4353
    %v4435 = vunpack.c.l.b16 %v4354
    %v4436 = vunpack.c.h.b16 %v4354
    %v4437 = vunpack.c.l.b16 %v4355
    %v4438 = vunpack.c.h.b16 %v4355
    %v4439 = vunpack.c.l.b16 %v4356
    %v4440 = vunpack.c.h.b16 %v4356
    %v4441 = vunpack.c.l.b16 %v4357
    %v4442 = vunpack.c.h.b16 %v4357
    %v4443 = vunpack.c.l.b16 %v4358
    %v4444 = vunpack.c.h.b16 %v4358
    %v4445 = vunpack.c.l.b16 %v4359
    %v4446 = vunpack.c.h.b16 %v4359
    %v4447 = vunpack.c.l.b16 %v4360
    %v4448 = vunpack.c.h.b16 %v4360
    %v4449 = vunpack.c.l.b16 %v4361
    %v4450 = vunpack.c.h.b16 %v4361
    %v4451 = vunpack.c.l.b16 %v4362
    %v4452 = vunpack.c.h.b16 %v4362
    %v4453 = vunpack.c.l.b16 %v4363
    %v4454 = vunpack.c.h.b16 %v4363
    %v4455 = vunpack.c.l.b16 %v4364
    %v4456 = vunpack.c.h.b16 %v4364
    %v4457 = vunpack.c.l.b16 %v4365
    %v4458 = vunpack.c.h.b16 %v4365
    %v4459 = vunpack.c.l.b16 %v4366
    %v4460 = vunpack.c.h.b16 %v4366
    %v4461 = vunpack.c.l.b16 %v4367
    %v4462 = vunpack.c.h.b16 %v4367
    %v4463 = vunpack.c.l.b16 %v4368
    %v4464 = vunpack.c.h.b16 %v4368
    %v4465 = vpack.c.b16 %v4405, %v4401
    %v4466 = vpack.c.b16 %v4406, %v4402
    %v4467 = vpack.c.b16 %v4407, %v4403
    %v4468 = vpack.c.b16 %v4408, %v4404
    %v4469 = vpack.c.b16 %v4413, %v4409
    %v4470 = vpack.c.b16 %v4414, %v4410
    %v4471 = vpack.c.b16 %v4415, %v4411
    %v4472 = vpack.c.b16 %v4416, %v4412
    %v4473 = vpack.c.b16 %v4421, %v4417
    %v4474 = vpack.c.b16 %v4422, %v4418
    %v4475 = vpack.c.b16 %v4423, %v4419
    %v4476 = vpack.c.b16 %v4424, %v4420
    %v4477 = vpack.c.b16 %v4429, %v4425
    %v4478 = vpack.c.b16 %v4430, %v4426
    %v4479 = vpack.c.b16 %v4431, %v4427
    %v4480 = vpack.c.b16 %v4432, %v4428
    %v4481 = vpack.c.b16 %v4437, %v4433
    %v4482 = vpack.c.b16 %v4438, %v4434
    %v4483 = vpack.c.b16 %v4439, %v4435
    %v4484 = vpack.c.b16 %v4440, %v4436
    %v4485 = vpack.c.b16 %v4445, %v4441
    %v4486 = vpack.c.b16 %v4446, %v4442
    %v4487 = vpack.c.b16 %v4447, %v4443
    %v4488 = vpack.c.b16 %v4448, %v4444
    %v4489 = vpack.c.b16 %v4453, %v4449
    %v4490 = vpack.c.b16 %v4454, %v4450
    %v4491 = vpack.c.b16 %v4455, %v4451
    %v4492 = vpack.c.b16 %v4456, %v4452
    %v4493 = vpack.c.b16 %v4461, %v4457
    %v4494 = vpack.c.b16 %v4462, %v4458
    %v4495 = vpack.c.b16 %v4463, %v4459
    %v4496 = vpack.c.b16 %v4464, %v4460
    %4529 = vmatpush.bf16.msra.mxu0 %v4493
    %4530 = vmatpush.bf16.msra.mxu0 %v4489
    %4531 = vmatpush.bf16.msra.mxu0 %v4485
    %4532 = vmatpush.bf16.msra.mxu0 %v4481
    %4533 = vmatpush.bf16.msra.mxu0 %v4477
    %4534 = vmatpush.bf16.msra.mxu0 %v4473
    %4535 = vmatpush.bf16.msra.mxu0 %v4469
    %4536 = vmatpush.bf16.msra.mxu0 %v4465
    %4537 = vmatmul.bf16.gmra.mxu0 %v4336
    %v4538 = vpop.f32.mrf.mxu0
    %v4539 = vadd.f32 0.0, %v4538
    %v4540 = vpop.f32.mrf.mxu0
    %4541 = vdwg.mxu0
    %4542 = vmatpush.bf16.msra.mxu0 %v4494
    %4543 = vmatpush.bf16.msra.mxu0 %v4490
    %4544 = vmatpush.bf16.msra.mxu0 %v4486
    %4545 = vmatpush.bf16.msra.mxu0 %v4482
    %4546 = vmatpush.bf16.msra.mxu0 %v4478
    %4547 = vmatpush.bf16.msra.mxu0 %v4474
    %4548 = vmatpush.bf16.msra.mxu0 %v4470
    %4549 = vmatpush.bf16.msra.mxu0 %v4466
    %4550 = vmatmul.bf16.gmra.mxu0 %v4336
    %v4551 = vpop.f32.mrf.mxu0
    %v4552 = vadd.f32 0.0, %v4551
    %v4553 = vpop.f32.mrf.mxu0
    %4554 = vdwg.mxu0
    %4555 = vmatpush.bf16.msra.mxu0 %v4495
    %4556 = vmatpush.bf16.msra.mxu0 %v4491
    %4557 = vmatpush.bf16.msra.mxu0 %v4487
    %4558 = vmatpush.bf16.msra.mxu0 %v4483
    %4559 = vmatpush.bf16.msra.mxu0 %v4479
    %4560 = vmatpush.bf16.msra.mxu0 %v4475
    %4561 = vmatpush.bf16.msra.mxu0 %v4471
    %4562 = vmatpush.bf16.msra.mxu0 %v4467
    %4563 = vmatmul.bf16.gmra.mxu0 %v4336
    %v4564 = vpop.f32.mrf.mxu0
    %v4565 = vadd.f32 0.0, %v4564
    %v4566 = vpop.f32.mrf.mxu0
    %4567 = vdwg.mxu0
    %4568 = vmatpush.bf16.msra.mxu0 %v4496
    %4569 = vmatpush.bf16.msra.mxu0 %v4492
    %4570 = vmatpush.bf16.msra.mxu0 %v4488
    %4571 = vmatpush.bf16.msra.mxu0 %v4484
    %4572 = vmatpush.bf16.msra.mxu0 %v4480
    %4573 = vmatpush.bf16.msra.mxu0 %v4476
    %4574 = vmatpush.bf16.msra.mxu0 %v4472
    %4575 = vmatpush.bf16.msra.mxu0 %v4468
    %4576 = vmatmul.bf16.gmra.mxu0 %v4336
    %v4577 = vpop.f32.mrf.mxu0
    %v4578 = vadd.f32 0.0, %v4577
    %v4579 = vpop.f32.mrf.mxu0
    %4580 = vdwg.mxu0
    %v4585 = vrot.slane %v4539, 2
    %v4586 = vrot.slane %v4552, 2
    %v4587 = vrot.slane %v4565, 2
    %v4588 = vrot.slane %v4578, 2
    %v4593 = vadd.f32 %v374, %v4585
    %v4594 = vadd.f32 %v388, %v4586
    %v4595 = vadd.f32 %v402, %v4587
    %v4596 = vadd.f32 %v416, %v4588
    %v4597 = vxor.u32 %v4593, 2147483648
    %v4598 = vmul.f32 %v4597, 1.442695
    %v4599 = vpow.pop %v4598
    %v4600 = vadd.f32 %v4599, 1.0
    %v4601 = vrcp.pop %v4600
    %v4602 = vmul.f32 %v4600, %v4601
    %v4603 = vsub.f32 1.0, %v4602
    %v4604 = vmul.f32 %v4601, %v4603
    %v4605 = vadd.f32 %v4601, %v4604
    %vm4606 = vweird.f32 %v4600
    %vm4607 = vweird.f32 %v4601
    %vm4608 = vmor %vm4606, %vm4607
    %v4609 = vsel %vm4608, %v4601, %v4605
    %v4610 = vand.u32 2147483647, %v4600
    %vm4611 = vcmp.eq.f32.partialorder %v4610, 8.507059e+37
    %v4612 = vand.u32 %v4600, 2147483648
    %v4613 = vor.u32 1.1754944e-38, %v4612
    %v4614 = vsel %vm4611, %v4613, %v4609
    %v4615 = vmul.f32 1.0, %v4614
    %v4616 = vxor.u32 %v4594, 2147483648
    %v4617 = vmul.f32 %v4616, 1.442695
    %v4618 = vpow.pop %v4617
    %v4619 = vadd.f32 %v4618, 1.0
    %v4620 = vrcp.pop %v4619
    %v4621 = vmul.f32 %v4619, %v4620
    %v4622 = vsub.f32 1.0, %v4621
    %v4623 = vmul.f32 %v4620, %v4622
    %v4624 = vadd.f32 %v4620, %v4623
    %vm4625 = vweird.f32 %v4619
    %vm4626 = vweird.f32 %v4620
    %vm4627 = vmor %vm4625, %vm4626
    %v4628 = vsel %vm4627, %v4620, %v4624
    %v4629 = vand.u32 2147483647, %v4619
    %vm4630 = vcmp.eq.f32.partialorder %v4629, 8.507059e+37
    %v4631 = vand.u32 %v4619, 2147483648
    %v4632 = vor.u32 1.1754944e-38, %v4631
    %v4633 = vsel %vm4630, %v4632, %v4628
    %v4634 = vmul.f32 1.0, %v4633
    %v4635 = vtanh.pop %v4595
    %v4636 = vxor.u32 %v4596, 2147483648
    %v4637 = vmul.f32 %v4636, 1.442695
    %v4638 = vpow.pop %v4637
    %v4639 = vadd.f32 %v4638, 1.0
    %v4640 = vrcp.pop %v4639
    %v4641 = vmul.f32 %v4639, %v4640
    %v4642 = vsub.f32 1.0, %v4641
    %v4643 = vmul.f32 %v4640, %v4642
    %v4644 = vadd.f32 %v4640, %v4643
    %vm4645 = vweird.f32 %v4639
    %vm4646 = vweird.f32 %v4640
    %vm4647 = vmor %vm4645, %vm4646
    %v4648 = vsel %vm4647, %v4640, %v4644
    %v4649 = vand.u32 2147483647, %v4639
    %vm4650 = vcmp.eq.f32.partialorder %v4649, 8.507059e+37
    %v4651 = vand.u32 %v4639, 2147483648
    %v4652 = vor.u32 1.1754944e-38, %v4651
    %v4653 = vsel %vm4650, %v4652, %v4648
    %v4654 = vmul.f32 1.0, %v4653
    %v4656 = vrot.slane %v4332, 2
    %v4658 = vmul.f32 %v4634, %v4656
    %v4659 = vmul.f32 %v4615, %v4635
    %v4660 = vadd.f32 %v4658, %v4659
    %v4661 = vtanh.pop %v4660
    %v4662 = vmul.f32 %v4654, %v4661
    %4663 = vst [vmem:[#allocation2 + $0x8] sm:$0xc0] %v4662
    %v4664 = vpack.c.bf16 %v4662, %v4662
    %v4665 = vld [vmem:[#allocation5] sm:$0xff]
    %v4666 = vld [vmem:[#allocation5 + $0x8] sm:$0xff]
    %v4667 = vld [vmem:[#allocation5 + $0x10] sm:$0xff]
    %v4668 = vld [vmem:[#allocation5 + $0x18] sm:$0xff]
    %v4669 = vld [vmem:[#allocation5 + $0x20] sm:$0xff]
    %v4670 = vld [vmem:[#allocation5 + $0x28] sm:$0xff]
    %v4671 = vld [vmem:[#allocation5 + $0x30] sm:$0xff]
    %v4672 = vld [vmem:[#allocation5 + $0x38] sm:$0xff]
    %v4673 = vld [vmem:[#allocation5 + $0x40] sm:$0xff]
    %v4674 = vld [vmem:[#allocation5 + $0x48] sm:$0xff]
    %v4675 = vld [vmem:[#allocation5 + $0x50] sm:$0xff]
    %v4676 = vld [vmem:[#allocation5 + $0x58] sm:$0xff]
    %v4677 = vld [vmem:[#allocation5 + $0x60] sm:$0xff]
    %v4678 = vld [vmem:[#allocation5 + $0x68] sm:$0xff]
    %v4679 = vld [vmem:[#allocation5 + $0x70] sm:$0xff]
    %v4680 = vld [vmem:[#allocation5 + $0x78] sm:$0xff]
    %v4681 = vld [vmem:[#allocation5 + $0x80] sm:$0xff]
    %v4682 = vld [vmem:[#allocation5 + $0x88] sm:$0xff]
    %v4683 = vld [vmem:[#allocation5 + $0x90] sm:$0xff]
    %v4684 = vld [vmem:[#allocation5 + $0x98] sm:$0xff]
    %v4685 = vld [vmem:[#allocation5 + $0xa0] sm:$0xff]
    %v4686 = vld [vmem:[#allocation5 + $0xa8] sm:$0xff]
    %v4687 = vld [vmem:[#allocation5 + $0xb0] sm:$0xff]
    %v4688 = vld [vmem:[#allocation5 + $0xb8] sm:$0xff]
    %v4689 = vld [vmem:[#allocation5 + $0xc0] sm:$0xff]
    %v4690 = vld [vmem:[#allocation5 + $0xc8] sm:$0xff]
    %v4691 = vld [vmem:[#allocation5 + $0xd0] sm:$0xff]
    %v4692 = vld [vmem:[#allocation5 + $0xd8] sm:$0xff]
    %v4693 = vld [vmem:[#allocation5 + $0xe0] sm:$0xff]
    %v4694 = vld [vmem:[#allocation5 + $0xe8] sm:$0xff]
    %v4695 = vld [vmem:[#allocation5 + $0xf0] sm:$0xff]
    %v4696 = vld [vmem:[#allocation5 + $0xf8] sm:$0xff]
    %v4698 = vrot.slane %v4664, 3
    %v4732 = vunpack.c.l.b16 %v4665
    %v4733 = vunpack.c.h.b16 %v4665
    %v4734 = vunpack.c.l.b16 %v4666
    %v4735 = vunpack.c.h.b16 %v4666
    %v4736 = vunpack.c.l.b16 %v4667
    %v4737 = vunpack.c.h.b16 %v4667
    %v4738 = vunpack.c.l.b16 %v4668
    %v4739 = vunpack.c.h.b16 %v4668
    %v4740 = vunpack.c.l.b16 %v4669
    %v4741 = vunpack.c.h.b16 %v4669
    %v4742 = vunpack.c.l.b16 %v4670
    %v4743 = vunpack.c.h.b16 %v4670
    %v4744 = vunpack.c.l.b16 %v4671
    %v4745 = vunpack.c.h.b16 %v4671
    %v4746 = vunpack.c.l.b16 %v4672
    %v4747 = vunpack.c.h.b16 %v4672
    %v4748 = vunpack.c.l.b16 %v4673
    %v4749 = vunpack.c.h.b16 %v4673
    %v4750 = vunpack.c.l.b16 %v4674
    %v4751 = vunpack.c.h.b16 %v4674
    %v4752 = vunpack.c.l.b16 %v4675
    %v4753 = vunpack.c.h.b16 %v4675
    %v4754 = vunpack.c.l.b16 %v4676
    %v4755 = vunpack.c.h.b16 %v4676
    %v4756 = vunpack.c.l.b16 %v4677
    %v4757 = vunpack.c.h.b16 %v4677
    %v4758 = vunpack.c.l.b16 %v4678
    %v4759 = vunpack.c.h.b16 %v4678
    %v4760 = vunpack.c.l.b16 %v4679
    %v4761 = vunpack.c.h.b16 %v4679
    %v4762 = vunpack.c.l.b16 %v4680
    %v4763 = vunpack.c.h.b16 %v4680
    %v4764 = vunpack.c.l.b16 %v4681
    %v4765 = vunpack.c.h.b16 %v4681
    %v4766 = vunpack.c.l.b16 %v4682
    %v4767 = vunpack.c.h.b16 %v4682
    %v4768 = vunpack.c.l.b16 %v4683
    %v4769 = vunpack.c.h.b16 %v4683
    %v4770 = vunpack.c.l.b16 %v4684
    %v4771 = vunpack.c.h.b16 %v4684
    %v4772 = vunpack.c.l.b16 %v4685
    %v4773 = vunpack.c.h.b16 %v4685
    %v4774 = vunpack.c.l.b16 %v4686
    %v4775 = vunpack.c.h.b16 %v4686
    %v4776 = vunpack.c.l.b16 %v4687
    %v4777 = vunpack.c.h.b16 %v4687
    %v4778 = vunpack.c.l.b16 %v4688
    %v4779 = vunpack.c.h.b16 %v4688
    %v4780 = vunpack.c.l.b16 %v4689
    %v4781 = vunpack.c.h.b16 %v4689
    %v4782 = vunpack.c.l.b16 %v4690
    %v4783 = vunpack.c.h.b16 %v4690
    %v4784 = vunpack.c.l.b16 %v4691
    %v4785 = vunpack.c.h.b16 %v4691
    %v4786 = vunpack.c.l.b16 %v4692
    %v4787 = vunpack.c.h.b16 %v4692
    %v4788 = vunpack.c.l.b16 %v4693
    %v4789 = vunpack.c.h.b16 %v4693
    %v4790 = vunpack.c.l.b16 %v4694
    %v4791 = vunpack.c.h.b16 %v4694
    %v4792 = vunpack.c.l.b16 %v4695
    %v4793 = vunpack.c.h.b16 %v4695
    %v4794 = vunpack.c.l.b16 %v4696
    %v4795 = vunpack.c.h.b16 %v4696
    %v4796 = vpack.c.b16 %v4736, %v4732
    %v4797 = vpack.c.b16 %v4737, %v4733
    %v4798 = vpack.c.b16 %v4738, %v4734
    %v4799 = vpack.c.b16 %v4739, %v4735
    %v4800 = vpack.c.b16 %v4744, %v4740
    %v4801 = vpack.c.b16 %v4745, %v4741
    %v4802 = vpack.c.b16 %v4746, %v4742
    %v4803 = vpack.c.b16 %v4747, %v4743
    %v4804 = vpack.c.b16 %v4752, %v4748
    %v4805 = vpack.c.b16 %v4753, %v4749
    %v4806 = vpack.c.b16 %v4754, %v4750
    %v4807 = vpack.c.b16 %v4755, %v4751
    %v4808 = vpack.c.b16 %v4760, %v4756
    %v4809 = vpack.c.b16 %v4761, %v4757
    %v4810 = vpack.c.b16 %v4762, %v4758
    %v4811 = vpack.c.b16 %v4763, %v4759
    %v4812 = vpack.c.b16 %v4768, %v4764
    %v4813 = vpack.c.b16 %v4769, %v4765
    %v4814 = vpack.c.b16 %v4770, %v4766
    %v4815 = vpack.c.b16 %v4771, %v4767
    %v4816 = vpack.c.b16 %v4776, %v4772
    %v4817 = vpack.c.b16 %v4777, %v4773
    %v4818 = vpack.c.b16 %v4778, %v4774
    %v4819 = vpack.c.b16 %v4779, %v4775
    %v4820 = vpack.c.b16 %v4784, %v4780
    %v4821 = vpack.c.b16 %v4785, %v4781
    %v4822 = vpack.c.b16 %v4786, %v4782
    %v4823 = vpack.c.b16 %v4787, %v4783
    %v4824 = vpack.c.b16 %v4792, %v4788
    %v4825 = vpack.c.b16 %v4793, %v4789
    %v4826 = vpack.c.b16 %v4794, %v4790
    %v4827 = vpack.c.b16 %v4795, %v4791
    %4860 = vmatpush.bf16.msra.mxu0 %v4824
    %4861 = vmatpush.bf16.msra.mxu0 %v4820
    %4862 = vmatpush.bf16.msra.mxu0 %v4816
    %4863 = vmatpush.bf16.msra.mxu0 %v4812
    %4864 = vmatpush.bf16.msra.mxu0 %v4808
    %4865 = vmatpush.bf16.msra.mxu0 %v4804
    %4866 = vmatpush.bf16.msra.mxu0 %v4800
    %4867 = vmatpush.bf16.msra.mxu0 %v4796
    %4868 = vmatmul.bf16.gmra.mxu0 %v4698
    %v4869 = vpop.f32.mrf.mxu0
    %v4870 = vadd.f32 0.0, %v4869
    %v4871 = vpop.f32.mrf.mxu0
    %4872 = vdwg.mxu0
    %4873 = vmatpush.bf16.msra.mxu0 %v4825
    %4874 = vmatpush.bf16.msra.mxu0 %v4821
    %4875 = vmatpush.bf16.msra.mxu0 %v4817
    %4876 = vmatpush.bf16.msra.mxu0 %v4813
    %4877 = vmatpush.bf16.msra.mxu0 %v4809
    %4878 = vmatpush.bf16.msra.mxu0 %v4805
    %4879 = vmatpush.bf16.msra.mxu0 %v4801
    %4880 = vmatpush.bf16.msra.mxu0 %v4797
    %4881 = vmatmul.bf16.gmra.mxu0 %v4698
    %v4882 = vpop.f32.mrf.mxu0
    %v4883 = vadd.f32 0.0, %v4882
    %v4884 = vpop.f32.mrf.mxu0
    %4885 = vdwg.mxu0
    %4886 = vmatpush.bf16.msra.mxu0 %v4826
    %4887 = vmatpush.bf16.msra.mxu0 %v4822
    %4888 = vmatpush.bf16.msra.mxu0 %v4818
    %4889 = vmatpush.bf16.msra.mxu0 %v4814
    %4890 = vmatpush.bf16.msra.mxu0 %v4810
    %4891 = vmatpush.bf16.msra.mxu0 %v4806
    %4892 = vmatpush.bf16.msra.mxu0 %v4802
    %4893 = vmatpush.bf16.msra.mxu0 %v4798
    %4894 = vmatmul.bf16.gmra.mxu0 %v4698
    %v4895 = vpop.f32.mrf.mxu0
    %v4896 = vadd.f32 0.0, %v4895
    %v4897 = vpop.f32.mrf.mxu0
    %4898 = vdwg.mxu0
    %4899 = vmatpush.bf16.msra.mxu0 %v4827
    %4900 = vmatpush.bf16.msra.mxu0 %v4823
    %4901 = vmatpush.bf16.msra.mxu0 %v4819
    %4902 = vmatpush.bf16.msra.mxu0 %v4815
    %4903 = vmatpush.bf16.msra.mxu0 %v4811
    %4904 = vmatpush.bf16.msra.mxu0 %v4807
    %4905 = vmatpush.bf16.msra.mxu0 %v4803
    %4906 = vmatpush.bf16.msra.mxu0 %v4799
    %4907 = vmatmul.bf16.gmra.mxu0 %v4698
    %v4908 = vpop.f32.mrf.mxu0
    %v4909 = vadd.f32 0.0, %v4908
    %v4910 = vpop.f32.mrf.mxu0
    %4911 = vdwg.mxu0
    %v4916 = vrot.slane %v4870, 4
    %v4917 = vrot.slane %v4883, 4
    %v4918 = vrot.slane %v4896, 4
    %v4919 = vrot.slane %v4909, 4
    %v4924 = vadd.f32 %v374, %v4916
    %v4925 = vadd.f32 %v388, %v4917
    %v4926 = vadd.f32 %v402, %v4918
    %v4927 = vadd.f32 %v416, %v4919
    %v4928 = vxor.u32 %v4924, 2147483648
    %v4929 = vmul.f32 %v4928, 1.442695
    %v4930 = vpow.pop %v4929
    %v4931 = vadd.f32 %v4930, 1.0
    %v4932 = vrcp.pop %v4931
    %v4933 = vmul.f32 %v4931, %v4932
    %v4934 = vsub.f32 1.0, %v4933
    %v4935 = vmul.f32 %v4932, %v4934
    %v4936 = vadd.f32 %v4932, %v4935
    %vm4937 = vweird.f32 %v4931
    %vm4938 = vweird.f32 %v4932
    %vm4939 = vmor %vm4937, %vm4938
    %v4940 = vsel %vm4939, %v4932, %v4936
    %v4941 = vand.u32 2147483647, %v4931
    %vm4942 = vcmp.eq.f32.partialorder %v4941, 8.507059e+37
    %v4943 = vand.u32 %v4931, 2147483648
    %v4944 = vor.u32 1.1754944e-38, %v4943
    %v4945 = vsel %vm4942, %v4944, %v4940
    %v4946 = vmul.f32 1.0, %v4945
    %v4947 = vxor.u32 %v4925, 2147483648
    %v4948 = vmul.f32 %v4947, 1.442695
    %v4949 = vpow.pop %v4948
    %v4950 = vadd.f32 %v4949, 1.0
    %v4951 = vrcp.pop %v4950
    %v4952 = vmul.f32 %v4950, %v4951
    %v4953 = vsub.f32 1.0, %v4952
    %v4954 = vmul.f32 %v4951, %v4953
    %v4955 = vadd.f32 %v4951, %v4954
    %vm4956 = vweird.f32 %v4950
    %vm4957 = vweird.f32 %v4951
    %vm4958 = vmor %vm4956, %vm4957
    %v4959 = vsel %vm4958, %v4951, %v4955
    %v4960 = vand.u32 2147483647, %v4950
    %vm4961 = vcmp.eq.f32.partialorder %v4960, 8.507059e+37
    %v4962 = vand.u32 %v4950, 2147483648
    %v4963 = vor.u32 1.1754944e-38, %v4962
    %v4964 = vsel %vm4961, %v4963, %v4959
    %v4965 = vmul.f32 1.0, %v4964
    %v4966 = vtanh.pop %v4926
    %v4967 = vxor.u32 %v4927, 2147483648
    %v4968 = vmul.f32 %v4967, 1.442695
    %v4969 = vpow.pop %v4968
    %v4970 = vadd.f32 %v4969, 1.0
    %v4971 = vrcp.pop %v4970
    %v4972 = vmul.f32 %v4970, %v4971
    %v4973 = vsub.f32 1.0, %v4972
    %v4974 = vmul.f32 %v4971, %v4973
    %v4975 = vadd.f32 %v4971, %v4974
    %vm4976 = vweird.f32 %v4970
    %vm4977 = vweird.f32 %v4971
    %vm4978 = vmor %vm4976, %vm4977
    %v4979 = vsel %vm4978, %v4971, %v4975
    %v4980 = vand.u32 2147483647, %v4970
    %vm4981 = vcmp.eq.f32.partialorder %v4980, 8.507059e+37
    %v4982 = vand.u32 %v4970, 2147483648
    %v4983 = vor.u32 1.1754944e-38, %v4982
    %v4984 = vsel %vm4981, %v4983, %v4979
    %v4985 = vmul.f32 1.0, %v4984
    %v4987 = vrot.slane %v4660, 2
    %v4989 = vmul.f32 %v4965, %v4987
    %v4990 = vmul.f32 %v4946, %v4966
    %v4991 = vadd.f32 %v4989, %v4990
    %v4992 = vtanh.pop %v4991
    %v4993 = vmul.f32 %v4985, %v4992
    %4994 = vst [vmem:[#allocation2 + $0x8] sm:$0x30] %v4993
    %v4995 = vpack.c.bf16 %v4993, %v4993
    %v4996 = vld [vmem:[#allocation5] sm:$0xff]
    %v4997 = vld [vmem:[#allocation5 + $0x8] sm:$0xff]
    %v4998 = vld [vmem:[#allocation5 + $0x10] sm:$0xff]
    %v4999 = vld [vmem:[#allocation5 + $0x18] sm:$0xff]
    %v5000 = vld [vmem:[#allocation5 + $0x20] sm:$0xff]
    %v5001 = vld [vmem:[#allocation5 + $0x28] sm:$0xff]
    %v5002 = vld [vmem:[#allocation5 + $0x30] sm:$0xff]
    %v5003 = vld [vmem:[#allocation5 + $0x38] sm:$0xff]
    %v5004 = vld [vmem:[#allocation5 + $0x40] sm:$0xff]
    %v5005 = vld [vmem:[#allocation5 + $0x48] sm:$0xff]
    %v5006 = vld [vmem:[#allocation5 + $0x50] sm:$0xff]
    %v5007 = vld [vmem:[#allocation5 + $0x58] sm:$0xff]
    %v5008 = vld [vmem:[#allocation5 + $0x60] sm:$0xff]
    %v5009 = vld [vmem:[#allocation5 + $0x68] sm:$0xff]
    %v5010 = vld [vmem:[#allocation5 + $0x70] sm:$0xff]
    %v5011 = vld [vmem:[#allocation5 + $0x78] sm:$0xff]
    %v5012 = vld [vmem:[#allocation5 + $0x80] sm:$0xff]
    %v5013 = vld [vmem:[#allocation5 + $0x88] sm:$0xff]
    %v5014 = vld [vmem:[#allocation5 + $0x90] sm:$0xff]
    %v5015 = vld [vmem:[#allocation5 + $0x98] sm:$0xff]
    %v5016 = vld [vmem:[#allocation5 + $0xa0] sm:$0xff]
    %v5017 = vld [vmem:[#allocation5 + $0xa8] sm:$0xff]
    %v5018 = vld [vmem:[#allocation5 + $0xb0] sm:$0xff]
    %v5019 = vld [vmem:[#allocation5 + $0xb8] sm:$0xff]
    %v5020 = vld [vmem:[#allocation5 + $0xc0] sm:$0xff]
    %v5021 = vld [vmem:[#allocation5 + $0xc8] sm:$0xff]
    %v5022 = vld [vmem:[#allocation5 + $0xd0] sm:$0xff]
    %v5023 = vld [vmem:[#allocation5 + $0xd8] sm:$0xff]
    %v5024 = vld [vmem:[#allocation5 + $0xe0] sm:$0xff]
    %v5025 = vld [vmem:[#allocation5 + $0xe8] sm:$0xff]
    %v5026 = vld [vmem:[#allocation5 + $0xf0] sm:$0xff]
    %v5027 = vld [vmem:[#allocation5 + $0xf8] sm:$0xff]
    %v5029 = vrot.slane %v4995, 2
    %v5063 = vunpack.c.l.b16 %v4996
    %v5064 = vunpack.c.h.b16 %v4996
    %v5065 = vunpack.c.l.b16 %v4997
    %v5066 = vunpack.c.h.b16 %v4997
    %v5067 = vunpack.c.l.b16 %v4998
    %v5068 = vunpack.c.h.b16 %v4998
    %v5069 = vunpack.c.l.b16 %v4999
    %v5070 = vunpack.c.h.b16 %v4999
    %v5071 = vunpack.c.l.b16 %v5000
    %v5072 = vunpack.c.h.b16 %v5000
    %v5073 = vunpack.c.l.b16 %v5001
    %v5074 = vunpack.c.h.b16 %v5001
    %v5075 = vunpack.c.l.b16 %v5002
    %v5076 = vunpack.c.h.b16 %v5002
    %v5077 = vunpack.c.l.b16 %v5003
    %v5078 = vunpack.c.h.b16 %v5003
    %v5079 = vunpack.c.l.b16 %v5004
    %v5080 = vunpack.c.h.b16 %v5004
    %v5081 = vunpack.c.l.b16 %v5005
    %v5082 = vunpack.c.h.b16 %v5005
    %v5083 = vunpack.c.l.b16 %v5006
    %v5084 = vunpack.c.h.b16 %v5006
    %v5085 = vunpack.c.l.b16 %v5007
    %v5086 = vunpack.c.h.b16 %v5007
    %v5087 = vunpack.c.l.b16 %v5008
    %v5088 = vunpack.c.h.b16 %v5008
    %v5089 = vunpack.c.l.b16 %v5009
    %v5090 = vunpack.c.h.b16 %v5009
    %v5091 = vunpack.c.l.b16 %v5010
    %v5092 = vunpack.c.h.b16 %v5010
    %v5093 = vunpack.c.l.b16 %v5011
    %v5094 = vunpack.c.h.b16 %v5011
    %v5095 = vunpack.c.l.b16 %v5012
    %v5096 = vunpack.c.h.b16 %v5012
    %v5097 = vunpack.c.l.b16 %v5013
    %v5098 = vunpack.c.h.b16 %v5013
    %v5099 = vunpack.c.l.b16 %v5014
    %v5100 = vunpack.c.h.b16 %v5014
    %v5101 = vunpack.c.l.b16 %v5015
    %v5102 = vunpack.c.h.b16 %v5015
    %v5103 = vunpack.c.l.b16 %v5016
    %v5104 = vunpack.c.h.b16 %v5016
    %v5105 = vunpack.c.l.b16 %v5017
    %v5106 = vunpack.c.h.b16 %v5017
    %v5107 = vunpack.c.l.b16 %v5018
    %v5108 = vunpack.c.h.b16 %v5018
    %v5109 = vunpack.c.l.b16 %v5019
    %v5110 = vunpack.c.h.b16 %v5019
    %v5111 = vunpack.c.l.b16 %v5020
    %v5112 = vunpack.c.h.b16 %v5020
    %v5113 = vunpack.c.l.b16 %v5021
    %v5114 = vunpack.c.h.b16 %v5021
    %v5115 = vunpack.c.l.b16 %v5022
    %v5116 = vunpack.c.h.b16 %v5022
    %v5117 = vunpack.c.l.b16 %v5023
    %v5118 = vunpack.c.h.b16 %v5023
    %v5119 = vunpack.c.l.b16 %v5024
    %v5120 = vunpack.c.h.b16 %v5024
    %v5121 = vunpack.c.l.b16 %v5025
    %v5122 = vunpack.c.h.b16 %v5025
    %v5123 = vunpack.c.l.b16 %v5026
    %v5124 = vunpack.c.h.b16 %v5026
    %v5125 = vunpack.c.l.b16 %v5027
    %v5126 = vunpack.c.h.b16 %v5027
    %v5127 = vpack.c.b16 %v5067, %v5063
    %v5128 = vpack.c.b16 %v5068, %v5064
    %v5129 = vpack.c.b16 %v5069, %v5065
    %v5130 = vpack.c.b16 %v5070, %v5066
    %v5131 = vpack.c.b16 %v5075, %v5071
    %v5132 = vpack.c.b16 %v5076, %v5072
    %v5133 = vpack.c.b16 %v5077, %v5073
    %v5134 = vpack.c.b16 %v5078, %v5074
    %v5135 = vpack.c.b16 %v5083, %v5079
    %v5136 = vpack.c.b16 %v5084, %v5080
    %v5137 = vpack.c.b16 %v5085, %v5081
    %v5138 = vpack.c.b16 %v5086, %v5082
    %v5139 = vpack.c.b16 %v5091, %v5087
    %v5140 = vpack.c.b16 %v5092, %v5088
    %v5141 = vpack.c.b16 %v5093, %v5089
    %v5142 = vpack.c.b16 %v5094, %v5090
    %v5143 = vpack.c.b16 %v5099, %v5095
    %v5144 = vpack.c.b16 %v5100, %v5096
    %v5145 = vpack.c.b16 %v5101, %v5097
    %v5146 = vpack.c.b16 %v5102, %v5098
    %v5147 = vpack.c.b16 %v5107, %v5103
    %v5148 = vpack.c.b16 %v5108, %v5104
    %v5149 = vpack.c.b16 %v5109, %v5105
    %v5150 = vpack.c.b16 %v5110, %v5106
    %v5151 = vpack.c.b16 %v5115, %v5111
    %v5152 = vpack.c.b16 %v5116, %v5112
    %v5153 = vpack.c.b16 %v5117, %v5113
    %v5154 = vpack.c.b16 %v5118, %v5114
    %v5155 = vpack.c.b16 %v5123, %v5119
    %v5156 = vpack.c.b16 %v5124, %v5120
    %v5157 = vpack.c.b16 %v5125, %v5121
    %v5158 = vpack.c.b16 %v5126, %v5122
    %5191 = vmatpush.bf16.msra.mxu0 %v5155
    %5192 = vmatpush.bf16.msra.mxu0 %v5151
    %5193 = vmatpush.bf16.msra.mxu0 %v5147
    %5194 = vmatpush.bf16.msra.mxu0 %v5143
    %5195 = vmatpush.bf16.msra.mxu0 %v5139
    %5196 = vmatpush.bf16.msra.mxu0 %v5135
    %5197 = vmatpush.bf16.msra.mxu0 %v5131
    %5198 = vmatpush.bf16.msra.mxu0 %v5127
    %5199 = vmatmul.bf16.gmra.mxu0 %v5029
    %v5200 = vpop.f32.mrf.mxu0
    %v5201 = vadd.f32 0.0, %v5200
    %v5202 = vpop.f32.mrf.mxu0
    %5203 = vdwg.mxu0
    %5204 = vmatpush.bf16.msra.mxu0 %v5156
    %5205 = vmatpush.bf16.msra.mxu0 %v5152
    %5206 = vmatpush.bf16.msra.mxu0 %v5148
    %5207 = vmatpush.bf16.msra.mxu0 %v5144
    %5208 = vmatpush.bf16.msra.mxu0 %v5140
    %5209 = vmatpush.bf16.msra.mxu0 %v5136
    %5210 = vmatpush.bf16.msra.mxu0 %v5132
    %5211 = vmatpush.bf16.msra.mxu0 %v5128
    %5212 = vmatmul.bf16.gmra.mxu0 %v5029
    %v5213 = vpop.f32.mrf.mxu0
    %v5214 = vadd.f32 0.0, %v5213
    %v5215 = vpop.f32.mrf.mxu0
    %5216 = vdwg.mxu0
    %5217 = vmatpush.bf16.msra.mxu0 %v5157
    %5218 = vmatpush.bf16.msra.mxu0 %v5153
    %5219 = vmatpush.bf16.msra.mxu0 %v5149
    %5220 = vmatpush.bf16.msra.mxu0 %v5145
    %5221 = vmatpush.bf16.msra.mxu0 %v5141
    %5222 = vmatpush.bf16.msra.mxu0 %v5137
    %5223 = vmatpush.bf16.msra.mxu0 %v5133
    %5224 = vmatpush.bf16.msra.mxu0 %v5129
    %5225 = vmatmul.bf16.gmra.mxu0 %v5029
    %v5226 = vpop.f32.mrf.mxu0
    %v5227 = vadd.f32 0.0, %v5226
    %v5228 = vpop.f32.mrf.mxu0
    %5229 = vdwg.mxu0
    %5230 = vmatpush.bf16.msra.mxu0 %v5158
    %5231 = vmatpush.bf16.msra.mxu0 %v5154
    %5232 = vmatpush.bf16.msra.mxu0 %v5150
    %5233 = vmatpush.bf16.msra.mxu0 %v5146
    %5234 = vmatpush.bf16.msra.mxu0 %v5142
    %5235 = vmatpush.bf16.msra.mxu0 %v5138
    %5236 = vmatpush.bf16.msra.mxu0 %v5134
    %5237 = vmatpush.bf16.msra.mxu0 %v5130
    %5238 = vmatmul.bf16.gmra.mxu0 %v5029
    %v5239 = vpop.f32.mrf.mxu0
    %v5240 = vadd.f32 0.0, %v5239
    %v5241 = vpop.f32.mrf.mxu0
    %5242 = vdwg.mxu0
    %v5247 = vrot.slane %v5201, 6
    %v5248 = vrot.slane %v5214, 6
    %v5249 = vrot.slane %v5227, 6
    %v5250 = vrot.slane %v5240, 6
    %v5255 = vadd.f32 %v374, %v5247
    %v5256 = vadd.f32 %v388, %v5248
    %v5257 = vadd.f32 %v402, %v5249
    %v5258 = vadd.f32 %v416, %v5250
    %v5259 = vxor.u32 %v5255, 2147483648
    %v5260 = vmul.f32 %v5259, 1.442695
    %v5261 = vpow.pop %v5260
    %v5262 = vadd.f32 %v5261, 1.0
    %v5263 = vrcp.pop %v5262
    %v5264 = vmul.f32 %v5262, %v5263
    %v5265 = vsub.f32 1.0, %v5264
    %v5266 = vmul.f32 %v5263, %v5265
    %v5267 = vadd.f32 %v5263, %v5266
    %vm5268 = vweird.f32 %v5262
    %vm5269 = vweird.f32 %v5263
    %vm5270 = vmor %vm5268, %vm5269
    %v5271 = vsel %vm5270, %v5263, %v5267
    %v5272 = vand.u32 2147483647, %v5262
    %vm5273 = vcmp.eq.f32.partialorder %v5272, 8.507059e+37
    %v5274 = vand.u32 %v5262, 2147483648
    %v5275 = vor.u32 1.1754944e-38, %v5274
    %v5276 = vsel %vm5273, %v5275, %v5271
    %v5277 = vmul.f32 1.0, %v5276
    %v5278 = vxor.u32 %v5256, 2147483648
    %v5279 = vmul.f32 %v5278, 1.442695
    %v5280 = vpow.pop %v5279
    %v5281 = vadd.f32 %v5280, 1.0
    %v5282 = vrcp.pop %v5281
    %v5283 = vmul.f32 %v5281, %v5282
    %v5284 = vsub.f32 1.0, %v5283
    %v5285 = vmul.f32 %v5282, %v5284
    %v5286 = vadd.f32 %v5282, %v5285
    %vm5287 = vweird.f32 %v5281
    %vm5288 = vweird.f32 %v5282
    %vm5289 = vmor %vm5287, %vm5288
    %v5290 = vsel %vm5289, %v5282, %v5286
    %v5291 = vand.u32 2147483647, %v5281
    %vm5292 = vcmp.eq.f32.partialorder %v5291, 8.507059e+37
    %v5293 = vand.u32 %v5281, 2147483648
    %v5294 = vor.u32 1.1754944e-38, %v5293
    %v5295 = vsel %vm5292, %v5294, %v5290
    %v5296 = vmul.f32 1.0, %v5295
    %v5297 = vtanh.pop %v5257
    %v5298 = vxor.u32 %v5258, 2147483648
    %v5299 = vmul.f32 %v5298, 1.442695
    %v5300 = vpow.pop %v5299
    %v5301 = vadd.f32 %v5300, 1.0
    %v5302 = vrcp.pop %v5301
    %v5303 = vmul.f32 %v5301, %v5302
    %v5304 = vsub.f32 1.0, %v5303
    %v5305 = vmul.f32 %v5302, %v5304
    %v5306 = vadd.f32 %v5302, %v5305
    %vm5307 = vweird.f32 %v5301
    %vm5308 = vweird.f32 %v5302
    %vm5309 = vmor %vm5307, %vm5308
    %v5310 = vsel %vm5309, %v5302, %v5306
    %v5311 = vand.u32 2147483647, %v5301
    %vm5312 = vcmp.eq.f32.partialorder %v5311, 8.507059e+37
    %v5313 = vand.u32 %v5301, 2147483648
    %v5314 = vor.u32 1.1754944e-38, %v5313
    %v5315 = vsel %vm5312, %v5314, %v5310
    %v5316 = vmul.f32 1.0, %v5315
    %v5318 = vrot.slane %v4991, 2
    %v5320 = vmul.f32 %v5296, %v5318
    %v5321 = vmul.f32 %v5277, %v5297
    %v5322 = vadd.f32 %v5320, %v5321
    %v5323 = vtanh.pop %v5322
    %v5324 = vmul.f32 %v5316, %v5323
    %5325 = vst [vmem:[#allocation2 + $0x8] sm:$0xc] %v5324
    %v5326 = vpack.c.bf16 %v5324, %v5324
    %v5327 = vld [vmem:[#allocation5] sm:$0xff]
    %v5328 = vld [vmem:[#allocation5 + $0x8] sm:$0xff]
    %v5329 = vld [vmem:[#allocation5 + $0x10] sm:$0xff]
    %v5330 = vld [vmem:[#allocation5 + $0x18] sm:$0xff]
    %v5331 = vld [vmem:[#allocation5 + $0x20] sm:$0xff]
    %v5332 = vld [vmem:[#allocation5 + $0x28] sm:$0xff]
    %v5333 = vld [vmem:[#allocation5 + $0x30] sm:$0xff]
    %v5334 = vld [vmem:[#allocation5 + $0x38] sm:$0xff]
    %v5335 = vld [vmem:[#allocation5 + $0x40] sm:$0xff]
    %v5336 = vld [vmem:[#allocation5 + $0x48] sm:$0xff]
    %v5337 = vld [vmem:[#allocation5 + $0x50] sm:$0xff]
    %v5338 = vld [vmem:[#allocation5 + $0x58] sm:$0xff]
    %v5339 = vld [vmem:[#allocation5 + $0x60] sm:$0xff]
    %v5340 = vld [vmem:[#allocation5 + $0x68] sm:$0xff]
    %v5341 = vld [vmem:[#allocation5 + $0x70] sm:$0xff]
    %v5342 = vld [vmem:[#allocation5 + $0x78] sm:$0xff]
    %v5343 = vld [vmem:[#allocation5 + $0x80] sm:$0xff]
    %v5344 = vld [vmem:[#allocation5 + $0x88] sm:$0xff]
    %v5345 = vld [vmem:[#allocation5 + $0x90] sm:$0xff]
    %v5346 = vld [vmem:[#allocation5 + $0x98] sm:$0xff]
    %v5347 = vld [vmem:[#allocation5 + $0xa0] sm:$0xff]
    %v5348 = vld [vmem:[#allocation5 + $0xa8] sm:$0xff]
    %v5349 = vld [vmem:[#allocation5 + $0xb0] sm:$0xff]
    %v5350 = vld [vmem:[#allocation5 + $0xb8] sm:$0xff]
    %v5351 = vld [vmem:[#allocation5 + $0xc0] sm:$0xff]
    %v5352 = vld [vmem:[#allocation5 + $0xc8] sm:$0xff]
    %v5353 = vld [vmem:[#allocation5 + $0xd0] sm:$0xff]
    %v5354 = vld [vmem:[#allocation5 + $0xd8] sm:$0xff]
    %v5355 = vld [vmem:[#allocation5 + $0xe0] sm:$0xff]
    %v5356 = vld [vmem:[#allocation5 + $0xe8] sm:$0xff]
    %v5357 = vld [vmem:[#allocation5 + $0xf0] sm:$0xff]
    %v5358 = vld [vmem:[#allocation5 + $0xf8] sm:$0xff]
    %v5360 = vrot.slane %v5326, 1
    %v5394 = vunpack.c.l.b16 %v5327
    %v5395 = vunpack.c.h.b16 %v5327
    %v5396 = vunpack.c.l.b16 %v5328
    %v5397 = vunpack.c.h.b16 %v5328
    %v5398 = vunpack.c.l.b16 %v5329
    %v5399 = vunpack.c.h.b16 %v5329
    %v5400 = vunpack.c.l.b16 %v5330
    %v5401 = vunpack.c.h.b16 %v5330
    %v5402 = vunpack.c.l.b16 %v5331
    %v5403 = vunpack.c.h.b16 %v5331
    %v5404 = vunpack.c.l.b16 %v5332
    %v5405 = vunpack.c.h.b16 %v5332
    %v5406 = vunpack.c.l.b16 %v5333
    %v5407 = vunpack.c.h.b16 %v5333
    %v5408 = vunpack.c.l.b16 %v5334
    %v5409 = vunpack.c.h.b16 %v5334
    %v5410 = vunpack.c.l.b16 %v5335
    %v5411 = vunpack.c.h.b16 %v5335
    %v5412 = vunpack.c.l.b16 %v5336
    %v5413 = vunpack.c.h.b16 %v5336
    %v5414 = vunpack.c.l.b16 %v5337
    %v5415 = vunpack.c.h.b16 %v5337
    %v5416 = vunpack.c.l.b16 %v5338
    %v5417 = vunpack.c.h.b16 %v5338
    %v5418 = vunpack.c.l.b16 %v5339
    %v5419 = vunpack.c.h.b16 %v5339
    %v5420 = vunpack.c.l.b16 %v5340
    %v5421 = vunpack.c.h.b16 %v5340
    %v5422 = vunpack.c.l.b16 %v5341
    %v5423 = vunpack.c.h.b16 %v5341
    %v5424 = vunpack.c.l.b16 %v5342
    %v5425 = vunpack.c.h.b16 %v5342
    %v5426 = vunpack.c.l.b16 %v5343
    %v5427 = vunpack.c.h.b16 %v5343
    %v5428 = vunpack.c.l.b16 %v5344
    %v5429 = vunpack.c.h.b16 %v5344
    %v5430 = vunpack.c.l.b16 %v5345
    %v5431 = vunpack.c.h.b16 %v5345
    %v5432 = vunpack.c.l.b16 %v5346
    %v5433 = vunpack.c.h.b16 %v5346
    %v5434 = vunpack.c.l.b16 %v5347
    %v5435 = vunpack.c.h.b16 %v5347
    %v5436 = vunpack.c.l.b16 %v5348
    %v5437 = vunpack.c.h.b16 %v5348
    %v5438 = vunpack.c.l.b16 %v5349
    %v5439 = vunpack.c.h.b16 %v5349
    %v5440 = vunpack.c.l.b16 %v5350
    %v5441 = vunpack.c.h.b16 %v5350
    %v5442 = vunpack.c.l.b16 %v5351
    %v5443 = vunpack.c.h.b16 %v5351
    %v5444 = vunpack.c.l.b16 %v5352
    %v5445 = vunpack.c.h.b16 %v5352
    %v5446 = vunpack.c.l.b16 %v5353
    %v5447 = vunpack.c.h.b16 %v5353
    %v5448 = vunpack.c.l.b16 %v5354
    %v5449 = vunpack.c.h.b16 %v5354
    %v5450 = vunpack.c.l.b16 %v5355
    %v5451 = vunpack.c.h.b16 %v5355
    %v5452 = vunpack.c.l.b16 %v5356
    %v5453 = vunpack.c.h.b16 %v5356
    %v5454 = vunpack.c.l.b16 %v5357
    %v5455 = vunpack.c.h.b16 %v5357
    %v5456 = vunpack.c.l.b16 %v5358
    %v5457 = vunpack.c.h.b16 %v5358
    %v5458 = vpack.c.b16 %v5398, %v5394
    %v5459 = vpack.c.b16 %v5399, %v5395
    %v5460 = vpack.c.b16 %v5400, %v5396
    %v5461 = vpack.c.b16 %v5401, %v5397
    %v5462 = vpack.c.b16 %v5406, %v5402
    %v5463 = vpack.c.b16 %v5407, %v5403
    %v5464 = vpack.c.b16 %v5408, %v5404
    %v5465 = vpack.c.b16 %v5409, %v5405
    %v5466 = vpack.c.b16 %v5414, %v5410
    %v5467 = vpack.c.b16 %v5415, %v5411
    %v5468 = vpack.c.b16 %v5416, %v5412
    %v5469 = vpack.c.b16 %v5417, %v5413
    %v5470 = vpack.c.b16 %v5422, %v5418
    %v5471 = vpack.c.b16 %v5423, %v5419
    %v5472 = vpack.c.b16 %v5424, %v5420
    %v5473 = vpack.c.b16 %v5425, %v5421
    %v5474 = vpack.c.b16 %v5430, %v5426
    %v5475 = vpack.c.b16 %v5431, %v5427
    %v5476 = vpack.c.b16 %v5432, %v5428
    %v5477 = vpack.c.b16 %v5433, %v5429
    %v5478 = vpack.c.b16 %v5438, %v5434
    %v5479 = vpack.c.b16 %v5439, %v5435
    %v5480 = vpack.c.b16 %v5440, %v5436
    %v5481 = vpack.c.b16 %v5441, %v5437
    %v5482 = vpack.c.b16 %v5446, %v5442
    %v5483 = vpack.c.b16 %v5447, %v5443
    %v5484 = vpack.c.b16 %v5448, %v5444
    %v5485 = vpack.c.b16 %v5449, %v5445
    %v5486 = vpack.c.b16 %v5454, %v5450
    %v5487 = vpack.c.b16 %v5455, %v5451
    %v5488 = vpack.c.b16 %v5456, %v5452
    %v5489 = vpack.c.b16 %v5457, %v5453
    %5522 = vmatpush.bf16.msra.mxu0 %v5486
    %5523 = vmatpush.bf16.msra.mxu0 %v5482
    %5524 = vmatpush.bf16.msra.mxu0 %v5478
    %5525 = vmatpush.bf16.msra.mxu0 %v5474
    %5526 = vmatpush.bf16.msra.mxu0 %v5470
    %5527 = vmatpush.bf16.msra.mxu0 %v5466
    %5528 = vmatpush.bf16.msra.mxu0 %v5462
    %5529 = vmatpush.bf16.msra.mxu0 %v5458
    %5530 = vmatmul.bf16.gmra.mxu0 %v5360
    %v5531 = vpop.f32.mrf.mxu0
    %v5532 = vadd.f32 0.0, %v5531
    %v5533 = vpop.f32.mrf.mxu0
    %5534 = vdwg.mxu0
    %5535 = vmatpush.bf16.msra.mxu0 %v5487
    %5536 = vmatpush.bf16.msra.mxu0 %v5483
    %5537 = vmatpush.bf16.msra.mxu0 %v5479
    %5538 = vmatpush.bf16.msra.mxu0 %v5475
    %5539 = vmatpush.bf16.msra.mxu0 %v5471
    %5540 = vmatpush.bf16.msra.mxu0 %v5467
    %5541 = vmatpush.bf16.msra.mxu0 %v5463
    %5542 = vmatpush.bf16.msra.mxu0 %v5459
    %5543 = vmatmul.bf16.gmra.mxu0 %v5360
    %v5544 = vpop.f32.mrf.mxu0
    %v5545 = vadd.f32 0.0, %v5544
    %v5546 = vpop.f32.mrf.mxu0
    %5547 = vdwg.mxu0
    %5548 = vmatpush.bf16.msra.mxu0 %v5488
    %5549 = vmatpush.bf16.msra.mxu0 %v5484
    %5550 = vmatpush.bf16.msra.mxu0 %v5480
    %5551 = vmatpush.bf16.msra.mxu0 %v5476
    %5552 = vmatpush.bf16.msra.mxu0 %v5472
    %5553 = vmatpush.bf16.msra.mxu0 %v5468
    %5554 = vmatpush.bf16.msra.mxu0 %v5464
    %5555 = vmatpush.bf16.msra.mxu0 %v5460
    %5556 = vmatmul.bf16.gmra.mxu0 %v5360
    %v5557 = vpop.f32.mrf.mxu0
    %v5558 = vadd.f32 0.0, %v5557
    %v5559 = vpop.f32.mrf.mxu0
    %5560 = vdwg.mxu0
    %5561 = vmatpush.bf16.msra.mxu0 %v5489
    %5562 = vmatpush.bf16.msra.mxu0 %v5485
    %5563 = vmatpush.bf16.msra.mxu0 %v5481
    %5564 = vmatpush.bf16.msra.mxu0 %v5477
    %5565 = vmatpush.bf16.msra.mxu0 %v5473
    %5566 = vmatpush.bf16.msra.mxu0 %v5469
    %5567 = vmatpush.bf16.msra.mxu0 %v5465
    %5568 = vmatpush.bf16.msra.mxu0 %v5461
    %5569 = vmatmul.bf16.gmra.mxu0 %v5360
    %v5570 = vpop.f32.mrf.mxu0
    %v5571 = vadd.f32 0.0, %v5570
    %v5572 = vpop.f32.mrf.mxu0
    %5573 = vdwg.mxu0
    %v5574 = vadd.f32 %v374, %v5532
    %v5575 = vadd.f32 %v388, %v5545
    %v5576 = vadd.f32 %v402, %v5558
    %v5577 = vadd.f32 %v416, %v5571
    %v5578 = vxor.u32 %v5574, 2147483648
    %v5579 = vmul.f32 %v5578, 1.442695
    %v5580 = vpow.pop %v5579
    %v5581 = vadd.f32 %v5580, 1.0
    %v5582 = vrcp.pop %v5581
    %v5583 = vmul.f32 %v5581, %v5582
    %v5584 = vsub.f32 1.0, %v5583
    %v5585 = vmul.f32 %v5582, %v5584
    %v5586 = vadd.f32 %v5582, %v5585
    %vm5587 = vweird.f32 %v5581
    %vm5588 = vweird.f32 %v5582
    %vm5589 = vmor %vm5587, %vm5588
    %v5590 = vsel %vm5589, %v5582, %v5586
    %v5591 = vand.u32 2147483647, %v5581
    %vm5592 = vcmp.eq.f32.partialorder %v5591, 8.507059e+37
    %v5593 = vand.u32 %v5581, 2147483648
    %v5594 = vor.u32 1.1754944e-38, %v5593
    %v5595 = vsel %vm5592, %v5594, %v5590
    %v5596 = vmul.f32 1.0, %v5595
    %v5597 = vxor.u32 %v5575, 2147483648
    %v5598 = vmul.f32 %v5597, 1.442695
    %v5599 = vpow.pop %v5598
    %v5600 = vadd.f32 %v5599, 1.0
    %v5601 = vrcp.pop %v5600
    %v5602 = vmul.f32 %v5600, %v5601
    %v5603 = vsub.f32 1.0, %v5602
    %v5604 = vmul.f32 %v5601, %v5603
    %v5605 = vadd.f32 %v5601, %v5604
    %vm5606 = vweird.f32 %v5600
    %vm5607 = vweird.f32 %v5601
    %vm5608 = vmor %vm5606, %vm5607
    %v5609 = vsel %vm5608, %v5601, %v5605
    %v5610 = vand.u32 2147483647, %v5600
    %vm5611 = vcmp.eq.f32.partialorder %v5610, 8.507059e+37
    %v5612 = vand.u32 %v5600, 2147483648
    %v5613 = vor.u32 1.1754944e-38, %v5612
    %v5614 = vsel %vm5611, %v5613, %v5609
    %v5615 = vmul.f32 1.0, %v5614
    %v5616 = vtanh.pop %v5576
    %v5617 = vxor.u32 %v5577, 2147483648
    %v5618 = vmul.f32 %v5617, 1.442695
    %v5619 = vpow.pop %v5618
    %v5620 = vadd.f32 %v5619, 1.0
    %v5621 = vrcp.pop %v5620
    %v5622 = vmul.f32 %v5620, %v5621
    %v5623 = vsub.f32 1.0, %v5622
    %v5624 = vmul.f32 %v5621, %v5623
    %v5625 = vadd.f32 %v5621, %v5624
    %vm5626 = vweird.f32 %v5620
    %vm5627 = vweird.f32 %v5621
    %vm5628 = vmor %vm5626, %vm5627
    %v5629 = vsel %vm5628, %v5621, %v5625
    %v5630 = vand.u32 2147483647, %v5620
    %vm5631 = vcmp.eq.f32.partialorder %v5630, 8.507059e+37
    %v5632 = vand.u32 %v5620, 2147483648
    %v5633 = vor.u32 1.1754944e-38, %v5632
    %v5634 = vsel %vm5631, %v5633, %v5629
    %v5635 = vmul.f32 1.0, %v5634
    %v5637 = vrot.slane %v5322, 2
    %v5639 = vmul.f32 %v5615, %v5637
    %v5640 = vmul.f32 %v5596, %v5616
    %v5641 = vadd.f32 %v5639, %v5640
    %v5642 = vtanh.pop %v5641
    %v5643 = vmul.f32 %v5635, %v5642
    %5644 = vst [vmem:[#allocation2 + $0x8] sm:$0x3] %v5643
    %v5645 = vld [vmem:[#allocation2] sm:$0xff]
    %v5646 = vld [vmem:[#allocation2 + $0x8] sm:$0xff]
    %v5647 = vld [vmem:[#allocation2 + $0x10] sm:$0xff]
    %v5648 = vld [vmem:[#allocation2 + $0x18] sm:$0xff]
    %v5649 = vpack.c.bf16 %v5646, %v5645
    %v5650 = vpack.c.bf16 %v5648, %v5647
    %v5651 = vld [vmem:[#allocation7] sm:$0xff]
    %v5652 = vld [vmem:[#allocation7 + $0x8] sm:$0xff]
    %v5653 = vld [vmem:[#allocation7 + $0x10] sm:$0xff]
    %v5654 = vld [vmem:[#allocation7 + $0x18] sm:$0xff]
    %v5655 = vld [vmem:[#allocation7 + $0x20] sm:$0xff]
    %v5656 = vld [vmem:[#allocation7 + $0x28] sm:$0xff]
    %v5657 = vld [vmem:[#allocation7 + $0x30] sm:$0xff]
    %v5658 = vld [vmem:[#allocation7 + $0x38] sm:$0xff]
    %v5659 = vld [vmem:[#allocation7 + $0x40] sm:$0xff]
    %v5660 = vld [vmem:[#allocation7 + $0x48] sm:$0xff]
    %v5661 = vld [vmem:[#allocation7 + $0x50] sm:$0xff]
    %v5662 = vld [vmem:[#allocation7 + $0x58] sm:$0xff]
    %v5663 = vld [vmem:[#allocation7 + $0x60] sm:$0xff]
    %v5664 = vld [vmem:[#allocation7 + $0x68] sm:$0xff]
    %v5665 = vld [vmem:[#allocation7 + $0x70] sm:$0xff]
    %v5666 = vld [vmem:[#allocation7 + $0x78] sm:$0xff]
    %v5667 = vld [vmem:[#allocation7 + $0x80] sm:$0xff]
    %v5668 = vld [vmem:[#allocation7 + $0x88] sm:$0xff]
    %v5669 = vld [vmem:[#allocation7 + $0x90] sm:$0xff]
    %v5670 = vld [vmem:[#allocation7 + $0x98] sm:$0xff]
    %v5671 = vld [vmem:[#allocation7 + $0xa0] sm:$0xff]
    %v5672 = vld [vmem:[#allocation7 + $0xa8] sm:$0xff]
    %v5673 = vld [vmem:[#allocation7 + $0xb0] sm:$0xff]
    %v5674 = vld [vmem:[#allocation7 + $0xb8] sm:$0xff]
    %v5675 = vld [vmem:[#allocation7 + $0xc0] sm:$0xff]
    %v5676 = vld [vmem:[#allocation7 + $0xc8] sm:$0xff]
    %v5677 = vld [vmem:[#allocation7 + $0xd0] sm:$0xff]
    %v5678 = vld [vmem:[#allocation7 + $0xd8] sm:$0xff]
    %v5679 = vld [vmem:[#allocation7 + $0xe0] sm:$0xff]
    %v5680 = vld [vmem:[#allocation7 + $0xe8] sm:$0xff]
    %v5681 = vld [vmem:[#allocation7 + $0xf0] sm:$0xff]
    %v5682 = vld [vmem:[#allocation7 + $0xf8] sm:$0xff]
    %v5683 = vld [vmem:[#allocation7 + $0x100] sm:$0xff]
    %v5684 = vld [vmem:[#allocation7 + $0x108] sm:$0xff]
    %v5685 = vld [vmem:[#allocation7 + $0x110] sm:$0xff]
    %v5686 = vld [vmem:[#allocation7 + $0x118] sm:$0xff]
    %v5687 = vld [vmem:[#allocation7 + $0x120] sm:$0xff]
    %v5688 = vld [vmem:[#allocation7 + $0x128] sm:$0xff]
    %v5689 = vld [vmem:[#allocation7 + $0x130] sm:$0xff]
    %v5690 = vld [vmem:[#allocation7 + $0x138] sm:$0xff]
    %v5691 = vld [vmem:[#allocation7 + $0x140] sm:$0xff]
    %v5692 = vld [vmem:[#allocation7 + $0x148] sm:$0xff]
    %v5693 = vld [vmem:[#allocation7 + $0x150] sm:$0xff]
    %v5694 = vld [vmem:[#allocation7 + $0x158] sm:$0xff]
    %v5695 = vld [vmem:[#allocation7 + $0x160] sm:$0xff]
    %v5696 = vld [vmem:[#allocation7 + $0x168] sm:$0xff]
    %v5697 = vld [vmem:[#allocation7 + $0x170] sm:$0xff]
    %v5698 = vld [vmem:[#allocation7 + $0x178] sm:$0xff]
    %v5699 = vld [vmem:[#allocation7 + $0x180] sm:$0xff]
    %v5700 = vld [vmem:[#allocation7 + $0x188] sm:$0xff]
    %v5701 = vld [vmem:[#allocation7 + $0x190] sm:$0xff]
    %v5702 = vld [vmem:[#allocation7 + $0x198] sm:$0xff]
    %v5703 = vld [vmem:[#allocation7 + $0x1a0] sm:$0xff]
    %v5704 = vld [vmem:[#allocation7 + $0x1a8] sm:$0xff]
    %v5705 = vld [vmem:[#allocation7 + $0x1b0] sm:$0xff]
    %v5706 = vld [vmem:[#allocation7 + $0x1b8] sm:$0xff]
    %v5707 = vld [vmem:[#allocation7 + $0x1c0] sm:$0xff]
    %v5708 = vld [vmem:[#allocation7 + $0x1c8] sm:$0xff]
    %v5709 = vld [vmem:[#allocation7 + $0x1d0] sm:$0xff]
    %v5710 = vld [vmem:[#allocation7 + $0x1d8] sm:$0xff]
    %v5711 = vld [vmem:[#allocation7 + $0x1e0] sm:$0xff]
    %v5712 = vld [vmem:[#allocation7 + $0x1e8] sm:$0xff]
    %v5713 = vld [vmem:[#allocation7 + $0x1f0] sm:$0xff]
    %v5714 = vld [vmem:[#allocation7 + $0x1f8] sm:$0xff]
    %v5715 = vld [vmem:[%s9] sm:$0xf]
    %v5717 = vperm.slane %v5715, 0
    %v5718 = vperm.slane %v5715, 1
    %v5719 = vperm.slane %v5715, 2
    %v5720 = vperm.slane %v5715, 3
    %v5727 = vunpack.c.l.b16 %v5649
    %v5728 = vunpack.c.h.b16 %v5649
    %v5729 = vunpack.c.l.b16 %v5650
    %v5730 = vunpack.c.h.b16 %v5650
    %v5731 = vpack.c.b16 %v5729, %v5727
    %v5732 = vpack.c.b16 %v5730, %v5728
    %v5799 = vunpack.c.l.b16 %v5651
    %v5800 = vunpack.c.h.b16 %v5651
    %v5801 = vunpack.c.l.b16 %v5652
    %v5802 = vunpack.c.h.b16 %v5652
    %v5803 = vunpack.c.l.b16 %v5653
    %v5804 = vunpack.c.h.b16 %v5653
    %v5805 = vunpack.c.l.b16 %v5654
    %v5806 = vunpack.c.h.b16 %v5654
    %v5807 = vunpack.c.l.b16 %v5655
    %v5808 = vunpack.c.h.b16 %v5655
    %v5809 = vunpack.c.l.b16 %v5656
    %v5810 = vunpack.c.h.b16 %v5656
    %v5811 = vunpack.c.l.b16 %v5657
    %v5812 = vunpack.c.h.b16 %v5657
    %v5813 = vunpack.c.l.b16 %v5658
    %v5814 = vunpack.c.h.b16 %v5658
    %v5815 = vunpack.c.l.b16 %v5659
    %v5816 = vunpack.c.h.b16 %v5659
    %v5817 = vunpack.c.l.b16 %v5660
    %v5818 = vunpack.c.h.b16 %v5660
    %v5819 = vunpack.c.l.b16 %v5661
    %v5820 = vunpack.c.h.b16 %v5661
    %v5821 = vunpack.c.l.b16 %v5662
    %v5822 = vunpack.c.h.b16 %v5662
    %v5823 = vunpack.c.l.b16 %v5663
    %v5824 = vunpack.c.h.b16 %v5663
    %v5825 = vunpack.c.l.b16 %v5664
    %v5826 = vunpack.c.h.b16 %v5664
    %v5827 = vunpack.c.l.b16 %v5665
    %v5828 = vunpack.c.h.b16 %v5665
    %v5829 = vunpack.c.l.b16 %v5666
    %v5830 = vunpack.c.h.b16 %v5666
    %v5831 = vunpack.c.l.b16 %v5667
    %v5832 = vunpack.c.h.b16 %v5667
    %v5833 = vunpack.c.l.b16 %v5668
    %v5834 = vunpack.c.h.b16 %v5668
    %v5835 = vunpack.c.l.b16 %v5669
    %v5836 = vunpack.c.h.b16 %v5669
    %v5837 = vunpack.c.l.b16 %v5670
    %v5838 = vunpack.c.h.b16 %v5670
    %v5839 = vunpack.c.l.b16 %v5671
    %v5840 = vunpack.c.h.b16 %v5671
    %v5841 = vunpack.c.l.b16 %v5672
    %v5842 = vunpack.c.h.b16 %v5672
    %v5843 = vunpack.c.l.b16 %v5673
    %v5844 = vunpack.c.h.b16 %v5673
    %v5845 = vunpack.c.l.b16 %v5674
    %v5846 = vunpack.c.h.b16 %v5674
    %v5847 = vunpack.c.l.b16 %v5675
    %v5848 = vunpack.c.h.b16 %v5675
    %v5849 = vunpack.c.l.b16 %v5676
    %v5850 = vunpack.c.h.b16 %v5676
    %v5851 = vunpack.c.l.b16 %v5677
    %v5852 = vunpack.c.h.b16 %v5677
    %v5853 = vunpack.c.l.b16 %v5678
    %v5854 = vunpack.c.h.b16 %v5678
    %v5855 = vunpack.c.l.b16 %v5679
    %v5856 = vunpack.c.h.b16 %v5679
    %v5857 = vunpack.c.l.b16 %v5680
    %v5858 = vunpack.c.h.b16 %v5680
    %v5859 = vunpack.c.l.b16 %v5681
    %v5860 = vunpack.c.h.b16 %v5681
    %v5861 = vunpack.c.l.b16 %v5682
    %v5862 = vunpack.c.h.b16 %v5682
    %v5863 = vunpack.c.l.b16 %v5683
    %v5864 = vunpack.c.h.b16 %v5683
    %v5865 = vunpack.c.l.b16 %v5684
    %v5866 = vunpack.c.h.b16 %v5684
    %v5867 = vunpack.c.l.b16 %v5685
    %v5868 = vunpack.c.h.b16 %v5685
    %v5869 = vunpack.c.l.b16 %v5686
    %v5870 = vunpack.c.h.b16 %v5686
    %v5871 = vunpack.c.l.b16 %v5687
    %v5872 = vunpack.c.h.b16 %v5687
    %v5873 = vunpack.c.l.b16 %v5688
    %v5874 = vunpack.c.h.b16 %v5688
    %v5875 = vunpack.c.l.b16 %v5689
    %v5876 = vunpack.c.h.b16 %v5689
    %v5877 = vunpack.c.l.b16 %v5690
    %v5878 = vunpack.c.h.b16 %v5690
    %v5879 = vunpack.c.l.b16 %v5691
    %v5880 = vunpack.c.h.b16 %v5691
    %v5881 = vunpack.c.l.b16 %v5692
    %v5882 = vunpack.c.h.b16 %v5692
    %v5883 = vunpack.c.l.b16 %v5693
    %v5884 = vunpack.c.h.b16 %v5693
    %v5885 = vunpack.c.l.b16 %v5694
    %v5886 = vunpack.c.h.b16 %v5694
    %v5887 = vunpack.c.l.b16 %v5695
    %v5888 = vunpack.c.h.b16 %v5695
    %v5889 = vunpack.c.l.b16 %v5696
    %v5890 = vunpack.c.h.b16 %v5696
    %v5891 = vunpack.c.l.b16 %v5697
    %v5892 = vunpack.c.h.b16 %v5697
    %v5893 = vunpack.c.l.b16 %v5698
    %v5894 = vunpack.c.h.b16 %v5698
    %v5895 = vunpack.c.l.b16 %v5699
    %v5896 = vunpack.c.h.b16 %v5699
    %v5897 = vunpack.c.l.b16 %v5700
    %v5898 = vunpack.c.h.b16 %v5700
    %v5899 = vunpack.c.l.b16 %v5701
    %v5900 = vunpack.c.h.b16 %v5701
    %v5901 = vunpack.c.l.b16 %v5702
    %v5902 = vunpack.c.h.b16 %v5702
    %v5903 = vunpack.c.l.b16 %v5703
    %v5904 = vunpack.c.h.b16 %v5703
    %v5905 = vunpack.c.l.b16 %v5704
    %v5906 = vunpack.c.h.b16 %v5704
    %v5907 = vunpack.c.l.b16 %v5705
    %v5908 = vunpack.c.h.b16 %v5705
    %v5909 = vunpack.c.l.b16 %v5706
    %v5910 = vunpack.c.h.b16 %v5706
    %v5911 = vunpack.c.l.b16 %v5707
    %v5912 = vunpack.c.h.b16 %v5707
    %v5913 = vunpack.c.l.b16 %v5708
    %v5914 = vunpack.c.h.b16 %v5708
    %v5915 = vunpack.c.l.b16 %v5709
    %v5916 = vunpack.c.h.b16 %v5709
    %v5917 = vunpack.c.l.b16 %v5710
    %v5918 = vunpack.c.h.b16 %v5710
    %v5919 = vunpack.c.l.b16 %v5711
    %v5920 = vunpack.c.h.b16 %v5711
    %v5921 = vunpack.c.l.b16 %v5712
    %v5922 = vunpack.c.h.b16 %v5712
    %v5923 = vunpack.c.l.b16 %v5713
    %v5924 = vunpack.c.h.b16 %v5713
    %v5925 = vunpack.c.l.b16 %v5714
    %v5926 = vunpack.c.h.b16 %v5714
    %v5927 = vpack.c.b16 %v5803, %v5799
    %v5928 = vpack.c.b16 %v5804, %v5800
    %v5929 = vpack.c.b16 %v5805, %v5801
    %v5930 = vpack.c.b16 %v5806, %v5802
    %v5931 = vpack.c.b16 %v5811, %v5807
    %v5932 = vpack.c.b16 %v5812, %v5808
    %v5933 = vpack.c.b16 %v5813, %v5809
    %v5934 = vpack.c.b16 %v5814, %v5810
    %v5935 = vpack.c.b16 %v5819, %v5815
    %v5936 = vpack.c.b16 %v5820, %v5816
    %v5937 = vpack.c.b16 %v5821, %v5817
    %v5938 = vpack.c.b16 %v5822, %v5818
    %v5939 = vpack.c.b16 %v5827, %v5823
    %v5940 = vpack.c.b16 %v5828, %v5824
    %v5941 = vpack.c.b16 %v5829, %v5825
    %v5942 = vpack.c.b16 %v5830, %v5826
    %v5943 = vpack.c.b16 %v5835, %v5831
    %v5944 = vpack.c.b16 %v5836, %v5832
    %v5945 = vpack.c.b16 %v5837, %v5833
    %v5946 = vpack.c.b16 %v5838, %v5834
    %v5947 = vpack.c.b16 %v5843, %v5839
    %v5948 = vpack.c.b16 %v5844, %v5840
    %v5949 = vpack.c.b16 %v5845, %v5841
    %v5950 = vpack.c.b16 %v5846, %v5842
    %v5951 = vpack.c.b16 %v5851, %v5847
    %v5952 = vpack.c.b16 %v5852, %v5848
    %v5953 = vpack.c.b16 %v5853, %v5849
    %v5954 = vpack.c.b16 %v5854, %v5850
    %v5955 = vpack.c.b16 %v5859, %v5855
    %v5956 = vpack.c.b16 %v5860, %v5856
    %v5957 = vpack.c.b16 %v5861, %v5857
    %v5958 = vpack.c.b16 %v5862, %v5858
    %v5959 = vpack.c.b16 %v5867, %v5863
    %v5960 = vpack.c.b16 %v5868, %v5864
    %v5961 = vpack.c.b16 %v5869, %v5865
    %v5962 = vpack.c.b16 %v5870, %v5866
    %v5963 = vpack.c.b16 %v5875, %v5871
    %v5964 = vpack.c.b16 %v5876, %v5872
    %v5965 = vpack.c.b16 %v5877, %v5873
    %v5966 = vpack.c.b16 %v5878, %v5874
    %v5967 = vpack.c.b16 %v5883, %v5879
    %v5968 = vpack.c.b16 %v5884, %v5880
    %v5969 = vpack.c.b16 %v5885, %v5881
    %v5970 = vpack.c.b16 %v5886, %v5882
    %v5971 = vpack.c.b16 %v5891, %v5887
    %v5972 = vpack.c.b16 %v5892, %v5888
    %v5973 = vpack.c.b16 %v5893, %v5889
    %v5974 = vpack.c.b16 %v5894, %v5890
    %v5975 = vpack.c.b16 %v5899, %v5895
    %v5976 = vpack.c.b16 %v5900, %v5896
    %v5977 = vpack.c.b16 %v5901, %v5897
    %v5978 = vpack.c.b16 %v5902, %v5898
    %v5979 = vpack.c.b16 %v5907, %v5903
    %v5980 = vpack.c.b16 %v5908, %v5904
    %v5981 = vpack.c.b16 %v5909, %v5905
    %v5982 = vpack.c.b16 %v5910, %v5906
    %v5983 = vpack.c.b16 %v5915, %v5911
    %v5984 = vpack.c.b16 %v5916, %v5912
    %v5985 = vpack.c.b16 %v5917, %v5913
    %v5986 = vpack.c.b16 %v5918, %v5914
    %v5987 = vpack.c.b16 %v5923, %v5919
    %v5988 = vpack.c.b16 %v5924, %v5920
    %v5989 = vpack.c.b16 %v5925, %v5921
    %v5990 = vpack.c.b16 %v5926, %v5922
    %6055 = vmatpush.bf16.msra.mxu0 %v5955
    %6056 = vmatpush.bf16.msra.mxu0 %v5951
    %6057 = vmatpush.bf16.msra.mxu0 %v5947
    %6058 = vmatpush.bf16.msra.mxu0 %v5943
    %6059 = vmatpush.bf16.msra.mxu0 %v5939
    %6060 = vmatpush.bf16.msra.mxu0 %v5935
    %6061 = vmatpush.bf16.msra.mxu0 %v5931
    %6062 = vmatpush.bf16.msra.mxu0 %v5927
    %6063 = vmatmul.bf16.gmra.mxu0 %v5731
    %v6064 = vpop.f32.mrf.mxu0
    %v6065 = vadd.f32 %v5717, %v6064
    %v6066 = vpop.f32.mrf.mxu0
    %v6067 = vadd.f32 %v5717, %v6066
    %6068 = vdwg.mxu0
    %6069 = vmatpush.bf16.msra.mxu0 %v5987
    %6070 = vmatpush.bf16.msra.mxu0 %v5983
    %6071 = vmatpush.bf16.msra.mxu0 %v5979
    %6072 = vmatpush.bf16.msra.mxu0 %v5975
    %6073 = vmatpush.bf16.msra.mxu0 %v5971
    %6074 = vmatpush.bf16.msra.mxu0 %v5967
    %6075 = vmatpush.bf16.msra.mxu0 %v5963
    %6076 = vmatpush.bf16.msra.mxu0 %v5959
    %6077 = vmatmul.bf16.gmra.mxu0 %v5732
    %v6078 = vpop.f32.mrf.mxu0
    %v6079 = vadd.f32 %v6065, %v6078
    %v6080 = vpop.f32.mrf.mxu0
    %v6081 = vadd.f32 %v6067, %v6080
    %6082 = vdwg.mxu0
    %6083 = vmatpush.bf16.msra.mxu0 %v5956
    %6084 = vmatpush.bf16.msra.mxu0 %v5952
    %6085 = vmatpush.bf16.msra.mxu0 %v5948
    %6086 = vmatpush.bf16.msra.mxu0 %v5944
    %6087 = vmatpush.bf16.msra.mxu0 %v5940
    %6088 = vmatpush.bf16.msra.mxu0 %v5936
    %6089 = vmatpush.bf16.msra.mxu0 %v5932
    %6090 = vmatpush.bf16.msra.mxu0 %v5928
    %6091 = vmatmul.bf16.gmra.mxu0 %v5731
    %v6092 = vpop.f32.mrf.mxu0
    %v6093 = vadd.f32 %v5718, %v6092
    %v6094 = vpop.f32.mrf.mxu0
    %v6095 = vadd.f32 %v5718, %v6094
    %6096 = vdwg.mxu0
    %6097 = vmatpush.bf16.msra.mxu0 %v5988
    %6098 = vmatpush.bf16.msra.mxu0 %v5984
    %6099 = vmatpush.bf16.msra.mxu0 %v5980
    %6100 = vmatpush.bf16.msra.mxu0 %v5976
    %6101 = vmatpush.bf16.msra.mxu0 %v5972
    %6102 = vmatpush.bf16.msra.mxu0 %v5968
    %6103 = vmatpush.bf16.msra.mxu0 %v5964
    %6104 = vmatpush.bf16.msra.mxu0 %v5960
    %6105 = vmatmul.bf16.gmra.mxu0 %v5732
    %v6106 = vpop.f32.mrf.mxu0
    %v6107 = vadd.f32 %v6093, %v6106
    %v6108 = vpop.f32.mrf.mxu0
    %v6109 = vadd.f32 %v6095, %v6108
    %6110 = vdwg.mxu0
    %6111 = vmatpush.bf16.msra.mxu0 %v5957
    %6112 = vmatpush.bf16.msra.mxu0 %v5953
    %6113 = vmatpush.bf16.msra.mxu0 %v5949
    %6114 = vmatpush.bf16.msra.mxu0 %v5945
    %6115 = vmatpush.bf16.msra.mxu0 %v5941
    %6116 = vmatpush.bf16.msra.mxu0 %v5937
    %6117 = vmatpush.bf16.msra.mxu0 %v5933
    %6118 = vmatpush.bf16.msra.mxu0 %v5929
    %6119 = vmatmul.bf16.gmra.mxu0 %v5731
    %v6120 = vpop.f32.mrf.mxu0
    %v6121 = vadd.f32 %v5719, %v6120
    %v6122 = vpop.f32.mrf.mxu0
    %v6123 = vadd.f32 %v5719, %v6122
    %6124 = vdwg.mxu0
    %6125 = vmatpush.bf16.msra.mxu0 %v5989
    %6126 = vmatpush.bf16.msra.mxu0 %v5985
    %6127 = vmatpush.bf16.msra.mxu0 %v5981
    %6128 = vmatpush.bf16.msra.mxu0 %v5977
    %6129 = vmatpush.bf16.msra.mxu0 %v5973
    %6130 = vmatpush.bf16.msra.mxu0 %v5969
    %6131 = vmatpush.bf16.msra.mxu0 %v5965
    %6132 = vmatpush.bf16.msra.mxu0 %v5961
    %6133 = vmatmul.bf16.gmra.mxu0 %v5732
    %v6134 = vpop.f32.mrf.mxu0
    %v6135 = vadd.f32 %v6121, %v6134
    %v6136 = vpop.f32.mrf.mxu0
    %v6137 = vadd.f32 %v6123, %v6136
    %6138 = vdwg.mxu0
    %6139 = vmatpush.bf16.msra.mxu0 %v5958
    %6140 = vmatpush.bf16.msra.mxu0 %v5954
    %6141 = vmatpush.bf16.msra.mxu0 %v5950
    %6142 = vmatpush.bf16.msra.mxu0 %v5946
    %6143 = vmatpush.bf16.msra.mxu0 %v5942
    %6144 = vmatpush.bf16.msra.mxu0 %v5938
    %6145 = vmatpush.bf16.msra.mxu0 %v5934
    %6146 = vmatpush.bf16.msra.mxu0 %v5930
    %6147 = vmatmul.bf16.gmra.mxu0 %v5731
    %v6148 = vpop.f32.mrf.mxu0
    %v6149 = vadd.f32 %v5720, %v6148
    %v6150 = vpop.f32.mrf.mxu0
    %v6151 = vadd.f32 %v5720, %v6150
    %6152 = vdwg.mxu0
    %6153 = vmatpush.bf16.msra.mxu0 %v5990
    %6154 = vmatpush.bf16.msra.mxu0 %v5986
    %6155 = vmatpush.bf16.msra.mxu0 %v5982
    %6156 = vmatpush.bf16.msra.mxu0 %v5978
    %6157 = vmatpush.bf16.msra.mxu0 %v5974
    %6158 = vmatpush.bf16.msra.mxu0 %v5970
    %6159 = vmatpush.bf16.msra.mxu0 %v5966
    %6160 = vmatpush.bf16.msra.mxu0 %v5962
    %6161 = vmatmul.bf16.gmra.mxu0 %v5732
    %v6162 = vpop.f32.mrf.mxu0
    %v6163 = vadd.f32 %v6149, %v6162
    %v6164 = vpop.f32.mrf.mxu0
    %v6165 = vadd.f32 %v6151, %v6164
    %6166 = vdwg.mxu0
    %v6167 = vld [vmem:[#allocation8] sm:$0xff]
    %v6168 = vld [vmem:[#allocation8 + $0x8] sm:$0xff]
    %v6169 = vld [vmem:[#allocation8 + $0x10] sm:$0xff]
    %v6170 = vld [vmem:[#allocation8 + $0x18] sm:$0xff]
    %v6171 = vld [vmem:[#allocation8 + $0x20] sm:$0xff]
    %v6172 = vld [vmem:[#allocation8 + $0x28] sm:$0xff]
    %v6173 = vld [vmem:[#allocation8 + $0x30] sm:$0xff]
    %v6174 = vld [vmem:[#allocation8 + $0x38] sm:$0xff]
    %v6175 = vld [vmem:[#allocation8 + $0x40] sm:$0xff]
    %v6176 = vld [vmem:[#allocation8 + $0x48] sm:$0xff]
    %v6177 = vld [vmem:[#allocation8 + $0x50] sm:$0xff]
    %v6178 = vld [vmem:[#allocation8 + $0x58] sm:$0xff]
    %v6179 = vld [vmem:[#allocation8 + $0x60] sm:$0xff]
    %v6180 = vld [vmem:[#allocation8 + $0x68] sm:$0xff]
    %v6181 = vld [vmem:[#allocation8 + $0x70] sm:$0xff]
    %v6182 = vld [vmem:[#allocation8 + $0x78] sm:$0xff]
    %v6183 = vld [vmem:[#allocation8 + $0x80] sm:$0xff]
    %v6184 = vld [vmem:[#allocation8 + $0x88] sm:$0xff]
    %v6185 = vld [vmem:[#allocation8 + $0x90] sm:$0xff]
    %v6186 = vld [vmem:[#allocation8 + $0x98] sm:$0xff]
    %v6187 = vld [vmem:[#allocation8 + $0xa0] sm:$0xff]
    %v6188 = vld [vmem:[#allocation8 + $0xa8] sm:$0xff]
    %v6189 = vld [vmem:[#allocation8 + $0xb0] sm:$0xff]
    %v6190 = vld [vmem:[#allocation8 + $0xb8] sm:$0xff]
    %v6191 = vld [vmem:[#allocation8 + $0xc0] sm:$0xff]
    %v6192 = vld [vmem:[#allocation8 + $0xc8] sm:$0xff]
    %v6193 = vld [vmem:[#allocation8 + $0xd0] sm:$0xff]
    %v6194 = vld [vmem:[#allocation8 + $0xd8] sm:$0xff]
    %v6195 = vld [vmem:[#allocation8 + $0xe0] sm:$0xff]
    %v6196 = vld [vmem:[#allocation8 + $0xe8] sm:$0xff]
    %v6197 = vld [vmem:[#allocation8 + $0xf0] sm:$0xff]
    %v6198 = vld [vmem:[#allocation8 + $0xf8] sm:$0xff]
    %v6231 = vunpack.c.l.b16 %v6167
    %v6232 = vunpack.c.h.b16 %v6167
    %v6233 = vunpack.c.l.b16 %v6168
    %v6234 = vunpack.c.h.b16 %v6168
    %v6235 = vunpack.c.l.b16 %v6169
    %v6236 = vunpack.c.h.b16 %v6169
    %v6237 = vunpack.c.l.b16 %v6170
    %v6238 = vunpack.c.h.b16 %v6170
    %v6239 = vunpack.c.l.b16 %v6171
    %v6240 = vunpack.c.h.b16 %v6171
    %v6241 = vunpack.c.l.b16 %v6172
    %v6242 = vunpack.c.h.b16 %v6172
    %v6243 = vunpack.c.l.b16 %v6173
    %v6244 = vunpack.c.h.b16 %v6173
    %v6245 = vunpack.c.l.b16 %v6174
    %v6246 = vunpack.c.h.b16 %v6174
    %v6247 = vunpack.c.l.b16 %v6175
    %v6248 = vunpack.c.h.b16 %v6175
    %v6249 = vunpack.c.l.b16 %v6176
    %v6250 = vunpack.c.h.b16 %v6176
    %v6251 = vunpack.c.l.b16 %v6177
    %v6252 = vunpack.c.h.b16 %v6177
    %v6253 = vunpack.c.l.b16 %v6178
    %v6254 = vunpack.c.h.b16 %v6178
    %v6255 = vunpack.c.l.b16 %v6179
    %v6256 = vunpack.c.h.b16 %v6179
    %v6257 = vunpack.c.l.b16 %v6180
    %v6258 = vunpack.c.h.b16 %v6180
    %v6259 = vunpack.c.l.b16 %v6181
    %v6260 = vunpack.c.h.b16 %v6181
    %v6261 = vunpack.c.l.b16 %v6182
    %v6262 = vunpack.c.h.b16 %v6182
    %v6263 = vunpack.c.l.b16 %v6183
    %v6264 = vunpack.c.h.b16 %v6183
    %v6265 = vunpack.c.l.b16 %v6184
    %v6266 = vunpack.c.h.b16 %v6184
    %v6267 = vunpack.c.l.b16 %v6185
    %v6268 = vunpack.c.h.b16 %v6185
    %v6269 = vunpack.c.l.b16 %v6186
    %v6270 = vunpack.c.h.b16 %v6186
    %v6271 = vunpack.c.l.b16 %v6187
    %v6272 = vunpack.c.h.b16 %v6187
    %v6273 = vunpack.c.l.b16 %v6188
    %v6274 = vunpack.c.h.b16 %v6188
    %v6275 = vunpack.c.l.b16 %v6189
    %v6276 = vunpack.c.h.b16 %v6189
    %v6277 = vunpack.c.l.b16 %v6190
    %v6278 = vunpack.c.h.b16 %v6190
    %v6279 = vunpack.c.l.b16 %v6191
    %v6280 = vunpack.c.h.b16 %v6191
    %v6281 = vunpack.c.l.b16 %v6192
    %v6282 = vunpack.c.h.b16 %v6192
    %v6283 = vunpack.c.l.b16 %v6193
    %v6284 = vunpack.c.h.b16 %v6193
    %v6285 = vunpack.c.l.b16 %v6194
    %v6286 = vunpack.c.h.b16 %v6194
    %v6287 = vunpack.c.l.b16 %v6195
    %v6288 = vunpack.c.h.b16 %v6195
    %v6289 = vunpack.c.l.b16 %v6196
    %v6290 = vunpack.c.h.b16 %v6196
    %v6291 = vunpack.c.l.b16 %v6197
    %v6292 = vunpack.c.h.b16 %v6197
    %v6293 = vunpack.c.l.b16 %v6198
    %v6294 = vunpack.c.h.b16 %v6198
    %v6295 = vpack.c.b16 %v6235, %v6231
    %v6296 = vpack.c.b16 %v6236, %v6232
    %v6297 = vpack.c.b16 %v6237, %v6233
    %v6298 = vpack.c.b16 %v6238, %v6234
    %v6299 = vpack.c.b16 %v6243, %v6239
    %v6300 = vpack.c.b16 %v6244, %v6240
    %v6301 = vpack.c.b16 %v6245, %v6241
    %v6302 = vpack.c.b16 %v6246, %v6242
    %v6303 = vpack.c.b16 %v6251, %v6247
    %v6304 = vpack.c.b16 %v6252, %v6248
    %v6305 = vpack.c.b16 %v6253, %v6249
    %v6306 = vpack.c.b16 %v6254, %v6250
    %v6307 = vpack.c.b16 %v6259, %v6255
    %v6308 = vpack.c.b16 %v6260, %v6256
    %v6309 = vpack.c.b16 %v6261, %v6257
    %v6310 = vpack.c.b16 %v6262, %v6258
    %v6311 = vpack.c.b16 %v6267, %v6263
    %v6312 = vpack.c.b16 %v6268, %v6264
    %v6313 = vpack.c.b16 %v6269, %v6265
    %v6314 = vpack.c.b16 %v6270, %v6266
    %v6315 = vpack.c.b16 %v6275, %v6271
    %v6316 = vpack.c.b16 %v6276, %v6272
    %v6317 = vpack.c.b16 %v6277, %v6273
    %v6318 = vpack.c.b16 %v6278, %v6274
    %v6319 = vpack.c.b16 %v6283, %v6279
    %v6320 = vpack.c.b16 %v6284, %v6280
    %v6321 = vpack.c.b16 %v6285, %v6281
    %v6322 = vpack.c.b16 %v6286, %v6282
    %v6323 = vpack.c.b16 %v6291, %v6287
    %v6324 = vpack.c.b16 %v6292, %v6288
    %v6325 = vpack.c.b16 %v6293, %v6289
    %v6326 = vpack.c.b16 %v6294, %v6290
    %6359 = vmatpush.bf16.msra.mxu0 %v6323
    %6360 = vmatpush.bf16.msra.mxu0 %v6319
    %6361 = vmatpush.bf16.msra.mxu0 %v6315
    %6362 = vmatpush.bf16.msra.mxu0 %v6311
    %6363 = vmatpush.bf16.msra.mxu0 %v6307
    %6364 = vmatpush.bf16.msra.mxu0 %v6303
    %6365 = vmatpush.bf16.msra.mxu0 %v6299
    %6366 = vmatpush.bf16.msra.mxu0 %v6295
    %6367 = vmatmul.bf16.gmra.mxu0 0
    %v6368 = vpop.f32.mrf.mxu0
    %v6369 = vadd.f32 0.0, %v6368
    %v6370 = vpop.f32.mrf.mxu0
    %6371 = vdwg.mxu0
    %6372 = vmatpush.bf16.msra.mxu0 %v6324
    %6373 = vmatpush.bf16.msra.mxu0 %v6320
    %6374 = vmatpush.bf16.msra.mxu0 %v6316
    %6375 = vmatpush.bf16.msra.mxu0 %v6312
    %6376 = vmatpush.bf16.msra.mxu0 %v6308
    %6377 = vmatpush.bf16.msra.mxu0 %v6304
    %6378 = vmatpush.bf16.msra.mxu0 %v6300
    %6379 = vmatpush.bf16.msra.mxu0 %v6296
    %6380 = vmatmul.bf16.gmra.mxu0 0
    %v6381 = vpop.f32.mrf.mxu0
    %v6382 = vadd.f32 0.0, %v6381
    %v6383 = vpop.f32.mrf.mxu0
    %6384 = vdwg.mxu0
    %6385 = vmatpush.bf16.msra.mxu0 %v6325
    %6386 = vmatpush.bf16.msra.mxu0 %v6321
    %6387 = vmatpush.bf16.msra.mxu0 %v6317
    %6388 = vmatpush.bf16.msra.mxu0 %v6313
    %6389 = vmatpush.bf16.msra.mxu0 %v6309
    %6390 = vmatpush.bf16.msra.mxu0 %v6305
    %6391 = vmatpush.bf16.msra.mxu0 %v6301
    %6392 = vmatpush.bf16.msra.mxu0 %v6297
    %6393 = vmatmul.bf16.gmra.mxu0 0
    %v6394 = vpop.f32.mrf.mxu0
    %v6395 = vadd.f32 0.0, %v6394
    %v6396 = vpop.f32.mrf.mxu0
    %6397 = vdwg.mxu0
    %6398 = vmatpush.bf16.msra.mxu0 %v6326
    %6399 = vmatpush.bf16.msra.mxu0 %v6322
    %6400 = vmatpush.bf16.msra.mxu0 %v6318
    %6401 = vmatpush.bf16.msra.mxu0 %v6314
    %6402 = vmatpush.bf16.msra.mxu0 %v6310
    %6403 = vmatpush.bf16.msra.mxu0 %v6306
    %6404 = vmatpush.bf16.msra.mxu0 %v6302
    %6405 = vmatpush.bf16.msra.mxu0 %v6298
    %6406 = vmatmul.bf16.gmra.mxu0 0
    %v6407 = vpop.f32.mrf.mxu0
    %v6408 = vadd.f32 0.0, %v6407
    %v6409 = vpop.f32.mrf.mxu0
    %6410 = vdwg.mxu0
    %v6411 = vadd.f32 %v6079, %v6369
    %v6412 = vadd.f32 %v6107, %v6382
    %v6413 = vadd.f32 %v6135, %v6395
    %v6414 = vadd.f32 %v6163, %v6408
    %v6415 = vxor.u32 %v6411, 2147483648
    %v6416 = vmul.f32 %v6415, 1.442695
    %v6417 = vpow.pop %v6416
    %v6418 = vadd.f32 %v6417, 1.0
    %v6419 = vrcp.pop %v6418
    %v6420 = vmul.f32 %v6418, %v6419
    %v6421 = vsub.f32 1.0, %v6420
    %v6422 = vmul.f32 %v6419, %v6421
    %v6423 = vadd.f32 %v6419, %v6422
    %vm6424 = vweird.f32 %v6418
    %vm6425 = vweird.f32 %v6419
    %vm6426 = vmor %vm6424, %vm6425
    %v6427 = vsel %vm6426, %v6419, %v6423
    %v6428 = vand.u32 2147483647, %v6418
    %vm6429 = vcmp.eq.f32.partialorder %v6428, 8.507059e+37
    %v6430 = vand.u32 %v6418, 2147483648
    %v6431 = vor.u32 1.1754944e-38, %v6430
    %v6432 = vsel %vm6429, %v6431, %v6427
    %v6433 = vmul.f32 1.0, %v6432
    %v6434 = vxor.u32 %v6412, 2147483648
    %v6435 = vmul.f32 %v6434, 1.442695
    %v6436 = vpow.pop %v6435
    %v6437 = vadd.f32 %v6436, 1.0
    %v6438 = vrcp.pop %v6437
    %v6439 = vmul.f32 %v6437, %v6438
    %v6440 = vsub.f32 1.0, %v6439
    %v6441 = vmul.f32 %v6438, %v6440
    %v6442 = vadd.f32 %v6438, %v6441
    %vm6443 = vweird.f32 %v6437
    %vm6444 = vweird.f32 %v6438
    %vm6445 = vmor %vm6443, %vm6444
    %v6446 = vsel %vm6445, %v6438, %v6442
    %v6447 = vand.u32 2147483647, %v6437
    %vm6448 = vcmp.eq.f32.partialorder %v6447, 8.507059e+37
    %v6449 = vand.u32 %v6437, 2147483648
    %v6450 = vor.u32 1.1754944e-38, %v6449
    %v6451 = vsel %vm6448, %v6450, %v6446
    %v6452 = vmul.f32 1.0, %v6451
    %v6453 = vtanh.pop %v6413
    %v6454 = vxor.u32 %v6414, 2147483648
    %v6455 = vmul.f32 %v6454, 1.442695
    %v6456 = vpow.pop %v6455
    %v6457 = vadd.f32 %v6456, 1.0
    %v6458 = vrcp.pop %v6457
    %v6459 = vmul.f32 %v6457, %v6458
    %v6460 = vsub.f32 1.0, %v6459
    %v6461 = vmul.f32 %v6458, %v6460
    %v6462 = vadd.f32 %v6458, %v6461
    %vm6463 = vweird.f32 %v6457
    %vm6464 = vweird.f32 %v6458
    %vm6465 = vmor %vm6463, %vm6464
    %v6466 = vsel %vm6465, %v6458, %v6462
    %v6467 = vand.u32 2147483647, %v6457
    %vm6468 = vcmp.eq.f32.partialorder %v6467, 8.507059e+37
    %v6469 = vand.u32 %v6457, 2147483648
    %v6470 = vor.u32 1.1754944e-38, %v6469
    %v6471 = vsel %vm6468, %v6470, %v6466
    %v6472 = vmul.f32 1.0, %v6471
    %v6473 = vmul.f32 %v6452, 0.0
    %v6474 = vmul.f32 %v6433, %v6453
    %v6475 = vadd.f32 %v6473, %v6474
    %v6476 = vtanh.pop %v6475
    %v6477 = vmul.f32 %v6472, %v6476
    %v6478 = vpack.c.bf16 %v6477, %v6477
    %6479 = vmatpush.bf16.msra.mxu0 %v6323
    %6480 = vmatpush.bf16.msra.mxu0 %v6319
    %6481 = vmatpush.bf16.msra.mxu0 %v6315
    %6482 = vmatpush.bf16.msra.mxu0 %v6311
    %6483 = vmatpush.bf16.msra.mxu0 %v6307
    %6484 = vmatpush.bf16.msra.mxu0 %v6303
    %6485 = vmatpush.bf16.msra.mxu0 %v6299
    %6486 = vmatpush.bf16.msra.mxu0 %v6295
    %6487 = vmatmul.bf16.gmra.mxu0 %v6478
    %v6488 = vpop.f32.mrf.mxu0
    %v6489 = vadd.f32 0.0, %v6488
    %v6490 = vpop.f32.mrf.mxu0
    %6491 = vdwg.mxu0
    %6492 = vmatpush.bf16.msra.mxu0 %v6324
    %6493 = vmatpush.bf16.msra.mxu0 %v6320
    %6494 = vmatpush.bf16.msra.mxu0 %v6316
    %6495 = vmatpush.bf16.msra.mxu0 %v6312
    %6496 = vmatpush.bf16.msra.mxu0 %v6308
    %6497 = vmatpush.bf16.msra.mxu0 %v6304
    %6498 = vmatpush.bf16.msra.mxu0 %v6300
    %6499 = vmatpush.bf16.msra.mxu0 %v6296
    %6500 = vmatmul.bf16.gmra.mxu0 %v6478
    %v6501 = vpop.f32.mrf.mxu0
    %v6502 = vadd.f32 0.0, %v6501
    %v6503 = vpop.f32.mrf.mxu0
    %6504 = vdwg.mxu0
    %6505 = vmatpush.bf16.msra.mxu0 %v6325
    %6506 = vmatpush.bf16.msra.mxu0 %v6321
    %6507 = vmatpush.bf16.msra.mxu0 %v6317
    %6508 = vmatpush.bf16.msra.mxu0 %v6313
    %6509 = vmatpush.bf16.msra.mxu0 %v6309
    %6510 = vmatpush.bf16.msra.mxu0 %v6305
    %6511 = vmatpush.bf16.msra.mxu0 %v6301
    %6512 = vmatpush.bf16.msra.mxu0 %v6297
    %6513 = vmatmul.bf16.gmra.mxu0 %v6478
    %v6514 = vpop.f32.mrf.mxu0
    %v6515 = vadd.f32 0.0, %v6514
    %v6516 = vpop.f32.mrf.mxu0
    %6517 = vdwg.mxu0
    %6518 = vmatpush.bf16.msra.mxu0 %v6326
    %6519 = vmatpush.bf16.msra.mxu0 %v6322
    %6520 = vmatpush.bf16.msra.mxu0 %v6318
    %6521 = vmatpush.bf16.msra.mxu0 %v6314
    %6522 = vmatpush.bf16.msra.mxu0 %v6310
    %6523 = vmatpush.bf16.msra.mxu0 %v6306
    %6524 = vmatpush.bf16.msra.mxu0 %v6302
    %6525 = vmatpush.bf16.msra.mxu0 %v6298
    %6526 = vmatmul.bf16.gmra.mxu0 %v6478
    %v6527 = vpop.f32.mrf.mxu0
    %v6528 = vadd.f32 0.0, %v6527
    %v6529 = vpop.f32.mrf.mxu0
    %6530 = vdwg.mxu0
    %v6535 = vrot.slane %v6489, 6
    %v6536 = vrot.slane %v6502, 6
    %v6537 = vrot.slane %v6515, 6
    %v6538 = vrot.slane %v6528, 6
    %v6543 = vadd.f32 %v6079, %v6535
    %v6544 = vadd.f32 %v6107, %v6536
    %v6545 = vadd.f32 %v6135, %v6537
    %v6546 = vadd.f32 %v6163, %v6538
    %v6547 = vxor.u32 %v6543, 2147483648
    %v6548 = vmul.f32 %v6547, 1.442695
    %v6549 = vpow.pop %v6548
    %v6550 = vadd.f32 %v6549, 1.0
    %v6551 = vrcp.pop %v6550
    %v6552 = vmul.f32 %v6550, %v6551
    %v6553 = vsub.f32 1.0, %v6552
    %v6554 = vmul.f32 %v6551, %v6553
    %v6555 = vadd.f32 %v6551, %v6554
    %vm6556 = vweird.f32 %v6550
    %vm6557 = vweird.f32 %v6551
    %vm6558 = vmor %vm6556, %vm6557
    %v6559 = vsel %vm6558, %v6551, %v6555
    %v6560 = vand.u32 2147483647, %v6550
    %vm6561 = vcmp.eq.f32.partialorder %v6560, 8.507059e+37
    %v6562 = vand.u32 %v6550, 2147483648
    %v6563 = vor.u32 1.1754944e-38, %v6562
    %v6564 = vsel %vm6561, %v6563, %v6559
    %v6565 = vmul.f32 1.0, %v6564
    %v6566 = vxor.u32 %v6544, 2147483648
    %v6567 = vmul.f32 %v6566, 1.442695
    %v6568 = vpow.pop %v6567
    %v6569 = vadd.f32 %v6568, 1.0
    %v6570 = vrcp.pop %v6569
    %v6571 = vmul.f32 %v6569, %v6570
    %v6572 = vsub.f32 1.0, %v6571
    %v6573 = vmul.f32 %v6570, %v6572
    %v6574 = vadd.f32 %v6570, %v6573
    %vm6575 = vweird.f32 %v6569
    %vm6576 = vweird.f32 %v6570
    %vm6577 = vmor %vm6575, %vm6576
    %v6578 = vsel %vm6577, %v6570, %v6574
    %v6579 = vand.u32 2147483647, %v6569
    %vm6580 = vcmp.eq.f32.partialorder %v6579, 8.507059e+37
    %v6581 = vand.u32 %v6569, 2147483648
    %v6582 = vor.u32 1.1754944e-38, %v6581
    %v6583 = vsel %vm6580, %v6582, %v6578
    %v6584 = vmul.f32 1.0, %v6583
    %v6585 = vtanh.pop %v6545
    %v6586 = vxor.u32 %v6546, 2147483648
    %v6587 = vmul.f32 %v6586, 1.442695
    %v6588 = vpow.pop %v6587
    %v6589 = vadd.f32 %v6588, 1.0
    %v6590 = vrcp.pop %v6589
    %v6591 = vmul.f32 %v6589, %v6590
    %v6592 = vsub.f32 1.0, %v6591
    %v6593 = vmul.f32 %v6590, %v6592
    %v6594 = vadd.f32 %v6590, %v6593
    %vm6595 = vweird.f32 %v6589
    %vm6596 = vweird.f32 %v6590
    %vm6597 = vmor %vm6595, %vm6596
    %v6598 = vsel %vm6597, %v6590, %v6594
    %v6599 = vand.u32 2147483647, %v6589
    %vm6600 = vcmp.eq.f32.partialorder %v6599, 8.507059e+37
    %v6601 = vand.u32 %v6589, 2147483648
    %v6602 = vor.u32 1.1754944e-38, %v6601
    %v6603 = vsel %vm6600, %v6602, %v6598
    %v6604 = vmul.f32 1.0, %v6603
    %v6606 = vrot.slane %v6475, 6
    %v6608 = vmul.f32 %v6584, %v6606
    %v6609 = vmul.f32 %v6565, %v6585
    %v6610 = vadd.f32 %v6608, %v6609
    %v6611 = vtanh.pop %v6610
    %v6612 = vmul.f32 %v6604, %v6611
    %v6613 = vpack.c.bf16 %v6612, %v6612
    %v6615 = vrot.slane %v6613, 1
    %6617 = vmatpush.bf16.msra.mxu0 %v6323
    %6618 = vmatpush.bf16.msra.mxu0 %v6319
    %6619 = vmatpush.bf16.msra.mxu0 %v6315
    %6620 = vmatpush.bf16.msra.mxu0 %v6311
    %6621 = vmatpush.bf16.msra.mxu0 %v6307
    %6622 = vmatpush.bf16.msra.mxu0 %v6303
    %6623 = vmatpush.bf16.msra.mxu0 %v6299
    %6624 = vmatpush.bf16.msra.mxu0 %v6295
    %6625 = vmatmul.bf16.gmra.mxu0 %v6615
    %v6626 = vpop.f32.mrf.mxu0
    %v6627 = vadd.f32 0.0, %v6626
    %v6628 = vpop.f32.mrf.mxu0
    %6629 = vdwg.mxu0
    %6630 = vmatpush.bf16.msra.mxu0 %v6324
    %6631 = vmatpush.bf16.msra.mxu0 %v6320
    %6632 = vmatpush.bf16.msra.mxu0 %v6316
    %6633 = vmatpush.bf16.msra.mxu0 %v6312
    %6634 = vmatpush.bf16.msra.mxu0 %v6308
    %6635 = vmatpush.bf16.msra.mxu0 %v6304
    %6636 = vmatpush.bf16.msra.mxu0 %v6300
    %6637 = vmatpush.bf16.msra.mxu0 %v6296
    %6638 = vmatmul.bf16.gmra.mxu0 %v6615
    %v6639 = vpop.f32.mrf.mxu0
    %v6640 = vadd.f32 0.0, %v6639
    %v6641 = vpop.f32.mrf.mxu0
    %6642 = vdwg.mxu0
    %6643 = vmatpush.bf16.msra.mxu0 %v6325
    %6644 = vmatpush.bf16.msra.mxu0 %v6321
    %6645 = vmatpush.bf16.msra.mxu0 %v6317
    %6646 = vmatpush.bf16.msra.mxu0 %v6313
    %6647 = vmatpush.bf16.msra.mxu0 %v6309
    %6648 = vmatpush.bf16.msra.mxu0 %v6305
    %6649 = vmatpush.bf16.msra.mxu0 %v6301
    %6650 = vmatpush.bf16.msra.mxu0 %v6297
    %6651 = vmatmul.bf16.gmra.mxu0 %v6615
    %v6652 = vpop.f32.mrf.mxu0
    %v6653 = vadd.f32 0.0, %v6652
    %v6654 = vpop.f32.mrf.mxu0
    %6655 = vdwg.mxu0
    %6656 = vmatpush.bf16.msra.mxu0 %v6326
    %6657 = vmatpush.bf16.msra.mxu0 %v6322
    %6658 = vmatpush.bf16.msra.mxu0 %v6318
    %6659 = vmatpush.bf16.msra.mxu0 %v6314
    %6660 = vmatpush.bf16.msra.mxu0 %v6310
    %6661 = vmatpush.bf16.msra.mxu0 %v6306
    %6662 = vmatpush.bf16.msra.mxu0 %v6302
    %6663 = vmatpush.bf16.msra.mxu0 %v6298
    %6664 = vmatmul.bf16.gmra.mxu0 %v6615
    %v6665 = vpop.f32.mrf.mxu0
    %v6666 = vadd.f32 0.0, %v6665
    %v6667 = vpop.f32.mrf.mxu0
    %6668 = vdwg.mxu0
    %v6673 = vrot.slane %v6627, 4
    %v6674 = vrot.slane %v6640, 4
    %v6675 = vrot.slane %v6653, 4
    %v6676 = vrot.slane %v6666, 4
    %v6681 = vadd.f32 %v6079, %v6673
    %v6682 = vadd.f32 %v6107, %v6674
    %v6683 = vadd.f32 %v6135, %v6675
    %v6684 = vadd.f32 %v6163, %v6676
    %v6685 = vxor.u32 %v6681, 2147483648
    %v6686 = vmul.f32 %v6685, 1.442695
    %v6687 = vpow.pop %v6686
    %v6688 = vadd.f32 %v6687, 1.0
    %v6689 = vrcp.pop %v6688
    %v6690 = vmul.f32 %v6688, %v6689
    %v6691 = vsub.f32 1.0, %v6690
    %v6692 = vmul.f32 %v6689, %v6691
    %v6693 = vadd.f32 %v6689, %v6692
    %vm6694 = vweird.f32 %v6688
    %vm6695 = vweird.f32 %v6689
    %vm6696 = vmor %vm6694, %vm6695
    %v6697 = vsel %vm6696, %v6689, %v6693
    %v6698 = vand.u32 2147483647, %v6688
    %vm6699 = vcmp.eq.f32.partialorder %v6698, 8.507059e+37
    %v6700 = vand.u32 %v6688, 2147483648
    %v6701 = vor.u32 1.1754944e-38, %v6700
    %v6702 = vsel %vm6699, %v6701, %v6697
    %v6703 = vmul.f32 1.0, %v6702
    %v6704 = vxor.u32 %v6682, 2147483648
    %v6705 = vmul.f32 %v6704, 1.442695
    %v6706 = vpow.pop %v6705
    %v6707 = vadd.f32 %v6706, 1.0
    %v6708 = vrcp.pop %v6707
    %v6709 = vmul.f32 %v6707, %v6708
    %v6710 = vsub.f32 1.0, %v6709
    %v6711 = vmul.f32 %v6708, %v6710
    %v6712 = vadd.f32 %v6708, %v6711
    %vm6713 = vweird.f32 %v6707
    %vm6714 = vweird.f32 %v6708
    %vm6715 = vmor %vm6713, %vm6714
    %v6716 = vsel %vm6715, %v6708, %v6712
    %v6717 = vand.u32 2147483647, %v6707
    %vm6718 = vcmp.eq.f32.partialorder %v6717, 8.507059e+37
    %v6719 = vand.u32 %v6707, 2147483648
    %v6720 = vor.u32 1.1754944e-38, %v6719
    %v6721 = vsel %vm6718, %v6720, %v6716
    %v6722 = vmul.f32 1.0, %v6721
    %v6723 = vtanh.pop %v6683
    %v6724 = vxor.u32 %v6684, 2147483648
    %v6725 = vmul.f32 %v6724, 1.442695
    %v6726 = vpow.pop %v6725
    %v6727 = vadd.f32 %v6726, 1.0
    %v6728 = vrcp.pop %v6727
    %v6729 = vmul.f32 %v6727, %v6728
    %v6730 = vsub.f32 1.0, %v6729
    %v6731 = vmul.f32 %v6728, %v6730
    %v6732 = vadd.f32 %v6728, %v6731
    %vm6733 = vweird.f32 %v6727
    %vm6734 = vweird.f32 %v6728
    %vm6735 = vmor %vm6733, %vm6734
    %v6736 = vsel %vm6735, %v6728, %v6732
    %v6737 = vand.u32 2147483647, %v6727
    %vm6738 = vcmp.eq.f32.partialorder %v6737, 8.507059e+37
    %v6739 = vand.u32 %v6727, 2147483648
    %v6740 = vor.u32 1.1754944e-38, %v6739
    %v6741 = vsel %vm6738, %v6740, %v6736
    %v6742 = vmul.f32 1.0, %v6741
    %v6744 = vrot.slane %v6610, 6
    %v6746 = vmul.f32 %v6722, %v6744
    %v6747 = vmul.f32 %v6703, %v6723
    %v6748 = vadd.f32 %v6746, %v6747
    %v6749 = vtanh.pop %v6748
    %v6750 = vmul.f32 %v6742, %v6749
    %v6751 = vpack.c.bf16 %v6750, %v6750
    %v6753 = vrot.slane %v6751, 2
    %6755 = vmatpush.bf16.msra.mxu0 %v6323
    %6756 = vmatpush.bf16.msra.mxu0 %v6319
    %6757 = vmatpush.bf16.msra.mxu0 %v6315
    %6758 = vmatpush.bf16.msra.mxu0 %v6311
    %6759 = vmatpush.bf16.msra.mxu0 %v6307
    %6760 = vmatpush.bf16.msra.mxu0 %v6303
    %6761 = vmatpush.bf16.msra.mxu0 %v6299
    %6762 = vmatpush.bf16.msra.mxu0 %v6295
    %6763 = vmatmul.bf16.gmra.mxu0 %v6753
    %v6764 = vpop.f32.mrf.mxu0
    %v6765 = vadd.f32 0.0, %v6764
    %v6766 = vpop.f32.mrf.mxu0
    %6767 = vdwg.mxu0
    %6768 = vmatpush.bf16.msra.mxu0 %v6324
    %6769 = vmatpush.bf16.msra.mxu0 %v6320
    %6770 = vmatpush.bf16.msra.mxu0 %v6316
    %6771 = vmatpush.bf16.msra.mxu0 %v6312
    %6772 = vmatpush.bf16.msra.mxu0 %v6308
    %6773 = vmatpush.bf16.msra.mxu0 %v6304
    %6774 = vmatpush.bf16.msra.mxu0 %v6300
    %6775 = vmatpush.bf16.msra.mxu0 %v6296
    %6776 = vmatmul.bf16.gmra.mxu0 %v6753
    %v6777 = vpop.f32.mrf.mxu0
    %v6778 = vadd.f32 0.0, %v6777
    %v6779 = vpop.f32.mrf.mxu0
    %6780 = vdwg.mxu0
    %6781 = vmatpush.bf16.msra.mxu0 %v6325
    %6782 = vmatpush.bf16.msra.mxu0 %v6321
    %6783 = vmatpush.bf16.msra.mxu0 %v6317
    %6784 = vmatpush.bf16.msra.mxu0 %v6313
    %6785 = vmatpush.bf16.msra.mxu0 %v6309
    %6786 = vmatpush.bf16.msra.mxu0 %v6305
    %6787 = vmatpush.bf16.msra.mxu0 %v6301
    %6788 = vmatpush.bf16.msra.mxu0 %v6297
    %6789 = vmatmul.bf16.gmra.mxu0 %v6753
    %v6790 = vpop.f32.mrf.mxu0
    %v6791 = vadd.f32 0.0, %v6790
    %v6792 = vpop.f32.mrf.mxu0
    %6793 = vdwg.mxu0
    %6794 = vmatpush.bf16.msra.mxu0 %v6326
    %6795 = vmatpush.bf16.msra.mxu0 %v6322
    %6796 = vmatpush.bf16.msra.mxu0 %v6318
    %6797 = vmatpush.bf16.msra.mxu0 %v6314
    %6798 = vmatpush.bf16.msra.mxu0 %v6310
    %6799 = vmatpush.bf16.msra.mxu0 %v6306
    %6800 = vmatpush.bf16.msra.mxu0 %v6302
    %6801 = vmatpush.bf16.msra.mxu0 %v6298
    %6802 = vmatmul.bf16.gmra.mxu0 %v6753
    %v6803 = vpop.f32.mrf.mxu0
    %v6804 = vadd.f32 0.0, %v6803
    %v6805 = vpop.f32.mrf.mxu0
    %6806 = vdwg.mxu0
    %v6811 = vrot.slane %v6765, 2
    %v6812 = vrot.slane %v6778, 2
    %v6813 = vrot.slane %v6791, 2
    %v6814 = vrot.slane %v6804, 2
    %v6819 = vadd.f32 %v6079, %v6811
    %v6820 = vadd.f32 %v6107, %v6812
    %v6821 = vadd.f32 %v6135, %v6813
    %v6822 = vadd.f32 %v6163, %v6814
    %v6823 = vxor.u32 %v6819, 2147483648
    %v6824 = vmul.f32 %v6823, 1.442695
    %v6825 = vpow.pop %v6824
    %v6826 = vadd.f32 %v6825, 1.0
    %v6827 = vrcp.pop %v6826
    %v6828 = vmul.f32 %v6826, %v6827
    %v6829 = vsub.f32 1.0, %v6828
    %v6830 = vmul.f32 %v6827, %v6829
    %v6831 = vadd.f32 %v6827, %v6830
    %vm6832 = vweird.f32 %v6826
    %vm6833 = vweird.f32 %v6827
    %vm6834 = vmor %vm6832, %vm6833
    %v6835 = vsel %vm6834, %v6827, %v6831
    %v6836 = vand.u32 2147483647, %v6826
    %vm6837 = vcmp.eq.f32.partialorder %v6836, 8.507059e+37
    %v6838 = vand.u32 %v6826, 2147483648
    %v6839 = vor.u32 1.1754944e-38, %v6838
    %v6840 = vsel %vm6837, %v6839, %v6835
    %v6841 = vmul.f32 1.0, %v6840
    %v6842 = vxor.u32 %v6820, 2147483648
    %v6843 = vmul.f32 %v6842, 1.442695
    %v6844 = vpow.pop %v6843
    %v6845 = vadd.f32 %v6844, 1.0
    %v6846 = vrcp.pop %v6845
    %v6847 = vmul.f32 %v6845, %v6846
    %v6848 = vsub.f32 1.0, %v6847
    %v6849 = vmul.f32 %v6846, %v6848
    %v6850 = vadd.f32 %v6846, %v6849
    %vm6851 = vweird.f32 %v6845
    %vm6852 = vweird.f32 %v6846
    %vm6853 = vmor %vm6851, %vm6852
    %v6854 = vsel %vm6853, %v6846, %v6850
    %v6855 = vand.u32 2147483647, %v6845
    %vm6856 = vcmp.eq.f32.partialorder %v6855, 8.507059e+37
    %v6857 = vand.u32 %v6845, 2147483648
    %v6858 = vor.u32 1.1754944e-38, %v6857
    %v6859 = vsel %vm6856, %v6858, %v6854
    %v6860 = vmul.f32 1.0, %v6859
    %v6861 = vtanh.pop %v6821
    %v6862 = vxor.u32 %v6822, 2147483648
    %v6863 = vmul.f32 %v6862, 1.442695
    %v6864 = vpow.pop %v6863
    %v6865 = vadd.f32 %v6864, 1.0
    %v6866 = vrcp.pop %v6865
    %v6867 = vmul.f32 %v6865, %v6866
    %v6868 = vsub.f32 1.0, %v6867
    %v6869 = vmul.f32 %v6866, %v6868
    %v6870 = vadd.f32 %v6866, %v6869
    %vm6871 = vweird.f32 %v6865
    %vm6872 = vweird.f32 %v6866
    %vm6873 = vmor %vm6871, %vm6872
    %v6874 = vsel %vm6873, %v6866, %v6870
    %v6875 = vand.u32 2147483647, %v6865
    %vm6876 = vcmp.eq.f32.partialorder %v6875, 8.507059e+37
    %v6877 = vand.u32 %v6865, 2147483648
    %v6878 = vor.u32 1.1754944e-38, %v6877
    %v6879 = vsel %vm6876, %v6878, %v6874
    %v6880 = vmul.f32 1.0, %v6879
    %v6882 = vrot.slane %v6748, 6
    %v6884 = vmul.f32 %v6860, %v6882
    %v6885 = vmul.f32 %v6841, %v6861
    %v6886 = vadd.f32 %v6884, %v6885
    %v6887 = vtanh.pop %v6886
    %v6888 = vmul.f32 %v6880, %v6887
    %v6889 = vpack.c.bf16 %v6888, %v6888
    %v6891 = vrot.slane %v6889, 3
    %6893 = vmatpush.bf16.msra.mxu0 %v6323
    %6894 = vmatpush.bf16.msra.mxu0 %v6319
    %6895 = vmatpush.bf16.msra.mxu0 %v6315
    %6896 = vmatpush.bf16.msra.mxu0 %v6311
    %6897 = vmatpush.bf16.msra.mxu0 %v6307
    %6898 = vmatpush.bf16.msra.mxu0 %v6303
    %6899 = vmatpush.bf16.msra.mxu0 %v6299
    %6900 = vmatpush.bf16.msra.mxu0 %v6295
    %6901 = vmatmul.bf16.gmra.mxu0 %v6891
    %v6902 = vpop.f32.mrf.mxu0
    %v6903 = vadd.f32 0.0, %v6902
    %v6904 = vpop.f32.mrf.mxu0
    %6905 = vdwg.mxu0
    %6906 = vmatpush.bf16.msra.mxu0 %v6324
    %6907 = vmatpush.bf16.msra.mxu0 %v6320
    %6908 = vmatpush.bf16.msra.mxu0 %v6316
    %6909 = vmatpush.bf16.msra.mxu0 %v6312
    %6910 = vmatpush.bf16.msra.mxu0 %v6308
    %6911 = vmatpush.bf16.msra.mxu0 %v6304
    %6912 = vmatpush.bf16.msra.mxu0 %v6300
    %6913 = vmatpush.bf16.msra.mxu0 %v6296
    %6914 = vmatmul.bf16.gmra.mxu0 %v6891
    %v6915 = vpop.f32.mrf.mxu0
    %v6916 = vadd.f32 0.0, %v6915
    %v6917 = vpop.f32.mrf.mxu0
    %6918 = vdwg.mxu0
    %6919 = vmatpush.bf16.msra.mxu0 %v6325
    %6920 = vmatpush.bf16.msra.mxu0 %v6321
    %6921 = vmatpush.bf16.msra.mxu0 %v6317
    %6922 = vmatpush.bf16.msra.mxu0 %v6313
    %6923 = vmatpush.bf16.msra.mxu0 %v6309
    %6924 = vmatpush.bf16.msra.mxu0 %v6305
    %6925 = vmatpush.bf16.msra.mxu0 %v6301
    %6926 = vmatpush.bf16.msra.mxu0 %v6297
    %6927 = vmatmul.bf16.gmra.mxu0 %v6891
    %v6928 = vpop.f32.mrf.mxu0
    %v6929 = vadd.f32 0.0, %v6928
    %v6930 = vpop.f32.mrf.mxu0
    %6931 = vdwg.mxu0
    %6932 = vmatpush.bf16.msra.mxu0 %v6326
    %6933 = vmatpush.bf16.msra.mxu0 %v6322
    %6934 = vmatpush.bf16.msra.mxu0 %v6318
    %6935 = vmatpush.bf16.msra.mxu0 %v6314
    %6936 = vmatpush.bf16.msra.mxu0 %v6310
    %6937 = vmatpush.bf16.msra.mxu0 %v6306
    %6938 = vmatpush.bf16.msra.mxu0 %v6302
    %6939 = vmatpush.bf16.msra.mxu0 %v6298
    %6940 = vmatmul.bf16.gmra.mxu0 %v6891
    %v6941 = vpop.f32.mrf.mxu0
    %v6942 = vadd.f32 0.0, %v6941
    %v6943 = vpop.f32.mrf.mxu0
    %6944 = vdwg.mxu0
    %v6945 = vadd.f32 %v6081, %v6903
    %v6946 = vadd.f32 %v6109, %v6916
    %v6947 = vadd.f32 %v6137, %v6929
    %v6948 = vadd.f32 %v6165, %v6942
    %v6949 = vxor.u32 %v6945, 2147483648
    %v6950 = vmul.f32 %v6949, 1.442695
    %v6951 = vpow.pop %v6950
    %v6952 = vadd.f32 %v6951, 1.0
    %v6953 = vrcp.pop %v6952
    %v6954 = vmul.f32 %v6952, %v6953
    %v6955 = vsub.f32 1.0, %v6954
    %v6956 = vmul.f32 %v6953, %v6955
    %v6957 = vadd.f32 %v6953, %v6956
    %vm6958 = vweird.f32 %v6952
    %vm6959 = vweird.f32 %v6953
    %vm6960 = vmor %vm6958, %vm6959
    %v6961 = vsel %vm6960, %v6953, %v6957
    %v6962 = vand.u32 2147483647, %v6952
    %vm6963 = vcmp.eq.f32.partialorder %v6962, 8.507059e+37
    %v6964 = vand.u32 %v6952, 2147483648
    %v6965 = vor.u32 1.1754944e-38, %v6964
    %v6966 = vsel %vm6963, %v6965, %v6961
    %v6967 = vmul.f32 1.0, %v6966
    %v6968 = vxor.u32 %v6946, 2147483648
    %v6969 = vmul.f32 %v6968, 1.442695
    %v6970 = vpow.pop %v6969
    %v6971 = vadd.f32 %v6970, 1.0
    %v6972 = vrcp.pop %v6971
    %v6973 = vmul.f32 %v6971, %v6972
    %v6974 = vsub.f32 1.0, %v6973
    %v6975 = vmul.f32 %v6972, %v6974
    %v6976 = vadd.f32 %v6972, %v6975
    %vm6977 = vweird.f32 %v6971
    %vm6978 = vweird.f32 %v6972
    %vm6979 = vmor %vm6977, %vm6978
    %v6980 = vsel %vm6979, %v6972, %v6976
    %v6981 = vand.u32 2147483647, %v6971
    %vm6982 = vcmp.eq.f32.partialorder %v6981, 8.507059e+37
    %v6983 = vand.u32 %v6971, 2147483648
    %v6984 = vor.u32 1.1754944e-38, %v6983
    %v6985 = vsel %vm6982, %v6984, %v6980
    %v6986 = vmul.f32 1.0, %v6985
    %v6987 = vtanh.pop %v6947
    %v6988 = vxor.u32 %v6948, 2147483648
    %v6989 = vmul.f32 %v6988, 1.442695
    %v6990 = vpow.pop %v6989
    %v6991 = vadd.f32 %v6990, 1.0
    %v6992 = vrcp.pop %v6991
    %v6993 = vmul.f32 %v6991, %v6992
    %v6994 = vsub.f32 1.0, %v6993
    %v6995 = vmul.f32 %v6992, %v6994
    %v6996 = vadd.f32 %v6992, %v6995
    %vm6997 = vweird.f32 %v6991
    %vm6998 = vweird.f32 %v6992
    %vm6999 = vmor %vm6997, %vm6998
    %v7000 = vsel %vm6999, %v6992, %v6996
    %v7001 = vand.u32 2147483647, %v6991
    %vm7002 = vcmp.eq.f32.partialorder %v7001, 8.507059e+37
    %v7003 = vand.u32 %v6991, 2147483648
    %v7004 = vor.u32 1.1754944e-38, %v7003
    %v7005 = vsel %vm7002, %v7004, %v7000
    %v7006 = vmul.f32 1.0, %v7005
    %v7008 = vrot.slane %v6886, 6
    %v7010 = vmul.f32 %v6986, %v7008
    %v7011 = vmul.f32 %v6967, %v6987
    %v7012 = vadd.f32 %v7010, %v7011
    %v7013 = vtanh.pop %v7012
    %v7014 = vmul.f32 %v7006, %v7013
    %v7015 = vpack.c.bf16 %v7014, %v7014
    %7016 = vmatpush.bf16.msra.mxu0 %v6323
    %7017 = vmatpush.bf16.msra.mxu0 %v6319
    %7018 = vmatpush.bf16.msra.mxu0 %v6315
    %7019 = vmatpush.bf16.msra.mxu0 %v6311
    %7020 = vmatpush.bf16.msra.mxu0 %v6307
    %7021 = vmatpush.bf16.msra.mxu0 %v6303
    %7022 = vmatpush.bf16.msra.mxu0 %v6299
    %7023 = vmatpush.bf16.msra.mxu0 %v6295
    %7024 = vmatmul.bf16.gmra.mxu0 %v7015
    %v7025 = vpop.f32.mrf.mxu0
    %v7026 = vadd.f32 0.0, %v7025
    %v7027 = vpop.f32.mrf.mxu0
    %7028 = vdwg.mxu0
    %7029 = vmatpush.bf16.msra.mxu0 %v6324
    %7030 = vmatpush.bf16.msra.mxu0 %v6320
    %7031 = vmatpush.bf16.msra.mxu0 %v6316
    %7032 = vmatpush.bf16.msra.mxu0 %v6312
    %7033 = vmatpush.bf16.msra.mxu0 %v6308
    %7034 = vmatpush.bf16.msra.mxu0 %v6304
    %7035 = vmatpush.bf16.msra.mxu0 %v6300
    %7036 = vmatpush.bf16.msra.mxu0 %v6296
    %7037 = vmatmul.bf16.gmra.mxu0 %v7015
    %v7038 = vpop.f32.mrf.mxu0
    %v7039 = vadd.f32 0.0, %v7038
    %v7040 = vpop.f32.mrf.mxu0
    %7041 = vdwg.mxu0
    %7042 = vmatpush.bf16.msra.mxu0 %v6325
    %7043 = vmatpush.bf16.msra.mxu0 %v6321
    %7044 = vmatpush.bf16.msra.mxu0 %v6317
    %7045 = vmatpush.bf16.msra.mxu0 %v6313
    %7046 = vmatpush.bf16.msra.mxu0 %v6309
    %7047 = vmatpush.bf16.msra.mxu0 %v6305
    %7048 = vmatpush.bf16.msra.mxu0 %v6301
    %7049 = vmatpush.bf16.msra.mxu0 %v6297
    %7050 = vmatmul.bf16.gmra.mxu0 %v7015
    %v7051 = vpop.f32.mrf.mxu0
    %v7052 = vadd.f32 0.0, %v7051
    %v7053 = vpop.f32.mrf.mxu0
    %7054 = vdwg.mxu0
    %7055 = vmatpush.bf16.msra.mxu0 %v6326
    %7056 = vmatpush.bf16.msra.mxu0 %v6322
    %7057 = vmatpush.bf16.msra.mxu0 %v6318
    %7058 = vmatpush.bf16.msra.mxu0 %v6314
    %7059 = vmatpush.bf16.msra.mxu0 %v6310
    %7060 = vmatpush.bf16.msra.mxu0 %v6306
    %7061 = vmatpush.bf16.msra.mxu0 %v6302
    %7062 = vmatpush.bf16.msra.mxu0 %v6298
    %7063 = vmatmul.bf16.gmra.mxu0 %v7015
    %v7064 = vpop.f32.mrf.mxu0
    %v7065 = vadd.f32 0.0, %v7064
    %v7066 = vpop.f32.mrf.mxu0
    %7067 = vdwg.mxu0
    %v7072 = vrot.slane %v7026, 6
    %v7073 = vrot.slane %v7039, 6
    %v7074 = vrot.slane %v7052, 6
    %v7075 = vrot.slane %v7065, 6
    %v7080 = vadd.f32 %v6081, %v7072
    %v7081 = vadd.f32 %v6109, %v7073
    %v7082 = vadd.f32 %v6137, %v7074
    %v7083 = vadd.f32 %v6165, %v7075
    %v7084 = vxor.u32 %v7080, 2147483648
    %v7085 = vmul.f32 %v7084, 1.442695
    %v7086 = vpow.pop %v7085
    %v7087 = vadd.f32 %v7086, 1.0
    %v7088 = vrcp.pop %v7087
    %v7089 = vmul.f32 %v7087, %v7088
    %v7090 = vsub.f32 1.0, %v7089
    %v7091 = vmul.f32 %v7088, %v7090
    %v7092 = vadd.f32 %v7088, %v7091
    %vm7093 = vweird.f32 %v7087
    %vm7094 = vweird.f32 %v7088
    %vm7095 = vmor %vm7093, %vm7094
    %v7096 = vsel %vm7095, %v7088, %v7092
    %v7097 = vand.u32 2147483647, %v7087
    %vm7098 = vcmp.eq.f32.partialorder %v7097, 8.507059e+37
    %v7099 = vand.u32 %v7087, 2147483648
    %v7100 = vor.u32 1.1754944e-38, %v7099
    %v7101 = vsel %vm7098, %v7100, %v7096
    %v7102 = vmul.f32 1.0, %v7101
    %v7103 = vxor.u32 %v7081, 2147483648
    %v7104 = vmul.f32 %v7103, 1.442695
    %v7105 = vpow.pop %v7104
    %v7106 = vadd.f32 %v7105, 1.0
    %v7107 = vrcp.pop %v7106
    %v7108 = vmul.f32 %v7106, %v7107
    %v7109 = vsub.f32 1.0, %v7108
    %v7110 = vmul.f32 %v7107, %v7109
    %v7111 = vadd.f32 %v7107, %v7110
    %vm7112 = vweird.f32 %v7106
    %vm7113 = vweird.f32 %v7107
    %vm7114 = vmor %vm7112, %vm7113
    %v7115 = vsel %vm7114, %v7107, %v7111
    %v7116 = vand.u32 2147483647, %v7106
    %vm7117 = vcmp.eq.f32.partialorder %v7116, 8.507059e+37
    %v7118 = vand.u32 %v7106, 2147483648
    %v7119 = vor.u32 1.1754944e-38, %v7118
    %v7120 = vsel %vm7117, %v7119, %v7115
    %v7121 = vmul.f32 1.0, %v7120
    %v7122 = vtanh.pop %v7082
    %v7123 = vxor.u32 %v7083, 2147483648
    %v7124 = vmul.f32 %v7123, 1.442695
    %v7125 = vpow.pop %v7124
    %v7126 = vadd.f32 %v7125, 1.0
    %v7127 = vrcp.pop %v7126
    %v7128 = vmul.f32 %v7126, %v7127
    %v7129 = vsub.f32 1.0, %v7128
    %v7130 = vmul.f32 %v7127, %v7129
    %v7131 = vadd.f32 %v7127, %v7130
    %vm7132 = vweird.f32 %v7126
    %vm7133 = vweird.f32 %v7127
    %vm7134 = vmor %vm7132, %vm7133
    %v7135 = vsel %vm7134, %v7127, %v7131
    %v7136 = vand.u32 2147483647, %v7126
    %vm7137 = vcmp.eq.f32.partialorder %v7136, 8.507059e+37
    %v7138 = vand.u32 %v7126, 2147483648
    %v7139 = vor.u32 1.1754944e-38, %v7138
    %v7140 = vsel %vm7137, %v7139, %v7135
    %v7141 = vmul.f32 1.0, %v7140
    %v7143 = vrot.slane %v7012, 6
    %v7145 = vmul.f32 %v7121, %v7143
    %v7146 = vmul.f32 %v7102, %v7122
    %v7147 = vadd.f32 %v7145, %v7146
    %v7148 = vtanh.pop %v7147
    %v7149 = vmul.f32 %v7141, %v7148
    %v7150 = vpack.c.bf16 %v7149, %v7149
    %v7152 = vrot.slane %v7150, 1
    %7154 = vmatpush.bf16.msra.mxu0 %v6323
    %7155 = vmatpush.bf16.msra.mxu0 %v6319
    %7156 = vmatpush.bf16.msra.mxu0 %v6315
    %7157 = vmatpush.bf16.msra.mxu0 %v6311
    %7158 = vmatpush.bf16.msra.mxu0 %v6307
    %7159 = vmatpush.bf16.msra.mxu0 %v6303
    %7160 = vmatpush.bf16.msra.mxu0 %v6299
    %7161 = vmatpush.bf16.msra.mxu0 %v6295
    %7162 = vmatmul.bf16.gmra.mxu0 %v7152
    %v7163 = vpop.f32.mrf.mxu0
    %v7164 = vadd.f32 0.0, %v7163
    %v7165 = vpop.f32.mrf.mxu0
    %7166 = vdwg.mxu0
    %7167 = vmatpush.bf16.msra.mxu0 %v6324
    %7168 = vmatpush.bf16.msra.mxu0 %v6320
    %7169 = vmatpush.bf16.msra.mxu0 %v6316
    %7170 = vmatpush.bf16.msra.mxu0 %v6312
    %7171 = vmatpush.bf16.msra.mxu0 %v6308
    %7172 = vmatpush.bf16.msra.mxu0 %v6304
    %7173 = vmatpush.bf16.msra.mxu0 %v6300
    %7174 = vmatpush.bf16.msra.mxu0 %v6296
    %7175 = vmatmul.bf16.gmra.mxu0 %v7152
    %v7176 = vpop.f32.mrf.mxu0
    %v7177 = vadd.f32 0.0, %v7176
    %v7178 = vpop.f32.mrf.mxu0
    %7179 = vdwg.mxu0
    %7180 = vmatpush.bf16.msra.mxu0 %v6325
    %7181 = vmatpush.bf16.msra.mxu0 %v6321
    %7182 = vmatpush.bf16.msra.mxu0 %v6317
    %7183 = vmatpush.bf16.msra.mxu0 %v6313
    %7184 = vmatpush.bf16.msra.mxu0 %v6309
    %7185 = vmatpush.bf16.msra.mxu0 %v6305
    %7186 = vmatpush.bf16.msra.mxu0 %v6301
    %7187 = vmatpush.bf16.msra.mxu0 %v6297
    %7188 = vmatmul.bf16.gmra.mxu0 %v7152
    %v7189 = vpop.f32.mrf.mxu0
    %v7190 = vadd.f32 0.0, %v7189
    %v7191 = vpop.f32.mrf.mxu0
    %7192 = vdwg.mxu0
    %7193 = vmatpush.bf16.msra.mxu0 %v6326
    %7194 = vmatpush.bf16.msra.mxu0 %v6322
    %7195 = vmatpush.bf16.msra.mxu0 %v6318
    %7196 = vmatpush.bf16.msra.mxu0 %v6314
    %7197 = vmatpush.bf16.msra.mxu0 %v6310
    %7198 = vmatpush.bf16.msra.mxu0 %v6306
    %7199 = vmatpush.bf16.msra.mxu0 %v6302
    %7200 = vmatpush.bf16.msra.mxu0 %v6298
    %7201 = vmatmul.bf16.gmra.mxu0 %v7152
    %v7202 = vpop.f32.mrf.mxu0
    %v7203 = vadd.f32 0.0, %v7202
    %v7204 = vpop.f32.mrf.mxu0
    %7205 = vdwg.mxu0
    %v7210 = vrot.slane %v7164, 4
    %v7211 = vrot.slane %v7177, 4
    %v7212 = vrot.slane %v7190, 4
    %v7213 = vrot.slane %v7203, 4
    %v7218 = vadd.f32 %v6081, %v7210
    %v7219 = vadd.f32 %v6109, %v7211
    %v7220 = vadd.f32 %v6137, %v7212
    %v7221 = vadd.f32 %v6165, %v7213
    %v7222 = vxor.u32 %v7218, 2147483648
    %v7223 = vmul.f32 %v7222, 1.442695
    %v7224 = vpow.pop %v7223
    %v7225 = vadd.f32 %v7224, 1.0
    %v7226 = vrcp.pop %v7225
    %v7227 = vmul.f32 %v7225, %v7226
    %v7228 = vsub.f32 1.0, %v7227
    %v7229 = vmul.f32 %v7226, %v7228
    %v7230 = vadd.f32 %v7226, %v7229
    %vm7231 = vweird.f32 %v7225
    %vm7232 = vweird.f32 %v7226
    %vm7233 = vmor %vm7231, %vm7232
    %v7234 = vsel %vm7233, %v7226, %v7230
    %v7235 = vand.u32 2147483647, %v7225
    %vm7236 = vcmp.eq.f32.partialorder %v7235, 8.507059e+37
    %v7237 = vand.u32 %v7225, 2147483648
    %v7238 = vor.u32 1.1754944e-38, %v7237
    %v7239 = vsel %vm7236, %v7238, %v7234
    %v7240 = vmul.f32 1.0, %v7239
    %v7241 = vxor.u32 %v7219, 2147483648
    %v7242 = vmul.f32 %v7241, 1.442695
    %v7243 = vpow.pop %v7242
    %v7244 = vadd.f32 %v7243, 1.0
    %v7245 = vrcp.pop %v7244
    %v7246 = vmul.f32 %v7244, %v7245
    %v7247 = vsub.f32 1.0, %v7246
    %v7248 = vmul.f32 %v7245, %v7247
    %v7249 = vadd.f32 %v7245, %v7248
    %vm7250 = vweird.f32 %v7244
    %vm7251 = vweird.f32 %v7245
    %vm7252 = vmor %vm7250, %vm7251
    %v7253 = vsel %vm7252, %v7245, %v7249
    %v7254 = vand.u32 2147483647, %v7244
    %vm7255 = vcmp.eq.f32.partialorder %v7254, 8.507059e+37
    %v7256 = vand.u32 %v7244, 2147483648
    %v7257 = vor.u32 1.1754944e-38, %v7256
    %v7258 = vsel %vm7255, %v7257, %v7253
    %v7259 = vmul.f32 1.0, %v7258
    %v7260 = vtanh.pop %v7220
    %v7261 = vxor.u32 %v7221, 2147483648
    %v7262 = vmul.f32 %v7261, 1.442695
    %v7263 = vpow.pop %v7262
    %v7264 = vadd.f32 %v7263, 1.0
    %v7265 = vrcp.pop %v7264
    %v7266 = vmul.f32 %v7264, %v7265
    %v7267 = vsub.f32 1.0, %v7266
    %v7268 = vmul.f32 %v7265, %v7267
    %v7269 = vadd.f32 %v7265, %v7268
    %vm7270 = vweird.f32 %v7264
    %vm7271 = vweird.f32 %v7265
    %vm7272 = vmor %vm7270, %vm7271
    %v7273 = vsel %vm7272, %v7265, %v7269
    %v7274 = vand.u32 2147483647, %v7264
    %vm7275 = vcmp.eq.f32.partialorder %v7274, 8.507059e+37
    %v7276 = vand.u32 %v7264, 2147483648
    %v7277 = vor.u32 1.1754944e-38, %v7276
    %v7278 = vsel %vm7275, %v7277, %v7273
    %v7279 = vmul.f32 1.0, %v7278
    %v7281 = vrot.slane %v7147, 6
    %v7283 = vmul.f32 %v7259, %v7281
    %v7284 = vmul.f32 %v7240, %v7260
    %v7285 = vadd.f32 %v7283, %v7284
    %v7286 = vtanh.pop %v7285
    %v7287 = vmul.f32 %v7279, %v7286
    %v7288 = vpack.c.bf16 %v7287, %v7287
    %v7290 = vrot.slane %v7288, 2
    %7292 = vmatpush.bf16.msra.mxu0 %v6323
    %7293 = vmatpush.bf16.msra.mxu0 %v6319
    %7294 = vmatpush.bf16.msra.mxu0 %v6315
    %7295 = vmatpush.bf16.msra.mxu0 %v6311
    %7296 = vmatpush.bf16.msra.mxu0 %v6307
    %7297 = vmatpush.bf16.msra.mxu0 %v6303
    %7298 = vmatpush.bf16.msra.mxu0 %v6299
    %7299 = vmatpush.bf16.msra.mxu0 %v6295
    %7300 = vmatmul.bf16.gmra.mxu0 %v7290
    %v7301 = vpop.f32.mrf.mxu0
    %v7302 = vadd.f32 0.0, %v7301
    %v7303 = vpop.f32.mrf.mxu0
    %7304 = vdwg.mxu0
    %7305 = vmatpush.bf16.msra.mxu0 %v6324
    %7306 = vmatpush.bf16.msra.mxu0 %v6320
    %7307 = vmatpush.bf16.msra.mxu0 %v6316
    %7308 = vmatpush.bf16.msra.mxu0 %v6312
    %7309 = vmatpush.bf16.msra.mxu0 %v6308
    %7310 = vmatpush.bf16.msra.mxu0 %v6304
    %7311 = vmatpush.bf16.msra.mxu0 %v6300
    %7312 = vmatpush.bf16.msra.mxu0 %v6296
    %7313 = vmatmul.bf16.gmra.mxu0 %v7290
    %v7314 = vpop.f32.mrf.mxu0
    %v7315 = vadd.f32 0.0, %v7314
    %v7316 = vpop.f32.mrf.mxu0
    %7317 = vdwg.mxu0
    %7318 = vmatpush.bf16.msra.mxu0 %v6325
    %7319 = vmatpush.bf16.msra.mxu0 %v6321
    %7320 = vmatpush.bf16.msra.mxu0 %v6317
    %7321 = vmatpush.bf16.msra.mxu0 %v6313
    %7322 = vmatpush.bf16.msra.mxu0 %v6309
    %7323 = vmatpush.bf16.msra.mxu0 %v6305
    %7324 = vmatpush.bf16.msra.mxu0 %v6301
    %7325 = vmatpush.bf16.msra.mxu0 %v6297
    %7326 = vmatmul.bf16.gmra.mxu0 %v7290
    %v7327 = vpop.f32.mrf.mxu0
    %v7328 = vadd.f32 0.0, %v7327
    %v7329 = vpop.f32.mrf.mxu0
    %7330 = vdwg.mxu0
    %7331 = vmatpush.bf16.msra.mxu0 %v6326
    %7332 = vmatpush.bf16.msra.mxu0 %v6322
    %7333 = vmatpush.bf16.msra.mxu0 %v6318
    %7334 = vmatpush.bf16.msra.mxu0 %v6314
    %7335 = vmatpush.bf16.msra.mxu0 %v6310
    %7336 = vmatpush.bf16.msra.mxu0 %v6306
    %7337 = vmatpush.bf16.msra.mxu0 %v6302
    %7338 = vmatpush.bf16.msra.mxu0 %v6298
    %7339 = vmatmul.bf16.gmra.mxu0 %v7290
    %v7340 = vpop.f32.mrf.mxu0
    %v7341 = vadd.f32 0.0, %v7340
    %v7342 = vpop.f32.mrf.mxu0
    %7343 = vdwg.mxu0
    %v7348 = vrot.slane %v7302, 2
    %v7349 = vrot.slane %v7315, 2
    %v7350 = vrot.slane %v7328, 2
    %v7351 = vrot.slane %v7341, 2
    %v7356 = vadd.f32 %v6081, %v7348
    %v7357 = vadd.f32 %v6109, %v7349
    %v7358 = vadd.f32 %v6137, %v7350
    %v7359 = vadd.f32 %v6165, %v7351
    %v7360 = vxor.u32 %v7356, 2147483648
    %v7361 = vmul.f32 %v7360, 1.442695
    %v7362 = vpow.pop %v7361
    %v7363 = vadd.f32 %v7362, 1.0
    %v7364 = vrcp.pop %v7363
    %v7365 = vmul.f32 %v7363, %v7364
    %v7366 = vsub.f32 1.0, %v7365
    %v7367 = vmul.f32 %v7364, %v7366
    %v7368 = vadd.f32 %v7364, %v7367
    %vm7369 = vweird.f32 %v7363
    %vm7370 = vweird.f32 %v7364
    %vm7371 = vmor %vm7369, %vm7370
    %v7372 = vsel %vm7371, %v7364, %v7368
    %v7373 = vand.u32 2147483647, %v7363
    %vm7374 = vcmp.eq.f32.partialorder %v7373, 8.507059e+37
    %v7375 = vand.u32 %v7363, 2147483648
    %v7376 = vor.u32 1.1754944e-38, %v7375
    %v7377 = vsel %vm7374, %v7376, %v7372
    %v7378 = vmul.f32 1.0, %v7377
    %v7379 = vxor.u32 %v7357, 2147483648
    %v7380 = vmul.f32 %v7379, 1.442695
    %v7381 = vpow.pop %v7380
    %v7382 = vadd.f32 %v7381, 1.0
    %v7383 = vrcp.pop %v7382
    %v7384 = vmul.f32 %v7382, %v7383
    %v7385 = vsub.f32 1.0, %v7384
    %v7386 = vmul.f32 %v7383, %v7385
    %v7387 = vadd.f32 %v7383, %v7386
    %vm7388 = vweird.f32 %v7382
    %vm7389 = vweird.f32 %v7383
    %vm7390 = vmor %vm7388, %vm7389
    %v7391 = vsel %vm7390, %v7383, %v7387
    %v7392 = vand.u32 2147483647, %v7382
    %vm7393 = vcmp.eq.f32.partialorder %v7392, 8.507059e+37
    %v7394 = vand.u32 %v7382, 2147483648
    %v7395 = vor.u32 1.1754944e-38, %v7394
    %v7396 = vsel %vm7393, %v7395, %v7391
    %v7397 = vmul.f32 1.0, %v7396
    %v7398 = vtanh.pop %v7358
    %v7399 = vxor.u32 %v7359, 2147483648
    %v7400 = vmul.f32 %v7399, 1.442695
    %v7401 = vpow.pop %v7400
    %v7402 = vadd.f32 %v7401, 1.0
    %v7403 = vrcp.pop %v7402
    %v7404 = vmul.f32 %v7402, %v7403
    %v7405 = vsub.f32 1.0, %v7404
    %v7406 = vmul.f32 %v7403, %v7405
    %v7407 = vadd.f32 %v7403, %v7406
    %vm7408 = vweird.f32 %v7402
    %vm7409 = vweird.f32 %v7403
    %vm7410 = vmor %vm7408, %vm7409
    %v7411 = vsel %vm7410, %v7403, %v7407
    %v7412 = vand.u32 2147483647, %v7402
    %vm7413 = vcmp.eq.f32.partialorder %v7412, 8.507059e+37
    %v7414 = vand.u32 %v7402, 2147483648
    %v7415 = vor.u32 1.1754944e-38, %v7414
    %v7416 = vsel %vm7413, %v7415, %v7411
    %v7417 = vmul.f32 1.0, %v7416
    %v7419 = vrot.slane %v7285, 6
    %v7421 = vmul.f32 %v7397, %v7419
    %v7422 = vmul.f32 %v7378, %v7398
    %v7423 = vadd.f32 %v7421, %v7422
    %v7424 = vtanh.pop %v7423
    %v7425 = vmul.f32 %v7417, %v7424
    %v7426 = vld [vmem:[#allocation10] sm:$0xff]
    %v7427 = vld [vmem:[#allocation10 + $0x8] sm:$0xff]
    %v7428 = vld [vmem:[#allocation10 + $0x10] sm:$0xff]
    %v7429 = vld [vmem:[#allocation10 + $0x18] sm:$0xff]
    %v7430 = vld [vmem:[#allocation10 + $0x20] sm:$0xff]
    %v7431 = vld [vmem:[#allocation10 + $0x28] sm:$0xff]
    %v7432 = vld [vmem:[#allocation10 + $0x30] sm:$0xff]
    %v7433 = vld [vmem:[#allocation10 + $0x38] sm:$0xff]
    %v7434 = vld [vmem:[#allocation10 + $0x40] sm:$0xff]
    %v7435 = vld [vmem:[#allocation10 + $0x48] sm:$0xff]
    %v7436 = vld [vmem:[#allocation10 + $0x50] sm:$0xff]
    %v7437 = vld [vmem:[#allocation10 + $0x58] sm:$0xff]
    %v7438 = vld [vmem:[#allocation10 + $0x60] sm:$0xff]
    %v7439 = vld [vmem:[#allocation10 + $0x68] sm:$0xff]
    %v7440 = vld [vmem:[#allocation10 + $0x70] sm:$0xff]
    %v7441 = vld [vmem:[#allocation10 + $0x78] sm:$0xff]
    %v7442 = vld [vmem:[#allocation10 + $0x80] sm:$0xff]
    %v7443 = vld [vmem:[#allocation10 + $0x88] sm:$0xff]
    %v7444 = vld [vmem:[#allocation10 + $0x90] sm:$0xff]
    %v7445 = vld [vmem:[#allocation10 + $0x98] sm:$0xff]
    %v7446 = vld [vmem:[#allocation10 + $0xa0] sm:$0xff]
    %v7447 = vld [vmem:[#allocation10 + $0xa8] sm:$0xff]
    %v7448 = vld [vmem:[#allocation10 + $0xb0] sm:$0xff]
    %v7449 = vld [vmem:[#allocation10 + $0xb8] sm:$0xff]
    %v7450 = vld [vmem:[#allocation10 + $0xc0] sm:$0xff]
    %v7451 = vld [vmem:[#allocation10 + $0xc8] sm:$0xff]
    %v7452 = vld [vmem:[#allocation10 + $0xd0] sm:$0xff]
    %v7453 = vld [vmem:[#allocation10 + $0xd8] sm:$0xff]
    %v7454 = vld [vmem:[#allocation10 + $0xe0] sm:$0xff]
    %v7455 = vld [vmem:[#allocation10 + $0xe8] sm:$0xff]
    %v7456 = vld [vmem:[#allocation10 + $0xf0] sm:$0xff]
    %v7457 = vld [vmem:[#allocation10 + $0xf8] sm:$0xff]
    %v7458 = vld [vmem:[#allocation10 + $0x100] sm:$0xff]
    %v7459 = vld [vmem:[#allocation10 + $0x108] sm:$0xff]
    %v7460 = vld [vmem:[#allocation10 + $0x110] sm:$0xff]
    %v7461 = vld [vmem:[#allocation10 + $0x118] sm:$0xff]
    %v7462 = vld [vmem:[#allocation10 + $0x120] sm:$0xff]
    %v7463 = vld [vmem:[#allocation10 + $0x128] sm:$0xff]
    %v7464 = vld [vmem:[#allocation10 + $0x130] sm:$0xff]
    %v7465 = vld [vmem:[#allocation10 + $0x138] sm:$0xff]
    %v7466 = vld [vmem:[#allocation10 + $0x140] sm:$0xff]
    %v7467 = vld [vmem:[#allocation10 + $0x148] sm:$0xff]
    %v7468 = vld [vmem:[#allocation10 + $0x150] sm:$0xff]
    %v7469 = vld [vmem:[#allocation10 + $0x158] sm:$0xff]
    %v7470 = vld [vmem:[#allocation10 + $0x160] sm:$0xff]
    %v7471 = vld [vmem:[#allocation10 + $0x168] sm:$0xff]
    %v7472 = vld [vmem:[#allocation10 + $0x170] sm:$0xff]
    %v7473 = vld [vmem:[#allocation10 + $0x178] sm:$0xff]
    %v7474 = vld [vmem:[#allocation10 + $0x180] sm:$0xff]
    %v7475 = vld [vmem:[#allocation10 + $0x188] sm:$0xff]
    %v7476 = vld [vmem:[#allocation10 + $0x190] sm:$0xff]
    %v7477 = vld [vmem:[#allocation10 + $0x198] sm:$0xff]
    %v7478 = vld [vmem:[#allocation10 + $0x1a0] sm:$0xff]
    %v7479 = vld [vmem:[#allocation10 + $0x1a8] sm:$0xff]
    %v7480 = vld [vmem:[#allocation10 + $0x1b0] sm:$0xff]
    %v7481 = vld [vmem:[#allocation10 + $0x1b8] sm:$0xff]
    %v7482 = vld [vmem:[#allocation10 + $0x1c0] sm:$0xff]
    %v7483 = vld [vmem:[#allocation10 + $0x1c8] sm:$0xff]
    %v7484 = vld [vmem:[#allocation10 + $0x1d0] sm:$0xff]
    %v7485 = vld [vmem:[#allocation10 + $0x1d8] sm:$0xff]
    %v7486 = vld [vmem:[#allocation10 + $0x1e0] sm:$0xff]
    %v7487 = vld [vmem:[#allocation10 + $0x1e8] sm:$0xff]
    %v7488 = vld [vmem:[#allocation10 + $0x1f0] sm:$0xff]
    %v7489 = vld [vmem:[#allocation10 + $0x1f8] sm:$0xff]
    %v7490 = vld [vmem:[%s11] sm:$0xf]
    %v7492 = vperm.slane %v7490, 0
    %v7493 = vperm.slane %v7490, 2
    %v7494 = vperm.slane %v7490, 3
    %v7498 = vpack.c.b16 %v5729, %v5729
    %v7499 = vpack.c.b16 %v5730, %v5730
    %v7500 = vrot.slane %v7498, 3
    %v7501 = vrot.slane %v7499, 3
    %v7568 = vunpack.c.l.b16 %v7426
    %v7569 = vunpack.c.l.b16 %v7427
    %v7570 = vunpack.c.h.b16 %v7427
    %v7571 = vunpack.c.l.b16 %v7428
    %v7572 = vunpack.c.l.b16 %v7429
    %v7573 = vunpack.c.h.b16 %v7429
    %v7574 = vunpack.c.l.b16 %v7430
    %v7575 = vunpack.c.l.b16 %v7431
    %v7576 = vunpack.c.h.b16 %v7431
    %v7577 = vunpack.c.l.b16 %v7432
    %v7578 = vunpack.c.l.b16 %v7433
    %v7579 = vunpack.c.h.b16 %v7433
    %v7580 = vunpack.c.l.b16 %v7434
    %v7581 = vunpack.c.l.b16 %v7435
    %v7582 = vunpack.c.h.b16 %v7435
    %v7583 = vunpack.c.l.b16 %v7436
    %v7584 = vunpack.c.l.b16 %v7437
    %v7585 = vunpack.c.h.b16 %v7437
    %v7586 = vunpack.c.l.b16 %v7438
    %v7587 = vunpack.c.l.b16 %v7439
    %v7588 = vunpack.c.h.b16 %v7439
    %v7589 = vunpack.c.l.b16 %v7440
    %v7590 = vunpack.c.l.b16 %v7441
    %v7591 = vunpack.c.h.b16 %v7441
    %v7592 = vunpack.c.l.b16 %v7442
    %v7593 = vunpack.c.l.b16 %v7443
    %v7594 = vunpack.c.h.b16 %v7443
    %v7595 = vunpack.c.l.b16 %v7444
    %v7596 = vunpack.c.l.b16 %v7445
    %v7597 = vunpack.c.h.b16 %v7445
    %v7598 = vunpack.c.l.b16 %v7446
    %v7599 = vunpack.c.l.b16 %v7447
    %v7600 = vunpack.c.h.b16 %v7447
    %v7601 = vunpack.c.l.b16 %v7448
    %v7602 = vunpack.c.l.b16 %v7449
    %v7603 = vunpack.c.h.b16 %v7449
    %v7604 = vunpack.c.l.b16 %v7450
    %v7605 = vunpack.c.l.b16 %v7451
    %v7606 = vunpack.c.h.b16 %v7451
    %v7607 = vunpack.c.l.b16 %v7452
    %v7608 = vunpack.c.l.b16 %v7453
    %v7609 = vunpack.c.h.b16 %v7453
    %v7610 = vunpack.c.l.b16 %v7454
    %v7611 = vunpack.c.l.b16 %v7455
    %v7612 = vunpack.c.h.b16 %v7455
    %v7613 = vunpack.c.l.b16 %v7456
    %v7614 = vunpack.c.l.b16 %v7457
    %v7615 = vunpack.c.h.b16 %v7457
    %v7616 = vunpack.c.l.b16 %v7458
    %v7617 = vunpack.c.l.b16 %v7459
    %v7618 = vunpack.c.h.b16 %v7459
    %v7619 = vunpack.c.l.b16 %v7460
    %v7620 = vunpack.c.l.b16 %v7461
    %v7621 = vunpack.c.h.b16 %v7461
    %v7622 = vunpack.c.l.b16 %v7462
    %v7623 = vunpack.c.l.b16 %v7463
    %v7624 = vunpack.c.h.b16 %v7463
    %v7625 = vunpack.c.l.b16 %v7464
    %v7626 = vunpack.c.l.b16 %v7465
    %v7627 = vunpack.c.h.b16 %v7465
    %v7628 = vunpack.c.l.b16 %v7466
    %v7629 = vunpack.c.l.b16 %v7467
    %v7630 = vunpack.c.h.b16 %v7467
    %v7631 = vunpack.c.l.b16 %v7468
    %v7632 = vunpack.c.l.b16 %v7469
    %v7633 = vunpack.c.h.b16 %v7469
    %v7634 = vunpack.c.l.b16 %v7470
    %v7635 = vunpack.c.l.b16 %v7471
    %v7636 = vunpack.c.h.b16 %v7471
    %v7637 = vunpack.c.l.b16 %v7472
    %v7638 = vunpack.c.l.b16 %v7473
    %v7639 = vunpack.c.h.b16 %v7473
    %v7640 = vunpack.c.l.b16 %v7474
    %v7641 = vunpack.c.l.b16 %v7475
    %v7642 = vunpack.c.h.b16 %v7475
    %v7643 = vunpack.c.l.b16 %v7476
    %v7644 = vunpack.c.l.b16 %v7477
    %v7645 = vunpack.c.h.b16 %v7477
    %v7646 = vunpack.c.l.b16 %v7478
    %v7647 = vunpack.c.l.b16 %v7479
    %v7648 = vunpack.c.h.b16 %v7479
    %v7649 = vunpack.c.l.b16 %v7480
    %v7650 = vunpack.c.l.b16 %v7481
    %v7651 = vunpack.c.h.b16 %v7481
    %v7652 = vunpack.c.l.b16 %v7482
    %v7653 = vunpack.c.l.b16 %v7483
    %v7654 = vunpack.c.h.b16 %v7483
    %v7655 = vunpack.c.l.b16 %v7484
    %v7656 = vunpack.c.l.b16 %v7485
    %v7657 = vunpack.c.h.b16 %v7485
    %v7658 = vunpack.c.l.b16 %v7486
    %v7659 = vunpack.c.l.b16 %v7487
    %v7660 = vunpack.c.h.b16 %v7487
    %v7661 = vunpack.c.l.b16 %v7488
    %v7662 = vunpack.c.l.b16 %v7489
    %v7663 = vunpack.c.h.b16 %v7489
    %v7664 = vpack.c.b16 %v7571, %v7568
    %v7665 = vpack.c.b16 %v7572, %v7569
    %v7666 = vpack.c.b16 %v7573, %v7570
    %v7667 = vpack.c.b16 %v7577, %v7574
    %v7668 = vpack.c.b16 %v7578, %v7575
    %v7669 = vpack.c.b16 %v7579, %v7576
    %v7670 = vpack.c.b16 %v7583, %v7580
    %v7671 = vpack.c.b16 %v7584, %v7581
    %v7672 = vpack.c.b16 %v7585, %v7582
    %v7673 = vpack.c.b16 %v7589, %v7586
    %v7674 = vpack.c.b16 %v7590, %v7587
    %v7675 = vpack.c.b16 %v7591, %v7588
    %v7676 = vpack.c.b16 %v7595, %v7592
    %v7677 = vpack.c.b16 %v7596, %v7593
    %v7678 = vpack.c.b16 %v7597, %v7594
    %v7679 = vpack.c.b16 %v7601, %v7598
    %v7680 = vpack.c.b16 %v7602, %v7599
    %v7681 = vpack.c.b16 %v7603, %v7600
    %v7682 = vpack.c.b16 %v7607, %v7604
    %v7683 = vpack.c.b16 %v7608, %v7605
    %v7684 = vpack.c.b16 %v7609, %v7606
    %v7685 = vpack.c.b16 %v7613, %v7610
    %v7686 = vpack.c.b16 %v7614, %v7611
    %v7687 = vpack.c.b16 %v7615, %v7612
    %v7688 = vpack.c.b16 %v7619, %v7616
    %v7689 = vpack.c.b16 %v7620, %v7617
    %v7690 = vpack.c.b16 %v7621, %v7618
    %v7691 = vpack.c.b16 %v7625, %v7622
    %v7692 = vpack.c.b16 %v7626, %v7623
    %v7693 = vpack.c.b16 %v7627, %v7624
    %v7694 = vpack.c.b16 %v7631, %v7628
    %v7695 = vpack.c.b16 %v7632, %v7629
    %v7696 = vpack.c.b16 %v7633, %v7630
    %v7697 = vpack.c.b16 %v7637, %v7634
    %v7698 = vpack.c.b16 %v7638, %v7635
    %v7699 = vpack.c.b16 %v7639, %v7636
    %v7700 = vpack.c.b16 %v7643, %v7640
    %v7701 = vpack.c.b16 %v7644, %v7641
    %v7702 = vpack.c.b16 %v7645, %v7642
    %v7703 = vpack.c.b16 %v7649, %v7646
    %v7704 = vpack.c.b16 %v7650, %v7647
    %v7705 = vpack.c.b16 %v7651, %v7648
    %v7706 = vpack.c.b16 %v7655, %v7652
    %v7707 = vpack.c.b16 %v7656, %v7653
    %v7708 = vpack.c.b16 %v7657, %v7654
    %v7709 = vpack.c.b16 %v7661, %v7658
    %v7710 = vpack.c.b16 %v7662, %v7659
    %v7711 = vpack.c.b16 %v7663, %v7660
    %7760 = vmatpush.bf16.msra.mxu0 %v7685
    %7761 = vmatpush.bf16.msra.mxu0 %v7682
    %7762 = vmatpush.bf16.msra.mxu0 %v7679
    %7763 = vmatpush.bf16.msra.mxu0 %v7676
    %7764 = vmatpush.bf16.msra.mxu0 %v7673
    %7765 = vmatpush.bf16.msra.mxu0 %v7670
    %7766 = vmatpush.bf16.msra.mxu0 %v7667
    %7767 = vmatpush.bf16.msra.mxu0 %v7664
    %7768 = vmatmul.bf16.gmra.mxu0 %v7500
    %v7769 = vpop.f32.mrf.mxu0
    %v7770 = vadd.f32 %v7492, %v7769
    %v7771 = vpop.f32.mrf.mxu0
    %7772 = vdwg.mxu0
    %7773 = vmatpush.bf16.msra.mxu0 %v7709
    %7774 = vmatpush.bf16.msra.mxu0 %v7706
    %7775 = vmatpush.bf16.msra.mxu0 %v7703
    %7776 = vmatpush.bf16.msra.mxu0 %v7700
    %7777 = vmatpush.bf16.msra.mxu0 %v7697
    %7778 = vmatpush.bf16.msra.mxu0 %v7694
    %7779 = vmatpush.bf16.msra.mxu0 %v7691
    %7780 = vmatpush.bf16.msra.mxu0 %v7688
    %7781 = vmatmul.bf16.gmra.mxu0 %v7501
    %v7782 = vpop.f32.mrf.mxu0
    %v7783 = vadd.f32 %v7770, %v7782
    %v7784 = vpop.f32.mrf.mxu0
    %7785 = vdwg.mxu0
    %7786 = vmatpush.bf16.msra.mxu0 %v7686
    %7787 = vmatpush.bf16.msra.mxu0 %v7683
    %7788 = vmatpush.bf16.msra.mxu0 %v7680
    %7789 = vmatpush.bf16.msra.mxu0 %v7677
    %7790 = vmatpush.bf16.msra.mxu0 %v7674
    %7791 = vmatpush.bf16.msra.mxu0 %v7671
    %7792 = vmatpush.bf16.msra.mxu0 %v7668
    %7793 = vmatpush.bf16.msra.mxu0 %v7665
    %7794 = vmatmul.bf16.gmra.mxu0 %v7500
    %v7795 = vpop.f32.mrf.mxu0
    %v7796 = vadd.f32 %v7493, %v7795
    %v7797 = vpop.f32.mrf.mxu0
    %7798 = vdwg.mxu0
    %7799 = vmatpush.bf16.msra.mxu0 %v7710
    %7800 = vmatpush.bf16.msra.mxu0 %v7707
    %7801 = vmatpush.bf16.msra.mxu0 %v7704
    %7802 = vmatpush.bf16.msra.mxu0 %v7701
    %7803 = vmatpush.bf16.msra.mxu0 %v7698
    %7804 = vmatpush.bf16.msra.mxu0 %v7695
    %7805 = vmatpush.bf16.msra.mxu0 %v7692
    %7806 = vmatpush.bf16.msra.mxu0 %v7689
    %7807 = vmatmul.bf16.gmra.mxu0 %v7501
    %v7808 = vpop.f32.mrf.mxu0
    %v7809 = vadd.f32 %v7796, %v7808
    %v7810 = vpop.f32.mrf.mxu0
    %7811 = vdwg.mxu0
    %7812 = vmatpush.bf16.msra.mxu0 %v7687
    %7813 = vmatpush.bf16.msra.mxu0 %v7684
    %7814 = vmatpush.bf16.msra.mxu0 %v7681
    %7815 = vmatpush.bf16.msra.mxu0 %v7678
    %7816 = vmatpush.bf16.msra.mxu0 %v7675
    %7817 = vmatpush.bf16.msra.mxu0 %v7672
    %7818 = vmatpush.bf16.msra.mxu0 %v7669
    %7819 = vmatpush.bf16.msra.mxu0 %v7666
    %7820 = vmatmul.bf16.gmra.mxu0 %v7500
    %v7821 = vpop.f32.mrf.mxu0
    %v7822 = vadd.f32 %v7494, %v7821
    %v7823 = vpop.f32.mrf.mxu0
    %7824 = vdwg.mxu0
    %7825 = vmatpush.bf16.msra.mxu0 %v7711
    %7826 = vmatpush.bf16.msra.mxu0 %v7708
    %7827 = vmatpush.bf16.msra.mxu0 %v7705
    %7828 = vmatpush.bf16.msra.mxu0 %v7702
    %7829 = vmatpush.bf16.msra.mxu0 %v7699
    %7830 = vmatpush.bf16.msra.mxu0 %v7696
    %7831 = vmatpush.bf16.msra.mxu0 %v7693
    %7832 = vmatpush.bf16.msra.mxu0 %v7690
    %7833 = vmatmul.bf16.gmra.mxu0 %v7501
    %v7834 = vpop.f32.mrf.mxu0
    %v7835 = vadd.f32 %v7822, %v7834
    %v7836 = vpop.f32.mrf.mxu0
    %7837 = vdwg.mxu0
    %v7838 = vxor.u32 %v7783, 2147483648
    %v7839 = vmul.f32 %v7838, 1.442695
    %v7840 = vpow.pop %v7839
    %v7841 = vadd.f32 %v7840, 1.0
    %v7842 = vrcp.pop %v7841
    %v7843 = vmul.f32 %v7841, %v7842
    %v7844 = vsub.f32 1.0, %v7843
    %v7845 = vmul.f32 %v7842, %v7844
    %v7846 = vadd.f32 %v7842, %v7845
    %vm7847 = vweird.f32 %v7841
    %vm7848 = vweird.f32 %v7842
    %vm7849 = vmor %vm7847, %vm7848
    %v7850 = vsel %vm7849, %v7842, %v7846
    %v7851 = vand.u32 2147483647, %v7841
    %vm7852 = vcmp.eq.f32.partialorder %v7851, 8.507059e+37
    %v7853 = vand.u32 %v7841, 2147483648
    %v7854 = vor.u32 1.1754944e-38, %v7853
    %v7855 = vsel %vm7852, %v7854, %v7850
    %v7856 = vmul.f32 1.0, %v7855
    %v7857 = vtanh.pop %v7809
    %v7858 = vxor.u32 %v7835, 2147483648
    %v7859 = vmul.f32 %v7858, 1.442695
    %v7860 = vpow.pop %v7859
    %v7861 = vadd.f32 %v7860, 1.0
    %v7862 = vrcp.pop %v7861
    %v7863 = vmul.f32 %v7861, %v7862
    %v7864 = vsub.f32 1.0, %v7863
    %v7865 = vmul.f32 %v7862, %v7864
    %v7866 = vadd.f32 %v7862, %v7865
    %vm7867 = vweird.f32 %v7861
    %vm7868 = vweird.f32 %v7862
    %vm7869 = vmor %vm7867, %vm7868
    %v7870 = vsel %vm7869, %v7862, %v7866
    %v7871 = vand.u32 2147483647, %v7861
    %vm7872 = vcmp.eq.f32.partialorder %v7871, 8.507059e+37
    %v7873 = vand.u32 %v7861, 2147483648
    %v7874 = vor.u32 1.1754944e-38, %v7873
    %v7875 = vsel %vm7872, %v7874, %v7870
    %v7876 = vmul.f32 1.0, %v7875
    %v7877 = vmul.f32 %v7856, %v7857
    %v7878 = vtanh.pop %v7877
    %v7879 = vmul.f32 %v7876, %v7878
    %v7880 = vpack.c.bf16 %v7425, %v7425
    %v7881 = vld [vmem:[#allocation11] sm:$0xf]
    %v7882 = vld [vmem:[#allocation11 + $0x4] sm:$0xf]
    %v7883 = vld [vmem:[#allocation11 + $0x8] sm:$0xf]
    %v7884 = vld [vmem:[#allocation11 + $0xc] sm:$0xf]
    %v7885 = vld [vmem:[#allocation11 + $0x10] sm:$0xf]
    %v7886 = vld [vmem:[#allocation11 + $0x14] sm:$0xf]
    %v7887 = vld [vmem:[#allocation11 + $0x18] sm:$0xf]
    %v7888 = vld [vmem:[#allocation11 + $0x1c] sm:$0xf]
    %v7889 = vld [vmem:[#allocation11 + $0x20] sm:$0xf]
    %v7890 = vld [vmem:[#allocation11 + $0x24] sm:$0xf]
    %v7891 = vld [vmem:[#allocation11 + $0x28] sm:$0xf]
    %v7892 = vld [vmem:[#allocation11 + $0x2c] sm:$0xf]
    %v7893 = vld [vmem:[#allocation11 + $0x30] sm:$0xf]
    %v7894 = vld [vmem:[#allocation11 + $0x34] sm:$0xf]
    %v7895 = vld [vmem:[#allocation11 + $0x38] sm:$0xf]
    %v7896 = vld [vmem:[#allocation11 + $0x3c] sm:$0xf]
    %v7897 = vpack.c.bf16 %v7879, %v7879
    %v7898 = vld [vmem:[#allocation11 + $0x40] sm:$0xf]
    %v7899 = vld [vmem:[#allocation11 + $0x44] sm:$0xf]
    %v7900 = vld [vmem:[#allocation11 + $0x48] sm:$0xf]
    %v7901 = vld [vmem:[#allocation11 + $0x4c] sm:$0xf]
    %v7902 = vld [vmem:[#allocation11 + $0x50] sm:$0xf]
    %v7903 = vld [vmem:[#allocation11 + $0x54] sm:$0xf]
    %v7904 = vld [vmem:[#allocation11 + $0x58] sm:$0xf]
    %v7905 = vld [vmem:[#allocation11 + $0x5c] sm:$0xf]
    %v7906 = vld [vmem:[#allocation11 + $0x60] sm:$0xf]
    %v7907 = vld [vmem:[#allocation11 + $0x64] sm:$0xf]
    %v7908 = vld [vmem:[#allocation11 + $0x68] sm:$0xf]
    %v7909 = vld [vmem:[#allocation11 + $0x6c] sm:$0xf]
    %v7910 = vld [vmem:[#allocation11 + $0x70] sm:$0xf]
    %v7911 = vld [vmem:[#allocation11 + $0x74] sm:$0xf]
    %v7912 = vld [vmem:[#allocation11 + $0x78] sm:$0xf]
    %v7913 = vld [vmem:[#allocation11 + $0x7c] sm:$0xf]
    %v7930 = vunpack.c.l.b16 %v7898
    %v7931 = vunpack.c.l.b16 %v7899
    %v7932 = vunpack.c.l.b16 %v7900
    %v7933 = vunpack.c.l.b16 %v7901
    %v7934 = vunpack.c.l.b16 %v7902
    %v7935 = vunpack.c.l.b16 %v7903
    %v7936 = vunpack.c.l.b16 %v7904
    %v7937 = vunpack.c.l.b16 %v7905
    %v7938 = vunpack.c.l.b16 %v7906
    %v7939 = vunpack.c.l.b16 %v7907
    %v7940 = vunpack.c.l.b16 %v7908
    %v7941 = vunpack.c.l.b16 %v7909
    %v7942 = vunpack.c.l.b16 %v7910
    %v7943 = vunpack.c.l.b16 %v7911
    %v7944 = vunpack.c.l.b16 %v7912
    %v7945 = vunpack.c.l.b16 %v7913
    %v7946 = vpack.c.b16 %v7931, %v7930
    %v7947 = vpack.c.b16 %v7933, %v7932
    %v7948 = vpack.c.b16 %v7935, %v7934
    %v7949 = vpack.c.b16 %v7937, %v7936
    %v7950 = vpack.c.b16 %v7939, %v7938
    %v7951 = vpack.c.b16 %v7941, %v7940
    %v7952 = vpack.c.b16 %v7943, %v7942
    %v7953 = vpack.c.b16 %v7945, %v7944
    %7962 = vmatpush.bf16.msra.mxu0 %v7953
    %7963 = vmatpush.bf16.msra.mxu0 %v7952
    %7964 = vmatpush.bf16.msra.mxu0 %v7951
    %7965 = vmatpush.bf16.msra.mxu0 %v7950
    %7966 = vmatpush.bf16.msra.mxu0 %v7949
    %7967 = vmatpush.bf16.msra.mxu0 %v7948
    %7968 = vmatpush.bf16.msra.mxu0 %v7947
    %7969 = vmatpush.bf16.msra.mxu0 %v7946
    %7970 = vmatmul.bf16.gmra.mxu0 %v7897
    %v7971 = vpop.f32.mrf.mxu0
    %v7972 = vadd.f32 0.0, %v7971
    %v7973 = vpop.f32.mrf.mxu0
    %7974 = vdwg.mxu0
    %v7976 = vrot.slane %v7880, 3
    %v7994 = vunpack.c.l.b16 %v7881
    %v7995 = vunpack.c.l.b16 %v7882
    %v7996 = vunpack.c.l.b16 %v7883
    %v7997 = vunpack.c.l.b16 %v7884
    %v7998 = vunpack.c.l.b16 %v7885
    %v7999 = vunpack.c.l.b16 %v7886
    %v8000 = vunpack.c.l.b16 %v7887
    %v8001 = vunpack.c.l.b16 %v7888
    %v8002 = vunpack.c.l.b16 %v7889
    %v8003 = vunpack.c.l.b16 %v7890
    %v8004 = vunpack.c.l.b16 %v7891
    %v8005 = vunpack.c.l.b16 %v7892
    %v8006 = vunpack.c.l.b16 %v7893
    %v8007 = vunpack.c.l.b16 %v7894
    %v8008 = vunpack.c.l.b16 %v7895
    %v8009 = vunpack.c.l.b16 %v7896
    %v8010 = vpack.c.b16 %v7995, %v7994
    %v8011 = vpack.c.b16 %v7997, %v7996
    %v8012 = vpack.c.b16 %v7999, %v7998
    %v8013 = vpack.c.b16 %v8001, %v8000
    %v8014 = vpack.c.b16 %v8003, %v8002
    %v8015 = vpack.c.b16 %v8005, %v8004
    %v8016 = vpack.c.b16 %v8007, %v8006
    %v8017 = vpack.c.b16 %v8009, %v8008
    %8026 = vmatpush.bf16.msra.mxu0 %v8017
    %8027 = vmatpush.bf16.msra.mxu0 %v8016
    %8028 = vmatpush.bf16.msra.mxu0 %v8015
    %8029 = vmatpush.bf16.msra.mxu0 %v8014
    %8030 = vmatpush.bf16.msra.mxu0 %v8013
    %8031 = vmatpush.bf16.msra.mxu0 %v8012
    %8032 = vmatpush.bf16.msra.mxu0 %v8011
    %8033 = vmatpush.bf16.msra.mxu0 %v8010
    %8034 = vmatmul.bf16.gmra.mxu0 %v7976
    %v8035 = vpop.f32.mrf.mxu0
    %v8036 = vadd.f32 %v7972, %v8035
    %v8037 = vpop.f32.mrf.mxu0
    %8038 = vdwg.mxu0
    %v8039 = vld [vmem:[%s13] sm:$0x1]
    %v8041 = vperm.slane %v8039, 0
    %v8043 = vadd.f32 %v8036, %v8041
    %v8044 = vmax.f32 %v8043, 0.0
    %v8045 = vpack.c.bf16 %v8044, %v8044
    %v8046 = vld [vmem:[#allocation13] sm:$0xf]
    %v8047 = vld [vmem:[#allocation13 + $0x4] sm:$0xf]
    %v8048 = vld [vmem:[#allocation13 + $0x8] sm:$0xf]
    %v8049 = vld [vmem:[#allocation13 + $0xc] sm:$0xf]
    %v8050 = vld [vmem:[#allocation13 + $0x10] sm:$0xf]
    %v8051 = vld [vmem:[#allocation13 + $0x14] sm:$0xf]
    %v8052 = vld [vmem:[#allocation13 + $0x18] sm:$0xf]
    %v8053 = vld [vmem:[#allocation13 + $0x1c] sm:$0xf]
    %v8054 = vld [vmem:[#allocation13 + $0x20] sm:$0xf]
    %v8055 = vld [vmem:[#allocation13 + $0x24] sm:$0xf]
    %v8056 = vld [vmem:[#allocation13 + $0x28] sm:$0xf]
    %v8057 = vld [vmem:[#allocation13 + $0x2c] sm:$0xf]
    %v8058 = vld [vmem:[#allocation13 + $0x30] sm:$0xf]
    %v8059 = vld [vmem:[#allocation13 + $0x34] sm:$0xf]
    %v8060 = vld [vmem:[#allocation13 + $0x38] sm:$0xf]
    %v8061 = vld [vmem:[#allocation13 + $0x3c] sm:$0xf]
    %v8062 = vld [vmem:[%s15] sm:$0x1]
    %v8064 = vperm.slane %v8062, 0
    %v8082 = vunpack.c.l.b16 %v8046
    %v8083 = vunpack.c.l.b16 %v8047
    %v8084 = vunpack.c.l.b16 %v8048
    %v8085 = vunpack.c.l.b16 %v8049
    %v8086 = vunpack.c.l.b16 %v8050
    %v8087 = vunpack.c.l.b16 %v8051
    %v8088 = vunpack.c.l.b16 %v8052
    %v8089 = vunpack.c.l.b16 %v8053
    %v8090 = vunpack.c.l.b16 %v8054
    %v8091 = vunpack.c.l.b16 %v8055
    %v8092 = vunpack.c.l.b16 %v8056
    %v8093 = vunpack.c.l.b16 %v8057
    %v8094 = vunpack.c.l.b16 %v8058
    %v8095 = vunpack.c.l.b16 %v8059
    %v8096 = vunpack.c.l.b16 %v8060
    %v8097 = vunpack.c.l.b16 %v8061
    %v8098 = vpack.c.b16 %v8083, %v8082
    %v8099 = vpack.c.b16 %v8085, %v8084
    %v8100 = vpack.c.b16 %v8087, %v8086
    %v8101 = vpack.c.b16 %v8089, %v8088
    %v8102 = vpack.c.b16 %v8091, %v8090
    %v8103 = vpack.c.b16 %v8093, %v8092
    %v8104 = vpack.c.b16 %v8095, %v8094
    %v8105 = vpack.c.b16 %v8097, %v8096
    %8114 = vmatpush.bf16.msra.mxu0 %v8105
    %8115 = vmatpush.bf16.msra.mxu0 %v8104
    %8116 = vmatpush.bf16.msra.mxu0 %v8103
    %8117 = vmatpush.bf16.msra.mxu0 %v8102
    %8118 = vmatpush.bf16.msra.mxu0 %v8101
    %8119 = vmatpush.bf16.msra.mxu0 %v8100
    %8120 = vmatpush.bf16.msra.mxu0 %v8099
    %8121 = vmatpush.bf16.msra.mxu0 %v8098
    %8122 = vmatmul.bf16.gmra.mxu0 %v8045
    %v8123 = vpop.f32.mrf.mxu0
    %v8124 = vadd.f32 %v8064, %v8123
    %v8125 = vpop.f32.mrf.mxu0
    %8126 = vdwg.mxu0
    %v8127 = vmax.f32 %v8124, 0.0
    %v8128 = vpack.c.bf16 %v8127, %v8127
    %v8129 = vld [vmem:[#allocation14] sm:$0xf]
    %v8130 = vld [vmem:[#allocation14 + $0x4] sm:$0xf]
    %v8131 = vld [vmem:[#allocation14 + $0x8] sm:$0xf]
    %v8132 = vld [vmem:[#allocation14 + $0xc] sm:$0xf]
    %v8133 = vld [vmem:[#allocation14 + $0x10] sm:$0xf]
    %v8134 = vld [vmem:[#allocation14 + $0x14] sm:$0xf]
    %v8135 = vld [vmem:[#allocation14 + $0x18] sm:$0xf]
    %v8136 = vld [vmem:[#allocation14 + $0x1c] sm:$0xf]
    %v8137 = vld [vmem:[#allocation14 + $0x20] sm:$0xf]
    %v8138 = vld [vmem:[#allocation14 + $0x24] sm:$0xf]
    %v8139 = vld [vmem:[#allocation14 + $0x28] sm:$0xf]
    %v8140 = vld [vmem:[#allocation14 + $0x2c] sm:$0xf]
    %v8141 = vld [vmem:[#allocation14 + $0x30] sm:$0xf]
    %v8142 = vld [vmem:[#allocation14 + $0x34] sm:$0xf]
    %v8143 = vld [vmem:[#allocation14 + $0x38] sm:$0xf]
    %v8144 = vld [vmem:[#allocation14 + $0x3c] sm:$0xf]
    %v8145 = vld [vmem:[%s17] sm:$0x1]
    %v8147 = vperm.slane %v8145, 0
    %v8165 = vunpack.c.l.b16 %v8129
    %v8166 = vunpack.c.l.b16 %v8130
    %v8167 = vunpack.c.l.b16 %v8131
    %v8168 = vunpack.c.l.b16 %v8132
    %v8169 = vunpack.c.l.b16 %v8133
    %v8170 = vunpack.c.l.b16 %v8134
    %v8171 = vunpack.c.l.b16 %v8135
    %v8172 = vunpack.c.l.b16 %v8136
    %v8173 = vunpack.c.l.b16 %v8137
    %v8174 = vunpack.c.l.b16 %v8138
    %v8175 = vunpack.c.l.b16 %v8139
    %v8176 = vunpack.c.l.b16 %v8140
    %v8177 = vunpack.c.l.b16 %v8141
    %v8178 = vunpack.c.l.b16 %v8142
    %v8179 = vunpack.c.l.b16 %v8143
    %v8180 = vunpack.c.l.b16 %v8144
    %v8181 = vpack.c.b16 %v8166, %v8165
    %v8182 = vpack.c.b16 %v8168, %v8167
    %v8183 = vpack.c.b16 %v8170, %v8169
    %v8184 = vpack.c.b16 %v8172, %v8171
    %v8185 = vpack.c.b16 %v8174, %v8173
    %v8186 = vpack.c.b16 %v8176, %v8175
    %v8187 = vpack.c.b16 %v8178, %v8177
    %v8188 = vpack.c.b16 %v8180, %v8179
    %8197 = vmatpush.bf16.msra.mxu0 %v8188
    %8198 = vmatpush.bf16.msra.mxu0 %v8187
    %8199 = vmatpush.bf16.msra.mxu0 %v8186
    %8200 = vmatpush.bf16.msra.mxu0 %v8185
    %8201 = vmatpush.bf16.msra.mxu0 %v8184
    %8202 = vmatpush.bf16.msra.mxu0 %v8183
    %8203 = vmatpush.bf16.msra.mxu0 %v8182
    %8204 = vmatpush.bf16.msra.mxu0 %v8181
    %8205 = vmatmul.bf16.gmra.mxu0 %v8128
    %v8206 = vpop.f32.mrf.mxu0
    %v8207 = vadd.f32 %v8147, %v8206
    %v8208 = vpop.f32.mrf.mxu0
    %8209 = vdwg.mxu0
    %v8210 = vmax.f32 %v8207, 0.0
    %v8211 = vpack.c.bf16 %v8210, %v8210
    %v8212 = vld [vmem:[#allocation16] sm:$0xf]
    %v8213 = vld [vmem:[#allocation16 + $0x4] sm:$0xf]
    %v8214 = vld [vmem:[#allocation16 + $0x8] sm:$0xf]
    %v8215 = vld [vmem:[#allocation16 + $0xc] sm:$0xf]
    %v8216 = vld [vmem:[#allocation16 + $0x10] sm:$0xf]
    %v8217 = vld [vmem:[#allocation16 + $0x14] sm:$0xf]
    %v8218 = vld [vmem:[#allocation16 + $0x18] sm:$0xf]
    %v8219 = vld [vmem:[#allocation16 + $0x1c] sm:$0xf]
    %v8220 = vld [vmem:[#allocation16 + $0x20] sm:$0xf]
    %v8221 = vld [vmem:[#allocation16 + $0x24] sm:$0xf]
    %v8222 = vld [vmem:[#allocation16 + $0x28] sm:$0xf]
    %v8223 = vld [vmem:[#allocation16 + $0x2c] sm:$0xf]
    %v8224 = vld [vmem:[#allocation16 + $0x30] sm:$0xf]
    %v8225 = vld [vmem:[#allocation16 + $0x34] sm:$0xf]
    %v8226 = vld [vmem:[#allocation16 + $0x38] sm:$0xf]
    %v8227 = vld [vmem:[#allocation16 + $0x3c] sm:$0xf]
    %v8228 = vld [vmem:[%s19] sm:$0x1]
    %v8230 = vperm.slane %v8228, 0
    %v8248 = vunpack.c.l.b16 %v8212
    %v8249 = vunpack.c.l.b16 %v8213
    %v8250 = vunpack.c.l.b16 %v8214
    %v8251 = vunpack.c.l.b16 %v8215
    %v8252 = vunpack.c.l.b16 %v8216
    %v8253 = vunpack.c.l.b16 %v8217
    %v8254 = vunpack.c.l.b16 %v8218
    %v8255 = vunpack.c.l.b16 %v8219
    %v8256 = vunpack.c.l.b16 %v8220
    %v8257 = vunpack.c.l.b16 %v8221
    %v8258 = vunpack.c.l.b16 %v8222
    %v8259 = vunpack.c.l.b16 %v8223
    %v8260 = vunpack.c.l.b16 %v8224
    %v8261 = vunpack.c.l.b16 %v8225
    %v8262 = vunpack.c.l.b16 %v8226
    %v8263 = vunpack.c.l.b16 %v8227
    %v8264 = vpack.c.b16 %v8249, %v8248
    %v8265 = vpack.c.b16 %v8251, %v8250
    %v8266 = vpack.c.b16 %v8253, %v8252
    %v8267 = vpack.c.b16 %v8255, %v8254
    %v8268 = vpack.c.b16 %v8257, %v8256
    %v8269 = vpack.c.b16 %v8259, %v8258
    %v8270 = vpack.c.b16 %v8261, %v8260
    %v8271 = vpack.c.b16 %v8263, %v8262
    %8280 = vmatpush.bf16.msra.mxu0 %v8271
    %8281 = vmatpush.bf16.msra.mxu0 %v8270
    %8282 = vmatpush.bf16.msra.mxu0 %v8269
    %8283 = vmatpush.bf16.msra.mxu0 %v8268
    %8284 = vmatpush.bf16.msra.mxu0 %v8267
    %8285 = vmatpush.bf16.msra.mxu0 %v8266
    %8286 = vmatpush.bf16.msra.mxu0 %v8265
    %8287 = vmatpush.bf16.msra.mxu0 %v8264
    %8288 = vmatmul.bf16.gmra.mxu0 %v8211
    %v8289 = vpop.f32.mrf.mxu0
    %v8290 = vadd.f32 %v8230, %v8289
    %v8291 = vpop.f32.mrf.mxu0
    %8292 = vdwg.mxu0
    %v8293 = vmax.f32 %v8290, 0.0
    %v8294 = vpack.c.bf16 %v8293, %v8293
    %v8295 = vld [vmem:[#allocation17] sm:$0xf]
    %v8296 = vld [vmem:[#allocation17 + $0x4] sm:$0xf]
    %v8297 = vld [vmem:[#allocation17 + $0x8] sm:$0xf]
    %v8298 = vld [vmem:[#allocation17 + $0xc] sm:$0xf]
    %v8299 = vld [vmem:[#allocation17 + $0x10] sm:$0xf]
    %v8300 = vld [vmem:[#allocation17 + $0x14] sm:$0xf]
    %v8301 = vld [vmem:[#allocation17 + $0x18] sm:$0xf]
    %v8302 = vld [vmem:[#allocation17 + $0x1c] sm:$0xf]
    %v8303 = vld [vmem:[#allocation17 + $0x20] sm:$0xf]
    %v8304 = vld [vmem:[#allocation17 + $0x24] sm:$0xf]
    %v8305 = vld [vmem:[#allocation17 + $0x28] sm:$0xf]
    %v8306 = vld [vmem:[#allocation17 + $0x2c] sm:$0xf]
    %v8307 = vld [vmem:[#allocation17 + $0x30] sm:$0xf]
    %v8308 = vld [vmem:[#allocation17 + $0x34] sm:$0xf]
    %v8309 = vld [vmem:[#allocation17 + $0x38] sm:$0xf]
    %v8310 = vld [vmem:[#allocation17 + $0x3c] sm:$0xf]
    %v8311 = vld [vmem:[%s21] sm:$0x1]
    %v8313 = vperm.slane %v8311, 0
    %v8331 = vunpack.c.l.b16 %v8295
    %v8332 = vunpack.c.l.b16 %v8296
    %v8333 = vunpack.c.l.b16 %v8297
    %v8334 = vunpack.c.l.b16 %v8298
    %v8335 = vunpack.c.l.b16 %v8299
    %v8336 = vunpack.c.l.b16 %v8300
    %v8337 = vunpack.c.l.b16 %v8301
    %v8338 = vunpack.c.l.b16 %v8302
    %v8339 = vunpack.c.l.b16 %v8303
    %v8340 = vunpack.c.l.b16 %v8304
    %v8341 = vunpack.c.l.b16 %v8305
    %v8342 = vunpack.c.l.b16 %v8306
    %v8343 = vunpack.c.l.b16 %v8307
    %v8344 = vunpack.c.l.b16 %v8308
    %v8345 = vunpack.c.l.b16 %v8309
    %v8346 = vunpack.c.l.b16 %v8310
    %v8347 = vpack.c.b16 %v8332, %v8331
    %v8348 = vpack.c.b16 %v8334, %v8333
    %v8349 = vpack.c.b16 %v8336, %v8335
    %v8350 = vpack.c.b16 %v8338, %v8337
    %v8351 = vpack.c.b16 %v8340, %v8339
    %v8352 = vpack.c.b16 %v8342, %v8341
    %v8353 = vpack.c.b16 %v8344, %v8343
    %v8354 = vpack.c.b16 %v8346, %v8345
    %8363 = vmatpush.bf16.msra.mxu0 %v8354
    %8364 = vmatpush.bf16.msra.mxu0 %v8353
    %8365 = vmatpush.bf16.msra.mxu0 %v8352
    %8366 = vmatpush.bf16.msra.mxu0 %v8351
    %8367 = vmatpush.bf16.msra.mxu0 %v8350
    %8368 = vmatpush.bf16.msra.mxu0 %v8349
    %8369 = vmatpush.bf16.msra.mxu0 %v8348
    %8370 = vmatpush.bf16.msra.mxu0 %v8347
    %8371 = vmatmul.bf16.gmra.mxu0 %v8294
    %v8372 = vpop.f32.mrf.mxu0
    %v8373 = vadd.f32 %v8313, %v8372
    %v8374 = vpop.f32.mrf.mxu0
    %8375 = vdwg.mxu0
    %v8376 = vxor.u32 %v8373, 2147483648
    %v8377 = vmul.f32 %v8376, 1.442695
    %v8378 = vpow.pop %v8377
    %v8379 = vadd.f32 %v8378, 1.0
    %v8380 = vrcp.pop %v8379
    %v8381 = vmul.f32 %v8379, %v8380
    %v8382 = vsub.f32 1.0, %v8381
    %v8383 = vmul.f32 %v8380, %v8382
    %v8384 = vadd.f32 %v8380, %v8383
    %vm8385 = vweird.f32 %v8379
    %vm8386 = vweird.f32 %v8380
    %vm8387 = vmor %vm8385, %vm8386
    %v8388 = vsel %vm8387, %v8380, %v8384
    %v8389 = vand.u32 2147483647, %v8379
    %vm8390 = vcmp.eq.f32.partialorder %v8389, 8.507059e+37
    %v8391 = vand.u32 %v8379, 2147483648
    %v8392 = vor.u32 1.1754944e-38, %v8391
    %v8393 = vsel %vm8390, %v8392, %v8388
    %v8394 = vmul.f32 1.0, %v8393
    %8395 = vst [vmem:[%s22] sm:$0x3] %v8394
    // Predicated region
    $region130: #{bilstm_forward.1} parent=1 // pred_check
      _
    $region131: #{bilstm_forward.1} parent=1 // pred_check_branch
      %8397 = sbr.rel (0) target = $region133
    $region132: #{bilstm_forward.1} parent=1 // pred_region
      _
    $region133: #{bilstm_forward.1} parent=1 // pred_fallthru
      _
    // Predicated region
    $region134: #{bilstm_forward.1} parent=1 // pred_check
      _
    $region135: #{bilstm_forward.1} parent=1 // pred_check_branch
      %8399 = sbr.rel (0) target = $region137
    $region136: #{bilstm_forward.1} parent=1 // pred_region
      _
    $region137: #{bilstm_forward.1} parent=1 // pred_fallthru
      _
    %8400 = vsyncpa [#allocation4], 1
    %8401 = vsyncpa [#allocation6], 1
    %8402 = vsyncpa [#allocation9], 1
    %8403 = vsyncpa [#allocation12], 1
    %8404 = vsyncpa [#allocation15], 1
    %8405 = vsyncpa [#allocation18], 1

</llo_original>
